<compile_context>
chip_gen: v7x
topology: tpu7x:2x2x1
jax: 0.10.0
libtpu: 0.0.40
codegen_flags: <defaults>
</compile_context>

<pallas_src>
import math
import jax
import jax.numpy as jnp
from jax.experimental import pallas as pl
from jax.experimental.pallas import tpu as pltpu


# ----------------------------------------------------------------------------
# Pallas kernel: one recurrent step of one direction.  Grid = (num_dirs, S).
#
# Lane layouts (all lane-dense):
#   hidden plane h, c, output : (B*H, W*F)       lane = w*F + c
#   gates                     : (B*H, 4*W*F)     lane = g*W*F + w*F + c
#   banded h->gates weights   : (3*W*F, 4*W*F)   row  = dy*W*F + w_in*F + c_in
# ----------------------------------------------------------------------------
def _convlstm_kernel(xg_ref, m_ref, d_ref, e_ref, gl_ref, bl_ref,
                     out_ref, hpad_ref, cx_ref):
    t = pl.program_id(1)

    B, Hp2, WF = hpad_ref.shape
    H = Hp2 - 2
    BH = B * H
    F4 = d_ref.shape[1]
    F = F4 // 4
    W = WF // F
    n = jnp.float32(B * H * W)

    @pl.when(t == 0)
    def _():
        # h_0 = c_0 = 0 (as in the PyTorch forward).  hpad keeps one zero row
        # above/below the H rows of each batch element (SAME padding along H);
        # the border rows are never written again.
        hpad_ref[...] = jnp.zeros_like(hpad_ref)
        cx_ref[...] = jnp.zeros_like(cx_ref)

    # ---- h-part of the gate conv: one bf16 MXU matmul ------------------------
    # h shifted by dy-1 along H (zero padded) for dy = 0,1,2, concatenated on
    # lanes; the W-shift and channel mixing live in the banded weight matrix.
    h0 = hpad_ref[:, 0:H, :].reshape(BH, WF)
    h1 = hpad_ref[:, 1:H + 1, :].reshape(BH, WF)
    h2 = hpad_ref[:, 2:H + 2, :].reshape(BH, WF)
    h_all = jnp.concatenate([h0, h1, h2], axis=-1).astype(jnp.bfloat16)
    gates = xg_ref[0, 0] + jnp.dot(h_all, m_ref[0],
                                   preferred_element_type=jnp.float32)

    # ---- BatchNorm2d, training-mode batch statistics, one pass ---------------
    # Per-channel stats over (B,H,W).  Lanes sharing a channel are summed /
    # broadcast back with tiny 0/1 selector matmuls (d: lane->channel,
    # e: channel->lane), keeping everything lane-dense.
    colsum = jnp.sum(gates, axis=0, keepdims=True)           # (1, 4*W*F)
    colsq = jnp.sum(gates * gates, axis=0, keepdims=True)    # (1, 4*W*F)
    ch_sum = jnp.dot(colsum, d_ref[...], preferred_element_type=jnp.float32)
    ch_sq = jnp.dot(colsq, d_ref[...], preferred_element_type=jnp.float32)
    mean_c = ch_sum / n
    var_c = jnp.maximum(ch_sq / n - mean_c * mean_c, 0.0)    # biased variance
    inv_c = jax.lax.rsqrt(var_c + 1e-5)
    mean_l = jnp.dot(mean_c, e_ref[...], preferred_element_type=jnp.float32)
    inv_l = jnp.dot(inv_c, e_ref[...], preferred_element_type=jnp.float32)
    gates = (gates - mean_l) * (inv_l * gl_ref[0]) + bl_ref[0]

    # ---- LSTM gating: gate planes are 128-aligned contiguous lane slices -----
    ingate = jax.nn.sigmoid(gates[:, 0 * WF:1 * WF])
    forgetgate = jax.nn.sigmoid(gates[:, 1 * WF:2 * WF])
    cellgate = gates[:, 2 * WF:3 * WF]
    outgate = jax.nn.sigmoid(gates[:, 3 * WF:4 * WF])

    cy = forgetgate * cx_ref[...] + ingate * cellgate
    hy = outgate * jnp.tanh(cy)

    cx_ref[...] = cy
    hpad_ref[:, 1:H + 1, :] = hy.reshape(B, H, WF)
    out_ref[0, 0] = hy


# ----------------------------------------------------------------------------
# Host-side (XLA) precomputation: layout plumbing + recurrence-independent work.
# ----------------------------------------------------------------------------
def _lane_channel(W, F):
    """Dense gate lane  g*W*F + w*F + c  ->  conv output channel  g*F + c."""
    lanes = jnp.arange(4 * W * F)
    return (lanes // (W * F)) * F + (lanes % F)


def _selectors(W, F):
    """0/1 matrices mapping lane<->channel for the BN statistics."""
    ch = _lane_channel(W, F)
    d = (ch[:, None] == jnp.arange(4 * F)[None, :]).astype(jnp.float32)
    return d, d.T                       # (4*W*F, 4F), (4F, 4*W*F)


def _banded_h_weights(wh, W):
    """Fold the 3x3 conv over h into a banded matrix.

    wh: (3, 3, F, 4F) HWIO conv weight for the h channels.  Returns M of shape
    (3*W*F, 4*W*F) with
        M[dy*W*F + w_in*F + c_in, g*W*F + w_out*F + c_out]
            = wh[dy, w_in - w_out + 1, c_in, g*F + c_out]   (zero outside band)
    so that  gates_h = sum_dy h_shifted(dy) @ M[dy]  reproduces the padding=1
    convolution along W (the H direction is handled by the dy shifts).
    """
    # TODO(synk): for large W the banded matrix grows O(W^2); switch to a tiled
    # im2col matmul in that regime.
    kh, kw, F, F4 = wh.shape
    G = F4 // F
    w_in = jnp.arange(W)[:, None]
    w_out = jnp.arange(W)[None, :]
    dx = w_in - w_out + 1                                   # (W, W)
    valid = ((dx >= 0) & (dx < kw)).astype(wh.dtype)
    m = wh[:, jnp.clip(dx, 0, kw - 1)]                      # (3, W, W, F, 4F)
    m = m * valid[None, :, :, None, None]
    m = m.reshape(kh, W, W, F, G, F)
    m = jnp.transpose(m, (0, 1, 3, 4, 2, 5))                # dy,w_in,c_in,g,w_out,c_out
    return m.reshape(kh * W * F, G * W * F)


def _prep_direction(x_seq, w, gamma, beta):
    """Everything that does not depend on the recurrence, for one direction."""
    S, B, H, W, C = x_seq.shape
    F4 = w.shape[-1]
    F = F4 // 4
    assert w.shape[2] == C + F
    wx, wh = w[:, :, :C, :], w[:, :, C:, :]

    # x-part of the gate conv for ALL timesteps at once (one batched XLA conv),
    # rearranged to the gate-major dense lane layout  g*W*F + w*F + c.
    xg = jax.lax.conv_general_dilated(
        x_seq.reshape(S * B, H, W, C), wx, (1, 1), "SAME",
        dimension_numbers=("NHWC", "HWIO", "NHWC"))
    xg = xg.reshape(S, B, H, W, 4, F)
    xg = jnp.transpose(xg, (0, 1, 2, 4, 3, 5)).reshape(S, B * H, 4 * W * F)

    m = _banded_h_weights(wh, W).astype(jnp.bfloat16)
    ch = _lane_channel(W, F)
    gl = gamma.reshape(-1)[ch].astype(jnp.float32)
    bl = beta.reshape(-1)[ch].astype(jnp.float32)
    return xg.astype(jnp.float32), m, gl, bl, F


def _convlstm_pallas(xg, m, gl, bl, dmat, emat, B, H, W, F):
    """Run the recurrent part.  xg: (ND, S, B*H, 4*W*F) -> (ND, S, B*H, W*F)."""
    ND, S, BH, L = xg.shape
    WF = W * F
    F4 = 4 * F
    return pl.pallas_call(
        _convlstm_kernel,
        out_shape=jax.ShapeDtypeStruct((ND, S, BH, WF), jnp.float32),
        grid_spec=pltpu.PrefetchScalarGridSpec(
            num_scalar_prefetch=0,
            grid=(ND, S),
            in_specs=[
                pl.BlockSpec((1, 1, BH, L), lambda d, t: (d, t, 0, 0)),   # x gates
                pl.BlockSpec((1, 3 * WF, L), lambda d, t: (d, 0, 0)),     # banded Wh
                pl.BlockSpec((L, F4), lambda d, t: (0, 0)),               # lane->ch
                pl.BlockSpec((F4, L), lambda d, t: (0, 0)),               # ch->lane
                pl.BlockSpec((1, 1, L), lambda d, t: (d, 0, 0)),          # gamma/lane
                pl.BlockSpec((1, 1, L), lambda d, t: (d, 0, 0)),          # beta/lane
            ],
            out_specs=pl.BlockSpec((1, 1, BH, WF), lambda d, t: (d, t, 0, 0)),
            scratch_shapes=[
                pltpu.VMEM((B, H + 2, WF), jnp.float32),   # h, zero-padded in H
                pltpu.VMEM((BH, WF), jnp.float32),         # cell state
            ],
        ),
        compiler_params=pltpu.CompilerParams(
            dimension_semantics=("parallel", "arbitrary"),
            vmem_limit_bytes=32 * 1024 * 1024),
    )(xg, m, dmat, emat, gl, bl)


def _dense_to_bschw(o, B, H, W, F):
    """(S, B*H, W*F) dense kernel output -> (B, S, F, H, W) PyTorch layout."""
    S = o.shape[0]
    o = o.reshape(S, B, H, W, F)
    return jnp.transpose(o, (1, 0, 4, 2, 3))


def conv_bilstm_layer(x_bschw, params, merge_mode="concat"):
    """ConvBiLSTMLayer forward.  x: (B, S, C, H, W) -> (B, S, F_total, H, W)."""
    B, S, C, H, W = x_bschw.shape
    x = jnp.transpose(x_bschw, (1, 0, 3, 4, 2))              # (S, B, H, W, C)

    xg_f, m_f, gl_f, bl_f, Ff = _prep_direction(
        x, params["w_f"], params["g_f"], params["b_f"])
    xg_b, m_b, gl_b, bl_b, Fb = _prep_direction(
        x[::-1], params["w_b"], params["g_b"], params["b_b"])

    if Ff == Fb:
        # Fused call: direction axis of size 2 marked "parallel" -> one
        # direction per TensorCore on v7x, harmless on v5e/v6e.
        dmat, emat = _selectors(W, Ff)
        out = _convlstm_pallas(
            jnp.stack([xg_f, xg_b]), jnp.stack([m_f, m_b]),
            jnp.stack([gl_f, gl_b])[:, None, :],
            jnp.stack([bl_f, bl_b])[:, None, :],
            dmat, emat, B, H, W, Ff)
        out_f, out_b = out[0], out[1]
    else:
        dmat_f, emat_f = _selectors(W, Ff)
        dmat_b, emat_b = _selectors(W, Fb)
        out_f = _convlstm_pallas(xg_f[None], m_f[None], gl_f[None, None],
                                 bl_f[None, None], dmat_f, emat_f,
                                 B, H, W, Ff)[0]
        out_b = _convlstm_pallas(xg_b[None], m_b[None], gl_b[None, None],
                                 bl_b[None, None], dmat_b, emat_b,
                                 B, H, W, Fb)[0]

    of = _dense_to_bschw(out_f, B, H, W, Ff)
    ob = _dense_to_bschw(out_b, B, H, W, Fb)  # NOT re-flipped (matches PyTorch)
    if merge_mode == "concat":
        return jnp.concatenate([of, ob], axis=2)
    elif merge_mode == "sum":
        return of + ob
    elif merge_mode == "multiply":
        return of * ob
    elif merge_mode == "average":
        # Matches the PyTorch module exactly: torch.mean(torch.stack([...]))
        # reduces to a scalar.
        return jnp.mean(jnp.stack([of, ob]))
    raise ValueError(merge_mode)


# ----------------------------------------------------------------------------
# Pure-JAX reference (mirrors the PyTorch module) for the correctness check.
# ----------------------------------------------------------------------------
def _conv_lstm_ref(x_sbhwc, w, gamma, beta):
    S, B, H, W, C = x_sbhwc.shape
    F4 = w.shape[-1]
    F = F4 // 4
    hx = jnp.zeros((B, H, W, F), jnp.float32)
    cx = jnp.zeros((B, H, W, F), jnp.float32)
    outs = []
    for t in range(S):
        comb = jnp.concatenate([x_sbhwc[t], hx], axis=-1)
        gates = jax.lax.conv_general_dilated(
            comb, w, (1, 1), "SAME",
            dimension_numbers=("NHWC", "HWIO", "NHWC"))
        mean = jnp.mean(gates, axis=(0, 1, 2), keepdims=True)
        var = jnp.mean(jnp.square(gates - mean), axis=(0, 1, 2), keepdims=True)
        gates = (gates - mean) * jax.lax.rsqrt(var + 1e-5)
        gates = gates * gamma.reshape(1, 1, 1, F4) + beta.reshape(1, 1, 1, F4)
        i = jax.nn.sigmoid(gates[..., :F])
        f = jax.nn.sigmoid(gates[..., F:2 * F])
        g = gates[..., 2 * F:3 * F]
        o = jax.nn.sigmoid(gates[..., 3 * F:])
        cx = f * cx + i * g
        hx = o * jnp.tanh(cx)
        outs.append(hx)
    return jnp.stack(outs)


def _conv_bilstm_ref(x_bschw, params):
    x = jnp.transpose(x_bschw, (1, 0, 3, 4, 2))
    of = _conv_lstm_ref(x, params["w_f"], params["g_f"], params["b_f"])
    ob = _conv_lstm_ref(x[::-1], params["w_b"], params["g_b"], params["b_b"])
    of = jnp.transpose(of, (1, 0, 4, 2, 3))
    ob = jnp.transpose(ob, (1, 0, 4, 2, 3))
    return jnp.concatenate([of, ob], axis=2)


if __name__ == "__main__":
    # Small shapes: B=2, S=8, C=4, H=W=16, num_features=32 (-> 16 per direction)
    B, S, C, H, W = 2, 8, 4, 16, 16
    num_features = 32
    Ff = num_features // 2          # forward direction features
    Fb = num_features - Ff          # backward direction features

    key = jax.random.PRNGKey(0)
    kx, kwf, kwb, kgf, kbf, kgb, kbb = jax.random.split(key, 7)

    def conv_init(k, cin, cout):
        bound = 1.0 / math.sqrt(cin * 9)
        return jax.random.uniform(k, (3, 3, cin, cout), jnp.float32,
                                  minval=-bound, maxval=bound)

    params = {
        "w_f": conv_init(kwf, C + Ff, 4 * Ff),
        "w_b": conv_init(kwb, C + Fb, 4 * Fb),
        "g_f": jax.random.uniform(kgf, (4 * Ff,), jnp.float32, 0.5, 1.5),
        "b_f": jax.random.uniform(kbf, (4 * Ff,), jnp.float32, -0.1, 0.1),
        "g_b": jax.random.uniform(kgb, (4 * Fb,), jnp.float32, 0.5, 1.5),
        "b_b": jax.random.uniform(kbb, (4 * Fb,), jnp.float32, -0.1, 0.1),
    }

    x = jax.random.normal(kx, (B, S, C, H, W), jnp.float32)

    out = jax.block_until_ready(jax.jit(conv_bilstm_layer)(x, params))
    assert out.shape == (B, S, num_features, H, W), out.shape

    ref = jax.block_until_ready(_conv_bilstm_ref(x, params))
    err = float(jnp.max(jnp.abs(out - ref)))
    # bf16 MXU matmuls inside the recurrence -> tolerance loosened vs pure f32.
    assert err < 3e-2, f"max abs error too large: {err}"

    print("KERNEL_OK")
</pallas_src>

<mosaic_0001>
module attributes {stable_mosaic.version = 11 : i64} {
  func.func @_convlstm_kernel(%arg0: i32, %arg1: i32, %arg2: memref<1x1x32x1024xf32, #tpu.memory_space<vmem>>, %arg3: memref<1x768x1024xbf16, #tpu.memory_space<vmem>>, %arg4: memref<1024x64xf32, #tpu.memory_space<vmem>>, %arg5: memref<64x1024xf32, #tpu.memory_space<vmem>>, %arg6: memref<1x1x1024xf32, #tpu.memory_space<vmem>>, %arg7: memref<1x1x1024xf32, #tpu.memory_space<vmem>>, %arg8: memref<1x1x32x256xf32, #tpu.memory_space<vmem>>, %arg9: memref<2x18x256xf32, #tpu.memory_space<vmem>>, %arg10: memref<32x256xf32, #tpu.memory_space<vmem>>) attributes {dimension_semantics = [#tpu.dimension_semantics<parallel>, #tpu.dimension_semantics<arbitrary>], iteration_bounds = array<i64: 2, 8>, scalar_prefetch = 0 : i64, scratch_operands = 2 : i64, tpu.core_type = #tpu.core_type<tc>, window_params = [{transform_indices = @transform_0, window_bounds = array<i64: 1, 1, 32, 1024>}, {transform_indices = @transform_1, window_bounds = array<i64: 1, 768, 1024>}, {pipeline_mode = #tpu.pipeline_mode<synchronous>, transform_indices = @transform_2, window_bounds = array<i64: 1024, 64>}, {pipeline_mode = #tpu.pipeline_mode<synchronous>, transform_indices = @transform_3, window_bounds = array<i64: 64, 1024>}, {transform_indices = @transform_4, window_bounds = array<i64: 1, 1, 1024>}, {transform_indices = @transform_5, window_bounds = array<i64: 1, 1, 1024>}, {transform_indices = @transform_6, window_bounds = array<i64: 1, 1, 32, 256>}]} {
    %c0_i32 = arith.constant 0 : i32
    %0 = arith.cmpi eq, %arg1, %c0_i32 : i32
    %1 = arith.extui %0 : i1 to i32
    %c0_i32_0 = arith.constant 0 : i32
    %2 = arith.cmpi ne, %1, %c0_i32_0 : i32
    scf.if %2 {
      %cst_52 = arith.constant 0.000000e+00 : f32
      %83 = vector.broadcast %cst_52 : f32 to vector<2x18x256xf32>
      %c0_53 = arith.constant 0 : index
      %c0_54 = arith.constant 0 : index
      %c0_55 = arith.constant 0 : index
      %84 = vector.load %arg9[%c0_53, %c0_54, %c0_55] : memref<2x18x256xf32, #tpu.memory_space<vmem>>, vector<2x18x256xf32>
      tpu.vector_store %arg9[%c0_53, %c0_54, %c0_55], %83 {strides = array<i32>} : memref<2x18x256xf32, #tpu.memory_space<vmem>>, vector<2x18x256xf32>,
      %cst_56 = arith.constant 0.000000e+00 : f32
      %85 = vector.broadcast %cst_56 : f32 to vector<32x256xf32>
      %c0_57 = arith.constant 0 : index
      %c0_58 = arith.constant 0 : index
      %86 = vector.load %arg10[%c0_57, %c0_58] : memref<32x256xf32, #tpu.memory_space<vmem>>, vector<32x256xf32>
      tpu.vector_store %arg10[%c0_57, %c0_58], %85 {strides = array<i32>} : memref<32x256xf32, #tpu.memory_space<vmem>>, vector<32x256xf32>,
    } else {
    }
    %c0 = arith.constant 0 : index
    %c0_1 = arith.constant 0 : index
    %c0_2 = arith.constant 0 : index
    %3 = vector.load %arg9[%c0, %c0_1, %c0_2] : memref<2x18x256xf32, #tpu.memory_space<vmem>>, vector<2x16x256xf32>
    %4 = vector.shape_cast %3 : vector<2x16x256xf32> to vector<32x256xf32>
    %c0_3 = arith.constant 0 : index
    %c1 = arith.constant 1 : index
    %c0_4 = arith.constant 0 : index
    %5 = vector.load %arg9[%c0_3, %c1, %c0_4] : memref<2x18x256xf32, #tpu.memory_space<vmem>>, vector<2x16x256xf32>
    %6 = vector.shape_cast %5 : vector<2x16x256xf32> to vector<32x256xf32>
    %c0_5 = arith.constant 0 : index
    %c2 = arith.constant 2 : index
    %c0_6 = arith.constant 0 : index
    %7 = vector.load %arg9[%c0_5, %c2, %c0_6] : memref<2x18x256xf32, #tpu.memory_space<vmem>>, vector<2x16x256xf32>
    %8 = vector.shape_cast %7 : vector<2x16x256xf32> to vector<32x256xf32>
    %9 = tpu.concatenate %4, %6, %8 in 1 : vector<32x256xf32>, vector<32x256xf32>, vector<32x256xf32> -> vector<32x768xf32>
    %10 = arith.truncf %9 : vector<32x768xf32> to vector<32x768xbf16>
    %c0_7 = arith.constant 0 : index
    %c0_8 = arith.constant 0 : index
    %c0_9 = arith.constant 0 : index
    %c0_10 = arith.constant 0 : index
    %11 = vector.load %arg2[%c0_7, %c0_8, %c0_9, %c0_10] : memref<1x1x32x1024xf32, #tpu.memory_space<vmem>>, vector<1x1x32x1024xf32>
    %12 = vector.shape_cast %11 : vector<1x1x32x1024xf32> to vector<32x1024xf32>
    %c0_11 = arith.constant 0 : index
    %c0_12 = arith.constant 0 : index
    %c0_13 = arith.constant 0 : index
    %13 = vector.load %arg3[%c0_11, %c0_12, %c0_13] : memref<1x768x1024xbf16, #tpu.memory_space<vmem>>, vector<1x768x1024xbf16>
    %14 = vector.shape_cast %13 : vector<1x768x1024xbf16> to vector<768x1024xbf16>
    %cst = arith.constant dense<0.000000e+00> : vector<32x1024xf32>
    %15 = tpu.matmul %10, %14, %cst {dimension_numbers = #tpu.dot_dimension_numbers<[1], [0], [0], [1], [0, 0, 1, 1], [], []>} : vector<32x768xbf16>, vector<768x1024xbf16>, vector<32x1024xf32> -> vector<32x1024xf32>
    %16 = arith.addf %12, %15 : vector<32x1024xf32>
    %cst_14 = arith.constant dense<0.000000e+00> : vector<1024xf32>
    %17 = vector.multi_reduction <add>, %16, %cst_14 [0] : vector<32x1024xf32> to vector<1024xf32>
    %18 = vector.shape_cast %17 : vector<1024xf32> to vector<1x1024xf32>
    %19 = arith.mulf %16, %16 : vector<32x1024xf32>
    %cst_15 = arith.constant dense<0.000000e+00> : vector<1024xf32>
    %20 = vector.multi_reduction <add>, %19, %cst_15 [0] : vector<32x1024xf32> to vector<1024xf32>
    %21 = vector.shape_cast %20 : vector<1024xf32> to vector<1x1024xf32>
    %c0_16 = arith.constant 0 : index
    %c0_17 = arith.constant 0 : index
    %22 = vector.load %arg4[%c0_16, %c0_17] : memref<1024x64xf32, #tpu.memory_space<vmem>>, vector<1024x64xf32>
    %cst_18 = arith.constant dense<0.000000e+00> : vector<1x64xf32>
    %23 = tpu.matmul %18, %22, %cst_18 {dimension_numbers = #tpu.dot_dimension_numbers<[1], [0], [0], [1], [0, 0, 1, 1], [], []>} : vector<1x1024xf32>, vector<1024x64xf32>, vector<1x64xf32> -> vector<1x64xf32>
    %c0_19 = arith.constant 0 : index
    %c0_20 = arith.constant 0 : index
    %24 = vector.load %arg4[%c0_19, %c0_20] : memref<1024x64xf32, #tpu.memory_space<vmem>>, vector<1024x64xf32>
    %cst_21 = arith.constant dense<0.000000e+00> : vector<1x64xf32>
    %25 = tpu.matmul %21, %24, %cst_21 {dimension_numbers = #tpu.dot_dimension_numbers<[1], [0], [0], [1], [0, 0, 1, 1], [], []>} : vector<1x1024xf32>, vector<1024x64xf32>, vector<1x64xf32> -> vector<1x64xf32>
    %cst_22 = arith.constant 5.120000e+02 : f32
    %26 = vector.broadcast %cst_22 : f32 to vector<1x64xf32>
    %27 = arith.divf %23, %26 : vector<1x64xf32>
    %cst_23 = arith.constant 5.120000e+02 : f32
    %28 = vector.broadcast %cst_23 : f32 to vector<1x64xf32>
    %29 = arith.divf %25, %28 : vector<1x64xf32>
    %30 = arith.mulf %27, %27 : vector<1x64xf32>
    %31 = arith.subf %29, %30 : vector<1x64xf32>
    %cst_24 = arith.constant 0.000000e+00 : f32
    %32 = vector.broadcast %cst_24 : f32 to vector<1x64xf32>
    %33 = arith.maximumf %31, %32 : vector<1x64xf32>
    %cst_25 = arith.constant 9.99999974E-6 : f32
    %34 = vector.broadcast %cst_25 : f32 to vector<1x64xf32>
    %35 = arith.addf %33, %34 : vector<1x64xf32>
    %36 = math.rsqrt %35 : vector<1x64xf32>
    %c0_26 = arith.constant 0 : index
    %c0_27 = arith.constant 0 : index
    %37 = vector.load %arg5[%c0_26, %c0_27] : memref<64x1024xf32, #tpu.memory_space<vmem>>, vector<64x1024xf32>
    %cst_28 = arith.constant dense<0.000000e+00> : vector<1x1024xf32>
    %38 = tpu.matmul %27, %37, %cst_28 {dimension_numbers = #tpu.dot_dimension_numbers<[1], [0], [0], [1], [0, 0, 1, 1], [], []>} : vector<1x64xf32>, vector<64x1024xf32>, vector<1x1024xf32> -> vector<1x1024xf32>
    %c0_29 = arith.constant 0 : index
    %c0_30 = arith.constant 0 : index
    %39 = vector.load %arg5[%c0_29, %c0_30] : memref<64x1024xf32, #tpu.memory_space<vmem>>, vector<64x1024xf32>
    %cst_31 = arith.constant dense<0.000000e+00> : vector<1x1024xf32>
    %40 = tpu.matmul %36, %39, %cst_31 {dimension_numbers = #tpu.dot_dimension_numbers<[1], [0], [0], [1], [0, 0, 1, 1], [], []>} : vector<1x64xf32>, vector<64x1024xf32>, vector<1x1024xf32> -> vector<1x1024xf32>
    %41 = vector.broadcast %38 : vector<1x1024xf32> to vector<32x1024xf32>
    %42 = arith.subf %16, %41 : vector<32x1024xf32>
    %c0_32 = arith.constant 0 : index
    %c0_33 = arith.constant 0 : index
    %c0_34 = arith.constant 0 : index
    %43 = vector.load %arg6[%c0_32, %c0_33, %c0_34] : memref<1x1x1024xf32, #tpu.memory_space<vmem>>, vector<1x1x1024xf32>
    %44 = vector.shape_cast %43 : vector<1x1x1024xf32> to vector<1x1024xf32>
    %45 = arith.mulf %40, %44 : vector<1x1024xf32>
    %46 = vector.broadcast %45 : vector<1x1024xf32> to vector<32x1024xf32>
    %47 = arith.mulf %42, %46 : vector<32x1024xf32>
    %c0_35 = arith.constant 0 : index
    %c0_36 = arith.constant 0 : index
    %c0_37 = arith.constant 0 : index
    %48 = vector.load %arg7[%c0_35, %c0_36, %c0_37] : memref<1x1x1024xf32, #tpu.memory_space<vmem>>, vector<1x1x1024xf32>
    %49 = vector.shape_cast %48 : vector<1x1x1024xf32> to vector<1x1024xf32>
    %50 = vector.broadcast %49 : vector<1x1024xf32> to vector<32x1024xf32>
    %51 = arith.addf %47, %50 : vector<32x1024xf32>
    %52 = vector.extract_strided_slice %51 {offsets = [0, 0], sizes = [32, 256], strides = [1, 1]} : vector<32x1024xf32> to vector<32x256xf32>
    %53 = arith.negf %52 : vector<32x256xf32>
    %54 = math.exp %53 : vector<32x256xf32>
    %cst_38 = arith.constant 1.000000e+00 : f32
    %55 = vector.broadcast %cst_38 : f32 to vector<32x256xf32>
    %56 = arith.addf %55, %54 : vector<32x256xf32>
    %57 = arith.divf %55, %56 : vector<32x256xf32>
    %58 = vector.extract_strided_slice %51 {offsets = [0, 256], sizes = [32, 256], strides = [1, 1]} : vector<32x1024xf32> to vector<32x256xf32>
    %59 = arith.negf %58 : vector<32x256xf32>
    %60 = math.exp %59 : vector<32x256xf32>
    %cst_39 = arith.constant 1.000000e+00 : f32
    %61 = vector.broadcast %cst_39 : f32 to vector<32x256xf32>
    %62 = arith.addf %61, %60 : vector<32x256xf32>
    %63 = arith.divf %61, %62 : vector<32x256xf32>
    %64 = vector.extract_strided_slice %51 {offsets = [0, 512], sizes = [32, 256], strides = [1, 1]} : vector<32x1024xf32> to vector<32x256xf32>
    %65 = vector.extract_strided_slice %51 {offsets = [0, 768], sizes = [32, 256], strides = [1, 1]} : vector<32x1024xf32> to vector<32x256xf32>
    %66 = arith.negf %65 : vector<32x256xf32>
    %67 = math.exp %66 : vector<32x256xf32>
    %cst_40 = arith.constant 1.000000e+00 : f32
    %68 = vector.broadcast %cst_40 : f32 to vector<32x256xf32>
    %69 = arith.addf %68, %67 : vector<32x256xf32>
    %70 = arith.divf %68, %69 : vector<32x256xf32>
    %c0_41 = arith.constant 0 : index
    %c0_42 = arith.constant 0 : index
    %71 = vector.load %arg10[%c0_41, %c0_42] : memref<32x256xf32, #tpu.memory_space<vmem>>, vector<32x256xf32>
    %72 = arith.mulf %63, %71 : vector<32x256xf32>
    %73 = arith.mulf %57, %64 : vector<32x256xf32>
    %74 = arith.addf %72, %73 : vector<32x256xf32>
    %75 = math.tanh %74 : vector<32x256xf32>
    %76 = arith.mulf %70, %75 : vector<32x256xf32>
    %c0_43 = arith.constant 0 : index
    %c0_44 = arith.constant 0 : index
    %77 = vector.load %arg10[%c0_43, %c0_44] : memref<32x256xf32, #tpu.memory_space<vmem>>, vector<32x256xf32>
    tpu.vector_store %arg10[%c0_43, %c0_44], %74 {strides = array<i32>} : memref<32x256xf32, #tpu.memory_space<vmem>>, vector<32x256xf32>,
    %78 = vector.shape_cast %76 : vector<32x256xf32> to vector<2x16x256xf32>
    %c0_45 = arith.constant 0 : index
    %c1_46 = arith.constant 1 : index
    %c0_47 = arith.constant 0 : index
    %79 = vector.load %arg9[%c0_45, %c1_46, %c0_47] : memref<2x18x256xf32, #tpu.memory_space<vmem>>, vector<2x16x256xf32>
    tpu.vector_store %arg9[%c0_45, %c1_46, %c0_47], %78 {strides = array<i32>} : memref<2x18x256xf32, #tpu.memory_space<vmem>>, vector<2x16x256xf32>,
    %c0_48 = arith.constant 0 : index
    %c0_49 = arith.constant 0 : index
    %c0_50 = arith.constant 0 : index
    %c0_51 = arith.constant 0 : index
    %80 = vector.load %arg8[%c0_48, %c0_49, %c0_50, %c0_51] : memref<1x1x32x256xf32, #tpu.memory_space<vmem>>, vector<1x1x32x256xf32>
    %81 = vector.shape_cast %80 : vector<1x1x32x256xf32> to vector<32x256xf32>
    %82 = vector.shape_cast %76 : vector<32x256xf32> to vector<1x1x32x256xf32>
    tpu.vector_store %arg8[%c0_48, %c0_49, %c0_50, %c0_51], %82 {strides = array<i32>} : memref<1x1x32x256xf32, #tpu.memory_space<vmem>>, vector<1x1x32x256xf32>,
    return
  }
  func.func @transform_0(%arg0: i32, %arg1: i32) -> (i32, i32, i32, i32) {
    %c0_i32 = arith.constant 0 : i32
    %c0_i32_0 = arith.constant 0 : i32
    %c0_i32_1 = arith.constant 0 : i32
    return %arg0, %arg1, %c0_i32, %c0_i32_0 : i32, i32, i32, i32
  }
  func.func @transform_1(%arg0: i32, %arg1: i32) -> (i32, i32, i32) {
    %c0_i32 = arith.constant 0 : i32
    %c0_i32_0 = arith.constant 0 : i32
    %c0_i32_1 = arith.constant 0 : i32
    return %arg0, %c0_i32, %c0_i32_0 : i32, i32, i32
  }
  func.func @transform_2(%arg0: i32, %arg1: i32) -> (i32, i32) {
    %c0_i32 = arith.constant 0 : i32
    %c0_i32_0 = arith.constant 0 : i32
    %c0_i32_1 = arith.constant 0 : i32
    return %c0_i32, %c0_i32_0 : i32, i32
  }
  func.func @transform_3(%arg0: i32, %arg1: i32) -> (i32, i32) {
    %c0_i32 = arith.constant 0 : i32
    %c0_i32_0 = arith.constant 0 : i32
    %c0_i32_1 = arith.constant 0 : i32
    return %c0_i32, %c0_i32_0 : i32, i32
  }
  func.func @transform_4(%arg0: i32, %arg1: i32) -> (i32, i32, i32) {
    %c0_i32 = arith.constant 0 : i32
    %c0_i32_0 = arith.constant 0 : i32
    %c0_i32_1 = arith.constant 0 : i32
    return %arg0, %c0_i32, %c0_i32_0 : i32, i32, i32
  }
  func.func @transform_5(%arg0: i32, %arg1: i32) -> (i32, i32, i32) {
    %c0_i32 = arith.constant 0 : i32
    %c0_i32_0 = arith.constant 0 : i32
    %c0_i32_1 = arith.constant 0 : i32
    return %arg0, %c0_i32, %c0_i32_0 : i32, i32, i32
  }
  func.func @transform_6(%arg0: i32, %arg1: i32) -> (i32, i32, i32, i32) {
    %c0_i32 = arith.constant 0 : i32
    %c0_i32_0 = arith.constant 0 : i32
    %c0_i32_1 = arith.constant 0 : i32
    return %arg0, %arg1, %c0_i32, %c0_i32_0 : i32, i32, i32, i32
  }
}

</mosaic_0001>

<llo_original>
// kernel: conv_bilstm_layer.1
$region0: #{conv_bilstm_layer.1}
  #allocation0 [shape = 'u32[]', space=smem, size = 0x4, offset = 0x4, fixed_abs, tag = 'smem constant byte address 0x4 - core index']
  #allocation1 [shape = 'u32[144,128]{1,0:T(1,128)}', space=vmem, size = 0x12000, scoped, tag = 'internal scratch']
  #allocation2 [shape = 'f32[2,18,256]{2,1,0:T(8,128)}', space=vmem, size = 0xc000, scoped, tag = 'scratch operand']
  #allocation3 [shape = 'f32[32,256]{1,0:T(8,128)}', space=vmem, size = 0x8000, scoped, tag = 'scratch operand']
  %s0 = inlined_call_operand.vmem [shape: f32[2,8,32,1024], index: 0, kind: input, shape index: {}]
  %s1 = inlined_call_operand.vmem [shape: bf16[2,768,1024], index: 1, kind: input, shape index: {}]
  %s2 = inlined_call_operand.vmem [shape: f32[1024,64], index: 2, kind: input, shape index: {}]
  %s3 = inlined_call_operand.vmem [shape: f32[64,1024], index: 3, kind: input, shape index: {}]
  %s4 = inlined_call_operand.vmem [shape: f32[2,1,1024], index: 4, kind: input, shape index: {}]
  %s5 = inlined_call_operand.vmem [shape: f32[2,1,1024], index: 5, kind: input, shape index: {}]
  %s6 = inlined_call_operand.vmem [shape: f32[2,8,32,256], index: 6, kind: output, shape index: {}]
  %s7 = sld [smem:[#allocation0]]
  $region61: #{conv_bilstm_layer.1} parent=0
    _
  %s9 = ssub.s32 1, %s7
  %s10 = scalar_select 0, %s9, %s7
  loop: start=0, step=1, limit=18
  $region2: #{conv_bilstm_layer.1} parent=0 // loop_pre_header
    _
  $region3: #{conv_bilstm_layer.1} parent=0 // loop_header
    %s12 = sphi 0, %s16
    %p13 = scmp.ge.s32.totalorder %s12, 18
    %s19 = sphi 0, %s31
    %s20 = sphi 0, %s27
    %s21 = sphi 0, %s19
    %s22 = sphi 0, %s20
    %s23 = sphi 0, %s21
    %s24 = sphi 0, %s22
    %s36 = sphi 0, %s38
    %s39 = sphi 0, %s36
    %s40 = sphi 0, %s39
    %s56 = sphi 0, %s40
    %s62 = sphi 0, %s64
    %s65 = sphi 0, %s62
    %s66 = sphi 0, %s65
    %s82 = sphi 0, %s66
    %s86 = sphi 0, %s86
    %s88 = sphi 0, %s86
    %s89 = sphi 0, %s88
    %s103 = sphi 0, %s89
    %s107 = sphi 0, %s107
    %s109 = sphi 0, %s107
    %s110 = sphi 0, %s109
    %s124 = sphi 0, %s110
    %s130 = sphi 0, %s132
    %s133 = sphi 0, %s130
    %s134 = sphi 0, %s133
    %s150 = sphi 0, %s134
    %s156 = sphi 0, %s158
    %s159 = sphi 0, %s156
    %s160 = sphi 0, %s159
    %s176 = sphi 0, %s160
    %s184 = sphi 0, %s186
    %s187 = sphi 0, %s184
    %s188 = sphi 0, %s187
    %s204 = sphi 0, %s188
  $region4: #{conv_bilstm_layer.1} parent=0 // loop_header_branch
    %15 = sbr.rel (%p13) target = $region8
  $region5: #{conv_bilstm_layer.1} parent=0 // loop_body
    %s17 = ssub.s32 %s12, 1
    %s18 = ssub.s32 %s12, 2
    %s25 = sadd.s32 1, %s20
    %p26 = scmp.ge.s32.totalorder %s25, 8
    %s27 = scalar_select %p26, 0, %s25
    %s28 = sadd.s32 1, %s19
    %s29 = scalar_select %p26, %s28, %s19
    %p30 = scmp.ge.s32.totalorder %s29, 2
    %s31 = scalar_select %p30, 0, %s29
    %s32 = ssub.s32 %s19, %s31
    %s33 = ssub.s32 %s20, %s27
    %s34 = sor.u32 %s32, %s33
    %p35 = scmp.eq.s32.totalorder %s34, 0
    %s37 = sadd.s32 %s36, 1
    %s38 = scalar_select %p35, %s36, %s37
    %p41 = pneg %p35
    %p42 = scmp.eq.s32.totalorder %s12, 15
    %p43 = por %p41, %p42
    %p44 = scmp.ne.s32.totalorder %s36, %s39
    %p45 = scmp.eq.s32.totalorder %s12, 0
    %p46 = por %p44, %p45
    %p47 = scmp.ne.s32.totalorder %s36, %s39
    %p48 = scmp.eq.s32.totalorder %s17, 15
    %p49 = por %p47, %p48
    %p50 = scmp.ne.s32.totalorder %s39, %s40
    %p51 = scmp.eq.s32.totalorder %s17, 0
    %p52 = por %p50, %p51
    %p53 = scmp.ne.s32.totalorder %s39, %s40
    %p54 = scmp.eq.s32.totalorder %s18, 15
    %p55 = por %p53, %p54
    %p57 = scmp.ne.s32.totalorder %s40, %s56
    %p58 = scmp.eq.s32.totalorder %s18, 0
    %p59 = por %p57, %p58
    %s60 = ssub.s32 %s19, %s31
    %p61 = scmp.eq.s32.totalorder %s60, 0
    %s63 = sadd.s32 %s62, 1
    %s64 = scalar_select %p61, %s62, %s63
    %p67 = pneg %p61
    %p68 = scmp.eq.s32.totalorder %s12, 15
    %p69 = por %p67, %p68
    %p70 = scmp.ne.s32.totalorder %s62, %s65
    %p71 = scmp.eq.s32.totalorder %s12, 0
    %p72 = por %p70, %p71
    %p73 = scmp.ne.s32.totalorder %s62, %s65
    %p74 = scmp.eq.s32.totalorder %s17, 15
    %p75 = por %p73, %p74
    %p76 = scmp.ne.s32.totalorder %s65, %s66
    %p77 = scmp.eq.s32.totalorder %s17, 0
    %p78 = por %p76, %p77
    %p79 = scmp.ne.s32.totalorder %s65, %s66
    %p80 = scmp.eq.s32.totalorder %s18, 15
    %p81 = por %p79, %p80
    %p83 = scmp.ne.s32.totalorder %s66, %s82
    %p84 = scmp.eq.s32.totalorder %s18, 0
    %p85 = por %p83, %p84
    %s87 = sadd.s32 %s86, 1
    %p90 = scmp.eq.s32.totalorder %s12, 15
    %p91 = scmp.ne.s32.totalorder %s86, %s88
    %p92 = scmp.eq.s32.totalorder %s12, 0
    %p93 = por %p91, %p92
    %p94 = scmp.ne.s32.totalorder %s86, %s88
    %p95 = scmp.eq.s32.totalorder %s17, 15
    %p96 = por %p94, %p95
    %p97 = scmp.ne.s32.totalorder %s88, %s89
    %p98 = scmp.eq.s32.totalorder %s17, 0
    %p99 = por %p97, %p98
    %p100 = scmp.ne.s32.totalorder %s88, %s89
    %p101 = scmp.eq.s32.totalorder %s18, 15
    %p102 = por %p100, %p101
    %p104 = scmp.ne.s32.totalorder %s89, %s103
    %p105 = scmp.eq.s32.totalorder %s18, 0
    %p106 = por %p104, %p105
    %s108 = sadd.s32 %s107, 1
    %p111 = scmp.eq.s32.totalorder %s12, 15
    %p112 = scmp.ne.s32.totalorder %s107, %s109
    %p113 = scmp.eq.s32.totalorder %s12, 0
    %p114 = por %p112, %p113
    %p115 = scmp.ne.s32.totalorder %s107, %s109
    %p116 = scmp.eq.s32.totalorder %s17, 15
    %p117 = por %p115, %p116
    %p118 = scmp.ne.s32.totalorder %s109, %s110
    %p119 = scmp.eq.s32.totalorder %s17, 0
    %p120 = por %p118, %p119
    %p121 = scmp.ne.s32.totalorder %s109, %s110
    %p122 = scmp.eq.s32.totalorder %s18, 15
    %p123 = por %p121, %p122
    %p125 = scmp.ne.s32.totalorder %s110, %s124
    %p126 = scmp.eq.s32.totalorder %s18, 0
    %p127 = por %p125, %p126
    %s128 = ssub.s32 %s19, %s31
    %p129 = scmp.eq.s32.totalorder %s128, 0
    %s131 = sadd.s32 %s130, 1
    %s132 = scalar_select %p129, %s130, %s131
    %p135 = pneg %p129
    %p136 = scmp.eq.s32.totalorder %s12, 15
    %p137 = por %p135, %p136
    %p138 = scmp.ne.s32.totalorder %s130, %s133
    %p139 = scmp.eq.s32.totalorder %s12, 0
    %p140 = por %p138, %p139
    %p141 = scmp.ne.s32.totalorder %s130, %s133
    %p142 = scmp.eq.s32.totalorder %s17, 15
    %p143 = por %p141, %p142
    %p144 = scmp.ne.s32.totalorder %s133, %s134
    %p145 = scmp.eq.s32.totalorder %s17, 0
    %p146 = por %p144, %p145
    %p147 = scmp.ne.s32.totalorder %s133, %s134
    %p148 = scmp.eq.s32.totalorder %s18, 15
    %p149 = por %p147, %p148
    %p151 = scmp.ne.s32.totalorder %s134, %s150
    %p152 = scmp.eq.s32.totalorder %s18, 0
    %p153 = por %p151, %p152
    %s154 = ssub.s32 %s19, %s31
    %p155 = scmp.eq.s32.totalorder %s154, 0
    %s157 = sadd.s32 %s156, 1
    %s158 = scalar_select %p155, %s156, %s157
    %p161 = pneg %p155
    %p162 = scmp.eq.s32.totalorder %s12, 15
    %p163 = por %p161, %p162
    %p164 = scmp.ne.s32.totalorder %s156, %s159
    %p165 = scmp.eq.s32.totalorder %s12, 0
    %p166 = por %p164, %p165
    %p167 = scmp.ne.s32.totalorder %s156, %s159
    %p168 = scmp.eq.s32.totalorder %s17, 15
    %p169 = por %p167, %p168
    %p170 = scmp.ne.s32.totalorder %s159, %s160
    %p171 = scmp.eq.s32.totalorder %s17, 0
    %p172 = por %p170, %p171
    %p173 = scmp.ne.s32.totalorder %s159, %s160
    %p174 = scmp.eq.s32.totalorder %s18, 15
    %p175 = por %p173, %p174
    %p177 = scmp.ne.s32.totalorder %s160, %s176
    %p178 = scmp.eq.s32.totalorder %s18, 0
    %p179 = por %p177, %p178
    %s180 = ssub.s32 %s19, %s31
    %s181 = ssub.s32 %s20, %s27
    %s182 = sor.u32 %s180, %s181
    %p183 = scmp.eq.s32.totalorder %s182, 0
    %s185 = sadd.s32 %s184, 1
    %s186 = scalar_select %p183, %s184, %s185
    %p189 = pneg %p183
    %p190 = scmp.eq.s32.totalorder %s12, 15
    %p191 = por %p189, %p190
    %p192 = scmp.ne.s32.totalorder %s184, %s187
    %p193 = scmp.eq.s32.totalorder %s12, 0
    %p194 = por %p192, %p193
    %p195 = scmp.ne.s32.totalorder %s184, %s187
    %p196 = scmp.eq.s32.totalorder %s17, 15
    %p197 = por %p195, %p196
    %p198 = scmp.ne.s32.totalorder %s187, %s188
    %p199 = scmp.eq.s32.totalorder %s17, 0
    %p200 = por %p198, %p199
    %p201 = scmp.ne.s32.totalorder %s187, %s188
    %p202 = scmp.eq.s32.totalorder %s18, 15
    %p203 = por %p201, %p202
    %p205 = scmp.ne.s32.totalorder %s188, %s204
    %p206 = scmp.eq.s32.totalorder %s18, 0
    %p207 = por %p205, %p206
    %p208 = scmp.le.s32.totalorder 1, %s12
    %p209 = scmp.lt.s32.totalorder %s12, 17
    %p210 = pnand %p208, %p209
    %p211 = pneg %p210
    // Predicated region
    $region9: #{conv_bilstm_layer.1} parent=5 // pred_check
      _
    $region10: #{conv_bilstm_layer.1} parent=5 // pred_check_branch
      %213 = sbr.rel (%p210) target = $region12
    $region11: #{conv_bilstm_layer.1} parent=5 // pred_region
      %s214 = ssub.s32 %s12, 1
      // Predicated region
      $region13: #{conv_bilstm_layer.1} parent=11 // pred_check
        %p215 = pneg %p99
      $region14: #{conv_bilstm_layer.1} parent=11 // pred_check_branch
        %217 = sbr.rel (%p215) target = $region16
      $region15: #{conv_bilstm_layer.1} parent=11 // pred_region
        _
      $region16: #{conv_bilstm_layer.1} parent=11 // pred_fallthru
        _
      // Predicated region
      $region17: #{conv_bilstm_layer.1} parent=11 // pred_check
        %p218 = pneg %p120
      $region18: #{conv_bilstm_layer.1} parent=11 // pred_check_branch
        %220 = sbr.rel (%p218) target = $region20
      $region19: #{conv_bilstm_layer.1} parent=11 // pred_region
        _
      $region20: #{conv_bilstm_layer.1} parent=11 // pred_fallthru
        _
    $region12: #{conv_bilstm_layer.1} parent=5 // pred_fallthru
      _
    %p221 = scmp.lt.s32.totalorder %s12, 16
    // Predicated region
    $region21: #{conv_bilstm_layer.1} parent=5 // pred_check
      %p222 = pneg %p221
    $region22: #{conv_bilstm_layer.1} parent=5 // pred_check_branch
      %224 = sbr.rel (%p222) target = $region24
    $region23: #{conv_bilstm_layer.1} parent=5 // pred_region
      // Predicated region
      $region25: #{conv_bilstm_layer.1} parent=23 // pred_check
        %p225 = pneg %p46
      $region26: #{conv_bilstm_layer.1} parent=23 // pred_check_branch
        %227 = sbr.rel (%p225) target = $region28
      $region27: #{conv_bilstm_layer.1} parent=23 // pred_region
        %p228 = scmp.lt.s32.totalorder %s19, 1
        %s229 = scalar_select %p228, %s19, 1
        %p230 = scmp.lt.s32.totalorder %s20, 7
        %s231 = scalar_select %p230, %s20, 7
        %s232 = smul.addr %s231, 32
        %s233 = smul.addr %s229, 256
        %s234 = sadd.s32 %s232, %s233
        %s235 = smul.addr %s234, 8
        %s236 = scalar_lea.vmem %s0, %s235
      $region28: #{conv_bilstm_layer.1} parent=23 // pred_fallthru
        _
      // Predicated region
      $region29: #{conv_bilstm_layer.1} parent=23 // pred_check
        %p237 = pneg %p72
      $region30: #{conv_bilstm_layer.1} parent=23 // pred_check_branch
        %239 = sbr.rel (%p237) target = $region32
      $region31: #{conv_bilstm_layer.1} parent=23 // pred_region
        %p240 = scmp.lt.s32.totalorder %s19, 1
        %s241 = scalar_select %p240, %s19, 1
        %s242 = smul.addr %s241, 768
        %s243 = smul.addr %s242, 4
        %s244 = scalar_lea.vmem %s1, %s243
      $region32: #{conv_bilstm_layer.1} parent=23 // pred_fallthru
        _
      // Predicated region
      $region33: #{conv_bilstm_layer.1} parent=23 // pred_check
        %p245 = pneg %p140
      $region34: #{conv_bilstm_layer.1} parent=23 // pred_check_branch
        %247 = sbr.rel (%p245) target = $region36
      $region35: #{conv_bilstm_layer.1} parent=23 // pred_region
        %p248 = scmp.lt.s32.totalorder %s19, 1
        %s249 = scalar_select %p248, %s19, 1
        %s250 = smul.addr %s249, 8
        %s251 = scalar_lea.vmem %s4, %s250
      $region36: #{conv_bilstm_layer.1} parent=23 // pred_fallthru
        _
      // Predicated region
      $region37: #{conv_bilstm_layer.1} parent=23 // pred_check
        %p252 = pneg %p166
      $region38: #{conv_bilstm_layer.1} parent=23 // pred_check_branch
        %254 = sbr.rel (%p252) target = $region40
      $region39: #{conv_bilstm_layer.1} parent=23 // pred_region
        %p255 = scmp.lt.s32.totalorder %s19, 1
        %s256 = scalar_select %p255, %s19, 1
        %s257 = smul.addr %s256, 8
        %s258 = scalar_lea.vmem %s5, %s257
      $region40: #{conv_bilstm_layer.1} parent=23 // pred_fallthru
        _
    $region24: #{conv_bilstm_layer.1} parent=5 // pred_fallthru
      _
    %p259 = scmp.le.s32.totalorder 1, %s12
    %p260 = scmp.lt.s32.totalorder %s12, 17
    %p261 = pnand %p259, %p260
    %p262 = pneg %p261
    // Predicated region
    $region41: #{conv_bilstm_layer.1} parent=5 // pred_check
      _
    $region42: #{conv_bilstm_layer.1} parent=5 // pred_check_branch
      %264 = sbr.rel (%p261) target = $region44
    $region43: #{conv_bilstm_layer.1} parent=5 // pred_region
      %s265 = ssub.s32 %s12, 1
      %p266 = scmp.lt.s32.totalorder %s21, 1
      %s267 = scalar_select %p266, %s21, 1
      %p268 = scmp.lt.s32.totalorder %s22, 7
      %s269 = scalar_select %p268, %s22, 7
      %s270 = smul.addr %s269, 32
      %s271 = smul.addr %s267, 256
      %s272 = sadd.s32 %s270, %s271
      %s273 = smul.addr %s272, 8
      %s274 = scalar_lea.vmem %s0, %s273
      %p275 = pneg %p52
      %p276 = pneg %p49
      %p277 = scmp.lt.s32.totalorder %s21, 1
      %s278 = scalar_select %p277, %s21, 1
      %s279 = smul.addr %s278, 768
      %s280 = smul.addr %s279, 4
      %s281 = scalar_lea.vmem %s1, %s280
      %p282 = pneg %p78
      %p283 = pneg %p75
      %p284 = pneg %p99
      %p285 = pneg %p96
      %p286 = pneg %p120
      %p287 = pneg %p117
      %p288 = scmp.lt.s32.totalorder %s21, 1
      %s289 = scalar_select %p288, %s21, 1
      %s290 = smul.addr %s289, 8
      %s291 = scalar_lea.vmem %s4, %s290
      %p292 = pneg %p146
      %p293 = pneg %p143
      %p294 = scmp.lt.s32.totalorder %s21, 1
      %s295 = scalar_select %p294, %s21, 1
      %s296 = smul.addr %s295, 8
      %s297 = scalar_lea.vmem %s5, %s296
      %p298 = pneg %p172
      %p299 = pneg %p169
      %p300 = pneg %p200
      %p301 = pneg %p197
      %p302 = scmp.lt.s32.totalorder %s21, 1
      %s303 = scalar_select %p302, %s21, 1
      %p304 = scmp.lt.s32.totalorder %s22, 7
      %s305 = scalar_select %p304, %s22, 7
      %s306 = smul.addr %s305, 8
      %s307 = smul.addr %s303, 64
      %s308 = sadd.s32 %s306, %s307
      %s309 = smul.addr %s308, 8
      %s310 = scalar_lea.vmem %s6, %s309
      %p311 = scmp.lt.s32.totalorder %s21, 1
      %s312 = scalar_select %p311, %s21, 1
      %p313 = scmp.lt.s32.totalorder %s22, 7
      %s314 = scalar_select %p313, %s22, 7
      %s315 = smul.addr %s314, 32
      %s316 = smul.addr %s312, 256
      %s317 = sadd.s32 %s315, %s316
      %s318 = smul.addr %s317, 8
      %s319 = scalar_lea.vmem %s0, %s318
      %p320 = scmp.lt.s32.totalorder %s21, 1
      %s321 = scalar_select %p320, %s21, 1
      %s322 = smul.addr %s321, 768
      %s323 = smul.addr %s322, 4
      %s324 = scalar_lea.vmem %s1, %s323
      %p325 = scmp.lt.s32.totalorder %s21, 1
      %s326 = scalar_select %p325, %s21, 1
      %s327 = smul.addr %s326, 8
      %s328 = scalar_lea.vmem %s4, %s327
      %p329 = scmp.lt.s32.totalorder %s21, 1
      %s330 = scalar_select %p329, %s21, 1
      %s331 = smul.addr %s330, 8
      %s332 = scalar_lea.vmem %s5, %s331
      %p333 = scmp.lt.s32.totalorder %s21, 1
      %s334 = scalar_select %p333, %s21, 1
      %p335 = scmp.lt.s32.totalorder %s22, 7
      %s336 = scalar_select %p335, %s22, 7
      %s337 = smul.addr %s336, 8
      %s338 = smul.addr %s334, 64
      %s339 = sadd.s32 %s337, %s338
      %s340 = smul.addr %s339, 8
      %s341 = scalar_lea.vmem %s6, %s340
      %p342 = scmp.eq.s32.totalorder %s22, 0
      // Predicated region
      $region45: #{conv_bilstm_layer.1} parent=43 // pred_check
        %p343 = pneg %p342
      $region46: #{conv_bilstm_layer.1} parent=43 // pred_check_branch
        %345 = sbr.rel (%p343) target = $region48
      $region47: #{conv_bilstm_layer.1} parent=43 // pred_region
        %346 = vst [vmem:[#allocation2] sm:$0xff] 0.0
        %347 = vst [vmem:[#allocation2 + $0x8] sm:$0xff] 0.0
        %348 = vst [vmem:[#allocation2 + $0x10] sm:$0xff] 0.0
        %349 = vst [vmem:[#allocation2 + $0x18] sm:$0xff] 0.0
        %350 = vst [vmem:[#allocation2 + $0x20] sm:$0x3] 0.0
        %351 = vst [vmem:[#allocation2 + $0x28] sm:$0x3] 0.0
        %352 = vst [vmem:[#allocation2 + $0x30] sm:$0xff] 0.0
        %353 = vst [vmem:[#allocation2 + $0x38] sm:$0xff] 0.0
        %354 = vst [vmem:[#allocation2 + $0x40] sm:$0xff] 0.0
        %355 = vst [vmem:[#allocation2 + $0x48] sm:$0xff] 0.0
        %356 = vst [vmem:[#allocation2 + $0x50] sm:$0x3] 0.0
        %357 = vst [vmem:[#allocation2 + $0x58] sm:$0x3] 0.0
        %358 = vst [vmem:[#allocation3] sm:$0xff] 0.0
        %359 = vst [vmem:[#allocation3 + $0x8] sm:$0xff] 0.0
        %360 = vst [vmem:[#allocation3 + $0x10] sm:$0xff] 0.0
        %361 = vst [vmem:[#allocation3 + $0x18] sm:$0xff] 0.0
        %362 = vst [vmem:[#allocation3 + $0x20] sm:$0xff] 0.0
        %363 = vst [vmem:[#allocation3 + $0x28] sm:$0xff] 0.0
        %364 = vst [vmem:[#allocation3 + $0x30] sm:$0xff] 0.0
        %365 = vst [vmem:[#allocation3 + $0x38] sm:$0xff] 0.0
      $region48: #{conv_bilstm_layer.1} parent=43 // pred_fallthru
        _
      %v366 = vld [vmem:[#allocation2] sm:$0xff]
      %v367 = vld [vmem:[#allocation2 + $0x8] sm:$0xff]
      %v368 = vld [vmem:[#allocation2 + $0x10] sm:$0xff]
      %v369 = vld [vmem:[#allocation2 + $0x18] sm:$0xff]
      %v370 = vld [vmem:[#allocation2 + $0x30] sm:$0xff]
      %v371 = vld [vmem:[#allocation2 + $0x38] sm:$0xff]
      %v372 = vld [vmem:[#allocation2 + $0x40] sm:$0xff]
      %v373 = vld [vmem:[#allocation2 + $0x48] sm:$0xff]
      %v374 = vld [vmem:[#allocation2] sm:$0xfe]
      %v375 = vld [vmem:[#allocation2 + $0x8] sm:$0xfe]
      %v376 = vld [vmem:[#allocation2 + $0x20] sm:$0x1]
      %v377 = vld [vmem:[#allocation2 + $0x28] sm:$0x1]
      %v378 = vld [vmem:[#allocation2 + $0x30] sm:$0xfe]
      %v379 = vld [vmem:[#allocation2 + $0x38] sm:$0xfe]
      %v380 = vld [vmem:[#allocation2 + $0x50] sm:$0x1]
      %v381 = vld [vmem:[#allocation2 + $0x58] sm:$0x1]
      %vm394 = vcmask 1046528
      %v395 = vrot.slane %v374, 1
      %v396 = vrot.slane %v368, 1
      %v397 = vsel %vm394, %v395, %v396
      %v398 = vrot.slane %v375, 1
      %v399 = vrot.slane %v369, 1
      %v400 = vsel %vm394, %v398, %v399
      %v401 = vrot.slane %v376, 1
      %v402 = vsel %vm394, %v396, %v401
      %v403 = vrot.slane %v377, 1
      %v404 = vsel %vm394, %v399, %v403
      %v405 = vrot.slane %v378, 1
      %v406 = vrot.slane %v372, 1
      %v407 = vsel %vm394, %v405, %v406
      %v408 = vrot.slane %v379, 1
      %v409 = vrot.slane %v373, 1
      %v410 = vsel %vm394, %v408, %v409
      %v411 = vrot.slane %v380, 1
      %v412 = vsel %vm394, %v406, %v411
      %v413 = vrot.slane %v381, 1
      %v414 = vsel %vm394, %v409, %v413
      %v423 = vld [vmem:[#allocation2] sm:$0xfc]
      %v424 = vld [vmem:[#allocation2 + $0x8] sm:$0xfc]
      %v425 = vld [vmem:[#allocation2 + $0x20] sm:$0x3]
      %v426 = vld [vmem:[#allocation2 + $0x28] sm:$0x3]
      %v427 = vld [vmem:[#allocation2 + $0x30] sm:$0xfc]
      %v428 = vld [vmem:[#allocation2 + $0x38] sm:$0xfc]
      %v429 = vld [vmem:[#allocation2 + $0x50] sm:$0x3]
      %v430 = vld [vmem:[#allocation2 + $0x58] sm:$0x3]
      %vm439 = vcmask 1045504
      %v440 = vrot.slane %v423, 2
      %v441 = vrot.slane %v368, 2
      %v442 = vsel %vm439, %v440, %v441
      %v443 = vrot.slane %v424, 2
      %v444 = vrot.slane %v369, 2
      %v445 = vsel %vm439, %v443, %v444
      %v446 = vrot.slane %v425, 2
      %v447 = vsel %vm439, %v441, %v446
      %v448 = vrot.slane %v426, 2
      %v449 = vsel %vm439, %v444, %v448
      %v450 = vrot.slane %v427, 2
      %v451 = vrot.slane %v372, 2
      %v452 = vsel %vm439, %v450, %v451
      %v453 = vrot.slane %v428, 2
      %v454 = vrot.slane %v373, 2
      %v455 = vsel %vm439, %v453, %v454
      %v456 = vrot.slane %v429, 2
      %v457 = vsel %vm439, %v451, %v456
      %v458 = vrot.slane %v430, 2
      %v459 = vsel %vm439, %v454, %v458
      %v468 = vpack.c.bf16 %v368, %v366
      %v469 = vpack.c.bf16 %v369, %v367
      %v470 = vpack.c.bf16 %v402, %v397
      %v471 = vpack.c.bf16 %v404, %v400
      %v472 = vpack.c.bf16 %v447, %v442
      %v473 = vpack.c.bf16 %v449, %v445
      %v474 = vpack.c.bf16 %v372, %v370
      %v475 = vpack.c.bf16 %v373, %v371
      %v476 = vpack.c.bf16 %v412, %v407
      %v477 = vpack.c.bf16 %v414, %v410
      %v478 = vpack.c.bf16 %v457, %v452
      %v479 = vpack.c.bf16 %v459, %v455
      %v480 = vld [vmem:[%s319] sm:$0xff]
      %v481 = vld [vmem:[%s319 + $0x8] sm:$0xff]
      %v482 = vld [vmem:[%s319 + $0x10] sm:$0xff]
      %v483 = vld [vmem:[%s319 + $0x18] sm:$0xff]
      %v484 = vld [vmem:[%s319 + $0x20] sm:$0xff]
      %v485 = vld [vmem:[%s319 + $0x28] sm:$0xff]
      %v486 = vld [vmem:[%s319 + $0x30] sm:$0xff]
      %v487 = vld [vmem:[%s319 + $0x38] sm:$0xff]
      %v488 = vld [vmem:[%s319 + $0x40] sm:$0xff]
      %v489 = vld [vmem:[%s319 + $0x48] sm:$0xff]
      %v490 = vld [vmem:[%s319 + $0x50] sm:$0xff]
      %v491 = vld [vmem:[%s319 + $0x58] sm:$0xff]
      %v492 = vld [vmem:[%s319 + $0x60] sm:$0xff]
      %v493 = vld [vmem:[%s319 + $0x68] sm:$0xff]
      %v494 = vld [vmem:[%s319 + $0x70] sm:$0xff]
      %v495 = vld [vmem:[%s319 + $0x78] sm:$0xff]
      %v496 = vld [vmem:[%s319 + $0x80] sm:$0xff]
      %v497 = vld [vmem:[%s319 + $0x88] sm:$0xff]
      %v498 = vld [vmem:[%s319 + $0x90] sm:$0xff]
      %v499 = vld [vmem:[%s319 + $0x98] sm:$0xff]
      %v500 = vld [vmem:[%s319 + $0xa0] sm:$0xff]
      %v501 = vld [vmem:[%s319 + $0xa8] sm:$0xff]
      %v502 = vld [vmem:[%s319 + $0xb0] sm:$0xff]
      %v503 = vld [vmem:[%s319 + $0xb8] sm:$0xff]
      %v504 = vld [vmem:[%s319 + $0xc0] sm:$0xff]
      %v505 = vld [vmem:[%s319 + $0xc8] sm:$0xff]
      %v506 = vld [vmem:[%s319 + $0xd0] sm:$0xff]
      %v507 = vld [vmem:[%s319 + $0xd8] sm:$0xff]
      %v508 = vld [vmem:[%s319 + $0xe0] sm:$0xff]
      %v509 = vld [vmem:[%s319 + $0xe8] sm:$0xff]
      %v510 = vld [vmem:[%s319 + $0xf0] sm:$0xff]
      %v511 = vld [vmem:[%s319 + $0xf8] sm:$0xff]
      %v512 = vld [vmem:[%s324] sm:$0xff]
      %v513 = vld [vmem:[%s324 + $0x8] sm:$0xff]
      %v514 = vld [vmem:[%s324 + $0x10] sm:$0xff]
      %v515 = vld [vmem:[%s324 + $0x18] sm:$0xff]
      %v516 = vld [vmem:[%s324 + $0x20] sm:$0xff]
      %v517 = vld [vmem:[%s324 + $0x28] sm:$0xff]
      %v518 = vld [vmem:[%s324 + $0x30] sm:$0xff]
      %v519 = vld [vmem:[%s324 + $0x38] sm:$0xff]
      %v520 = vld [vmem:[%s324 + $0x40] sm:$0xff]
      %v521 = vld [vmem:[%s324 + $0x48] sm:$0xff]
      %v522 = vld [vmem:[%s324 + $0x50] sm:$0xff]
      %v523 = vld [vmem:[%s324 + $0x58] sm:$0xff]
      %v524 = vld [vmem:[%s324 + $0x60] sm:$0xff]
      %v525 = vld [vmem:[%s324 + $0x68] sm:$0xff]
      %v526 = vld [vmem:[%s324 + $0x70] sm:$0xff]
      %v527 = vld [vmem:[%s324 + $0x78] sm:$0xff]
      %v528 = vld [vmem:[%s324 + $0x80] sm:$0xff]
      %v529 = vld [vmem:[%s324 + $0x88] sm:$0xff]
      %v530 = vld [vmem:[%s324 + $0x90] sm:$0xff]
      %v531 = vld [vmem:[%s324 + $0x98] sm:$0xff]
      %v532 = vld [vmem:[%s324 + $0xa0] sm:$0xff]
      %v533 = vld [vmem:[%s324 + $0xa8] sm:$0xff]
      %v534 = vld [vmem:[%s324 + $0xb0] sm:$0xff]
      %v535 = vld [vmem:[%s324 + $0xb8] sm:$0xff]
      %v536 = vld [vmem:[%s324 + $0xc0] sm:$0xff]
      %v537 = vld [vmem:[%s324 + $0xc8] sm:$0xff]
      %v538 = vld [vmem:[%s324 + $0xd0] sm:$0xff]
      %v539 = vld [vmem:[%s324 + $0xd8] sm:$0xff]
      %v540 = vld [vmem:[%s324 + $0xe0] sm:$0xff]
      %v541 = vld [vmem:[%s324 + $0xe8] sm:$0xff]
      %v542 = vld [vmem:[%s324 + $0xf0] sm:$0xff]
      %v543 = vld [vmem:[%s324 + $0xf8] sm:$0xff]
      %v544 = vld [vmem:[%s324 + $0x100] sm:$0xff]
      %v545 = vld [vmem:[%s324 + $0x108] sm:$0xff]
      %v546 = vld [vmem:[%s324 + $0x110] sm:$0xff]
      %v547 = vld [vmem:[%s324 + $0x118] sm:$0xff]
      %v548 = vld [vmem:[%s324 + $0x120] sm:$0xff]
      %v549 = vld [vmem:[%s324 + $0x128] sm:$0xff]
      %v550 = vld [vmem:[%s324 + $0x130] sm:$0xff]
      %v551 = vld [vmem:[%s324 + $0x138] sm:$0xff]
      %v552 = vld [vmem:[%s324 + $0x140] sm:$0xff]
      %v553 = vld [vmem:[%s324 + $0x148] sm:$0xff]
      %v554 = vld [vmem:[%s324 + $0x150] sm:$0xff]
      %v555 = vld [vmem:[%s324 + $0x158] sm:$0xff]
      %v556 = vld [vmem:[%s324 + $0x160] sm:$0xff]
      %v557 = vld [vmem:[%s324 + $0x168] sm:$0xff]
      %v558 = vld [vmem:[%s324 + $0x170] sm:$0xff]
      %v559 = vld [vmem:[%s324 + $0x178] sm:$0xff]
      %v560 = vld [vmem:[%s324 + $0x180] sm:$0xff]
      %v561 = vld [vmem:[%s324 + $0x188] sm:$0xff]
      %v562 = vld [vmem:[%s324 + $0x190] sm:$0xff]
      %v563 = vld [vmem:[%s324 + $0x198] sm:$0xff]
      %v564 = vld [vmem:[%s324 + $0x1a0] sm:$0xff]
      %v565 = vld [vmem:[%s324 + $0x1a8] sm:$0xff]
      %v566 = vld [vmem:[%s324 + $0x1b0] sm:$0xff]
      %v567 = vld [vmem:[%s324 + $0x1b8] sm:$0xff]
      %v568 = vld [vmem:[%s324 + $0x1c0] sm:$0xff]
      %v569 = vld [vmem:[%s324 + $0x1c8] sm:$0xff]
      %v570 = vld [vmem:[%s324 + $0x1d0] sm:$0xff]
      %v571 = vld [vmem:[%s324 + $0x1d8] sm:$0xff]
      %v572 = vld [vmem:[%s324 + $0x1e0] sm:$0xff]
      %v573 = vld [vmem:[%s324 + $0x1e8] sm:$0xff]
      %v574 = vld [vmem:[%s324 + $0x1f0] sm:$0xff]
      %v575 = vld [vmem:[%s324 + $0x1f8] sm:$0xff]
      %v576 = vld [vmem:[%s324 + $0x200] sm:$0xff]
      %v577 = vld [vmem:[%s324 + $0x208] sm:$0xff]
      %v578 = vld [vmem:[%s324 + $0x210] sm:$0xff]
      %v579 = vld [vmem:[%s324 + $0x218] sm:$0xff]
      %v580 = vld [vmem:[%s324 + $0x220] sm:$0xff]
      %v581 = vld [vmem:[%s324 + $0x228] sm:$0xff]
      %v582 = vld [vmem:[%s324 + $0x230] sm:$0xff]
      %v583 = vld [vmem:[%s324 + $0x238] sm:$0xff]
      %v584 = vld [vmem:[%s324 + $0x240] sm:$0xff]
      %v585 = vld [vmem:[%s324 + $0x248] sm:$0xff]
      %v586 = vld [vmem:[%s324 + $0x250] sm:$0xff]
      %v587 = vld [vmem:[%s324 + $0x258] sm:$0xff]
      %v588 = vld [vmem:[%s324 + $0x260] sm:$0xff]
      %v589 = vld [vmem:[%s324 + $0x268] sm:$0xff]
      %v590 = vld [vmem:[%s324 + $0x270] sm:$0xff]
      %v591 = vld [vmem:[%s324 + $0x278] sm:$0xff]
      %v592 = vld [vmem:[%s324 + $0x280] sm:$0xff]
      %v593 = vld [vmem:[%s324 + $0x288] sm:$0xff]
      %v594 = vld [vmem:[%s324 + $0x290] sm:$0xff]
      %v595 = vld [vmem:[%s324 + $0x298] sm:$0xff]
      %v596 = vld [vmem:[%s324 + $0x2a0] sm:$0xff]
      %v597 = vld [vmem:[%s324 + $0x2a8] sm:$0xff]
      %v598 = vld [vmem:[%s324 + $0x2b0] sm:$0xff]
      %v599 = vld [vmem:[%s324 + $0x2b8] sm:$0xff]
      %v600 = vld [vmem:[%s324 + $0x2c0] sm:$0xff]
      %v601 = vld [vmem:[%s324 + $0x2c8] sm:$0xff]
      %v602 = vld [vmem:[%s324 + $0x2d0] sm:$0xff]
      %v603 = vld [vmem:[%s324 + $0x2d8] sm:$0xff]
      %v604 = vld [vmem:[%s324 + $0x2e0] sm:$0xff]
      %v605 = vld [vmem:[%s324 + $0x2e8] sm:$0xff]
      %v606 = vld [vmem:[%s324 + $0x2f0] sm:$0xff]
      %v607 = vld [vmem:[%s324 + $0x2f8] sm:$0xff]
      %v608 = vld [vmem:[%s324 + $0x300] sm:$0xff]
      %v609 = vld [vmem:[%s324 + $0x308] sm:$0xff]
      %v610 = vld [vmem:[%s324 + $0x310] sm:$0xff]
      %v611 = vld [vmem:[%s324 + $0x318] sm:$0xff]
      %v612 = vld [vmem:[%s324 + $0x320] sm:$0xff]
      %v613 = vld [vmem:[%s324 + $0x328] sm:$0xff]
      %v614 = vld [vmem:[%s324 + $0x330] sm:$0xff]
      %v615 = vld [vmem:[%s324 + $0x338] sm:$0xff]
      %v616 = vld [vmem:[%s324 + $0x340] sm:$0xff]
      %v617 = vld [vmem:[%s324 + $0x348] sm:$0xff]
      %v618 = vld [vmem:[%s324 + $0x350] sm:$0xff]
      %v619 = vld [vmem:[%s324 + $0x358] sm:$0xff]
      %v620 = vld [vmem:[%s324 + $0x360] sm:$0xff]
      %v621 = vld [vmem:[%s324 + $0x368] sm:$0xff]
      %v622 = vld [vmem:[%s324 + $0x370] sm:$0xff]
      %v623 = vld [vmem:[%s324 + $0x378] sm:$0xff]
      %v624 = vld [vmem:[%s324 + $0x380] sm:$0xff]
      %v625 = vld [vmem:[%s324 + $0x388] sm:$0xff]
      %v626 = vld [vmem:[%s324 + $0x390] sm:$0xff]
      %v627 = vld [vmem:[%s324 + $0x398] sm:$0xff]
      %v628 = vld [vmem:[%s324 + $0x3a0] sm:$0xff]
      %v629 = vld [vmem:[%s324 + $0x3a8] sm:$0xff]
      %v630 = vld [vmem:[%s324 + $0x3b0] sm:$0xff]
      %v631 = vld [vmem:[%s324 + $0x3b8] sm:$0xff]
      %v632 = vld [vmem:[%s324 + $0x3c0] sm:$0xff]
      %v633 = vld [vmem:[%s324 + $0x3c8] sm:$0xff]
      %v634 = vld [vmem:[%s324 + $0x3d0] sm:$0xff]
      %v635 = vld [vmem:[%s324 + $0x3d8] sm:$0xff]
      %v636 = vld [vmem:[%s324 + $0x3e0] sm:$0xff]
      %v637 = vld [vmem:[%s324 + $0x3e8] sm:$0xff]
      %v638 = vld [vmem:[%s324 + $0x3f0] sm:$0xff]
      %v639 = vld [vmem:[%s324 + $0x3f8] sm:$0xff]
      %v640 = vld [vmem:[%s324 + $0x400] sm:$0xff]
      %v641 = vld [vmem:[%s324 + $0x408] sm:$0xff]
      %v642 = vld [vmem:[%s324 + $0x410] sm:$0xff]
      %v643 = vld [vmem:[%s324 + $0x418] sm:$0xff]
      %v644 = vld [vmem:[%s324 + $0x420] sm:$0xff]
      %v645 = vld [vmem:[%s324 + $0x428] sm:$0xff]
      %v646 = vld [vmem:[%s324 + $0x430] sm:$0xff]
      %v647 = vld [vmem:[%s324 + $0x438] sm:$0xff]
      %v648 = vld [vmem:[%s324 + $0x440] sm:$0xff]
      %v649 = vld [vmem:[%s324 + $0x448] sm:$0xff]
      %v650 = vld [vmem:[%s324 + $0x450] sm:$0xff]
      %v651 = vld [vmem:[%s324 + $0x458] sm:$0xff]
      %v652 = vld [vmem:[%s324 + $0x460] sm:$0xff]
      %v653 = vld [vmem:[%s324 + $0x468] sm:$0xff]
      %v654 = vld [vmem:[%s324 + $0x470] sm:$0xff]
      %v655 = vld [vmem:[%s324 + $0x478] sm:$0xff]
      %v656 = vld [vmem:[%s324 + $0x480] sm:$0xff]
      %v657 = vld [vmem:[%s324 + $0x488] sm:$0xff]
      %v658 = vld [vmem:[%s324 + $0x490] sm:$0xff]
      %v659 = vld [vmem:[%s324 + $0x498] sm:$0xff]
      %v660 = vld [vmem:[%s324 + $0x4a0] sm:$0xff]
      %v661 = vld [vmem:[%s324 + $0x4a8] sm:$0xff]
      %v662 = vld [vmem:[%s324 + $0x4b0] sm:$0xff]
      %v663 = vld [vmem:[%s324 + $0x4b8] sm:$0xff]
      %v664 = vld [vmem:[%s324 + $0x4c0] sm:$0xff]
      %v665 = vld [vmem:[%s324 + $0x4c8] sm:$0xff]
      %v666 = vld [vmem:[%s324 + $0x4d0] sm:$0xff]
      %v667 = vld [vmem:[%s324 + $0x4d8] sm:$0xff]
      %v668 = vld [vmem:[%s324 + $0x4e0] sm:$0xff]
      %v669 = vld [vmem:[%s324 + $0x4e8] sm:$0xff]
      %v670 = vld [vmem:[%s324 + $0x4f0] sm:$0xff]
      %v671 = vld [vmem:[%s324 + $0x4f8] sm:$0xff]
      %v672 = vld [vmem:[%s324 + $0x500] sm:$0xff]
      %v673 = vld [vmem:[%s324 + $0x508] sm:$0xff]
      %v674 = vld [vmem:[%s324 + $0x510] sm:$0xff]
      %v675 = vld [vmem:[%s324 + $0x518] sm:$0xff]
      %v676 = vld [vmem:[%s324 + $0x520] sm:$0xff]
      %v677 = vld [vmem:[%s324 + $0x528] sm:$0xff]
      %v678 = vld [vmem:[%s324 + $0x530] sm:$0xff]
      %v679 = vld [vmem:[%s324 + $0x538] sm:$0xff]
      %v680 = vld [vmem:[%s324 + $0x540] sm:$0xff]
      %v681 = vld [vmem:[%s324 + $0x548] sm:$0xff]
      %v682 = vld [vmem:[%s324 + $0x550] sm:$0xff]
      %v683 = vld [vmem:[%s324 + $0x558] sm:$0xff]
      %v684 = vld [vmem:[%s324 + $0x560] sm:$0xff]
      %v685 = vld [vmem:[%s324 + $0x568] sm:$0xff]
      %v686 = vld [vmem:[%s324 + $0x570] sm:$0xff]
      %v687 = vld [vmem:[%s324 + $0x578] sm:$0xff]
      %v688 = vld [vmem:[%s324 + $0x580] sm:$0xff]
      %v689 = vld [vmem:[%s324 + $0x588] sm:$0xff]
      %v690 = vld [vmem:[%s324 + $0x590] sm:$0xff]
      %v691 = vld [vmem:[%s324 + $0x598] sm:$0xff]
      %v692 = vld [vmem:[%s324 + $0x5a0] sm:$0xff]
      %v693 = vld [vmem:[%s324 + $0x5a8] sm:$0xff]
      %v694 = vld [vmem:[%s324 + $0x5b0] sm:$0xff]
      %v695 = vld [vmem:[%s324 + $0x5b8] sm:$0xff]
      %v696 = vld [vmem:[%s324 + $0x5c0] sm:$0xff]
      %v697 = vld [vmem:[%s324 + $0x5c8] sm:$0xff]
      %v698 = vld [vmem:[%s324 + $0x5d0] sm:$0xff]
      %v699 = vld [vmem:[%s324 + $0x5d8] sm:$0xff]
      %v700 = vld [vmem:[%s324 + $0x5e0] sm:$0xff]
      %v701 = vld [vmem:[%s324 + $0x5e8] sm:$0xff]
      %v702 = vld [vmem:[%s324 + $0x5f0] sm:$0xff]
      %v703 = vld [vmem:[%s324 + $0x5f8] sm:$0xff]
      %v704 = vld [vmem:[%s324 + $0x600] sm:$0xff]
      %v705 = vld [vmem:[%s324 + $0x608] sm:$0xff]
      %v706 = vld [vmem:[%s324 + $0x610] sm:$0xff]
      %v707 = vld [vmem:[%s324 + $0x618] sm:$0xff]
      %v708 = vld [vmem:[%s324 + $0x620] sm:$0xff]
      %v709 = vld [vmem:[%s324 + $0x628] sm:$0xff]
      %v710 = vld [vmem:[%s324 + $0x630] sm:$0xff]
      %v711 = vld [vmem:[%s324 + $0x638] sm:$0xff]
      %v712 = vld [vmem:[%s324 + $0x640] sm:$0xff]
      %v713 = vld [vmem:[%s324 + $0x648] sm:$0xff]
      %v714 = vld [vmem:[%s324 + $0x650] sm:$0xff]
      %v715 = vld [vmem:[%s324 + $0x658] sm:$0xff]
      %v716 = vld [vmem:[%s324 + $0x660] sm:$0xff]
      %v717 = vld [vmem:[%s324 + $0x668] sm:$0xff]
      %v718 = vld [vmem:[%s324 + $0x670] sm:$0xff]
      %v719 = vld [vmem:[%s324 + $0x678] sm:$0xff]
      %v720 = vld [vmem:[%s324 + $0x680] sm:$0xff]
      %v721 = vld [vmem:[%s324 + $0x688] sm:$0xff]
      %v722 = vld [vmem:[%s324 + $0x690] sm:$0xff]
      %v723 = vld [vmem:[%s324 + $0x698] sm:$0xff]
      %v724 = vld [vmem:[%s324 + $0x6a0] sm:$0xff]
      %v725 = vld [vmem:[%s324 + $0x6a8] sm:$0xff]
      %v726 = vld [vmem:[%s324 + $0x6b0] sm:$0xff]
      %v727 = vld [vmem:[%s324 + $0x6b8] sm:$0xff]
      %v728 = vld [vmem:[%s324 + $0x6c0] sm:$0xff]
      %v729 = vld [vmem:[%s324 + $0x6c8] sm:$0xff]
      %v730 = vld [vmem:[%s324 + $0x6d0] sm:$0xff]
      %v731 = vld [vmem:[%s324 + $0x6d8] sm:$0xff]
      %v732 = vld [vmem:[%s324 + $0x6e0] sm:$0xff]
      %v733 = vld [vmem:[%s324 + $0x6e8] sm:$0xff]
      %v734 = vld [vmem:[%s324 + $0x6f0] sm:$0xff]
      %v735 = vld [vmem:[%s324 + $0x6f8] sm:$0xff]
      %v736 = vld [vmem:[%s324 + $0x700] sm:$0xff]
      %v737 = vld [vmem:[%s324 + $0x708] sm:$0xff]
      %v738 = vld [vmem:[%s324 + $0x710] sm:$0xff]
      %v739 = vld [vmem:[%s324 + $0x718] sm:$0xff]
      %v740 = vld [vmem:[%s324 + $0x720] sm:$0xff]
      %v741 = vld [vmem:[%s324 + $0x728] sm:$0xff]
      %v742 = vld [vmem:[%s324 + $0x730] sm:$0xff]
      %v743 = vld [vmem:[%s324 + $0x738] sm:$0xff]
      %v744 = vld [vmem:[%s324 + $0x740] sm:$0xff]
      %v745 = vld [vmem:[%s324 + $0x748] sm:$0xff]
      %v746 = vld [vmem:[%s324 + $0x750] sm:$0xff]
      %v747 = vld [vmem:[%s324 + $0x758] sm:$0xff]
      %v748 = vld [vmem:[%s324 + $0x760] sm:$0xff]
      %v749 = vld [vmem:[%s324 + $0x768] sm:$0xff]
      %v750 = vld [vmem:[%s324 + $0x770] sm:$0xff]
      %v751 = vld [vmem:[%s324 + $0x778] sm:$0xff]
      %v752 = vld [vmem:[%s324 + $0x780] sm:$0xff]
      %v753 = vld [vmem:[%s324 + $0x788] sm:$0xff]
      %v754 = vld [vmem:[%s324 + $0x790] sm:$0xff]
      %v755 = vld [vmem:[%s324 + $0x798] sm:$0xff]
      %v756 = vld [vmem:[%s324 + $0x7a0] sm:$0xff]
      %v757 = vld [vmem:[%s324 + $0x7a8] sm:$0xff]
      %v758 = vld [vmem:[%s324 + $0x7b0] sm:$0xff]
      %v759 = vld [vmem:[%s324 + $0x7b8] sm:$0xff]
      %v760 = vld [vmem:[%s324 + $0x7c0] sm:$0xff]
      %v761 = vld [vmem:[%s324 + $0x7c8] sm:$0xff]
      %v762 = vld [vmem:[%s324 + $0x7d0] sm:$0xff]
      %v763 = vld [vmem:[%s324 + $0x7d8] sm:$0xff]
      %v764 = vld [vmem:[%s324 + $0x7e0] sm:$0xff]
      %v765 = vld [vmem:[%s324 + $0x7e8] sm:$0xff]
      %v766 = vld [vmem:[%s324 + $0x7f0] sm:$0xff]
      %v767 = vld [vmem:[%s324 + $0x7f8] sm:$0xff]
      %v768 = vld [vmem:[%s324 + $0x800] sm:$0xff]
      %v769 = vld [vmem:[%s324 + $0x808] sm:$0xff]
      %v770 = vld [vmem:[%s324 + $0x810] sm:$0xff]
      %v771 = vld [vmem:[%s324 + $0x818] sm:$0xff]
      %v772 = vld [vmem:[%s324 + $0x820] sm:$0xff]
      %v773 = vld [vmem:[%s324 + $0x828] sm:$0xff]
      %v774 = vld [vmem:[%s324 + $0x830] sm:$0xff]
      %v775 = vld [vmem:[%s324 + $0x838] sm:$0xff]
      %v776 = vld [vmem:[%s324 + $0x840] sm:$0xff]
      %v777 = vld [vmem:[%s324 + $0x848] sm:$0xff]
      %v778 = vld [vmem:[%s324 + $0x850] sm:$0xff]
      %v779 = vld [vmem:[%s324 + $0x858] sm:$0xff]
      %v780 = vld [vmem:[%s324 + $0x860] sm:$0xff]
      %v781 = vld [vmem:[%s324 + $0x868] sm:$0xff]
      %v782 = vld [vmem:[%s324 + $0x870] sm:$0xff]
      %v783 = vld [vmem:[%s324 + $0x878] sm:$0xff]
      %v784 = vld [vmem:[%s324 + $0x880] sm:$0xff]
      %v785 = vld [vmem:[%s324 + $0x888] sm:$0xff]
      %v786 = vld [vmem:[%s324 + $0x890] sm:$0xff]
      %v787 = vld [vmem:[%s324 + $0x898] sm:$0xff]
      %v788 = vld [vmem:[%s324 + $0x8a0] sm:$0xff]
      %v789 = vld [vmem:[%s324 + $0x8a8] sm:$0xff]
      %v790 = vld [vmem:[%s324 + $0x8b0] sm:$0xff]
      %v791 = vld [vmem:[%s324 + $0x8b8] sm:$0xff]
      %v792 = vld [vmem:[%s324 + $0x8c0] sm:$0xff]
      %v793 = vld [vmem:[%s324 + $0x8c8] sm:$0xff]
      %v794 = vld [vmem:[%s324 + $0x8d0] sm:$0xff]
      %v795 = vld [vmem:[%s324 + $0x8d8] sm:$0xff]
      %v796 = vld [vmem:[%s324 + $0x8e0] sm:$0xff]
      %v797 = vld [vmem:[%s324 + $0x8e8] sm:$0xff]
      %v798 = vld [vmem:[%s324 + $0x8f0] sm:$0xff]
      %v799 = vld [vmem:[%s324 + $0x8f8] sm:$0xff]
      %v800 = vld [vmem:[%s324 + $0x900] sm:$0xff]
      %v801 = vld [vmem:[%s324 + $0x908] sm:$0xff]
      %v802 = vld [vmem:[%s324 + $0x910] sm:$0xff]
      %v803 = vld [vmem:[%s324 + $0x918] sm:$0xff]
      %v804 = vld [vmem:[%s324 + $0x920] sm:$0xff]
      %v805 = vld [vmem:[%s324 + $0x928] sm:$0xff]
      %v806 = vld [vmem:[%s324 + $0x930] sm:$0xff]
      %v807 = vld [vmem:[%s324 + $0x938] sm:$0xff]
      %v808 = vld [vmem:[%s324 + $0x940] sm:$0xff]
      %v809 = vld [vmem:[%s324 + $0x948] sm:$0xff]
      %v810 = vld [vmem:[%s324 + $0x950] sm:$0xff]
      %v811 = vld [vmem:[%s324 + $0x958] sm:$0xff]
      %v812 = vld [vmem:[%s324 + $0x960] sm:$0xff]
      %v813 = vld [vmem:[%s324 + $0x968] sm:$0xff]
      %v814 = vld [vmem:[%s324 + $0x970] sm:$0xff]
      %v815 = vld [vmem:[%s324 + $0x978] sm:$0xff]
      %v816 = vld [vmem:[%s324 + $0x980] sm:$0xff]
      %v817 = vld [vmem:[%s324 + $0x988] sm:$0xff]
      %v818 = vld [vmem:[%s324 + $0x990] sm:$0xff]
      %v819 = vld [vmem:[%s324 + $0x998] sm:$0xff]
      %v820 = vld [vmem:[%s324 + $0x9a0] sm:$0xff]
      %v821 = vld [vmem:[%s324 + $0x9a8] sm:$0xff]
      %v822 = vld [vmem:[%s324 + $0x9b0] sm:$0xff]
      %v823 = vld [vmem:[%s324 + $0x9b8] sm:$0xff]
      %v824 = vld [vmem:[%s324 + $0x9c0] sm:$0xff]
      %v825 = vld [vmem:[%s324 + $0x9c8] sm:$0xff]
      %v826 = vld [vmem:[%s324 + $0x9d0] sm:$0xff]
      %v827 = vld [vmem:[%s324 + $0x9d8] sm:$0xff]
      %v828 = vld [vmem:[%s324 + $0x9e0] sm:$0xff]
      %v829 = vld [vmem:[%s324 + $0x9e8] sm:$0xff]
      %v830 = vld [vmem:[%s324 + $0x9f0] sm:$0xff]
      %v831 = vld [vmem:[%s324 + $0x9f8] sm:$0xff]
      %v832 = vld [vmem:[%s324 + $0xa00] sm:$0xff]
      %v833 = vld [vmem:[%s324 + $0xa08] sm:$0xff]
      %v834 = vld [vmem:[%s324 + $0xa10] sm:$0xff]
      %v835 = vld [vmem:[%s324 + $0xa18] sm:$0xff]
      %v836 = vld [vmem:[%s324 + $0xa20] sm:$0xff]
      %v837 = vld [vmem:[%s324 + $0xa28] sm:$0xff]
      %v838 = vld [vmem:[%s324 + $0xa30] sm:$0xff]
      %v839 = vld [vmem:[%s324 + $0xa38] sm:$0xff]
      %v840 = vld [vmem:[%s324 + $0xa40] sm:$0xff]
      %v841 = vld [vmem:[%s324 + $0xa48] sm:$0xff]
      %v842 = vld [vmem:[%s324 + $0xa50] sm:$0xff]
      %v843 = vld [vmem:[%s324 + $0xa58] sm:$0xff]
      %v844 = vld [vmem:[%s324 + $0xa60] sm:$0xff]
      %v845 = vld [vmem:[%s324 + $0xa68] sm:$0xff]
      %v846 = vld [vmem:[%s324 + $0xa70] sm:$0xff]
      %v847 = vld [vmem:[%s324 + $0xa78] sm:$0xff]
      %v848 = vld [vmem:[%s324 + $0xa80] sm:$0xff]
      %v849 = vld [vmem:[%s324 + $0xa88] sm:$0xff]
      %v850 = vld [vmem:[%s324 + $0xa90] sm:$0xff]
      %v851 = vld [vmem:[%s324 + $0xa98] sm:$0xff]
      %v852 = vld [vmem:[%s324 + $0xaa0] sm:$0xff]
      %v853 = vld [vmem:[%s324 + $0xaa8] sm:$0xff]
      %v854 = vld [vmem:[%s324 + $0xab0] sm:$0xff]
      %v855 = vld [vmem:[%s324 + $0xab8] sm:$0xff]
      %v856 = vld [vmem:[%s324 + $0xac0] sm:$0xff]
      %v857 = vld [vmem:[%s324 + $0xac8] sm:$0xff]
      %v858 = vld [vmem:[%s324 + $0xad0] sm:$0xff]
      %v859 = vld [vmem:[%s324 + $0xad8] sm:$0xff]
      %v860 = vld [vmem:[%s324 + $0xae0] sm:$0xff]
      %v861 = vld [vmem:[%s324 + $0xae8] sm:$0xff]
      %v862 = vld [vmem:[%s324 + $0xaf0] sm:$0xff]
      %v863 = vld [vmem:[%s324 + $0xaf8] sm:$0xff]
      %v864 = vld [vmem:[%s324 + $0xb00] sm:$0xff]
      %v865 = vld [vmem:[%s324 + $0xb08] sm:$0xff]
      %v866 = vld [vmem:[%s324 + $0xb10] sm:$0xff]
      %v867 = vld [vmem:[%s324 + $0xb18] sm:$0xff]
      %v868 = vld [vmem:[%s324 + $0xb20] sm:$0xff]
      %v869 = vld [vmem:[%s324 + $0xb28] sm:$0xff]
      %v870 = vld [vmem:[%s324 + $0xb30] sm:$0xff]
      %v871 = vld [vmem:[%s324 + $0xb38] sm:$0xff]
      %v872 = vld [vmem:[%s324 + $0xb40] sm:$0xff]
      %v873 = vld [vmem:[%s324 + $0xb48] sm:$0xff]
      %v874 = vld [vmem:[%s324 + $0xb50] sm:$0xff]
      %v875 = vld [vmem:[%s324 + $0xb58] sm:$0xff]
      %v876 = vld [vmem:[%s324 + $0xb60] sm:$0xff]
      %v877 = vld [vmem:[%s324 + $0xb68] sm:$0xff]
      %v878 = vld [vmem:[%s324 + $0xb70] sm:$0xff]
      %v879 = vld [vmem:[%s324 + $0xb78] sm:$0xff]
      %v880 = vld [vmem:[%s324 + $0xb80] sm:$0xff]
      %v881 = vld [vmem:[%s324 + $0xb88] sm:$0xff]
      %v882 = vld [vmem:[%s324 + $0xb90] sm:$0xff]
      %v883 = vld [vmem:[%s324 + $0xb98] sm:$0xff]
      %v884 = vld [vmem:[%s324 + $0xba0] sm:$0xff]
      %v885 = vld [vmem:[%s324 + $0xba8] sm:$0xff]
      %v886 = vld [vmem:[%s324 + $0xbb0] sm:$0xff]
      %v887 = vld [vmem:[%s324 + $0xbb8] sm:$0xff]
      %v888 = vld [vmem:[%s324 + $0xbc0] sm:$0xff]
      %v889 = vld [vmem:[%s324 + $0xbc8] sm:$0xff]
      %v890 = vld [vmem:[%s324 + $0xbd0] sm:$0xff]
      %v891 = vld [vmem:[%s324 + $0xbd8] sm:$0xff]
      %v892 = vld [vmem:[%s324 + $0xbe0] sm:$0xff]
      %v893 = vld [vmem:[%s324 + $0xbe8] sm:$0xff]
      %v894 = vld [vmem:[%s324 + $0xbf0] sm:$0xff]
      %v895 = vld [vmem:[%s324 + $0xbf8] sm:$0xff]
      %v1280 = vunpack.c.l.b16 %v512
      %v1281 = vunpack.c.h.b16 %v512
      %v1282 = vunpack.c.l.b16 %v513
      %v1283 = vunpack.c.h.b16 %v513
      %v1284 = vunpack.c.l.b16 %v514
      %v1285 = vunpack.c.h.b16 %v514
      %v1286 = vunpack.c.l.b16 %v515
      %v1287 = vunpack.c.h.b16 %v515
      %v1288 = vunpack.c.l.b16 %v516
      %v1289 = vunpack.c.h.b16 %v516
      %v1290 = vunpack.c.l.b16 %v517
      %v1291 = vunpack.c.h.b16 %v517
      %v1292 = vunpack.c.l.b16 %v518
      %v1293 = vunpack.c.h.b16 %v518
      %v1294 = vunpack.c.l.b16 %v519
      %v1295 = vunpack.c.h.b16 %v519
      %v1296 = vunpack.c.l.b16 %v520
      %v1297 = vunpack.c.h.b16 %v520
      %v1298 = vunpack.c.l.b16 %v521
      %v1299 = vunpack.c.h.b16 %v521
      %v1300 = vunpack.c.l.b16 %v522
      %v1301 = vunpack.c.h.b16 %v522
      %v1302 = vunpack.c.l.b16 %v523
      %v1303 = vunpack.c.h.b16 %v523
      %v1304 = vunpack.c.l.b16 %v524
      %v1305 = vunpack.c.h.b16 %v524
      %v1306 = vunpack.c.l.b16 %v525
      %v1307 = vunpack.c.h.b16 %v525
      %v1308 = vunpack.c.l.b16 %v526
      %v1309 = vunpack.c.h.b16 %v526
      %v1310 = vunpack.c.l.b16 %v527
      %v1311 = vunpack.c.h.b16 %v527
      %v1312 = vunpack.c.l.b16 %v528
      %v1313 = vunpack.c.h.b16 %v528
      %v1314 = vunpack.c.l.b16 %v529
      %v1315 = vunpack.c.h.b16 %v529
      %v1316 = vunpack.c.l.b16 %v530
      %v1317 = vunpack.c.h.b16 %v530
      %v1318 = vunpack.c.l.b16 %v531
      %v1319 = vunpack.c.h.b16 %v531
      %v1320 = vunpack.c.l.b16 %v532
      %v1321 = vunpack.c.h.b16 %v532
      %v1322 = vunpack.c.l.b16 %v533
      %v1323 = vunpack.c.h.b16 %v533
      %v1324 = vunpack.c.l.b16 %v534
      %v1325 = vunpack.c.h.b16 %v534
      %v1326 = vunpack.c.l.b16 %v535
      %v1327 = vunpack.c.h.b16 %v535
      %v1328 = vunpack.c.l.b16 %v536
      %v1329 = vunpack.c.h.b16 %v536
      %v1330 = vunpack.c.l.b16 %v537
      %v1331 = vunpack.c.h.b16 %v537
      %v1332 = vunpack.c.l.b16 %v538
      %v1333 = vunpack.c.h.b16 %v538
      %v1334 = vunpack.c.l.b16 %v539
      %v1335 = vunpack.c.h.b16 %v539
      %v1336 = vunpack.c.l.b16 %v540
      %v1337 = vunpack.c.h.b16 %v540
      %v1338 = vunpack.c.l.b16 %v541
      %v1339 = vunpack.c.h.b16 %v541
      %v1340 = vunpack.c.l.b16 %v542
      %v1341 = vunpack.c.h.b16 %v542
      %v1342 = vunpack.c.l.b16 %v543
      %v1343 = vunpack.c.h.b16 %v543
      %v1344 = vunpack.c.l.b16 %v544
      %v1345 = vunpack.c.h.b16 %v544
      %v1346 = vunpack.c.l.b16 %v545
      %v1347 = vunpack.c.h.b16 %v545
      %v1348 = vunpack.c.l.b16 %v546
      %v1349 = vunpack.c.h.b16 %v546
      %v1350 = vunpack.c.l.b16 %v547
      %v1351 = vunpack.c.h.b16 %v547
      %v1352 = vunpack.c.l.b16 %v548
      %v1353 = vunpack.c.h.b16 %v548
      %v1354 = vunpack.c.l.b16 %v549
      %v1355 = vunpack.c.h.b16 %v549
      %v1356 = vunpack.c.l.b16 %v550
      %v1357 = vunpack.c.h.b16 %v550
      %v1358 = vunpack.c.l.b16 %v551
      %v1359 = vunpack.c.h.b16 %v551
      %v1360 = vunpack.c.l.b16 %v552
      %v1361 = vunpack.c.h.b16 %v552
      %v1362 = vunpack.c.l.b16 %v553
      %v1363 = vunpack.c.h.b16 %v553
      %v1364 = vunpack.c.l.b16 %v554
      %v1365 = vunpack.c.h.b16 %v554
      %v1366 = vunpack.c.l.b16 %v555
      %v1367 = vunpack.c.h.b16 %v555
      %v1368 = vunpack.c.l.b16 %v556
      %v1369 = vunpack.c.h.b16 %v556
      %v1370 = vunpack.c.l.b16 %v557
      %v1371 = vunpack.c.h.b16 %v557
      %v1372 = vunpack.c.l.b16 %v558
      %v1373 = vunpack.c.h.b16 %v558
      %v1374 = vunpack.c.l.b16 %v559
      %v1375 = vunpack.c.h.b16 %v559
      %v1376 = vunpack.c.l.b16 %v560
      %v1377 = vunpack.c.h.b16 %v560
      %v1378 = vunpack.c.l.b16 %v561
      %v1379 = vunpack.c.h.b16 %v561
      %v1380 = vunpack.c.l.b16 %v562
      %v1381 = vunpack.c.h.b16 %v562
      %v1382 = vunpack.c.l.b16 %v563
      %v1383 = vunpack.c.h.b16 %v563
      %v1384 = vunpack.c.l.b16 %v564
      %v1385 = vunpack.c.h.b16 %v564
      %v1386 = vunpack.c.l.b16 %v565
      %v1387 = vunpack.c.h.b16 %v565
      %v1388 = vunpack.c.l.b16 %v566
      %v1389 = vunpack.c.h.b16 %v566
      %v1390 = vunpack.c.l.b16 %v567
      %v1391 = vunpack.c.h.b16 %v567
      %v1392 = vunpack.c.l.b16 %v568
      %v1393 = vunpack.c.h.b16 %v568
      %v1394 = vunpack.c.l.b16 %v569
      %v1395 = vunpack.c.h.b16 %v569
      %v1396 = vunpack.c.l.b16 %v570
      %v1397 = vunpack.c.h.b16 %v570
      %v1398 = vunpack.c.l.b16 %v571
      %v1399 = vunpack.c.h.b16 %v571
      %v1400 = vunpack.c.l.b16 %v572
      %v1401 = vunpack.c.h.b16 %v572
      %v1402 = vunpack.c.l.b16 %v573
      %v1403 = vunpack.c.h.b16 %v573
      %v1404 = vunpack.c.l.b16 %v574
      %v1405 = vunpack.c.h.b16 %v574
      %v1406 = vunpack.c.l.b16 %v575
      %v1407 = vunpack.c.h.b16 %v575
      %v1408 = vunpack.c.l.b16 %v576
      %v1409 = vunpack.c.h.b16 %v576
      %v1410 = vunpack.c.l.b16 %v577
      %v1411 = vunpack.c.h.b16 %v577
      %v1412 = vunpack.c.l.b16 %v578
      %v1413 = vunpack.c.h.b16 %v578
      %v1414 = vunpack.c.l.b16 %v579
      %v1415 = vunpack.c.h.b16 %v579
      %v1416 = vunpack.c.l.b16 %v580
      %v1417 = vunpack.c.h.b16 %v580
      %v1418 = vunpack.c.l.b16 %v581
      %v1419 = vunpack.c.h.b16 %v581
      %v1420 = vunpack.c.l.b16 %v582
      %v1421 = vunpack.c.h.b16 %v582
      %v1422 = vunpack.c.l.b16 %v583
      %v1423 = vunpack.c.h.b16 %v583
      %v1424 = vunpack.c.l.b16 %v584
      %v1425 = vunpack.c.h.b16 %v584
      %v1426 = vunpack.c.l.b16 %v585
      %v1427 = vunpack.c.h.b16 %v585
      %v1428 = vunpack.c.l.b16 %v586
      %v1429 = vunpack.c.h.b16 %v586
      %v1430 = vunpack.c.l.b16 %v587
      %v1431 = vunpack.c.h.b16 %v587
      %v1432 = vunpack.c.l.b16 %v588
      %v1433 = vunpack.c.h.b16 %v588
      %v1434 = vunpack.c.l.b16 %v589
      %v1435 = vunpack.c.h.b16 %v589
      %v1436 = vunpack.c.l.b16 %v590
      %v1437 = vunpack.c.h.b16 %v590
      %v1438 = vunpack.c.l.b16 %v591
      %v1439 = vunpack.c.h.b16 %v591
      %v1440 = vunpack.c.l.b16 %v592
      %v1441 = vunpack.c.h.b16 %v592
      %v1442 = vunpack.c.l.b16 %v593
      %v1443 = vunpack.c.h.b16 %v593
      %v1444 = vunpack.c.l.b16 %v594
      %v1445 = vunpack.c.h.b16 %v594
      %v1446 = vunpack.c.l.b16 %v595
      %v1447 = vunpack.c.h.b16 %v595
      %v1448 = vunpack.c.l.b16 %v596
      %v1449 = vunpack.c.h.b16 %v596
      %v1450 = vunpack.c.l.b16 %v597
      %v1451 = vunpack.c.h.b16 %v597
      %v1452 = vunpack.c.l.b16 %v598
      %v1453 = vunpack.c.h.b16 %v598
      %v1454 = vunpack.c.l.b16 %v599
      %v1455 = vunpack.c.h.b16 %v599
      %v1456 = vunpack.c.l.b16 %v600
      %v1457 = vunpack.c.h.b16 %v600
      %v1458 = vunpack.c.l.b16 %v601
      %v1459 = vunpack.c.h.b16 %v601
      %v1460 = vunpack.c.l.b16 %v602
      %v1461 = vunpack.c.h.b16 %v602
      %v1462 = vunpack.c.l.b16 %v603
      %v1463 = vunpack.c.h.b16 %v603
      %v1464 = vunpack.c.l.b16 %v604
      %v1465 = vunpack.c.h.b16 %v604
      %v1466 = vunpack.c.l.b16 %v605
      %v1467 = vunpack.c.h.b16 %v605
      %v1468 = vunpack.c.l.b16 %v606
      %v1469 = vunpack.c.h.b16 %v606
      %v1470 = vunpack.c.l.b16 %v607
      %v1471 = vunpack.c.h.b16 %v607
      %v1472 = vunpack.c.l.b16 %v608
      %v1473 = vunpack.c.h.b16 %v608
      %v1474 = vunpack.c.l.b16 %v609
      %v1475 = vunpack.c.h.b16 %v609
      %v1476 = vunpack.c.l.b16 %v610
      %v1477 = vunpack.c.h.b16 %v610
      %v1478 = vunpack.c.l.b16 %v611
      %v1479 = vunpack.c.h.b16 %v611
      %v1480 = vunpack.c.l.b16 %v612
      %v1481 = vunpack.c.h.b16 %v612
      %v1482 = vunpack.c.l.b16 %v613
      %v1483 = vunpack.c.h.b16 %v613
      %v1484 = vunpack.c.l.b16 %v614
      %v1485 = vunpack.c.h.b16 %v614
      %v1486 = vunpack.c.l.b16 %v615
      %v1487 = vunpack.c.h.b16 %v615
      %v1488 = vunpack.c.l.b16 %v616
      %v1489 = vunpack.c.h.b16 %v616
      %v1490 = vunpack.c.l.b16 %v617
      %v1491 = vunpack.c.h.b16 %v617
      %v1492 = vunpack.c.l.b16 %v618
      %v1493 = vunpack.c.h.b16 %v618
      %v1494 = vunpack.c.l.b16 %v619
      %v1495 = vunpack.c.h.b16 %v619
      %v1496 = vunpack.c.l.b16 %v620
      %v1497 = vunpack.c.h.b16 %v620
      %v1498 = vunpack.c.l.b16 %v621
      %v1499 = vunpack.c.h.b16 %v621
      %v1500 = vunpack.c.l.b16 %v622
      %v1501 = vunpack.c.h.b16 %v622
      %v1502 = vunpack.c.l.b16 %v623
      %v1503 = vunpack.c.h.b16 %v623
      %v1504 = vunpack.c.l.b16 %v624
      %v1505 = vunpack.c.h.b16 %v624
      %v1506 = vunpack.c.l.b16 %v625
      %v1507 = vunpack.c.h.b16 %v625
      %v1508 = vunpack.c.l.b16 %v626
      %v1509 = vunpack.c.h.b16 %v626
      %v1510 = vunpack.c.l.b16 %v627
      %v1511 = vunpack.c.h.b16 %v627
      %v1512 = vunpack.c.l.b16 %v628
      %v1513 = vunpack.c.h.b16 %v628
      %v1514 = vunpack.c.l.b16 %v629
      %v1515 = vunpack.c.h.b16 %v629
      %v1516 = vunpack.c.l.b16 %v630
      %v1517 = vunpack.c.h.b16 %v630
      %v1518 = vunpack.c.l.b16 %v631
      %v1519 = vunpack.c.h.b16 %v631
      %v1520 = vunpack.c.l.b16 %v632
      %v1521 = vunpack.c.h.b16 %v632
      %v1522 = vunpack.c.l.b16 %v633
      %v1523 = vunpack.c.h.b16 %v633
      %v1524 = vunpack.c.l.b16 %v634
      %v1525 = vunpack.c.h.b16 %v634
      %v1526 = vunpack.c.l.b16 %v635
      %v1527 = vunpack.c.h.b16 %v635
      %v1528 = vunpack.c.l.b16 %v636
      %v1529 = vunpack.c.h.b16 %v636
      %v1530 = vunpack.c.l.b16 %v637
      %v1531 = vunpack.c.h.b16 %v637
      %v1532 = vunpack.c.l.b16 %v638
      %v1533 = vunpack.c.h.b16 %v638
      %v1534 = vunpack.c.l.b16 %v639
      %v1535 = vunpack.c.h.b16 %v639
      %v1536 = vunpack.c.l.b16 %v640
      %v1537 = vunpack.c.h.b16 %v640
      %v1538 = vunpack.c.l.b16 %v641
      %v1539 = vunpack.c.h.b16 %v641
      %v1540 = vunpack.c.l.b16 %v642
      %v1541 = vunpack.c.h.b16 %v642
      %v1542 = vunpack.c.l.b16 %v643
      %v1543 = vunpack.c.h.b16 %v643
      %v1544 = vunpack.c.l.b16 %v644
      %v1545 = vunpack.c.h.b16 %v644
      %v1546 = vunpack.c.l.b16 %v645
      %v1547 = vunpack.c.h.b16 %v645
      %v1548 = vunpack.c.l.b16 %v646
      %v1549 = vunpack.c.h.b16 %v646
      %v1550 = vunpack.c.l.b16 %v647
      %v1551 = vunpack.c.h.b16 %v647
      %v1552 = vunpack.c.l.b16 %v648
      %v1553 = vunpack.c.h.b16 %v648
      %v1554 = vunpack.c.l.b16 %v649
      %v1555 = vunpack.c.h.b16 %v649
      %v1556 = vunpack.c.l.b16 %v650
      %v1557 = vunpack.c.h.b16 %v650
      %v1558 = vunpack.c.l.b16 %v651
      %v1559 = vunpack.c.h.b16 %v651
      %v1560 = vunpack.c.l.b16 %v652
      %v1561 = vunpack.c.h.b16 %v652
      %v1562 = vunpack.c.l.b16 %v653
      %v1563 = vunpack.c.h.b16 %v653
      %v1564 = vunpack.c.l.b16 %v654
      %v1565 = vunpack.c.h.b16 %v654
      %v1566 = vunpack.c.l.b16 %v655
      %v1567 = vunpack.c.h.b16 %v655
      %v1568 = vunpack.c.l.b16 %v656
      %v1569 = vunpack.c.h.b16 %v656
      %v1570 = vunpack.c.l.b16 %v657
      %v1571 = vunpack.c.h.b16 %v657
      %v1572 = vunpack.c.l.b16 %v658
      %v1573 = vunpack.c.h.b16 %v658
      %v1574 = vunpack.c.l.b16 %v659
      %v1575 = vunpack.c.h.b16 %v659
      %v1576 = vunpack.c.l.b16 %v660
      %v1577 = vunpack.c.h.b16 %v660
      %v1578 = vunpack.c.l.b16 %v661
      %v1579 = vunpack.c.h.b16 %v661
      %v1580 = vunpack.c.l.b16 %v662
      %v1581 = vunpack.c.h.b16 %v662
      %v1582 = vunpack.c.l.b16 %v663
      %v1583 = vunpack.c.h.b16 %v663
      %v1584 = vunpack.c.l.b16 %v664
      %v1585 = vunpack.c.h.b16 %v664
      %v1586 = vunpack.c.l.b16 %v665
      %v1587 = vunpack.c.h.b16 %v665
      %v1588 = vunpack.c.l.b16 %v666
      %v1589 = vunpack.c.h.b16 %v666
      %v1590 = vunpack.c.l.b16 %v667
      %v1591 = vunpack.c.h.b16 %v667
      %v1592 = vunpack.c.l.b16 %v668
      %v1593 = vunpack.c.h.b16 %v668
      %v1594 = vunpack.c.l.b16 %v669
      %v1595 = vunpack.c.h.b16 %v669
      %v1596 = vunpack.c.l.b16 %v670
      %v1597 = vunpack.c.h.b16 %v670
      %v1598 = vunpack.c.l.b16 %v671
      %v1599 = vunpack.c.h.b16 %v671
      %v1600 = vunpack.c.l.b16 %v672
      %v1601 = vunpack.c.h.b16 %v672
      %v1602 = vunpack.c.l.b16 %v673
      %v1603 = vunpack.c.h.b16 %v673
      %v1604 = vunpack.c.l.b16 %v674
      %v1605 = vunpack.c.h.b16 %v674
      %v1606 = vunpack.c.l.b16 %v675
      %v1607 = vunpack.c.h.b16 %v675
      %v1608 = vunpack.c.l.b16 %v676
      %v1609 = vunpack.c.h.b16 %v676
      %v1610 = vunpack.c.l.b16 %v677
      %v1611 = vunpack.c.h.b16 %v677
      %v1612 = vunpack.c.l.b16 %v678
      %v1613 = vunpack.c.h.b16 %v678
      %v1614 = vunpack.c.l.b16 %v679
      %v1615 = vunpack.c.h.b16 %v679
      %v1616 = vunpack.c.l.b16 %v680
      %v1617 = vunpack.c.h.b16 %v680
      %v1618 = vunpack.c.l.b16 %v681
      %v1619 = vunpack.c.h.b16 %v681
      %v1620 = vunpack.c.l.b16 %v682
      %v1621 = vunpack.c.h.b16 %v682
      %v1622 = vunpack.c.l.b16 %v683
      %v1623 = vunpack.c.h.b16 %v683
      %v1624 = vunpack.c.l.b16 %v684
      %v1625 = vunpack.c.h.b16 %v684
      %v1626 = vunpack.c.l.b16 %v685
      %v1627 = vunpack.c.h.b16 %v685
      %v1628 = vunpack.c.l.b16 %v686
      %v1629 = vunpack.c.h.b16 %v686
      %v1630 = vunpack.c.l.b16 %v687
      %v1631 = vunpack.c.h.b16 %v687
      %v1632 = vunpack.c.l.b16 %v688
      %v1633 = vunpack.c.h.b16 %v688
      %v1634 = vunpack.c.l.b16 %v689
      %v1635 = vunpack.c.h.b16 %v689
      %v1636 = vunpack.c.l.b16 %v690
      %v1637 = vunpack.c.h.b16 %v690
      %v1638 = vunpack.c.l.b16 %v691
      %v1639 = vunpack.c.h.b16 %v691
      %v1640 = vunpack.c.l.b16 %v692
      %v1641 = vunpack.c.h.b16 %v692
      %v1642 = vunpack.c.l.b16 %v693
      %v1643 = vunpack.c.h.b16 %v693
      %v1644 = vunpack.c.l.b16 %v694
      %v1645 = vunpack.c.h.b16 %v694
      %v1646 = vunpack.c.l.b16 %v695
      %v1647 = vunpack.c.h.b16 %v695
      %v1648 = vunpack.c.l.b16 %v696
      %v1649 = vunpack.c.h.b16 %v696
      %v1650 = vunpack.c.l.b16 %v697
      %v1651 = vunpack.c.h.b16 %v697
      %v1652 = vunpack.c.l.b16 %v698
      %v1653 = vunpack.c.h.b16 %v698
      %v1654 = vunpack.c.l.b16 %v699
      %v1655 = vunpack.c.h.b16 %v699
      %v1656 = vunpack.c.l.b16 %v700
      %v1657 = vunpack.c.h.b16 %v700
      %v1658 = vunpack.c.l.b16 %v701
      %v1659 = vunpack.c.h.b16 %v701
      %v1660 = vunpack.c.l.b16 %v702
      %v1661 = vunpack.c.h.b16 %v702
      %v1662 = vunpack.c.l.b16 %v703
      %v1663 = vunpack.c.h.b16 %v703
      %v1664 = vunpack.c.l.b16 %v704
      %v1665 = vunpack.c.h.b16 %v704
      %v1666 = vunpack.c.l.b16 %v705
      %v1667 = vunpack.c.h.b16 %v705
      %v1668 = vunpack.c.l.b16 %v706
      %v1669 = vunpack.c.h.b16 %v706
      %v1670 = vunpack.c.l.b16 %v707
      %v1671 = vunpack.c.h.b16 %v707
      %v1672 = vunpack.c.l.b16 %v708
      %v1673 = vunpack.c.h.b16 %v708
      %v1674 = vunpack.c.l.b16 %v709
      %v1675 = vunpack.c.h.b16 %v709
      %v1676 = vunpack.c.l.b16 %v710
      %v1677 = vunpack.c.h.b16 %v710
      %v1678 = vunpack.c.l.b16 %v711
      %v1679 = vunpack.c.h.b16 %v711
      %v1680 = vunpack.c.l.b16 %v712
      %v1681 = vunpack.c.h.b16 %v712
      %v1682 = vunpack.c.l.b16 %v713
      %v1683 = vunpack.c.h.b16 %v713
      %v1684 = vunpack.c.l.b16 %v714
      %v1685 = vunpack.c.h.b16 %v714
      %v1686 = vunpack.c.l.b16 %v715
      %v1687 = vunpack.c.h.b16 %v715
      %v1688 = vunpack.c.l.b16 %v716
      %v1689 = vunpack.c.h.b16 %v716
      %v1690 = vunpack.c.l.b16 %v717
      %v1691 = vunpack.c.h.b16 %v717
      %v1692 = vunpack.c.l.b16 %v718
      %v1693 = vunpack.c.h.b16 %v718
      %v1694 = vunpack.c.l.b16 %v719
      %v1695 = vunpack.c.h.b16 %v719
      %v1696 = vunpack.c.l.b16 %v720
      %v1697 = vunpack.c.h.b16 %v720
      %v1698 = vunpack.c.l.b16 %v721
      %v1699 = vunpack.c.h.b16 %v721
      %v1700 = vunpack.c.l.b16 %v722
      %v1701 = vunpack.c.h.b16 %v722
      %v1702 = vunpack.c.l.b16 %v723
      %v1703 = vunpack.c.h.b16 %v723
      %v1704 = vunpack.c.l.b16 %v724
      %v1705 = vunpack.c.h.b16 %v724
      %v1706 = vunpack.c.l.b16 %v725
      %v1707 = vunpack.c.h.b16 %v725
      %v1708 = vunpack.c.l.b16 %v726
      %v1709 = vunpack.c.h.b16 %v726
      %v1710 = vunpack.c.l.b16 %v727
      %v1711 = vunpack.c.h.b16 %v727
      %v1712 = vunpack.c.l.b16 %v728
      %v1713 = vunpack.c.h.b16 %v728
      %v1714 = vunpack.c.l.b16 %v729
      %v1715 = vunpack.c.h.b16 %v729
      %v1716 = vunpack.c.l.b16 %v730
      %v1717 = vunpack.c.h.b16 %v730
      %v1718 = vunpack.c.l.b16 %v731
      %v1719 = vunpack.c.h.b16 %v731
      %v1720 = vunpack.c.l.b16 %v732
      %v1721 = vunpack.c.h.b16 %v732
      %v1722 = vunpack.c.l.b16 %v733
      %v1723 = vunpack.c.h.b16 %v733
      %v1724 = vunpack.c.l.b16 %v734
      %v1725 = vunpack.c.h.b16 %v734
      %v1726 = vunpack.c.l.b16 %v735
      %v1727 = vunpack.c.h.b16 %v735
      %v1728 = vunpack.c.l.b16 %v736
      %v1729 = vunpack.c.h.b16 %v736
      %v1730 = vunpack.c.l.b16 %v737
      %v1731 = vunpack.c.h.b16 %v737
      %v1732 = vunpack.c.l.b16 %v738
      %v1733 = vunpack.c.h.b16 %v738
      %v1734 = vunpack.c.l.b16 %v739
      %v1735 = vunpack.c.h.b16 %v739
      %v1736 = vunpack.c.l.b16 %v740
      %v1737 = vunpack.c.h.b16 %v740
      %v1738 = vunpack.c.l.b16 %v741
      %v1739 = vunpack.c.h.b16 %v741
      %v1740 = vunpack.c.l.b16 %v742
      %v1741 = vunpack.c.h.b16 %v742
      %v1742 = vunpack.c.l.b16 %v743
      %v1743 = vunpack.c.h.b16 %v743
      %v1744 = vunpack.c.l.b16 %v744
      %v1745 = vunpack.c.h.b16 %v744
      %v1746 = vunpack.c.l.b16 %v745
      %v1747 = vunpack.c.h.b16 %v745
      %v1748 = vunpack.c.l.b16 %v746
      %v1749 = vunpack.c.h.b16 %v746
      %v1750 = vunpack.c.l.b16 %v747
      %v1751 = vunpack.c.h.b16 %v747
      %v1752 = vunpack.c.l.b16 %v748
      %v1753 = vunpack.c.h.b16 %v748
      %v1754 = vunpack.c.l.b16 %v749
      %v1755 = vunpack.c.h.b16 %v749
      %v1756 = vunpack.c.l.b16 %v750
      %v1757 = vunpack.c.h.b16 %v750
      %v1758 = vunpack.c.l.b16 %v751
      %v1759 = vunpack.c.h.b16 %v751
      %v1760 = vunpack.c.l.b16 %v752
      %v1761 = vunpack.c.h.b16 %v752
      %v1762 = vunpack.c.l.b16 %v753
      %v1763 = vunpack.c.h.b16 %v753
      %v1764 = vunpack.c.l.b16 %v754
      %v1765 = vunpack.c.h.b16 %v754
      %v1766 = vunpack.c.l.b16 %v755
      %v1767 = vunpack.c.h.b16 %v755
      %v1768 = vunpack.c.l.b16 %v756
      %v1769 = vunpack.c.h.b16 %v756
      %v1770 = vunpack.c.l.b16 %v757
      %v1771 = vunpack.c.h.b16 %v757
      %v1772 = vunpack.c.l.b16 %v758
      %v1773 = vunpack.c.h.b16 %v758
      %v1774 = vunpack.c.l.b16 %v759
      %v1775 = vunpack.c.h.b16 %v759
      %v1776 = vunpack.c.l.b16 %v760
      %v1777 = vunpack.c.h.b16 %v760
      %v1778 = vunpack.c.l.b16 %v761
      %v1779 = vunpack.c.h.b16 %v761
      %v1780 = vunpack.c.l.b16 %v762
      %v1781 = vunpack.c.h.b16 %v762
      %v1782 = vunpack.c.l.b16 %v763
      %v1783 = vunpack.c.h.b16 %v763
      %v1784 = vunpack.c.l.b16 %v764
      %v1785 = vunpack.c.h.b16 %v764
      %v1786 = vunpack.c.l.b16 %v765
      %v1787 = vunpack.c.h.b16 %v765
      %v1788 = vunpack.c.l.b16 %v766
      %v1789 = vunpack.c.h.b16 %v766
      %v1790 = vunpack.c.l.b16 %v767
      %v1791 = vunpack.c.h.b16 %v767
      %v1792 = vunpack.c.l.b16 %v768
      %v1793 = vunpack.c.h.b16 %v768
      %v1794 = vunpack.c.l.b16 %v769
      %v1795 = vunpack.c.h.b16 %v769
      %v1796 = vunpack.c.l.b16 %v770
      %v1797 = vunpack.c.h.b16 %v770
      %v1798 = vunpack.c.l.b16 %v771
      %v1799 = vunpack.c.h.b16 %v771
      %v1800 = vunpack.c.l.b16 %v772
      %v1801 = vunpack.c.h.b16 %v772
      %v1802 = vunpack.c.l.b16 %v773
      %v1803 = vunpack.c.h.b16 %v773
      %v1804 = vunpack.c.l.b16 %v774
      %v1805 = vunpack.c.h.b16 %v774
      %v1806 = vunpack.c.l.b16 %v775
      %v1807 = vunpack.c.h.b16 %v775
      %v1808 = vunpack.c.l.b16 %v776
      %v1809 = vunpack.c.h.b16 %v776
      %v1810 = vunpack.c.l.b16 %v777
      %v1811 = vunpack.c.h.b16 %v777
      %v1812 = vunpack.c.l.b16 %v778
      %v1813 = vunpack.c.h.b16 %v778
      %v1814 = vunpack.c.l.b16 %v779
      %v1815 = vunpack.c.h.b16 %v779
      %v1816 = vunpack.c.l.b16 %v780
      %v1817 = vunpack.c.h.b16 %v780
      %v1818 = vunpack.c.l.b16 %v781
      %v1819 = vunpack.c.h.b16 %v781
      %v1820 = vunpack.c.l.b16 %v782
      %v1821 = vunpack.c.h.b16 %v782
      %v1822 = vunpack.c.l.b16 %v783
      %v1823 = vunpack.c.h.b16 %v783
      %v1824 = vunpack.c.l.b16 %v784
      %v1825 = vunpack.c.h.b16 %v784
      %v1826 = vunpack.c.l.b16 %v785
      %v1827 = vunpack.c.h.b16 %v785
      %v1828 = vunpack.c.l.b16 %v786
      %v1829 = vunpack.c.h.b16 %v786
      %v1830 = vunpack.c.l.b16 %v787
      %v1831 = vunpack.c.h.b16 %v787
      %v1832 = vunpack.c.l.b16 %v788
      %v1833 = vunpack.c.h.b16 %v788
      %v1834 = vunpack.c.l.b16 %v789
      %v1835 = vunpack.c.h.b16 %v789
      %v1836 = vunpack.c.l.b16 %v790
      %v1837 = vunpack.c.h.b16 %v790
      %v1838 = vunpack.c.l.b16 %v791
      %v1839 = vunpack.c.h.b16 %v791
      %v1840 = vunpack.c.l.b16 %v792
      %v1841 = vunpack.c.h.b16 %v792
      %v1842 = vunpack.c.l.b16 %v793
      %v1843 = vunpack.c.h.b16 %v793
      %v1844 = vunpack.c.l.b16 %v794
      %v1845 = vunpack.c.h.b16 %v794
      %v1846 = vunpack.c.l.b16 %v795
      %v1847 = vunpack.c.h.b16 %v795
      %v1848 = vunpack.c.l.b16 %v796
      %v1849 = vunpack.c.h.b16 %v796
      %v1850 = vunpack.c.l.b16 %v797
      %v1851 = vunpack.c.h.b16 %v797
      %v1852 = vunpack.c.l.b16 %v798
      %v1853 = vunpack.c.h.b16 %v798
      %v1854 = vunpack.c.l.b16 %v799
      %v1855 = vunpack.c.h.b16 %v799
      %v1856 = vunpack.c.l.b16 %v800
      %v1857 = vunpack.c.h.b16 %v800
      %v1858 = vunpack.c.l.b16 %v801
      %v1859 = vunpack.c.h.b16 %v801
      %v1860 = vunpack.c.l.b16 %v802
      %v1861 = vunpack.c.h.b16 %v802
      %v1862 = vunpack.c.l.b16 %v803
      %v1863 = vunpack.c.h.b16 %v803
      %v1864 = vunpack.c.l.b16 %v804
      %v1865 = vunpack.c.h.b16 %v804
      %v1866 = vunpack.c.l.b16 %v805
      %v1867 = vunpack.c.h.b16 %v805
      %v1868 = vunpack.c.l.b16 %v806
      %v1869 = vunpack.c.h.b16 %v806
      %v1870 = vunpack.c.l.b16 %v807
      %v1871 = vunpack.c.h.b16 %v807
      %v1872 = vunpack.c.l.b16 %v808
      %v1873 = vunpack.c.h.b16 %v808
      %v1874 = vunpack.c.l.b16 %v809
      %v1875 = vunpack.c.h.b16 %v809
      %v1876 = vunpack.c.l.b16 %v810
      %v1877 = vunpack.c.h.b16 %v810
      %v1878 = vunpack.c.l.b16 %v811
      %v1879 = vunpack.c.h.b16 %v811
      %v1880 = vunpack.c.l.b16 %v812
      %v1881 = vunpack.c.h.b16 %v812
      %v1882 = vunpack.c.l.b16 %v813
      %v1883 = vunpack.c.h.b16 %v813
      %v1884 = vunpack.c.l.b16 %v814
      %v1885 = vunpack.c.h.b16 %v814
      %v1886 = vunpack.c.l.b16 %v815
      %v1887 = vunpack.c.h.b16 %v815
      %v1888 = vunpack.c.l.b16 %v816
      %v1889 = vunpack.c.h.b16 %v816
      %v1890 = vunpack.c.l.b16 %v817
      %v1891 = vunpack.c.h.b16 %v817
      %v1892 = vunpack.c.l.b16 %v818
      %v1893 = vunpack.c.h.b16 %v818
      %v1894 = vunpack.c.l.b16 %v819
      %v1895 = vunpack.c.h.b16 %v819
      %v1896 = vunpack.c.l.b16 %v820
      %v1897 = vunpack.c.h.b16 %v820
      %v1898 = vunpack.c.l.b16 %v821
      %v1899 = vunpack.c.h.b16 %v821
      %v1900 = vunpack.c.l.b16 %v822
      %v1901 = vunpack.c.h.b16 %v822
      %v1902 = vunpack.c.l.b16 %v823
      %v1903 = vunpack.c.h.b16 %v823
      %v1904 = vunpack.c.l.b16 %v824
      %v1905 = vunpack.c.h.b16 %v824
      %v1906 = vunpack.c.l.b16 %v825
      %v1907 = vunpack.c.h.b16 %v825
      %v1908 = vunpack.c.l.b16 %v826
      %v1909 = vunpack.c.h.b16 %v826
      %v1910 = vunpack.c.l.b16 %v827
      %v1911 = vunpack.c.h.b16 %v827
      %v1912 = vunpack.c.l.b16 %v828
      %v1913 = vunpack.c.h.b16 %v828
      %v1914 = vunpack.c.l.b16 %v829
      %v1915 = vunpack.c.h.b16 %v829
      %v1916 = vunpack.c.l.b16 %v830
      %v1917 = vunpack.c.h.b16 %v830
      %v1918 = vunpack.c.l.b16 %v831
      %v1919 = vunpack.c.h.b16 %v831
      %v1920 = vunpack.c.l.b16 %v832
      %v1921 = vunpack.c.h.b16 %v832
      %v1922 = vunpack.c.l.b16 %v833
      %v1923 = vunpack.c.h.b16 %v833
      %v1924 = vunpack.c.l.b16 %v834
      %v1925 = vunpack.c.h.b16 %v834
      %v1926 = vunpack.c.l.b16 %v835
      %v1927 = vunpack.c.h.b16 %v835
      %v1928 = vunpack.c.l.b16 %v836
      %v1929 = vunpack.c.h.b16 %v836
      %v1930 = vunpack.c.l.b16 %v837
      %v1931 = vunpack.c.h.b16 %v837
      %v1932 = vunpack.c.l.b16 %v838
      %v1933 = vunpack.c.h.b16 %v838
      %v1934 = vunpack.c.l.b16 %v839
      %v1935 = vunpack.c.h.b16 %v839
      %v1936 = vunpack.c.l.b16 %v840
      %v1937 = vunpack.c.h.b16 %v840
      %v1938 = vunpack.c.l.b16 %v841
      %v1939 = vunpack.c.h.b16 %v841
      %v1940 = vunpack.c.l.b16 %v842
      %v1941 = vunpack.c.h.b16 %v842
      %v1942 = vunpack.c.l.b16 %v843
      %v1943 = vunpack.c.h.b16 %v843
      %v1944 = vunpack.c.l.b16 %v844
      %v1945 = vunpack.c.h.b16 %v844
      %v1946 = vunpack.c.l.b16 %v845
      %v1947 = vunpack.c.h.b16 %v845
      %v1948 = vunpack.c.l.b16 %v846
      %v1949 = vunpack.c.h.b16 %v846
      %v1950 = vunpack.c.l.b16 %v847
      %v1951 = vunpack.c.h.b16 %v847
      %v1952 = vunpack.c.l.b16 %v848
      %v1953 = vunpack.c.h.b16 %v848
      %v1954 = vunpack.c.l.b16 %v849
      %v1955 = vunpack.c.h.b16 %v849
      %v1956 = vunpack.c.l.b16 %v850
      %v1957 = vunpack.c.h.b16 %v850
      %v1958 = vunpack.c.l.b16 %v851
      %v1959 = vunpack.c.h.b16 %v851
      %v1960 = vunpack.c.l.b16 %v852
      %v1961 = vunpack.c.h.b16 %v852
      %v1962 = vunpack.c.l.b16 %v853
      %v1963 = vunpack.c.h.b16 %v853
      %v1964 = vunpack.c.l.b16 %v854
      %v1965 = vunpack.c.h.b16 %v854
      %v1966 = vunpack.c.l.b16 %v855
      %v1967 = vunpack.c.h.b16 %v855
      %v1968 = vunpack.c.l.b16 %v856
      %v1969 = vunpack.c.h.b16 %v856
      %v1970 = vunpack.c.l.b16 %v857
      %v1971 = vunpack.c.h.b16 %v857
      %v1972 = vunpack.c.l.b16 %v858
      %v1973 = vunpack.c.h.b16 %v858
      %v1974 = vunpack.c.l.b16 %v859
      %v1975 = vunpack.c.h.b16 %v859
      %v1976 = vunpack.c.l.b16 %v860
      %v1977 = vunpack.c.h.b16 %v860
      %v1978 = vunpack.c.l.b16 %v861
      %v1979 = vunpack.c.h.b16 %v861
      %v1980 = vunpack.c.l.b16 %v862
      %v1981 = vunpack.c.h.b16 %v862
      %v1982 = vunpack.c.l.b16 %v863
      %v1983 = vunpack.c.h.b16 %v863
      %v1984 = vunpack.c.l.b16 %v864
      %v1985 = vunpack.c.h.b16 %v864
      %v1986 = vunpack.c.l.b16 %v865
      %v1987 = vunpack.c.h.b16 %v865
      %v1988 = vunpack.c.l.b16 %v866
      %v1989 = vunpack.c.h.b16 %v866
      %v1990 = vunpack.c.l.b16 %v867
      %v1991 = vunpack.c.h.b16 %v867
      %v1992 = vunpack.c.l.b16 %v868
      %v1993 = vunpack.c.h.b16 %v868
      %v1994 = vunpack.c.l.b16 %v869
      %v1995 = vunpack.c.h.b16 %v869
      %v1996 = vunpack.c.l.b16 %v870
      %v1997 = vunpack.c.h.b16 %v870
      %v1998 = vunpack.c.l.b16 %v871
      %v1999 = vunpack.c.h.b16 %v871
      %v2000 = vunpack.c.l.b16 %v872
      %v2001 = vunpack.c.h.b16 %v872
      %v2002 = vunpack.c.l.b16 %v873
      %v2003 = vunpack.c.h.b16 %v873
      %v2004 = vunpack.c.l.b16 %v874
      %v2005 = vunpack.c.h.b16 %v874
      %v2006 = vunpack.c.l.b16 %v875
      %v2007 = vunpack.c.h.b16 %v875
      %v2008 = vunpack.c.l.b16 %v876
      %v2009 = vunpack.c.h.b16 %v876
      %v2010 = vunpack.c.l.b16 %v877
      %v2011 = vunpack.c.h.b16 %v877
      %v2012 = vunpack.c.l.b16 %v878
      %v2013 = vunpack.c.h.b16 %v878
      %v2014 = vunpack.c.l.b16 %v879
      %v2015 = vunpack.c.h.b16 %v879
      %v2016 = vunpack.c.l.b16 %v880
      %v2017 = vunpack.c.h.b16 %v880
      %v2018 = vunpack.c.l.b16 %v881
      %v2019 = vunpack.c.h.b16 %v881
      %v2020 = vunpack.c.l.b16 %v882
      %v2021 = vunpack.c.h.b16 %v882
      %v2022 = vunpack.c.l.b16 %v883
      %v2023 = vunpack.c.h.b16 %v883
      %v2024 = vunpack.c.l.b16 %v884
      %v2025 = vunpack.c.h.b16 %v884
      %v2026 = vunpack.c.l.b16 %v885
      %v2027 = vunpack.c.h.b16 %v885
      %v2028 = vunpack.c.l.b16 %v886
      %v2029 = vunpack.c.h.b16 %v886
      %v2030 = vunpack.c.l.b16 %v887
      %v2031 = vunpack.c.h.b16 %v887
      %v2032 = vunpack.c.l.b16 %v888
      %v2033 = vunpack.c.h.b16 %v888
      %v2034 = vunpack.c.l.b16 %v889
      %v2035 = vunpack.c.h.b16 %v889
      %v2036 = vunpack.c.l.b16 %v890
      %v2037 = vunpack.c.h.b16 %v890
      %v2038 = vunpack.c.l.b16 %v891
      %v2039 = vunpack.c.h.b16 %v891
      %v2040 = vunpack.c.l.b16 %v892
      %v2041 = vunpack.c.h.b16 %v892
      %v2042 = vunpack.c.l.b16 %v893
      %v2043 = vunpack.c.h.b16 %v893
      %v2044 = vunpack.c.l.b16 %v894
      %v2045 = vunpack.c.h.b16 %v894
      %v2046 = vunpack.c.l.b16 %v895
      %v2047 = vunpack.c.h.b16 %v895
      %v2048 = vpack.c.b16 %v1288, %v1280
      %v2049 = vpack.c.b16 %v1289, %v1281
      %v2050 = vpack.c.b16 %v1290, %v1282
      %v2051 = vpack.c.b16 %v1291, %v1283
      %v2052 = vpack.c.b16 %v1292, %v1284
      %v2053 = vpack.c.b16 %v1293, %v1285
      %v2054 = vpack.c.b16 %v1294, %v1286
      %v2055 = vpack.c.b16 %v1295, %v1287
      %v2056 = vpack.c.b16 %v1304, %v1296
      %v2057 = vpack.c.b16 %v1305, %v1297
      %v2058 = vpack.c.b16 %v1306, %v1298
      %v2059 = vpack.c.b16 %v1307, %v1299
      %v2060 = vpack.c.b16 %v1308, %v1300
      %v2061 = vpack.c.b16 %v1309, %v1301
      %v2062 = vpack.c.b16 %v1310, %v1302
      %v2063 = vpack.c.b16 %v1311, %v1303
      %v2064 = vpack.c.b16 %v1320, %v1312
      %v2065 = vpack.c.b16 %v1321, %v1313
      %v2066 = vpack.c.b16 %v1322, %v1314
      %v2067 = vpack.c.b16 %v1323, %v1315
      %v2068 = vpack.c.b16 %v1324, %v1316
      %v2069 = vpack.c.b16 %v1325, %v1317
      %v2070 = vpack.c.b16 %v1326, %v1318
      %v2071 = vpack.c.b16 %v1327, %v1319
      %v2072 = vpack.c.b16 %v1336, %v1328
      %v2073 = vpack.c.b16 %v1337, %v1329
      %v2074 = vpack.c.b16 %v1338, %v1330
      %v2075 = vpack.c.b16 %v1339, %v1331
      %v2076 = vpack.c.b16 %v1340, %v1332
      %v2077 = vpack.c.b16 %v1341, %v1333
      %v2078 = vpack.c.b16 %v1342, %v1334
      %v2079 = vpack.c.b16 %v1343, %v1335
      %v2080 = vpack.c.b16 %v1352, %v1344
      %v2081 = vpack.c.b16 %v1353, %v1345
      %v2082 = vpack.c.b16 %v1354, %v1346
      %v2083 = vpack.c.b16 %v1355, %v1347
      %v2084 = vpack.c.b16 %v1356, %v1348
      %v2085 = vpack.c.b16 %v1357, %v1349
      %v2086 = vpack.c.b16 %v1358, %v1350
      %v2087 = vpack.c.b16 %v1359, %v1351
      %v2088 = vpack.c.b16 %v1368, %v1360
      %v2089 = vpack.c.b16 %v1369, %v1361
      %v2090 = vpack.c.b16 %v1370, %v1362
      %v2091 = vpack.c.b16 %v1371, %v1363
      %v2092 = vpack.c.b16 %v1372, %v1364
      %v2093 = vpack.c.b16 %v1373, %v1365
      %v2094 = vpack.c.b16 %v1374, %v1366
      %v2095 = vpack.c.b16 %v1375, %v1367
      %v2096 = vpack.c.b16 %v1384, %v1376
      %v2097 = vpack.c.b16 %v1385, %v1377
      %v2098 = vpack.c.b16 %v1386, %v1378
      %v2099 = vpack.c.b16 %v1387, %v1379
      %v2100 = vpack.c.b16 %v1388, %v1380
      %v2101 = vpack.c.b16 %v1389, %v1381
      %v2102 = vpack.c.b16 %v1390, %v1382
      %v2103 = vpack.c.b16 %v1391, %v1383
      %v2104 = vpack.c.b16 %v1400, %v1392
      %v2105 = vpack.c.b16 %v1401, %v1393
      %v2106 = vpack.c.b16 %v1402, %v1394
      %v2107 = vpack.c.b16 %v1403, %v1395
      %v2108 = vpack.c.b16 %v1404, %v1396
      %v2109 = vpack.c.b16 %v1405, %v1397
      %v2110 = vpack.c.b16 %v1406, %v1398
      %v2111 = vpack.c.b16 %v1407, %v1399
      %v2112 = vpack.c.b16 %v1416, %v1408
      %v2113 = vpack.c.b16 %v1417, %v1409
      %v2114 = vpack.c.b16 %v1418, %v1410
      %v2115 = vpack.c.b16 %v1419, %v1411
      %v2116 = vpack.c.b16 %v1420, %v1412
      %v2117 = vpack.c.b16 %v1421, %v1413
      %v2118 = vpack.c.b16 %v1422, %v1414
      %v2119 = vpack.c.b16 %v1423, %v1415
      %v2120 = vpack.c.b16 %v1432, %v1424
      %v2121 = vpack.c.b16 %v1433, %v1425
      %v2122 = vpack.c.b16 %v1434, %v1426
      %v2123 = vpack.c.b16 %v1435, %v1427
      %v2124 = vpack.c.b16 %v1436, %v1428
      %v2125 = vpack.c.b16 %v1437, %v1429
      %v2126 = vpack.c.b16 %v1438, %v1430
      %v2127 = vpack.c.b16 %v1439, %v1431
      %v2128 = vpack.c.b16 %v1448, %v1440
      %v2129 = vpack.c.b16 %v1449, %v1441
      %v2130 = vpack.c.b16 %v1450, %v1442
      %v2131 = vpack.c.b16 %v1451, %v1443
      %v2132 = vpack.c.b16 %v1452, %v1444
      %v2133 = vpack.c.b16 %v1453, %v1445
      %v2134 = vpack.c.b16 %v1454, %v1446
      %v2135 = vpack.c.b16 %v1455, %v1447
      %v2136 = vpack.c.b16 %v1464, %v1456
      %v2137 = vpack.c.b16 %v1465, %v1457
      %v2138 = vpack.c.b16 %v1466, %v1458
      %v2139 = vpack.c.b16 %v1467, %v1459
      %v2140 = vpack.c.b16 %v1468, %v1460
      %v2141 = vpack.c.b16 %v1469, %v1461
      %v2142 = vpack.c.b16 %v1470, %v1462
      %v2143 = vpack.c.b16 %v1471, %v1463
      %v2144 = vpack.c.b16 %v1480, %v1472
      %v2145 = vpack.c.b16 %v1481, %v1473
      %v2146 = vpack.c.b16 %v1482, %v1474
      %v2147 = vpack.c.b16 %v1483, %v1475
      %v2148 = vpack.c.b16 %v1484, %v1476
      %v2149 = vpack.c.b16 %v1485, %v1477
      %v2150 = vpack.c.b16 %v1486, %v1478
      %v2151 = vpack.c.b16 %v1487, %v1479
      %v2152 = vpack.c.b16 %v1496, %v1488
      %v2153 = vpack.c.b16 %v1497, %v1489
      %v2154 = vpack.c.b16 %v1498, %v1490
      %v2155 = vpack.c.b16 %v1499, %v1491
      %v2156 = vpack.c.b16 %v1500, %v1492
      %v2157 = vpack.c.b16 %v1501, %v1493
      %v2158 = vpack.c.b16 %v1502, %v1494
      %v2159 = vpack.c.b16 %v1503, %v1495
      %v2160 = vpack.c.b16 %v1512, %v1504
      %v2161 = vpack.c.b16 %v1513, %v1505
      %v2162 = vpack.c.b16 %v1514, %v1506
      %v2163 = vpack.c.b16 %v1515, %v1507
      %v2164 = vpack.c.b16 %v1516, %v1508
      %v2165 = vpack.c.b16 %v1517, %v1509
      %v2166 = vpack.c.b16 %v1518, %v1510
      %v2167 = vpack.c.b16 %v1519, %v1511
      %v2168 = vpack.c.b16 %v1528, %v1520
      %v2169 = vpack.c.b16 %v1529, %v1521
      %v2170 = vpack.c.b16 %v1530, %v1522
      %v2171 = vpack.c.b16 %v1531, %v1523
      %v2172 = vpack.c.b16 %v1532, %v1524
      %v2173 = vpack.c.b16 %v1533, %v1525
      %v2174 = vpack.c.b16 %v1534, %v1526
      %v2175 = vpack.c.b16 %v1535, %v1527
      %v2176 = vpack.c.b16 %v1544, %v1536
      %v2177 = vpack.c.b16 %v1545, %v1537
      %v2178 = vpack.c.b16 %v1546, %v1538
      %v2179 = vpack.c.b16 %v1547, %v1539
      %v2180 = vpack.c.b16 %v1548, %v1540
      %v2181 = vpack.c.b16 %v1549, %v1541
      %v2182 = vpack.c.b16 %v1550, %v1542
      %v2183 = vpack.c.b16 %v1551, %v1543
      %v2184 = vpack.c.b16 %v1560, %v1552
      %v2185 = vpack.c.b16 %v1561, %v1553
      %v2186 = vpack.c.b16 %v1562, %v1554
      %v2187 = vpack.c.b16 %v1563, %v1555
      %v2188 = vpack.c.b16 %v1564, %v1556
      %v2189 = vpack.c.b16 %v1565, %v1557
      %v2190 = vpack.c.b16 %v1566, %v1558
      %v2191 = vpack.c.b16 %v1567, %v1559
      %v2192 = vpack.c.b16 %v1576, %v1568
      %v2193 = vpack.c.b16 %v1577, %v1569
      %v2194 = vpack.c.b16 %v1578, %v1570
      %v2195 = vpack.c.b16 %v1579, %v1571
      %v2196 = vpack.c.b16 %v1580, %v1572
      %v2197 = vpack.c.b16 %v1581, %v1573
      %v2198 = vpack.c.b16 %v1582, %v1574
      %v2199 = vpack.c.b16 %v1583, %v1575
      %v2200 = vpack.c.b16 %v1592, %v1584
      %v2201 = vpack.c.b16 %v1593, %v1585
      %v2202 = vpack.c.b16 %v1594, %v1586
      %v2203 = vpack.c.b16 %v1595, %v1587
      %v2204 = vpack.c.b16 %v1596, %v1588
      %v2205 = vpack.c.b16 %v1597, %v1589
      %v2206 = vpack.c.b16 %v1598, %v1590
      %v2207 = vpack.c.b16 %v1599, %v1591
      %v2208 = vpack.c.b16 %v1608, %v1600
      %v2209 = vpack.c.b16 %v1609, %v1601
      %v2210 = vpack.c.b16 %v1610, %v1602
      %v2211 = vpack.c.b16 %v1611, %v1603
      %v2212 = vpack.c.b16 %v1612, %v1604
      %v2213 = vpack.c.b16 %v1613, %v1605
      %v2214 = vpack.c.b16 %v1614, %v1606
      %v2215 = vpack.c.b16 %v1615, %v1607
      %v2216 = vpack.c.b16 %v1624, %v1616
      %v2217 = vpack.c.b16 %v1625, %v1617
      %v2218 = vpack.c.b16 %v1626, %v1618
      %v2219 = vpack.c.b16 %v1627, %v1619
      %v2220 = vpack.c.b16 %v1628, %v1620
      %v2221 = vpack.c.b16 %v1629, %v1621
      %v2222 = vpack.c.b16 %v1630, %v1622
      %v2223 = vpack.c.b16 %v1631, %v1623
      %v2224 = vpack.c.b16 %v1640, %v1632
      %v2225 = vpack.c.b16 %v1641, %v1633
      %v2226 = vpack.c.b16 %v1642, %v1634
      %v2227 = vpack.c.b16 %v1643, %v1635
      %v2228 = vpack.c.b16 %v1644, %v1636
      %v2229 = vpack.c.b16 %v1645, %v1637
      %v2230 = vpack.c.b16 %v1646, %v1638
      %v2231 = vpack.c.b16 %v1647, %v1639
      %v2232 = vpack.c.b16 %v1656, %v1648
      %v2233 = vpack.c.b16 %v1657, %v1649
      %v2234 = vpack.c.b16 %v1658, %v1650
      %v2235 = vpack.c.b16 %v1659, %v1651
      %v2236 = vpack.c.b16 %v1660, %v1652
      %v2237 = vpack.c.b16 %v1661, %v1653
      %v2238 = vpack.c.b16 %v1662, %v1654
      %v2239 = vpack.c.b16 %v1663, %v1655
      %v2240 = vpack.c.b16 %v1672, %v1664
      %v2241 = vpack.c.b16 %v1673, %v1665
      %v2242 = vpack.c.b16 %v1674, %v1666
      %v2243 = vpack.c.b16 %v1675, %v1667
      %v2244 = vpack.c.b16 %v1676, %v1668
      %v2245 = vpack.c.b16 %v1677, %v1669
      %v2246 = vpack.c.b16 %v1678, %v1670
      %v2247 = vpack.c.b16 %v1679, %v1671
      %v2248 = vpack.c.b16 %v1688, %v1680
      %v2249 = vpack.c.b16 %v1689, %v1681
      %v2250 = vpack.c.b16 %v1690, %v1682
      %v2251 = vpack.c.b16 %v1691, %v1683
      %v2252 = vpack.c.b16 %v1692, %v1684
      %v2253 = vpack.c.b16 %v1693, %v1685
      %v2254 = vpack.c.b16 %v1694, %v1686
      %v2255 = vpack.c.b16 %v1695, %v1687
      %v2256 = vpack.c.b16 %v1704, %v1696
      %v2257 = vpack.c.b16 %v1705, %v1697
      %v2258 = vpack.c.b16 %v1706, %v1698
      %v2259 = vpack.c.b16 %v1707, %v1699
      %v2260 = vpack.c.b16 %v1708, %v1700
      %v2261 = vpack.c.b16 %v1709, %v1701
      %v2262 = vpack.c.b16 %v1710, %v1702
      %v2263 = vpack.c.b16 %v1711, %v1703
      %v2264 = vpack.c.b16 %v1720, %v1712
      %v2265 = vpack.c.b16 %v1721, %v1713
      %v2266 = vpack.c.b16 %v1722, %v1714
      %v2267 = vpack.c.b16 %v1723, %v1715
      %v2268 = vpack.c.b16 %v1724, %v1716
      %v2269 = vpack.c.b16 %v1725, %v1717
      %v2270 = vpack.c.b16 %v1726, %v1718
      %v2271 = vpack.c.b16 %v1727, %v1719
      %v2272 = vpack.c.b16 %v1736, %v1728
      %v2273 = vpack.c.b16 %v1737, %v1729
      %v2274 = vpack.c.b16 %v1738, %v1730
      %v2275 = vpack.c.b16 %v1739, %v1731
      %v2276 = vpack.c.b16 %v1740, %v1732
      %v2277 = vpack.c.b16 %v1741, %v1733
      %v2278 = vpack.c.b16 %v1742, %v1734
      %v2279 = vpack.c.b16 %v1743, %v1735
      %v2280 = vpack.c.b16 %v1752, %v1744
      %v2281 = vpack.c.b16 %v1753, %v1745
      %v2282 = vpack.c.b16 %v1754, %v1746
      %v2283 = vpack.c.b16 %v1755, %v1747
      %v2284 = vpack.c.b16 %v1756, %v1748
      %v2285 = vpack.c.b16 %v1757, %v1749
      %v2286 = vpack.c.b16 %v1758, %v1750
      %v2287 = vpack.c.b16 %v1759, %v1751
      %v2288 = vpack.c.b16 %v1768, %v1760
      %v2289 = vpack.c.b16 %v1769, %v1761
      %v2290 = vpack.c.b16 %v1770, %v1762
      %v2291 = vpack.c.b16 %v1771, %v1763
      %v2292 = vpack.c.b16 %v1772, %v1764
      %v2293 = vpack.c.b16 %v1773, %v1765
      %v2294 = vpack.c.b16 %v1774, %v1766
      %v2295 = vpack.c.b16 %v1775, %v1767
      %v2296 = vpack.c.b16 %v1784, %v1776
      %v2297 = vpack.c.b16 %v1785, %v1777
      %v2298 = vpack.c.b16 %v1786, %v1778
      %v2299 = vpack.c.b16 %v1787, %v1779
      %v2300 = vpack.c.b16 %v1788, %v1780
      %v2301 = vpack.c.b16 %v1789, %v1781
      %v2302 = vpack.c.b16 %v1790, %v1782
      %v2303 = vpack.c.b16 %v1791, %v1783
      %v2304 = vpack.c.b16 %v1800, %v1792
      %v2305 = vpack.c.b16 %v1801, %v1793
      %v2306 = vpack.c.b16 %v1802, %v1794
      %v2307 = vpack.c.b16 %v1803, %v1795
      %v2308 = vpack.c.b16 %v1804, %v1796
      %v2309 = vpack.c.b16 %v1805, %v1797
      %v2310 = vpack.c.b16 %v1806, %v1798
      %v2311 = vpack.c.b16 %v1807, %v1799
      %v2312 = vpack.c.b16 %v1816, %v1808
      %v2313 = vpack.c.b16 %v1817, %v1809
      %v2314 = vpack.c.b16 %v1818, %v1810
      %v2315 = vpack.c.b16 %v1819, %v1811
      %v2316 = vpack.c.b16 %v1820, %v1812
      %v2317 = vpack.c.b16 %v1821, %v1813
      %v2318 = vpack.c.b16 %v1822, %v1814
      %v2319 = vpack.c.b16 %v1823, %v1815
      %v2320 = vpack.c.b16 %v1832, %v1824
      %v2321 = vpack.c.b16 %v1833, %v1825
      %v2322 = vpack.c.b16 %v1834, %v1826
      %v2323 = vpack.c.b16 %v1835, %v1827
      %v2324 = vpack.c.b16 %v1836, %v1828
      %v2325 = vpack.c.b16 %v1837, %v1829
      %v2326 = vpack.c.b16 %v1838, %v1830
      %v2327 = vpack.c.b16 %v1839, %v1831
      %v2328 = vpack.c.b16 %v1848, %v1840
      %v2329 = vpack.c.b16 %v1849, %v1841
      %v2330 = vpack.c.b16 %v1850, %v1842
      %v2331 = vpack.c.b16 %v1851, %v1843
      %v2332 = vpack.c.b16 %v1852, %v1844
      %v2333 = vpack.c.b16 %v1853, %v1845
      %v2334 = vpack.c.b16 %v1854, %v1846
      %v2335 = vpack.c.b16 %v1855, %v1847
      %v2336 = vpack.c.b16 %v1864, %v1856
      %v2337 = vpack.c.b16 %v1865, %v1857
      %v2338 = vpack.c.b16 %v1866, %v1858
      %v2339 = vpack.c.b16 %v1867, %v1859
      %v2340 = vpack.c.b16 %v1868, %v1860
      %v2341 = vpack.c.b16 %v1869, %v1861
      %v2342 = vpack.c.b16 %v1870, %v1862
      %v2343 = vpack.c.b16 %v1871, %v1863
      %v2344 = vpack.c.b16 %v1880, %v1872
      %v2345 = vpack.c.b16 %v1881, %v1873
      %v2346 = vpack.c.b16 %v1882, %v1874
      %v2347 = vpack.c.b16 %v1883, %v1875
      %v2348 = vpack.c.b16 %v1884, %v1876
      %v2349 = vpack.c.b16 %v1885, %v1877
      %v2350 = vpack.c.b16 %v1886, %v1878
      %v2351 = vpack.c.b16 %v1887, %v1879
      %v2352 = vpack.c.b16 %v1896, %v1888
      %v2353 = vpack.c.b16 %v1897, %v1889
      %v2354 = vpack.c.b16 %v1898, %v1890
      %v2355 = vpack.c.b16 %v1899, %v1891
      %v2356 = vpack.c.b16 %v1900, %v1892
      %v2357 = vpack.c.b16 %v1901, %v1893
      %v2358 = vpack.c.b16 %v1902, %v1894
      %v2359 = vpack.c.b16 %v1903, %v1895
      %v2360 = vpack.c.b16 %v1912, %v1904
      %v2361 = vpack.c.b16 %v1913, %v1905
      %v2362 = vpack.c.b16 %v1914, %v1906
      %v2363 = vpack.c.b16 %v1915, %v1907
      %v2364 = vpack.c.b16 %v1916, %v1908
      %v2365 = vpack.c.b16 %v1917, %v1909
      %v2366 = vpack.c.b16 %v1918, %v1910
      %v2367 = vpack.c.b16 %v1919, %v1911
      %v2368 = vpack.c.b16 %v1928, %v1920
      %v2369 = vpack.c.b16 %v1929, %v1921
      %v2370 = vpack.c.b16 %v1930, %v1922
      %v2371 = vpack.c.b16 %v1931, %v1923
      %v2372 = vpack.c.b16 %v1932, %v1924
      %v2373 = vpack.c.b16 %v1933, %v1925
      %v2374 = vpack.c.b16 %v1934, %v1926
      %v2375 = vpack.c.b16 %v1935, %v1927
      %v2376 = vpack.c.b16 %v1944, %v1936
      %v2377 = vpack.c.b16 %v1945, %v1937
      %v2378 = vpack.c.b16 %v1946, %v1938
      %v2379 = vpack.c.b16 %v1947, %v1939
      %v2380 = vpack.c.b16 %v1948, %v1940
      %v2381 = vpack.c.b16 %v1949, %v1941
      %v2382 = vpack.c.b16 %v1950, %v1942
      %v2383 = vpack.c.b16 %v1951, %v1943
      %v2384 = vpack.c.b16 %v1960, %v1952
      %v2385 = vpack.c.b16 %v1961, %v1953
      %v2386 = vpack.c.b16 %v1962, %v1954
      %v2387 = vpack.c.b16 %v1963, %v1955
      %v2388 = vpack.c.b16 %v1964, %v1956
      %v2389 = vpack.c.b16 %v1965, %v1957
      %v2390 = vpack.c.b16 %v1966, %v1958
      %v2391 = vpack.c.b16 %v1967, %v1959
      %v2392 = vpack.c.b16 %v1976, %v1968
      %v2393 = vpack.c.b16 %v1977, %v1969
      %v2394 = vpack.c.b16 %v1978, %v1970
      %v2395 = vpack.c.b16 %v1979, %v1971
      %v2396 = vpack.c.b16 %v1980, %v1972
      %v2397 = vpack.c.b16 %v1981, %v1973
      %v2398 = vpack.c.b16 %v1982, %v1974
      %v2399 = vpack.c.b16 %v1983, %v1975
      %v2400 = vpack.c.b16 %v1992, %v1984
      %v2401 = vpack.c.b16 %v1993, %v1985
      %v2402 = vpack.c.b16 %v1994, %v1986
      %v2403 = vpack.c.b16 %v1995, %v1987
      %v2404 = vpack.c.b16 %v1996, %v1988
      %v2405 = vpack.c.b16 %v1997, %v1989
      %v2406 = vpack.c.b16 %v1998, %v1990
      %v2407 = vpack.c.b16 %v1999, %v1991
      %v2408 = vpack.c.b16 %v2008, %v2000
      %v2409 = vpack.c.b16 %v2009, %v2001
      %v2410 = vpack.c.b16 %v2010, %v2002
      %v2411 = vpack.c.b16 %v2011, %v2003
      %v2412 = vpack.c.b16 %v2012, %v2004
      %v2413 = vpack.c.b16 %v2013, %v2005
      %v2414 = vpack.c.b16 %v2014, %v2006
      %v2415 = vpack.c.b16 %v2015, %v2007
      %v2416 = vpack.c.b16 %v2024, %v2016
      %v2417 = vpack.c.b16 %v2025, %v2017
      %v2418 = vpack.c.b16 %v2026, %v2018
      %v2419 = vpack.c.b16 %v2027, %v2019
      %v2420 = vpack.c.b16 %v2028, %v2020
      %v2421 = vpack.c.b16 %v2029, %v2021
      %v2422 = vpack.c.b16 %v2030, %v2022
      %v2423 = vpack.c.b16 %v2031, %v2023
      %v2424 = vpack.c.b16 %v2040, %v2032
      %v2425 = vpack.c.b16 %v2041, %v2033
      %v2426 = vpack.c.b16 %v2042, %v2034
      %v2427 = vpack.c.b16 %v2043, %v2035
      %v2428 = vpack.c.b16 %v2044, %v2036
      %v2429 = vpack.c.b16 %v2045, %v2037
      %v2430 = vpack.c.b16 %v2046, %v2038
      %v2431 = vpack.c.b16 %v2047, %v2039
      %2816 = vmatprep.subr.bf16.mxu0 %v2049
      %2817 = vmatpush1.bf16.msra.mxu0 %v2048
      %2818 = vmatprep.subr.bf16.mxu0 %v2057
      %2819 = vmatpush1.bf16.msra.mxu0 %v2056
      %2820 = vmatprep.subr.bf16.mxu0 %v2065
      %2821 = vmatpush1.bf16.msra.mxu0 %v2064
      %2822 = vmatprep.subr.bf16.mxu0 %v2073
      %2823 = vmatpush1.bf16.msra.mxu0 %v2072
      %2824 = vmatprep.subr.bf16.mxu0 %v2081
      %2825 = vmatpush1.bf16.msra.mxu0 %v2080
      %2826 = vmatprep.subr.bf16.mxu0 %v2089
      %2827 = vmatpush1.bf16.msra.mxu0 %v2088
      %2828 = vmatprep.subr.bf16.mxu0 %v2097
      %2829 = vmatpush1.bf16.msra.mxu0 %v2096
      %2830 = vmatprep.subr.bf16.mxu0 %v2105
      %2831 = vmatpush1.bf16.msra.mxu0 %v2104
      %2832 = vmatprep.subr.bf16.mxu0 %v2113
      %2833 = vmatpush1.bf16.msra.mxu0 %v2112
      %2834 = vmatprep.subr.bf16.mxu0 %v2121
      %2835 = vmatpush1.bf16.msra.mxu0 %v2120
      %2836 = vmatprep.subr.bf16.mxu0 %v2129
      %2837 = vmatpush1.bf16.msra.mxu0 %v2128
      %2838 = vmatprep.subr.bf16.mxu0 %v2137
      %2839 = vmatpush1.bf16.msra.mxu0 %v2136
      %2840 = vmatprep.subr.bf16.mxu0 %v2145
      %2841 = vmatpush1.bf16.msra.mxu0 %v2144
      %2842 = vmatprep.subr.bf16.mxu0 %v2153
      %2843 = vmatpush1.bf16.msra.mxu0 %v2152
      %2844 = vmatprep.subr.bf16.mxu0 %v2161
      %2845 = vmatpush1.bf16.msra.mxu0 %v2160
      %2846 = vmatprep.subr.bf16.mxu0 %v2169
      %2847 = vmatpush1.bf16.msra.mxu0 %v2168
      %2848 = vmatprep.mubr.bf16.mxu0 %v469
      %2849 = vmatmul.mubr.bf16.gmra.mrb[0].mxu0 %v468
      %v2850 = vpop.f32.mrb[0].mxu0
      %v2851 = vadd.f32 0.0, %v2850
      %v2852 = vpop.f32.mrb[0].mxu0
      %v2853 = vadd.f32 0.0, %v2852
      %v2854 = vpop.f32.mrb[0].mxu0
      %v2855 = vadd.f32 0.0, %v2854
      %v2856 = vpop.f32.mrb[0].mxu0
      %v2857 = vadd.f32 0.0, %v2856
      %2858 = vmatprep.mubr.bf16.mxu0 %v475
      %2859 = vmatmul.mubr.bf16.gmra.mrb[0].mxu0 %v474
      %v2860 = vpop.f32.mrb[0].mxu0
      %v2861 = vadd.f32 0.0, %v2860
      %v2862 = vpop.f32.mrb[0].mxu0
      %v2863 = vadd.f32 0.0, %v2862
      %v2864 = vpop.f32.mrb[0].mxu0
      %v2865 = vadd.f32 0.0, %v2864
      %v2866 = vpop.f32.mrb[0].mxu0
      %v2867 = vadd.f32 0.0, %v2866
      %2868 = vdwg.mxu0
      %2869 = vmatprep.subr.bf16.mxu0 %v2177
      %2870 = vmatpush1.bf16.msra.mxu0 %v2176
      %2871 = vmatprep.subr.bf16.mxu0 %v2185
      %2872 = vmatpush1.bf16.msra.mxu0 %v2184
      %2873 = vmatprep.subr.bf16.mxu0 %v2193
      %2874 = vmatpush1.bf16.msra.mxu0 %v2192
      %2875 = vmatprep.subr.bf16.mxu0 %v2201
      %2876 = vmatpush1.bf16.msra.mxu0 %v2200
      %2877 = vmatprep.subr.bf16.mxu0 %v2209
      %2878 = vmatpush1.bf16.msra.mxu0 %v2208
      %2879 = vmatprep.subr.bf16.mxu0 %v2217
      %2880 = vmatpush1.bf16.msra.mxu0 %v2216
      %2881 = vmatprep.subr.bf16.mxu0 %v2225
      %2882 = vmatpush1.bf16.msra.mxu0 %v2224
      %2883 = vmatprep.subr.bf16.mxu0 %v2233
      %2884 = vmatpush1.bf16.msra.mxu0 %v2232
      %2885 = vmatprep.subr.bf16.mxu0 %v2241
      %2886 = vmatpush1.bf16.msra.mxu0 %v2240
      %2887 = vmatprep.subr.bf16.mxu0 %v2249
      %2888 = vmatpush1.bf16.msra.mxu0 %v2248
      %2889 = vmatprep.subr.bf16.mxu0 %v2257
      %2890 = vmatpush1.bf16.msra.mxu0 %v2256
      %2891 = vmatprep.subr.bf16.mxu0 %v2265
      %2892 = vmatpush1.bf16.msra.mxu0 %v2264
      %2893 = vmatprep.subr.bf16.mxu0 %v2273
      %2894 = vmatpush1.bf16.msra.mxu0 %v2272
      %2895 = vmatprep.subr.bf16.mxu0 %v2281
      %2896 = vmatpush1.bf16.msra.mxu0 %v2280
      %2897 = vmatprep.subr.bf16.mxu0 %v2289
      %2898 = vmatpush1.bf16.msra.mxu0 %v2288
      %2899 = vmatprep.subr.bf16.mxu0 %v2297
      %2900 = vmatpush1.bf16.msra.mxu0 %v2296
      %2901 = vmatprep.mubr.bf16.mxu0 %v471
      %2902 = vmatmul.mubr.bf16.gmra.mrb[0].mxu0 %v470
      %v2903 = vpop.f32.mrb[0].mxu0
      %v2904 = vadd.f32 %v2851, %v2903
      %v2905 = vpop.f32.mrb[0].mxu0
      %v2906 = vadd.f32 %v2853, %v2905
      %v2907 = vpop.f32.mrb[0].mxu0
      %v2908 = vadd.f32 %v2855, %v2907
      %v2909 = vpop.f32.mrb[0].mxu0
      %v2910 = vadd.f32 %v2857, %v2909
      %2911 = vmatprep.mubr.bf16.mxu0 %v477
      %2912 = vmatmul.mubr.bf16.gmra.mrb[0].mxu0 %v476
      %v2913 = vpop.f32.mrb[0].mxu0
      %v2914 = vadd.f32 %v2861, %v2913
      %v2915 = vpop.f32.mrb[0].mxu0
      %v2916 = vadd.f32 %v2863, %v2915
      %v2917 = vpop.f32.mrb[0].mxu0
      %v2918 = vadd.f32 %v2865, %v2917
      %v2919 = vpop.f32.mrb[0].mxu0
      %v2920 = vadd.f32 %v2867, %v2919
      %2921 = vdwg.mxu0
      %2922 = vmatprep.subr.bf16.mxu0 %v2305
      %2923 = vmatpush1.bf16.msra.mxu0 %v2304
      %2924 = vmatprep.subr.bf16.mxu0 %v2313
      %2925 = vmatpush1.bf16.msra.mxu0 %v2312
      %2926 = vmatprep.subr.bf16.mxu0 %v2321
      %2927 = vmatpush1.bf16.msra.mxu0 %v2320
      %2928 = vmatprep.subr.bf16.mxu0 %v2329
      %2929 = vmatpush1.bf16.msra.mxu0 %v2328
      %2930 = vmatprep.subr.bf16.mxu0 %v2337
      %2931 = vmatpush1.bf16.msra.mxu0 %v2336
      %2932 = vmatprep.subr.bf16.mxu0 %v2345
      %2933 = vmatpush1.bf16.msra.mxu0 %v2344
      %2934 = vmatprep.subr.bf16.mxu0 %v2353
      %2935 = vmatpush1.bf16.msra.mxu0 %v2352
      %2936 = vmatprep.subr.bf16.mxu0 %v2361
      %2937 = vmatpush1.bf16.msra.mxu0 %v2360
      %2938 = vmatprep.subr.bf16.mxu0 %v2369
      %2939 = vmatpush1.bf16.msra.mxu0 %v2368
      %2940 = vmatprep.subr.bf16.mxu0 %v2377
      %2941 = vmatpush1.bf16.msra.mxu0 %v2376
      %2942 = vmatprep.subr.bf16.mxu0 %v2385
      %2943 = vmatpush1.bf16.msra.mxu0 %v2384
      %2944 = vmatprep.subr.bf16.mxu0 %v2393
      %2945 = vmatpush1.bf16.msra.mxu0 %v2392
      %2946 = vmatprep.subr.bf16.mxu0 %v2401
      %2947 = vmatpush1.bf16.msra.mxu0 %v2400
      %2948 = vmatprep.subr.bf16.mxu0 %v2409
      %2949 = vmatpush1.bf16.msra.mxu0 %v2408
      %2950 = vmatprep.subr.bf16.mxu0 %v2417
      %2951 = vmatpush1.bf16.msra.mxu0 %v2416
      %2952 = vmatprep.subr.bf16.mxu0 %v2425
      %2953 = vmatpush1.bf16.msra.mxu0 %v2424
      %2954 = vmatprep.mubr.bf16.mxu0 %v473
      %2955 = vmatmul.mubr.bf16.gmra.mrb[0].mxu0 %v472
      %v2956 = vpop.f32.mrb[0].mxu0
      %v2957 = vadd.f32 %v2904, %v2956
      %v2958 = vpop.f32.mrb[0].mxu0
      %v2959 = vadd.f32 %v2906, %v2958
      %v2960 = vpop.f32.mrb[0].mxu0
      %v2961 = vadd.f32 %v2908, %v2960
      %v2962 = vpop.f32.mrb[0].mxu0
      %v2963 = vadd.f32 %v2910, %v2962
      %2964 = vmatprep.mubr.bf16.mxu0 %v479
      %2965 = vmatmul.mubr.bf16.gmra.mrb[0].mxu0 %v478
      %v2966 = vpop.f32.mrb[0].mxu0
      %v2967 = vadd.f32 %v2914, %v2966
      %v2968 = vpop.f32.mrb[0].mxu0
      %v2969 = vadd.f32 %v2916, %v2968
      %v2970 = vpop.f32.mrb[0].mxu0
      %v2971 = vadd.f32 %v2918, %v2970
      %v2972 = vpop.f32.mrb[0].mxu0
      %v2973 = vadd.f32 %v2920, %v2972
      %2974 = vdwg.mxu0
      %2975 = vmatprep.subr.bf16.mxu0 %v2051
      %2976 = vmatpush1.bf16.msra.mxu0 %v2050
      %2977 = vmatprep.subr.bf16.mxu0 %v2059
      %2978 = vmatpush1.bf16.msra.mxu0 %v2058
      %2979 = vmatprep.subr.bf16.mxu0 %v2067
      %2980 = vmatpush1.bf16.msra.mxu0 %v2066
      %2981 = vmatprep.subr.bf16.mxu0 %v2075
      %2982 = vmatpush1.bf16.msra.mxu0 %v2074
      %2983 = vmatprep.subr.bf16.mxu0 %v2083
      %2984 = vmatpush1.bf16.msra.mxu0 %v2082
      %2985 = vmatprep.subr.bf16.mxu0 %v2091
      %2986 = vmatpush1.bf16.msra.mxu0 %v2090
      %2987 = vmatprep.subr.bf16.mxu0 %v2099
      %2988 = vmatpush1.bf16.msra.mxu0 %v2098
      %2989 = vmatprep.subr.bf16.mxu0 %v2107
      %2990 = vmatpush1.bf16.msra.mxu0 %v2106
      %2991 = vmatprep.subr.bf16.mxu0 %v2115
      %2992 = vmatpush1.bf16.msra.mxu0 %v2114
      %2993 = vmatprep.subr.bf16.mxu0 %v2123
      %2994 = vmatpush1.bf16.msra.mxu0 %v2122
      %2995 = vmatprep.subr.bf16.mxu0 %v2131
      %2996 = vmatpush1.bf16.msra.mxu0 %v2130
      %2997 = vmatprep.subr.bf16.mxu0 %v2139
      %2998 = vmatpush1.bf16.msra.mxu0 %v2138
      %2999 = vmatprep.subr.bf16.mxu0 %v2147
      %3000 = vmatpush1.bf16.msra.mxu0 %v2146
      %3001 = vmatprep.subr.bf16.mxu0 %v2155
      %3002 = vmatpush1.bf16.msra.mxu0 %v2154
      %3003 = vmatprep.subr.bf16.mxu0 %v2163
      %3004 = vmatpush1.bf16.msra.mxu0 %v2162
      %3005 = vmatprep.subr.bf16.mxu0 %v2171
      %3006 = vmatpush1.bf16.msra.mxu0 %v2170
      %3007 = vmatprep.mubr.bf16.mxu0 %v469
      %3008 = vmatmul.mubr.bf16.gmra.mrb[0].mxu0 %v468
      %v3009 = vpop.f32.mrb[0].mxu0
      %v3010 = vadd.f32 0.0, %v3009
      %v3011 = vpop.f32.mrb[0].mxu0
      %v3012 = vadd.f32 0.0, %v3011
      %v3013 = vpop.f32.mrb[0].mxu0
      %v3014 = vadd.f32 0.0, %v3013
      %v3015 = vpop.f32.mrb[0].mxu0
      %v3016 = vadd.f32 0.0, %v3015
      %3017 = vmatprep.mubr.bf16.mxu0 %v475
      %3018 = vmatmul.mubr.bf16.gmra.mrb[0].mxu0 %v474
      %v3019 = vpop.f32.mrb[0].mxu0
      %v3020 = vadd.f32 0.0, %v3019
      %v3021 = vpop.f32.mrb[0].mxu0
      %v3022 = vadd.f32 0.0, %v3021
      %v3023 = vpop.f32.mrb[0].mxu0
      %v3024 = vadd.f32 0.0, %v3023
      %v3025 = vpop.f32.mrb[0].mxu0
      %v3026 = vadd.f32 0.0, %v3025
      %3027 = vdwg.mxu0
      %3028 = vmatprep.subr.bf16.mxu0 %v2179
      %3029 = vmatpush1.bf16.msra.mxu0 %v2178
      %3030 = vmatprep.subr.bf16.mxu0 %v2187
      %3031 = vmatpush1.bf16.msra.mxu0 %v2186
      %3032 = vmatprep.subr.bf16.mxu0 %v2195
      %3033 = vmatpush1.bf16.msra.mxu0 %v2194
      %3034 = vmatprep.subr.bf16.mxu0 %v2203
      %3035 = vmatpush1.bf16.msra.mxu0 %v2202
      %3036 = vmatprep.subr.bf16.mxu0 %v2211
      %3037 = vmatpush1.bf16.msra.mxu0 %v2210
      %3038 = vmatprep.subr.bf16.mxu0 %v2219
      %3039 = vmatpush1.bf16.msra.mxu0 %v2218
      %3040 = vmatprep.subr.bf16.mxu0 %v2227
      %3041 = vmatpush1.bf16.msra.mxu0 %v2226
      %3042 = vmatprep.subr.bf16.mxu0 %v2235
      %3043 = vmatpush1.bf16.msra.mxu0 %v2234
      %3044 = vmatprep.subr.bf16.mxu0 %v2243
      %3045 = vmatpush1.bf16.msra.mxu0 %v2242
      %3046 = vmatprep.subr.bf16.mxu0 %v2251
      %3047 = vmatpush1.bf16.msra.mxu0 %v2250
      %3048 = vmatprep.subr.bf16.mxu0 %v2259
      %3049 = vmatpush1.bf16.msra.mxu0 %v2258
      %3050 = vmatprep.subr.bf16.mxu0 %v2267
      %3051 = vmatpush1.bf16.msra.mxu0 %v2266
      %3052 = vmatprep.subr.bf16.mxu0 %v2275
      %3053 = vmatpush1.bf16.msra.mxu0 %v2274
      %3054 = vmatprep.subr.bf16.mxu0 %v2283
      %3055 = vmatpush1.bf16.msra.mxu0 %v2282
      %3056 = vmatprep.subr.bf16.mxu0 %v2291
      %3057 = vmatpush1.bf16.msra.mxu0 %v2290
      %3058 = vmatprep.subr.bf16.mxu0 %v2299
      %3059 = vmatpush1.bf16.msra.mxu0 %v2298
      %3060 = vmatprep.mubr.bf16.mxu0 %v471
      %3061 = vmatmul.mubr.bf16.gmra.mrb[0].mxu0 %v470
      %v3062 = vpop.f32.mrb[0].mxu0
      %v3063 = vadd.f32 %v3010, %v3062
      %v3064 = vpop.f32.mrb[0].mxu0
      %v3065 = vadd.f32 %v3012, %v3064
      %v3066 = vpop.f32.mrb[0].mxu0
      %v3067 = vadd.f32 %v3014, %v3066
      %v3068 = vpop.f32.mrb[0].mxu0
      %v3069 = vadd.f32 %v3016, %v3068
      %3070 = vmatprep.mubr.bf16.mxu0 %v477
      %3071 = vmatmul.mubr.bf16.gmra.mrb[0].mxu0 %v476
      %v3072 = vpop.f32.mrb[0].mxu0
      %v3073 = vadd.f32 %v3020, %v3072
      %v3074 = vpop.f32.mrb[0].mxu0
      %v3075 = vadd.f32 %v3022, %v3074
      %v3076 = vpop.f32.mrb[0].mxu0
      %v3077 = vadd.f32 %v3024, %v3076
      %v3078 = vpop.f32.mrb[0].mxu0
      %v3079 = vadd.f32 %v3026, %v3078
      %3080 = vdwg.mxu0
      %3081 = vmatprep.subr.bf16.mxu0 %v2307
      %3082 = vmatpush1.bf16.msra.mxu0 %v2306
      %3083 = vmatprep.subr.bf16.mxu0 %v2315
      %3084 = vmatpush1.bf16.msra.mxu0 %v2314
      %3085 = vmatprep.subr.bf16.mxu0 %v2323
      %3086 = vmatpush1.bf16.msra.mxu0 %v2322
      %3087 = vmatprep.subr.bf16.mxu0 %v2331
      %3088 = vmatpush1.bf16.msra.mxu0 %v2330
      %3089 = vmatprep.subr.bf16.mxu0 %v2339
      %3090 = vmatpush1.bf16.msra.mxu0 %v2338
      %3091 = vmatprep.subr.bf16.mxu0 %v2347
      %3092 = vmatpush1.bf16.msra.mxu0 %v2346
      %3093 = vmatprep.subr.bf16.mxu0 %v2355
      %3094 = vmatpush1.bf16.msra.mxu0 %v2354
      %3095 = vmatprep.subr.bf16.mxu0 %v2363
      %3096 = vmatpush1.bf16.msra.mxu0 %v2362
      %3097 = vmatprep.subr.bf16.mxu0 %v2371
      %3098 = vmatpush1.bf16.msra.mxu0 %v2370
      %3099 = vmatprep.subr.bf16.mxu0 %v2379
      %3100 = vmatpush1.bf16.msra.mxu0 %v2378
      %3101 = vmatprep.subr.bf16.mxu0 %v2387
      %3102 = vmatpush1.bf16.msra.mxu0 %v2386
      %3103 = vmatprep.subr.bf16.mxu0 %v2395
      %3104 = vmatpush1.bf16.msra.mxu0 %v2394
      %3105 = vmatprep.subr.bf16.mxu0 %v2403
      %3106 = vmatpush1.bf16.msra.mxu0 %v2402
      %3107 = vmatprep.subr.bf16.mxu0 %v2411
      %3108 = vmatpush1.bf16.msra.mxu0 %v2410
      %3109 = vmatprep.subr.bf16.mxu0 %v2419
      %3110 = vmatpush1.bf16.msra.mxu0 %v2418
      %3111 = vmatprep.subr.bf16.mxu0 %v2427
      %3112 = vmatpush1.bf16.msra.mxu0 %v2426
      %3113 = vmatprep.mubr.bf16.mxu0 %v473
      %3114 = vmatmul.mubr.bf16.gmra.mrb[0].mxu0 %v472
      %v3115 = vpop.f32.mrb[0].mxu0
      %v3116 = vadd.f32 %v3063, %v3115
      %v3117 = vpop.f32.mrb[0].mxu0
      %v3118 = vadd.f32 %v3065, %v3117
      %v3119 = vpop.f32.mrb[0].mxu0
      %v3120 = vadd.f32 %v3067, %v3119
      %v3121 = vpop.f32.mrb[0].mxu0
      %v3122 = vadd.f32 %v3069, %v3121
      %3123 = vmatprep.mubr.bf16.mxu0 %v479
      %3124 = vmatmul.mubr.bf16.gmra.mrb[0].mxu0 %v478
      %v3125 = vpop.f32.mrb[0].mxu0
      %v3126 = vadd.f32 %v3073, %v3125
      %v3127 = vpop.f32.mrb[0].mxu0
      %v3128 = vadd.f32 %v3075, %v3127
      %v3129 = vpop.f32.mrb[0].mxu0
      %v3130 = vadd.f32 %v3077, %v3129
      %v3131 = vpop.f32.mrb[0].mxu0
      %v3132 = vadd.f32 %v3079, %v3131
      %3133 = vdwg.mxu0
      %3134 = vmatprep.subr.bf16.mxu0 %v2053
      %3135 = vmatpush1.bf16.msra.mxu0 %v2052
      %3136 = vmatprep.subr.bf16.mxu0 %v2061
      %3137 = vmatpush1.bf16.msra.mxu0 %v2060
      %3138 = vmatprep.subr.bf16.mxu0 %v2069
      %3139 = vmatpush1.bf16.msra.mxu0 %v2068
      %3140 = vmatprep.subr.bf16.mxu0 %v2077
      %3141 = vmatpush1.bf16.msra.mxu0 %v2076
      %3142 = vmatprep.subr.bf16.mxu0 %v2085
      %3143 = vmatpush1.bf16.msra.mxu0 %v2084
      %3144 = vmatprep.subr.bf16.mxu0 %v2093
      %3145 = vmatpush1.bf16.msra.mxu0 %v2092
      %3146 = vmatprep.subr.bf16.mxu0 %v2101
      %3147 = vmatpush1.bf16.msra.mxu0 %v2100
      %3148 = vmatprep.subr.bf16.mxu0 %v2109
      %3149 = vmatpush1.bf16.msra.mxu0 %v2108
      %3150 = vmatprep.subr.bf16.mxu0 %v2117
      %3151 = vmatpush1.bf16.msra.mxu0 %v2116
      %3152 = vmatprep.subr.bf16.mxu0 %v2125
      %3153 = vmatpush1.bf16.msra.mxu0 %v2124
      %3154 = vmatprep.subr.bf16.mxu0 %v2133
      %3155 = vmatpush1.bf16.msra.mxu0 %v2132
      %3156 = vmatprep.subr.bf16.mxu0 %v2141
      %3157 = vmatpush1.bf16.msra.mxu0 %v2140
      %3158 = vmatprep.subr.bf16.mxu0 %v2149
      %3159 = vmatpush1.bf16.msra.mxu0 %v2148
      %3160 = vmatprep.subr.bf16.mxu0 %v2157
      %3161 = vmatpush1.bf16.msra.mxu0 %v2156
      %3162 = vmatprep.subr.bf16.mxu0 %v2165
      %3163 = vmatpush1.bf16.msra.mxu0 %v2164
      %3164 = vmatprep.subr.bf16.mxu0 %v2173
      %3165 = vmatpush1.bf16.msra.mxu0 %v2172
      %3166 = vmatprep.mubr.bf16.mxu0 %v469
      %3167 = vmatmul.mubr.bf16.gmra.mrb[0].mxu0 %v468
      %v3168 = vpop.f32.mrb[0].mxu0
      %v3169 = vadd.f32 0.0, %v3168
      %v3170 = vpop.f32.mrb[0].mxu0
      %v3171 = vadd.f32 0.0, %v3170
      %v3172 = vpop.f32.mrb[0].mxu0
      %v3173 = vadd.f32 0.0, %v3172
      %v3174 = vpop.f32.mrb[0].mxu0
      %v3175 = vadd.f32 0.0, %v3174
      %3176 = vmatprep.mubr.bf16.mxu0 %v475
      %3177 = vmatmul.mubr.bf16.gmra.mrb[0].mxu0 %v474
      %v3178 = vpop.f32.mrb[0].mxu0
      %v3179 = vadd.f32 0.0, %v3178
      %v3180 = vpop.f32.mrb[0].mxu0
      %v3181 = vadd.f32 0.0, %v3180
      %v3182 = vpop.f32.mrb[0].mxu0
      %v3183 = vadd.f32 0.0, %v3182
      %v3184 = vpop.f32.mrb[0].mxu0
      %v3185 = vadd.f32 0.0, %v3184
      %3186 = vdwg.mxu0
      %3187 = vmatprep.subr.bf16.mxu0 %v2181
      %3188 = vmatpush1.bf16.msra.mxu0 %v2180
      %3189 = vmatprep.subr.bf16.mxu0 %v2189
      %3190 = vmatpush1.bf16.msra.mxu0 %v2188
      %3191 = vmatprep.subr.bf16.mxu0 %v2197
      %3192 = vmatpush1.bf16.msra.mxu0 %v2196
      %3193 = vmatprep.subr.bf16.mxu0 %v2205
      %3194 = vmatpush1.bf16.msra.mxu0 %v2204
      %3195 = vmatprep.subr.bf16.mxu0 %v2213
      %3196 = vmatpush1.bf16.msra.mxu0 %v2212
      %3197 = vmatprep.subr.bf16.mxu0 %v2221
      %3198 = vmatpush1.bf16.msra.mxu0 %v2220
      %3199 = vmatprep.subr.bf16.mxu0 %v2229
      %3200 = vmatpush1.bf16.msra.mxu0 %v2228
      %3201 = vmatprep.subr.bf16.mxu0 %v2237
      %3202 = vmatpush1.bf16.msra.mxu0 %v2236
      %3203 = vmatprep.subr.bf16.mxu0 %v2245
      %3204 = vmatpush1.bf16.msra.mxu0 %v2244
      %3205 = vmatprep.subr.bf16.mxu0 %v2253
      %3206 = vmatpush1.bf16.msra.mxu0 %v2252
      %3207 = vmatprep.subr.bf16.mxu0 %v2261
      %3208 = vmatpush1.bf16.msra.mxu0 %v2260
      %3209 = vmatprep.subr.bf16.mxu0 %v2269
      %3210 = vmatpush1.bf16.msra.mxu0 %v2268
      %3211 = vmatprep.subr.bf16.mxu0 %v2277
      %3212 = vmatpush1.bf16.msra.mxu0 %v2276
      %3213 = vmatprep.subr.bf16.mxu0 %v2285
      %3214 = vmatpush1.bf16.msra.mxu0 %v2284
      %3215 = vmatprep.subr.bf16.mxu0 %v2293
      %3216 = vmatpush1.bf16.msra.mxu0 %v2292
      %3217 = vmatprep.subr.bf16.mxu0 %v2301
      %3218 = vmatpush1.bf16.msra.mxu0 %v2300
      %3219 = vmatprep.mubr.bf16.mxu0 %v471
      %3220 = vmatmul.mubr.bf16.gmra.mrb[0].mxu0 %v470
      %v3221 = vpop.f32.mrb[0].mxu0
      %v3222 = vadd.f32 %v3169, %v3221
      %v3223 = vpop.f32.mrb[0].mxu0
      %v3224 = vadd.f32 %v3171, %v3223
      %v3225 = vpop.f32.mrb[0].mxu0
      %v3226 = vadd.f32 %v3173, %v3225
      %v3227 = vpop.f32.mrb[0].mxu0
      %v3228 = vadd.f32 %v3175, %v3227
      %3229 = vmatprep.mubr.bf16.mxu0 %v477
      %3230 = vmatmul.mubr.bf16.gmra.mrb[0].mxu0 %v476
      %v3231 = vpop.f32.mrb[0].mxu0
      %v3232 = vadd.f32 %v3179, %v3231
      %v3233 = vpop.f32.mrb[0].mxu0
      %v3234 = vadd.f32 %v3181, %v3233
      %v3235 = vpop.f32.mrb[0].mxu0
      %v3236 = vadd.f32 %v3183, %v3235
      %v3237 = vpop.f32.mrb[0].mxu0
      %v3238 = vadd.f32 %v3185, %v3237
      %3239 = vdwg.mxu0
      %3240 = vmatprep.subr.bf16.mxu0 %v2309
      %3241 = vmatpush1.bf16.msra.mxu0 %v2308
      %3242 = vmatprep.subr.bf16.mxu0 %v2317
      %3243 = vmatpush1.bf16.msra.mxu0 %v2316
      %3244 = vmatprep.subr.bf16.mxu0 %v2325
      %3245 = vmatpush1.bf16.msra.mxu0 %v2324
      %3246 = vmatprep.subr.bf16.mxu0 %v2333
      %3247 = vmatpush1.bf16.msra.mxu0 %v2332
      %3248 = vmatprep.subr.bf16.mxu0 %v2341
      %3249 = vmatpush1.bf16.msra.mxu0 %v2340
      %3250 = vmatprep.subr.bf16.mxu0 %v2349
      %3251 = vmatpush1.bf16.msra.mxu0 %v2348
      %3252 = vmatprep.subr.bf16.mxu0 %v2357
      %3253 = vmatpush1.bf16.msra.mxu0 %v2356
      %3254 = vmatprep.subr.bf16.mxu0 %v2365
      %3255 = vmatpush1.bf16.msra.mxu0 %v2364
      %3256 = vmatprep.subr.bf16.mxu0 %v2373
      %3257 = vmatpush1.bf16.msra.mxu0 %v2372
      %3258 = vmatprep.subr.bf16.mxu0 %v2381
      %3259 = vmatpush1.bf16.msra.mxu0 %v2380
      %3260 = vmatprep.subr.bf16.mxu0 %v2389
      %3261 = vmatpush1.bf16.msra.mxu0 %v2388
      %3262 = vmatprep.subr.bf16.mxu0 %v2397
      %3263 = vmatpush1.bf16.msra.mxu0 %v2396
      %3264 = vmatprep.subr.bf16.mxu0 %v2405
      %3265 = vmatpush1.bf16.msra.mxu0 %v2404
      %3266 = vmatprep.subr.bf16.mxu0 %v2413
      %3267 = vmatpush1.bf16.msra.mxu0 %v2412
      %3268 = vmatprep.subr.bf16.mxu0 %v2421
      %3269 = vmatpush1.bf16.msra.mxu0 %v2420
      %3270 = vmatprep.subr.bf16.mxu0 %v2429
      %3271 = vmatpush1.bf16.msra.mxu0 %v2428
      %3272 = vmatprep.mubr.bf16.mxu0 %v473
      %3273 = vmatmul.mubr.bf16.gmra.mrb[0].mxu0 %v472
      %v3274 = vpop.f32.mrb[0].mxu0
      %v3275 = vadd.f32 %v3222, %v3274
      %v3276 = vpop.f32.mrb[0].mxu0
      %v3277 = vadd.f32 %v3224, %v3276
      %v3278 = vpop.f32.mrb[0].mxu0
      %v3279 = vadd.f32 %v3226, %v3278
      %v3280 = vpop.f32.mrb[0].mxu0
      %v3281 = vadd.f32 %v3228, %v3280
      %3282 = vmatprep.mubr.bf16.mxu0 %v479
      %3283 = vmatmul.mubr.bf16.gmra.mrb[0].mxu0 %v478
      %v3284 = vpop.f32.mrb[0].mxu0
      %v3285 = vadd.f32 %v3232, %v3284
      %v3286 = vpop.f32.mrb[0].mxu0
      %v3287 = vadd.f32 %v3234, %v3286
      %v3288 = vpop.f32.mrb[0].mxu0
      %v3289 = vadd.f32 %v3236, %v3288
      %v3290 = vpop.f32.mrb[0].mxu0
      %v3291 = vadd.f32 %v3238, %v3290
      %3292 = vdwg.mxu0
      %3293 = vmatprep.subr.bf16.mxu0 %v2055
      %3294 = vmatpush1.bf16.msra.mxu0 %v2054
      %3295 = vmatprep.subr.bf16.mxu0 %v2063
      %3296 = vmatpush1.bf16.msra.mxu0 %v2062
      %3297 = vmatprep.subr.bf16.mxu0 %v2071
      %3298 = vmatpush1.bf16.msra.mxu0 %v2070
      %3299 = vmatprep.subr.bf16.mxu0 %v2079
      %3300 = vmatpush1.bf16.msra.mxu0 %v2078
      %3301 = vmatprep.subr.bf16.mxu0 %v2087
      %3302 = vmatpush1.bf16.msra.mxu0 %v2086
      %3303 = vmatprep.subr.bf16.mxu0 %v2095
      %3304 = vmatpush1.bf16.msra.mxu0 %v2094
      %3305 = vmatprep.subr.bf16.mxu0 %v2103
      %3306 = vmatpush1.bf16.msra.mxu0 %v2102
      %3307 = vmatprep.subr.bf16.mxu0 %v2111
      %3308 = vmatpush1.bf16.msra.mxu0 %v2110
      %3309 = vmatprep.subr.bf16.mxu0 %v2119
      %3310 = vmatpush1.bf16.msra.mxu0 %v2118
      %3311 = vmatprep.subr.bf16.mxu0 %v2127
      %3312 = vmatpush1.bf16.msra.mxu0 %v2126
      %3313 = vmatprep.subr.bf16.mxu0 %v2135
      %3314 = vmatpush1.bf16.msra.mxu0 %v2134
      %3315 = vmatprep.subr.bf16.mxu0 %v2143
      %3316 = vmatpush1.bf16.msra.mxu0 %v2142
      %3317 = vmatprep.subr.bf16.mxu0 %v2151
      %3318 = vmatpush1.bf16.msra.mxu0 %v2150
      %3319 = vmatprep.subr.bf16.mxu0 %v2159
      %3320 = vmatpush1.bf16.msra.mxu0 %v2158
      %3321 = vmatprep.subr.bf16.mxu0 %v2167
      %3322 = vmatpush1.bf16.msra.mxu0 %v2166
      %3323 = vmatprep.subr.bf16.mxu0 %v2175
      %3324 = vmatpush1.bf16.msra.mxu0 %v2174
      %3325 = vmatprep.mubr.bf16.mxu0 %v469
      %3326 = vmatmul.mubr.bf16.gmra.mrb[0].mxu0 %v468
      %v3327 = vpop.f32.mrb[0].mxu0
      %v3328 = vadd.f32 0.0, %v3327
      %v3329 = vpop.f32.mrb[0].mxu0
      %v3330 = vadd.f32 0.0, %v3329
      %v3331 = vpop.f32.mrb[0].mxu0
      %v3332 = vadd.f32 0.0, %v3331
      %v3333 = vpop.f32.mrb[0].mxu0
      %v3334 = vadd.f32 0.0, %v3333
      %3335 = vmatprep.mubr.bf16.mxu0 %v475
      %3336 = vmatmul.mubr.bf16.gmra.mrb[0].mxu0 %v474
      %v3337 = vpop.f32.mrb[0].mxu0
      %v3338 = vadd.f32 0.0, %v3337
      %v3339 = vpop.f32.mrb[0].mxu0
      %v3340 = vadd.f32 0.0, %v3339
      %v3341 = vpop.f32.mrb[0].mxu0
      %v3342 = vadd.f32 0.0, %v3341
      %v3343 = vpop.f32.mrb[0].mxu0
      %v3344 = vadd.f32 0.0, %v3343
      %3345 = vdwg.mxu0
      %3346 = vmatprep.subr.bf16.mxu0 %v2183
      %3347 = vmatpush1.bf16.msra.mxu0 %v2182
      %3348 = vmatprep.subr.bf16.mxu0 %v2191
      %3349 = vmatpush1.bf16.msra.mxu0 %v2190
      %3350 = vmatprep.subr.bf16.mxu0 %v2199
      %3351 = vmatpush1.bf16.msra.mxu0 %v2198
      %3352 = vmatprep.subr.bf16.mxu0 %v2207
      %3353 = vmatpush1.bf16.msra.mxu0 %v2206
      %3354 = vmatprep.subr.bf16.mxu0 %v2215
      %3355 = vmatpush1.bf16.msra.mxu0 %v2214
      %3356 = vmatprep.subr.bf16.mxu0 %v2223
      %3357 = vmatpush1.bf16.msra.mxu0 %v2222
      %3358 = vmatprep.subr.bf16.mxu0 %v2231
      %3359 = vmatpush1.bf16.msra.mxu0 %v2230
      %3360 = vmatprep.subr.bf16.mxu0 %v2239
      %3361 = vmatpush1.bf16.msra.mxu0 %v2238
      %3362 = vmatprep.subr.bf16.mxu0 %v2247
      %3363 = vmatpush1.bf16.msra.mxu0 %v2246
      %3364 = vmatprep.subr.bf16.mxu0 %v2255
      %3365 = vmatpush1.bf16.msra.mxu0 %v2254
      %3366 = vmatprep.subr.bf16.mxu0 %v2263
      %3367 = vmatpush1.bf16.msra.mxu0 %v2262
      %3368 = vmatprep.subr.bf16.mxu0 %v2271
      %3369 = vmatpush1.bf16.msra.mxu0 %v2270
      %3370 = vmatprep.subr.bf16.mxu0 %v2279
      %3371 = vmatpush1.bf16.msra.mxu0 %v2278
      %3372 = vmatprep.subr.bf16.mxu0 %v2287
      %3373 = vmatpush1.bf16.msra.mxu0 %v2286
      %3374 = vmatprep.subr.bf16.mxu0 %v2295
      %3375 = vmatpush1.bf16.msra.mxu0 %v2294
      %3376 = vmatprep.subr.bf16.mxu0 %v2303
      %3377 = vmatpush1.bf16.msra.mxu0 %v2302
      %3378 = vmatprep.mubr.bf16.mxu0 %v471
      %3379 = vmatmul.mubr.bf16.gmra.mrb[0].mxu0 %v470
      %v3380 = vpop.f32.mrb[0].mxu0
      %v3381 = vadd.f32 %v3328, %v3380
      %v3382 = vpop.f32.mrb[0].mxu0
      %v3383 = vadd.f32 %v3330, %v3382
      %v3384 = vpop.f32.mrb[0].mxu0
      %v3385 = vadd.f32 %v3332, %v3384
      %v3386 = vpop.f32.mrb[0].mxu0
      %v3387 = vadd.f32 %v3334, %v3386
      %3388 = vmatprep.mubr.bf16.mxu0 %v477
      %3389 = vmatmul.mubr.bf16.gmra.mrb[0].mxu0 %v476
      %v3390 = vpop.f32.mrb[0].mxu0
      %v3391 = vadd.f32 %v3338, %v3390
      %v3392 = vpop.f32.mrb[0].mxu0
      %v3393 = vadd.f32 %v3340, %v3392
      %v3394 = vpop.f32.mrb[0].mxu0
      %v3395 = vadd.f32 %v3342, %v3394
      %v3396 = vpop.f32.mrb[0].mxu0
      %v3397 = vadd.f32 %v3344, %v3396
      %3398 = vdwg.mxu0
      %3399 = vmatprep.subr.bf16.mxu0 %v2311
      %3400 = vmatpush1.bf16.msra.mxu0 %v2310
      %3401 = vmatprep.subr.bf16.mxu0 %v2319
      %3402 = vmatpush1.bf16.msra.mxu0 %v2318
      %3403 = vmatprep.subr.bf16.mxu0 %v2327
      %3404 = vmatpush1.bf16.msra.mxu0 %v2326
      %3405 = vmatprep.subr.bf16.mxu0 %v2335
      %3406 = vmatpush1.bf16.msra.mxu0 %v2334
      %3407 = vmatprep.subr.bf16.mxu0 %v2343
      %3408 = vmatpush1.bf16.msra.mxu0 %v2342
      %3409 = vmatprep.subr.bf16.mxu0 %v2351
      %3410 = vmatpush1.bf16.msra.mxu0 %v2350
      %3411 = vmatprep.subr.bf16.mxu0 %v2359
      %3412 = vmatpush1.bf16.msra.mxu0 %v2358
      %3413 = vmatprep.subr.bf16.mxu0 %v2367
      %3414 = vmatpush1.bf16.msra.mxu0 %v2366
      %3415 = vmatprep.subr.bf16.mxu0 %v2375
      %3416 = vmatpush1.bf16.msra.mxu0 %v2374
      %3417 = vmatprep.subr.bf16.mxu0 %v2383
      %3418 = vmatpush1.bf16.msra.mxu0 %v2382
      %3419 = vmatprep.subr.bf16.mxu0 %v2391
      %3420 = vmatpush1.bf16.msra.mxu0 %v2390
      %3421 = vmatprep.subr.bf16.mxu0 %v2399
      %3422 = vmatpush1.bf16.msra.mxu0 %v2398
      %3423 = vmatprep.subr.bf16.mxu0 %v2407
      %3424 = vmatpush1.bf16.msra.mxu0 %v2406
      %3425 = vmatprep.subr.bf16.mxu0 %v2415
      %3426 = vmatpush1.bf16.msra.mxu0 %v2414
      %3427 = vmatprep.subr.bf16.mxu0 %v2423
      %3428 = vmatpush1.bf16.msra.mxu0 %v2422
      %3429 = vmatprep.subr.bf16.mxu0 %v2431
      %3430 = vmatpush1.bf16.msra.mxu0 %v2430
      %3431 = vmatprep.mubr.bf16.mxu0 %v473
      %3432 = vmatmul.mubr.bf16.gmra.mrb[0].mxu0 %v472
      %v3433 = vpop.f32.mrb[0].mxu0
      %v3434 = vadd.f32 %v3381, %v3433
      %v3435 = vpop.f32.mrb[0].mxu0
      %v3436 = vadd.f32 %v3383, %v3435
      %v3437 = vpop.f32.mrb[0].mxu0
      %v3438 = vadd.f32 %v3385, %v3437
      %v3439 = vpop.f32.mrb[0].mxu0
      %v3440 = vadd.f32 %v3387, %v3439
      %3441 = vmatprep.mubr.bf16.mxu0 %v479
      %3442 = vmatmul.mubr.bf16.gmra.mrb[0].mxu0 %v478
      %v3443 = vpop.f32.mrb[0].mxu0
      %v3444 = vadd.f32 %v3391, %v3443
      %v3445 = vpop.f32.mrb[0].mxu0
      %v3446 = vadd.f32 %v3393, %v3445
      %v3447 = vpop.f32.mrb[0].mxu0
      %v3448 = vadd.f32 %v3395, %v3447
      %v3449 = vpop.f32.mrb[0].mxu0
      %v3450 = vadd.f32 %v3397, %v3449
      %3451 = vdwg.mxu0
      %v3452 = vadd.f32 %v480, %v2957
      %v3453 = vadd.f32 %v481, %v2959
      %v3454 = vadd.f32 %v482, %v3116
      %v3455 = vadd.f32 %v483, %v3118
      %v3456 = vadd.f32 %v484, %v3275
      %v3457 = vadd.f32 %v485, %v3277
      %v3458 = vadd.f32 %v486, %v3434
      %v3459 = vadd.f32 %v487, %v3436
      %v3460 = vadd.f32 %v488, %v2961
      %v3461 = vadd.f32 %v489, %v2963
      %v3462 = vadd.f32 %v490, %v3120
      %v3463 = vadd.f32 %v491, %v3122
      %v3464 = vadd.f32 %v492, %v3279
      %v3465 = vadd.f32 %v493, %v3281
      %v3466 = vadd.f32 %v494, %v3438
      %v3467 = vadd.f32 %v495, %v3440
      %v3468 = vadd.f32 %v496, %v2967
      %v3469 = vadd.f32 %v497, %v2969
      %v3470 = vadd.f32 %v498, %v3126
      %v3471 = vadd.f32 %v499, %v3128
      %v3472 = vadd.f32 %v500, %v3285
      %v3473 = vadd.f32 %v501, %v3287
      %v3474 = vadd.f32 %v502, %v3444
      %v3475 = vadd.f32 %v503, %v3446
      %v3476 = vadd.f32 %v504, %v2971
      %v3477 = vadd.f32 %v505, %v2973
      %v3478 = vadd.f32 %v506, %v3130
      %v3479 = vadd.f32 %v507, %v3132
      %v3480 = vadd.f32 %v508, %v3289
      %v3481 = vadd.f32 %v509, %v3291
      %v3482 = vadd.f32 %v510, %v3448
      %v3483 = vadd.f32 %v511, %v3450
      %v3484 = vadd.f32 %v3452, %v3460
      %v3485 = vadd.f32 %v3484, %v3468
      %v3486 = vadd.f32 %v3485, %v3476
      %v3487 = vrot.slane %v3486, 4
      %v3488 = vadd.f32 %v3486, %v3487
      %v3489 = vrot.slane %v3488, 2
      %v3490 = vadd.f32 %v3488, %v3489
      %v3491 = vrot.slane %v3490, 1
      %v3492 = vadd.f32 %v3490, %v3491
      %v3493 = vadd.f32 %v3453, %v3461
      %v3494 = vadd.f32 %v3493, %v3469
      %v3495 = vadd.f32 %v3494, %v3477
      %v3496 = vrot.slane %v3495, 4
      %v3497 = vadd.f32 %v3495, %v3496
      %v3498 = vrot.slane %v3497, 2
      %v3499 = vadd.f32 %v3497, %v3498
      %v3500 = vrot.slane %v3499, 1
      %v3501 = vadd.f32 %v3499, %v3500
      %v3502 = vadd.f32 %v3454, %v3462
      %v3503 = vadd.f32 %v3502, %v3470
      %v3504 = vadd.f32 %v3503, %v3478
      %v3505 = vrot.slane %v3504, 4
      %v3506 = vadd.f32 %v3504, %v3505
      %v3507 = vrot.slane %v3506, 2
      %v3508 = vadd.f32 %v3506, %v3507
      %v3509 = vrot.slane %v3508, 1
      %v3510 = vadd.f32 %v3508, %v3509
      %v3511 = vadd.f32 %v3455, %v3463
      %v3512 = vadd.f32 %v3511, %v3471
      %v3513 = vadd.f32 %v3512, %v3479
      %v3514 = vrot.slane %v3513, 4
      %v3515 = vadd.f32 %v3513, %v3514
      %v3516 = vrot.slane %v3515, 2
      %v3517 = vadd.f32 %v3515, %v3516
      %v3518 = vrot.slane %v3517, 1
      %v3519 = vadd.f32 %v3517, %v3518
      %v3520 = vadd.f32 %v3456, %v3464
      %v3521 = vadd.f32 %v3520, %v3472
      %v3522 = vadd.f32 %v3521, %v3480
      %v3523 = vrot.slane %v3522, 4
      %v3524 = vadd.f32 %v3522, %v3523
      %v3525 = vrot.slane %v3524, 2
      %v3526 = vadd.f32 %v3524, %v3525
      %v3527 = vrot.slane %v3526, 1
      %v3528 = vadd.f32 %v3526, %v3527
      %v3529 = vadd.f32 %v3457, %v3465
      %v3530 = vadd.f32 %v3529, %v3473
      %v3531 = vadd.f32 %v3530, %v3481
      %v3532 = vrot.slane %v3531, 4
      %v3533 = vadd.f32 %v3531, %v3532
      %v3534 = vrot.slane %v3533, 2
      %v3535 = vadd.f32 %v3533, %v3534
      %v3536 = vrot.slane %v3535, 1
      %v3537 = vadd.f32 %v3535, %v3536
      %v3538 = vadd.f32 %v3458, %v3466
      %v3539 = vadd.f32 %v3538, %v3474
      %v3540 = vadd.f32 %v3539, %v3482
      %v3541 = vrot.slane %v3540, 4
      %v3542 = vadd.f32 %v3540, %v3541
      %v3543 = vrot.slane %v3542, 2
      %v3544 = vadd.f32 %v3542, %v3543
      %v3545 = vrot.slane %v3544, 1
      %v3546 = vadd.f32 %v3544, %v3545
      %v3547 = vadd.f32 %v3459, %v3467
      %v3548 = vadd.f32 %v3547, %v3475
      %v3549 = vadd.f32 %v3548, %v3483
      %v3550 = vrot.slane %v3549, 4
      %v3551 = vadd.f32 %v3549, %v3550
      %v3552 = vrot.slane %v3551, 2
      %v3553 = vadd.f32 %v3551, %v3552
      %v3554 = vrot.slane %v3553, 1
      %v3555 = vadd.f32 %v3553, %v3554
      %v3556 = vmul.f32 %v3452, %v3452
      %v3557 = vmul.f32 %v3453, %v3453
      %v3558 = vmul.f32 %v3454, %v3454
      %v3559 = vmul.f32 %v3455, %v3455
      %v3560 = vmul.f32 %v3456, %v3456
      %v3561 = vmul.f32 %v3457, %v3457
      %v3562 = vmul.f32 %v3458, %v3458
      %v3563 = vmul.f32 %v3459, %v3459
      %v3564 = vmul.f32 %v3460, %v3460
      %v3565 = vmul.f32 %v3461, %v3461
      %v3566 = vmul.f32 %v3462, %v3462
      %v3567 = vmul.f32 %v3463, %v3463
      %v3568 = vmul.f32 %v3464, %v3464
      %v3569 = vmul.f32 %v3465, %v3465
      %v3570 = vmul.f32 %v3466, %v3466
      %v3571 = vmul.f32 %v3467, %v3467
      %v3572 = vmul.f32 %v3468, %v3468
      %v3573 = vmul.f32 %v3469, %v3469
      %v3574 = vmul.f32 %v3470, %v3470
      %v3575 = vmul.f32 %v3471, %v3471
      %v3576 = vmul.f32 %v3472, %v3472
      %v3577 = vmul.f32 %v3473, %v3473
      %v3578 = vmul.f32 %v3474, %v3474
      %v3579 = vmul.f32 %v3475, %v3475
      %v3580 = vmul.f32 %v3476, %v3476
      %v3581 = vmul.f32 %v3477, %v3477
      %v3582 = vmul.f32 %v3478, %v3478
      %v3583 = vmul.f32 %v3479, %v3479
      %v3584 = vmul.f32 %v3480, %v3480
      %v3585 = vmul.f32 %v3481, %v3481
      %v3586 = vmul.f32 %v3482, %v3482
      %v3587 = vmul.f32 %v3483, %v3483
      %v3588 = vadd.f32 %v3556, %v3564
      %v3589 = vadd.f32 %v3588, %v3572
      %v3590 = vadd.f32 %v3589, %v3580
      %v3591 = vrot.slane %v3590, 4
      %v3592 = vadd.f32 %v3590, %v3591
      %v3593 = vrot.slane %v3592, 2
      %v3594 = vadd.f32 %v3592, %v3593
      %v3595 = vrot.slane %v3594, 1
      %v3596 = vadd.f32 %v3594, %v3595
      %v3597 = vadd.f32 %v3557, %v3565
      %v3598 = vadd.f32 %v3597, %v3573
      %v3599 = vadd.f32 %v3598, %v3581
      %v3600 = vrot.slane %v3599, 4
      %v3601 = vadd.f32 %v3599, %v3600
      %v3602 = vrot.slane %v3601, 2
      %v3603 = vadd.f32 %v3601, %v3602
      %v3604 = vrot.slane %v3603, 1
      %v3605 = vadd.f32 %v3603, %v3604
      %v3606 = vadd.f32 %v3558, %v3566
      %v3607 = vadd.f32 %v3606, %v3574
      %v3608 = vadd.f32 %v3607, %v3582
      %v3609 = vrot.slane %v3608, 4
      %v3610 = vadd.f32 %v3608, %v3609
      %v3611 = vrot.slane %v3610, 2
      %v3612 = vadd.f32 %v3610, %v3611
      %v3613 = vrot.slane %v3612, 1
      %v3614 = vadd.f32 %v3612, %v3613
      %v3615 = vadd.f32 %v3559, %v3567
      %v3616 = vadd.f32 %v3615, %v3575
      %v3617 = vadd.f32 %v3616, %v3583
      %v3618 = vrot.slane %v3617, 4
      %v3619 = vadd.f32 %v3617, %v3618
      %v3620 = vrot.slane %v3619, 2
      %v3621 = vadd.f32 %v3619, %v3620
      %v3622 = vrot.slane %v3621, 1
      %v3623 = vadd.f32 %v3621, %v3622
      %v3624 = vadd.f32 %v3560, %v3568
      %v3625 = vadd.f32 %v3624, %v3576
      %v3626 = vadd.f32 %v3625, %v3584
      %v3627 = vrot.slane %v3626, 4
      %v3628 = vadd.f32 %v3626, %v3627
      %v3629 = vrot.slane %v3628, 2
      %v3630 = vadd.f32 %v3628, %v3629
      %v3631 = vrot.slane %v3630, 1
      %v3632 = vadd.f32 %v3630, %v3631
      %v3633 = vadd.f32 %v3561, %v3569
      %v3634 = vadd.f32 %v3633, %v3577
      %v3635 = vadd.f32 %v3634, %v3585
      %v3636 = vrot.slane %v3635, 4
      %v3637 = vadd.f32 %v3635, %v3636
      %v3638 = vrot.slane %v3637, 2
      %v3639 = vadd.f32 %v3637, %v3638
      %v3640 = vrot.slane %v3639, 1
      %v3641 = vadd.f32 %v3639, %v3640
      %v3642 = vadd.f32 %v3562, %v3570
      %v3643 = vadd.f32 %v3642, %v3578
      %v3644 = vadd.f32 %v3643, %v3586
      %v3645 = vrot.slane %v3644, 4
      %v3646 = vadd.f32 %v3644, %v3645
      %v3647 = vrot.slane %v3646, 2
      %v3648 = vadd.f32 %v3646, %v3647
      %v3649 = vrot.slane %v3648, 1
      %v3650 = vadd.f32 %v3648, %v3649
      %v3651 = vadd.f32 %v3563, %v3571
      %v3652 = vadd.f32 %v3651, %v3579
      %v3653 = vadd.f32 %v3652, %v3587
      %v3654 = vrot.slane %v3653, 4
      %v3655 = vadd.f32 %v3653, %v3654
      %v3656 = vrot.slane %v3655, 2
      %v3657 = vadd.f32 %v3655, %v3656
      %v3658 = vrot.slane %v3657, 1
      %v3659 = vadd.f32 %v3657, %v3658
      %v3660 = vld [vmem:[%s2] sm:$0xff]
      %v3661 = vld [vmem:[%s2 + $0x8] sm:$0xff]
      %v3662 = vld [vmem:[%s2 + $0x10] sm:$0xff]
      %v3663 = vld [vmem:[%s2 + $0x18] sm:$0xff]
      %v3664 = vld [vmem:[%s2 + $0x20] sm:$0xff]
      %v3665 = vld [vmem:[%s2 + $0x28] sm:$0xff]
      %v3666 = vld [vmem:[%s2 + $0x30] sm:$0xff]
      %v3667 = vld [vmem:[%s2 + $0x38] sm:$0xff]
      %v3668 = vld [vmem:[%s2 + $0x40] sm:$0xff]
      %v3669 = vld [vmem:[%s2 + $0x48] sm:$0xff]
      %v3670 = vld [vmem:[%s2 + $0x50] sm:$0xff]
      %v3671 = vld [vmem:[%s2 + $0x58] sm:$0xff]
      %v3672 = vld [vmem:[%s2 + $0x60] sm:$0xff]
      %v3673 = vld [vmem:[%s2 + $0x68] sm:$0xff]
      %v3674 = vld [vmem:[%s2 + $0x70] sm:$0xff]
      %v3675 = vld [vmem:[%s2 + $0x78] sm:$0xff]
      %v3676 = vld [vmem:[%s2 + $0x80] sm:$0xff]
      %v3677 = vld [vmem:[%s2 + $0x88] sm:$0xff]
      %v3678 = vld [vmem:[%s2 + $0x90] sm:$0xff]
      %v3679 = vld [vmem:[%s2 + $0x98] sm:$0xff]
      %v3680 = vld [vmem:[%s2 + $0xa0] sm:$0xff]
      %v3681 = vld [vmem:[%s2 + $0xa8] sm:$0xff]
      %v3682 = vld [vmem:[%s2 + $0xb0] sm:$0xff]
      %v3683 = vld [vmem:[%s2 + $0xb8] sm:$0xff]
      %v3684 = vld [vmem:[%s2 + $0xc0] sm:$0xff]
      %v3685 = vld [vmem:[%s2 + $0xc8] sm:$0xff]
      %v3686 = vld [vmem:[%s2 + $0xd0] sm:$0xff]
      %v3687 = vld [vmem:[%s2 + $0xd8] sm:$0xff]
      %v3688 = vld [vmem:[%s2 + $0xe0] sm:$0xff]
      %v3689 = vld [vmem:[%s2 + $0xe8] sm:$0xff]
      %v3690 = vld [vmem:[%s2 + $0xf0] sm:$0xff]
      %v3691 = vld [vmem:[%s2 + $0xf8] sm:$0xff]
      %v3692 = vld [vmem:[%s2 + $0x100] sm:$0xff]
      %v3693 = vld [vmem:[%s2 + $0x108] sm:$0xff]
      %v3694 = vld [vmem:[%s2 + $0x110] sm:$0xff]
      %v3695 = vld [vmem:[%s2 + $0x118] sm:$0xff]
      %v3696 = vld [vmem:[%s2 + $0x120] sm:$0xff]
      %v3697 = vld [vmem:[%s2 + $0x128] sm:$0xff]
      %v3698 = vld [vmem:[%s2 + $0x130] sm:$0xff]
      %v3699 = vld [vmem:[%s2 + $0x138] sm:$0xff]
      %v3700 = vld [vmem:[%s2 + $0x140] sm:$0xff]
      %v3701 = vld [vmem:[%s2 + $0x148] sm:$0xff]
      %v3702 = vld [vmem:[%s2 + $0x150] sm:$0xff]
      %v3703 = vld [vmem:[%s2 + $0x158] sm:$0xff]
      %v3704 = vld [vmem:[%s2 + $0x160] sm:$0xff]
      %v3705 = vld [vmem:[%s2 + $0x168] sm:$0xff]
      %v3706 = vld [vmem:[%s2 + $0x170] sm:$0xff]
      %v3707 = vld [vmem:[%s2 + $0x178] sm:$0xff]
      %v3708 = vld [vmem:[%s2 + $0x180] sm:$0xff]
      %v3709 = vld [vmem:[%s2 + $0x188] sm:$0xff]
      %v3710 = vld [vmem:[%s2 + $0x190] sm:$0xff]
      %v3711 = vld [vmem:[%s2 + $0x198] sm:$0xff]
      %v3712 = vld [vmem:[%s2 + $0x1a0] sm:$0xff]
      %v3713 = vld [vmem:[%s2 + $0x1a8] sm:$0xff]
      %v3714 = vld [vmem:[%s2 + $0x1b0] sm:$0xff]
      %v3715 = vld [vmem:[%s2 + $0x1b8] sm:$0xff]
      %v3716 = vld [vmem:[%s2 + $0x1c0] sm:$0xff]
      %v3717 = vld [vmem:[%s2 + $0x1c8] sm:$0xff]
      %v3718 = vld [vmem:[%s2 + $0x1d0] sm:$0xff]
      %v3719 = vld [vmem:[%s2 + $0x1d8] sm:$0xff]
      %v3720 = vld [vmem:[%s2 + $0x1e0] sm:$0xff]
      %v3721 = vld [vmem:[%s2 + $0x1e8] sm:$0xff]
      %v3722 = vld [vmem:[%s2 + $0x1f0] sm:$0xff]
      %v3723 = vld [vmem:[%s2 + $0x1f8] sm:$0xff]
      %v3724 = vld [vmem:[%s2 + $0x200] sm:$0xff]
      %v3725 = vld [vmem:[%s2 + $0x208] sm:$0xff]
      %v3726 = vld [vmem:[%s2 + $0x210] sm:$0xff]
      %v3727 = vld [vmem:[%s2 + $0x218] sm:$0xff]
      %v3728 = vld [vmem:[%s2 + $0x220] sm:$0xff]
      %v3729 = vld [vmem:[%s2 + $0x228] sm:$0xff]
      %v3730 = vld [vmem:[%s2 + $0x230] sm:$0xff]
      %v3731 = vld [vmem:[%s2 + $0x238] sm:$0xff]
      %v3732 = vld [vmem:[%s2 + $0x240] sm:$0xff]
      %v3733 = vld [vmem:[%s2 + $0x248] sm:$0xff]
      %v3734 = vld [vmem:[%s2 + $0x250] sm:$0xff]
      %v3735 = vld [vmem:[%s2 + $0x258] sm:$0xff]
      %v3736 = vld [vmem:[%s2 + $0x260] sm:$0xff]
      %v3737 = vld [vmem:[%s2 + $0x268] sm:$0xff]
      %v3738 = vld [vmem:[%s2 + $0x270] sm:$0xff]
      %v3739 = vld [vmem:[%s2 + $0x278] sm:$0xff]
      %v3740 = vld [vmem:[%s2 + $0x280] sm:$0xff]
      %v3741 = vld [vmem:[%s2 + $0x288] sm:$0xff]
      %v3742 = vld [vmem:[%s2 + $0x290] sm:$0xff]
      %v3743 = vld [vmem:[%s2 + $0x298] sm:$0xff]
      %v3744 = vld [vmem:[%s2 + $0x2a0] sm:$0xff]
      %v3745 = vld [vmem:[%s2 + $0x2a8] sm:$0xff]
      %v3746 = vld [vmem:[%s2 + $0x2b0] sm:$0xff]
      %v3747 = vld [vmem:[%s2 + $0x2b8] sm:$0xff]
      %v3748 = vld [vmem:[%s2 + $0x2c0] sm:$0xff]
      %v3749 = vld [vmem:[%s2 + $0x2c8] sm:$0xff]
      %v3750 = vld [vmem:[%s2 + $0x2d0] sm:$0xff]
      %v3751 = vld [vmem:[%s2 + $0x2d8] sm:$0xff]
      %v3752 = vld [vmem:[%s2 + $0x2e0] sm:$0xff]
      %v3753 = vld [vmem:[%s2 + $0x2e8] sm:$0xff]
      %v3754 = vld [vmem:[%s2 + $0x2f0] sm:$0xff]
      %v3755 = vld [vmem:[%s2 + $0x2f8] sm:$0xff]
      %v3756 = vld [vmem:[%s2 + $0x300] sm:$0xff]
      %v3757 = vld [vmem:[%s2 + $0x308] sm:$0xff]
      %v3758 = vld [vmem:[%s2 + $0x310] sm:$0xff]
      %v3759 = vld [vmem:[%s2 + $0x318] sm:$0xff]
      %v3760 = vld [vmem:[%s2 + $0x320] sm:$0xff]
      %v3761 = vld [vmem:[%s2 + $0x328] sm:$0xff]
      %v3762 = vld [vmem:[%s2 + $0x330] sm:$0xff]
      %v3763 = vld [vmem:[%s2 + $0x338] sm:$0xff]
      %v3764 = vld [vmem:[%s2 + $0x340] sm:$0xff]
      %v3765 = vld [vmem:[%s2 + $0x348] sm:$0xff]
      %v3766 = vld [vmem:[%s2 + $0x350] sm:$0xff]
      %v3767 = vld [vmem:[%s2 + $0x358] sm:$0xff]
      %v3768 = vld [vmem:[%s2 + $0x360] sm:$0xff]
      %v3769 = vld [vmem:[%s2 + $0x368] sm:$0xff]
      %v3770 = vld [vmem:[%s2 + $0x370] sm:$0xff]
      %v3771 = vld [vmem:[%s2 + $0x378] sm:$0xff]
      %v3772 = vld [vmem:[%s2 + $0x380] sm:$0xff]
      %v3773 = vld [vmem:[%s2 + $0x388] sm:$0xff]
      %v3774 = vld [vmem:[%s2 + $0x390] sm:$0xff]
      %v3775 = vld [vmem:[%s2 + $0x398] sm:$0xff]
      %v3776 = vld [vmem:[%s2 + $0x3a0] sm:$0xff]
      %v3777 = vld [vmem:[%s2 + $0x3a8] sm:$0xff]
      %v3778 = vld [vmem:[%s2 + $0x3b0] sm:$0xff]
      %v3779 = vld [vmem:[%s2 + $0x3b8] sm:$0xff]
      %v3780 = vld [vmem:[%s2 + $0x3c0] sm:$0xff]
      %v3781 = vld [vmem:[%s2 + $0x3c8] sm:$0xff]
      %v3782 = vld [vmem:[%s2 + $0x3d0] sm:$0xff]
      %v3783 = vld [vmem:[%s2 + $0x3d8] sm:$0xff]
      %v3784 = vld [vmem:[%s2 + $0x3e0] sm:$0xff]
      %v3785 = vld [vmem:[%s2 + $0x3e8] sm:$0xff]
      %v3786 = vld [vmem:[%s2 + $0x3f0] sm:$0xff]
      %v3787 = vld [vmem:[%s2 + $0x3f8] sm:$0xff]
      %3788 = vmatprep.subr.mxu0 0.0
      %3789 = vmatpush1.msra.mxu0 %v3660
      %3790 = vmatprep.subr.mxu0 0.0
      %3791 = vmatpush1.msra.mxu0 %v3661
      %3792 = vmatprep.subr.mxu0 0.0
      %3793 = vmatpush1.msra.mxu0 %v3662
      %3794 = vmatprep.subr.mxu0 0.0
      %3795 = vmatpush1.msra.mxu0 %v3663
      %3796 = vmatprep.subr.mxu0 0.0
      %3797 = vmatpush1.msra.mxu0 %v3664
      %3798 = vmatprep.subr.mxu0 0.0
      %3799 = vmatpush1.msra.mxu0 %v3665
      %3800 = vmatprep.subr.mxu0 0.0
      %3801 = vmatpush1.msra.mxu0 %v3666
      %3802 = vmatprep.subr.mxu0 0.0
      %3803 = vmatpush1.msra.mxu0 %v3667
      %3804 = vmatprep.subr.mxu0 0.0
      %3805 = vmatpush1.msra.mxu0 %v3668
      %3806 = vmatprep.subr.mxu0 0.0
      %3807 = vmatpush1.msra.mxu0 %v3669
      %3808 = vmatprep.subr.mxu0 0.0
      %3809 = vmatpush1.msra.mxu0 %v3670
      %3810 = vmatprep.subr.mxu0 0.0
      %3811 = vmatpush1.msra.mxu0 %v3671
      %3812 = vmatprep.subr.mxu0 0.0
      %3813 = vmatpush1.msra.mxu0 %v3672
      %3814 = vmatprep.subr.mxu0 0.0
      %3815 = vmatpush1.msra.mxu0 %v3673
      %3816 = vmatprep.subr.mxu0 0.0
      %3817 = vmatpush1.msra.mxu0 %v3674
      %3818 = vmatprep.subr.mxu0 0.0
      %3819 = vmatpush1.msra.mxu0 %v3675
      %3820 = vmatprep.subr.mxu0 0.0
      %3821 = vmatpush1.msra.mxu0 %v3676
      %3822 = vmatprep.subr.mxu0 0.0
      %3823 = vmatpush1.msra.mxu0 %v3677
      %3824 = vmatprep.subr.mxu0 0.0
      %3825 = vmatpush1.msra.mxu0 %v3678
      %3826 = vmatprep.subr.mxu0 0.0
      %3827 = vmatpush1.msra.mxu0 %v3679
      %3828 = vmatprep.subr.mxu0 0.0
      %3829 = vmatpush1.msra.mxu0 %v3680
      %3830 = vmatprep.subr.mxu0 0.0
      %3831 = vmatpush1.msra.mxu0 %v3681
      %3832 = vmatprep.subr.mxu0 0.0
      %3833 = vmatpush1.msra.mxu0 %v3682
      %3834 = vmatprep.subr.mxu0 0.0
      %3835 = vmatpush1.msra.mxu0 %v3683
      %3836 = vmatprep.subr.mxu0 0.0
      %3837 = vmatpush1.msra.mxu0 %v3684
      %3838 = vmatprep.subr.mxu0 0.0
      %3839 = vmatpush1.msra.mxu0 %v3685
      %3840 = vmatprep.subr.mxu0 0.0
      %3841 = vmatpush1.msra.mxu0 %v3686
      %3842 = vmatprep.subr.mxu0 0.0
      %3843 = vmatpush1.msra.mxu0 %v3687
      %3844 = vmatprep.subr.mxu0 0.0
      %3845 = vmatpush1.msra.mxu0 %v3688
      %3846 = vmatprep.subr.mxu0 0.0
      %3847 = vmatpush1.msra.mxu0 %v3689
      %3848 = vmatprep.subr.mxu0 0.0
      %3849 = vmatpush1.msra.mxu0 %v3690
      %3850 = vmatprep.subr.mxu0 0.0
      %3851 = vmatpush1.msra.mxu0 %v3691
      %3852 = vmatprep.mubr.f32.mxu0 %v3501
      %3853 = vmatmul.mubr.f32.gmra.mrb[0].mxu0 %v3492
      %v3854 = vpop.f32.mrb[0].mxu0
      %v3855 = vadd.f32 0.0, %v3854
      %v3856 = vpop.f32.mrb[0].mxu0
      %3857 = vdwg.mxu0
      %3858 = vmatprep.subr.mxu0 0.0
      %3859 = vmatpush1.msra.mxu0 %v3692
      %3860 = vmatprep.subr.mxu0 0.0
      %3861 = vmatpush1.msra.mxu0 %v3693
      %3862 = vmatprep.subr.mxu0 0.0
      %3863 = vmatpush1.msra.mxu0 %v3694
      %3864 = vmatprep.subr.mxu0 0.0
      %3865 = vmatpush1.msra.mxu0 %v3695
      %3866 = vmatprep.subr.mxu0 0.0
      %3867 = vmatpush1.msra.mxu0 %v3696
      %3868 = vmatprep.subr.mxu0 0.0
      %3869 = vmatpush1.msra.mxu0 %v3697
      %3870 = vmatprep.subr.mxu0 0.0
      %3871 = vmatpush1.msra.mxu0 %v3698
      %3872 = vmatprep.subr.mxu0 0.0
      %3873 = vmatpush1.msra.mxu0 %v3699
      %3874 = vmatprep.subr.mxu0 0.0
      %3875 = vmatpush1.msra.mxu0 %v3700
      %3876 = vmatprep.subr.mxu0 0.0
      %3877 = vmatpush1.msra.mxu0 %v3701
      %3878 = vmatprep.subr.mxu0 0.0
      %3879 = vmatpush1.msra.mxu0 %v3702
      %3880 = vmatprep.subr.mxu0 0.0
      %3881 = vmatpush1.msra.mxu0 %v3703
      %3882 = vmatprep.subr.mxu0 0.0
      %3883 = vmatpush1.msra.mxu0 %v3704
      %3884 = vmatprep.subr.mxu0 0.0
      %3885 = vmatpush1.msra.mxu0 %v3705
      %3886 = vmatprep.subr.mxu0 0.0
      %3887 = vmatpush1.msra.mxu0 %v3706
      %3888 = vmatprep.subr.mxu0 0.0
      %3889 = vmatpush1.msra.mxu0 %v3707
      %3890 = vmatprep.subr.mxu0 0.0
      %3891 = vmatpush1.msra.mxu0 %v3708
      %3892 = vmatprep.subr.mxu0 0.0
      %3893 = vmatpush1.msra.mxu0 %v3709
      %3894 = vmatprep.subr.mxu0 0.0
      %3895 = vmatpush1.msra.mxu0 %v3710
      %3896 = vmatprep.subr.mxu0 0.0
      %3897 = vmatpush1.msra.mxu0 %v3711
      %3898 = vmatprep.subr.mxu0 0.0
      %3899 = vmatpush1.msra.mxu0 %v3712
      %3900 = vmatprep.subr.mxu0 0.0
      %3901 = vmatpush1.msra.mxu0 %v3713
      %3902 = vmatprep.subr.mxu0 0.0
      %3903 = vmatpush1.msra.mxu0 %v3714
      %3904 = vmatprep.subr.mxu0 0.0
      %3905 = vmatpush1.msra.mxu0 %v3715
      %3906 = vmatprep.subr.mxu0 0.0
      %3907 = vmatpush1.msra.mxu0 %v3716
      %3908 = vmatprep.subr.mxu0 0.0
      %3909 = vmatpush1.msra.mxu0 %v3717
      %3910 = vmatprep.subr.mxu0 0.0
      %3911 = vmatpush1.msra.mxu0 %v3718
      %3912 = vmatprep.subr.mxu0 0.0
      %3913 = vmatpush1.msra.mxu0 %v3719
      %3914 = vmatprep.subr.mxu0 0.0
      %3915 = vmatpush1.msra.mxu0 %v3720
      %3916 = vmatprep.subr.mxu0 0.0
      %3917 = vmatpush1.msra.mxu0 %v3721
      %3918 = vmatprep.subr.mxu0 0.0
      %3919 = vmatpush1.msra.mxu0 %v3722
      %3920 = vmatprep.subr.mxu0 0.0
      %3921 = vmatpush1.msra.mxu0 %v3723
      %3922 = vmatprep.mubr.f32.mxu0 %v3519
      %3923 = vmatmul.mubr.f32.gmra.mrb[0].mxu0 %v3510
      %v3924 = vpop.f32.mrb[0].mxu0
      %v3925 = vadd.f32 %v3855, %v3924
      %v3926 = vpop.f32.mrb[0].mxu0
      %3927 = vdwg.mxu0
      %3928 = vmatprep.subr.mxu0 0.0
      %3929 = vmatpush1.msra.mxu0 %v3724
      %3930 = vmatprep.subr.mxu0 0.0
      %3931 = vmatpush1.msra.mxu0 %v3725
      %3932 = vmatprep.subr.mxu0 0.0
      %3933 = vmatpush1.msra.mxu0 %v3726
      %3934 = vmatprep.subr.mxu0 0.0
      %3935 = vmatpush1.msra.mxu0 %v3727
      %3936 = vmatprep.subr.mxu0 0.0
      %3937 = vmatpush1.msra.mxu0 %v3728
      %3938 = vmatprep.subr.mxu0 0.0
      %3939 = vmatpush1.msra.mxu0 %v3729
      %3940 = vmatprep.subr.mxu0 0.0
      %3941 = vmatpush1.msra.mxu0 %v3730
      %3942 = vmatprep.subr.mxu0 0.0
      %3943 = vmatpush1.msra.mxu0 %v3731
      %3944 = vmatprep.subr.mxu0 0.0
      %3945 = vmatpush1.msra.mxu0 %v3732
      %3946 = vmatprep.subr.mxu0 0.0
      %3947 = vmatpush1.msra.mxu0 %v3733
      %3948 = vmatprep.subr.mxu0 0.0
      %3949 = vmatpush1.msra.mxu0 %v3734
      %3950 = vmatprep.subr.mxu0 0.0
      %3951 = vmatpush1.msra.mxu0 %v3735
      %3952 = vmatprep.subr.mxu0 0.0
      %3953 = vmatpush1.msra.mxu0 %v3736
      %3954 = vmatprep.subr.mxu0 0.0
      %3955 = vmatpush1.msra.mxu0 %v3737
      %3956 = vmatprep.subr.mxu0 0.0
      %3957 = vmatpush1.msra.mxu0 %v3738
      %3958 = vmatprep.subr.mxu0 0.0
      %3959 = vmatpush1.msra.mxu0 %v3739
      %3960 = vmatprep.subr.mxu0 0.0
      %3961 = vmatpush1.msra.mxu0 %v3740
      %3962 = vmatprep.subr.mxu0 0.0
      %3963 = vmatpush1.msra.mxu0 %v3741
      %3964 = vmatprep.subr.mxu0 0.0
      %3965 = vmatpush1.msra.mxu0 %v3742
      %3966 = vmatprep.subr.mxu0 0.0
      %3967 = vmatpush1.msra.mxu0 %v3743
      %3968 = vmatprep.subr.mxu0 0.0
      %3969 = vmatpush1.msra.mxu0 %v3744
      %3970 = vmatprep.subr.mxu0 0.0
      %3971 = vmatpush1.msra.mxu0 %v3745
      %3972 = vmatprep.subr.mxu0 0.0
      %3973 = vmatpush1.msra.mxu0 %v3746
      %3974 = vmatprep.subr.mxu0 0.0
      %3975 = vmatpush1.msra.mxu0 %v3747
      %3976 = vmatprep.subr.mxu0 0.0
      %3977 = vmatpush1.msra.mxu0 %v3748
      %3978 = vmatprep.subr.mxu0 0.0
      %3979 = vmatpush1.msra.mxu0 %v3749
      %3980 = vmatprep.subr.mxu0 0.0
      %3981 = vmatpush1.msra.mxu0 %v3750
      %3982 = vmatprep.subr.mxu0 0.0
      %3983 = vmatpush1.msra.mxu0 %v3751
      %3984 = vmatprep.subr.mxu0 0.0
      %3985 = vmatpush1.msra.mxu0 %v3752
      %3986 = vmatprep.subr.mxu0 0.0
      %3987 = vmatpush1.msra.mxu0 %v3753
      %3988 = vmatprep.subr.mxu0 0.0
      %3989 = vmatpush1.msra.mxu0 %v3754
      %3990 = vmatprep.subr.mxu0 0.0
      %3991 = vmatpush1.msra.mxu0 %v3755
      %3992 = vmatprep.mubr.f32.mxu0 %v3537
      %3993 = vmatmul.mubr.f32.gmra.mrb[0].mxu0 %v3528
      %v3994 = vpop.f32.mrb[0].mxu0
      %v3995 = vadd.f32 %v3925, %v3994
      %v3996 = vpop.f32.mrb[0].mxu0
      %3997 = vdwg.mxu0
      %3998 = vmatprep.subr.mxu0 0.0
      %3999 = vmatpush1.msra.mxu0 %v3756
      %4000 = vmatprep.subr.mxu0 0.0
      %4001 = vmatpush1.msra.mxu0 %v3757
      %4002 = vmatprep.subr.mxu0 0.0
      %4003 = vmatpush1.msra.mxu0 %v3758
      %4004 = vmatprep.subr.mxu0 0.0
      %4005 = vmatpush1.msra.mxu0 %v3759
      %4006 = vmatprep.subr.mxu0 0.0
      %4007 = vmatpush1.msra.mxu0 %v3760
      %4008 = vmatprep.subr.mxu0 0.0
      %4009 = vmatpush1.msra.mxu0 %v3761
      %4010 = vmatprep.subr.mxu0 0.0
      %4011 = vmatpush1.msra.mxu0 %v3762
      %4012 = vmatprep.subr.mxu0 0.0
      %4013 = vmatpush1.msra.mxu0 %v3763
      %4014 = vmatprep.subr.mxu0 0.0
      %4015 = vmatpush1.msra.mxu0 %v3764
      %4016 = vmatprep.subr.mxu0 0.0
      %4017 = vmatpush1.msra.mxu0 %v3765
      %4018 = vmatprep.subr.mxu0 0.0
      %4019 = vmatpush1.msra.mxu0 %v3766
      %4020 = vmatprep.subr.mxu0 0.0
      %4021 = vmatpush1.msra.mxu0 %v3767
      %4022 = vmatprep.subr.mxu0 0.0
      %4023 = vmatpush1.msra.mxu0 %v3768
      %4024 = vmatprep.subr.mxu0 0.0
      %4025 = vmatpush1.msra.mxu0 %v3769
      %4026 = vmatprep.subr.mxu0 0.0
      %4027 = vmatpush1.msra.mxu0 %v3770
      %4028 = vmatprep.subr.mxu0 0.0
      %4029 = vmatpush1.msra.mxu0 %v3771
      %4030 = vmatprep.subr.mxu0 0.0
      %4031 = vmatpush1.msra.mxu0 %v3772
      %4032 = vmatprep.subr.mxu0 0.0
      %4033 = vmatpush1.msra.mxu0 %v3773
      %4034 = vmatprep.subr.mxu0 0.0
      %4035 = vmatpush1.msra.mxu0 %v3774
      %4036 = vmatprep.subr.mxu0 0.0
      %4037 = vmatpush1.msra.mxu0 %v3775
      %4038 = vmatprep.subr.mxu0 0.0
      %4039 = vmatpush1.msra.mxu0 %v3776
      %4040 = vmatprep.subr.mxu0 0.0
      %4041 = vmatpush1.msra.mxu0 %v3777
      %4042 = vmatprep.subr.mxu0 0.0
      %4043 = vmatpush1.msra.mxu0 %v3778
      %4044 = vmatprep.subr.mxu0 0.0
      %4045 = vmatpush1.msra.mxu0 %v3779
      %4046 = vmatprep.subr.mxu0 0.0
      %4047 = vmatpush1.msra.mxu0 %v3780
      %4048 = vmatprep.subr.mxu0 0.0
      %4049 = vmatpush1.msra.mxu0 %v3781
      %4050 = vmatprep.subr.mxu0 0.0
      %4051 = vmatpush1.msra.mxu0 %v3782
      %4052 = vmatprep.subr.mxu0 0.0
      %4053 = vmatpush1.msra.mxu0 %v3783
      %4054 = vmatprep.subr.mxu0 0.0
      %4055 = vmatpush1.msra.mxu0 %v3784
      %4056 = vmatprep.subr.mxu0 0.0
      %4057 = vmatpush1.msra.mxu0 %v3785
      %4058 = vmatprep.subr.mxu0 0.0
      %4059 = vmatpush1.msra.mxu0 %v3786
      %4060 = vmatprep.subr.mxu0 0.0
      %4061 = vmatpush1.msra.mxu0 %v3787
      %4062 = vmatprep.mubr.f32.mxu0 %v3555
      %4063 = vmatmul.mubr.f32.gmra.mrb[0].mxu0 %v3546
      %v4064 = vpop.f32.mrb[0].mxu0
      %v4065 = vadd.f32 %v3995, %v4064
      %v4066 = vpop.f32.mrb[0].mxu0
      %4067 = vdwg.mxu0
      %4068 = vmatprep.subr.mxu0 0.0
      %4069 = vmatpush1.msra.mxu0 %v3660
      %4070 = vmatprep.subr.mxu0 0.0
      %4071 = vmatpush1.msra.mxu0 %v3661
      %4072 = vmatprep.subr.mxu0 0.0
      %4073 = vmatpush1.msra.mxu0 %v3662
      %4074 = vmatprep.subr.mxu0 0.0
      %4075 = vmatpush1.msra.mxu0 %v3663
      %4076 = vmatprep.subr.mxu0 0.0
      %4077 = vmatpush1.msra.mxu0 %v3664
      %4078 = vmatprep.subr.mxu0 0.0
      %4079 = vmatpush1.msra.mxu0 %v3665
      %4080 = vmatprep.subr.mxu0 0.0
      %4081 = vmatpush1.msra.mxu0 %v3666
      %4082 = vmatprep.subr.mxu0 0.0
      %4083 = vmatpush1.msra.mxu0 %v3667
      %4084 = vmatprep.subr.mxu0 0.0
      %4085 = vmatpush1.msra.mxu0 %v3668
      %4086 = vmatprep.subr.mxu0 0.0
      %4087 = vmatpush1.msra.mxu0 %v3669
      %4088 = vmatprep.subr.mxu0 0.0
      %4089 = vmatpush1.msra.mxu0 %v3670
      %4090 = vmatprep.subr.mxu0 0.0
      %4091 = vmatpush1.msra.mxu0 %v3671
      %4092 = vmatprep.subr.mxu0 0.0
      %4093 = vmatpush1.msra.mxu0 %v3672
      %4094 = vmatprep.subr.mxu0 0.0
      %4095 = vmatpush1.msra.mxu0 %v3673
      %4096 = vmatprep.subr.mxu0 0.0
      %4097 = vmatpush1.msra.mxu0 %v3674
      %4098 = vmatprep.subr.mxu0 0.0
      %4099 = vmatpush1.msra.mxu0 %v3675
      %4100 = vmatprep.subr.mxu0 0.0
      %4101 = vmatpush1.msra.mxu0 %v3676
      %4102 = vmatprep.subr.mxu0 0.0
      %4103 = vmatpush1.msra.mxu0 %v3677
      %4104 = vmatprep.subr.mxu0 0.0
      %4105 = vmatpush1.msra.mxu0 %v3678
      %4106 = vmatprep.subr.mxu0 0.0
      %4107 = vmatpush1.msra.mxu0 %v3679
      %4108 = vmatprep.subr.mxu0 0.0
      %4109 = vmatpush1.msra.mxu0 %v3680
      %4110 = vmatprep.subr.mxu0 0.0
      %4111 = vmatpush1.msra.mxu0 %v3681
      %4112 = vmatprep.subr.mxu0 0.0
      %4113 = vmatpush1.msra.mxu0 %v3682
      %4114 = vmatprep.subr.mxu0 0.0
      %4115 = vmatpush1.msra.mxu0 %v3683
      %4116 = vmatprep.subr.mxu0 0.0
      %4117 = vmatpush1.msra.mxu0 %v3684
      %4118 = vmatprep.subr.mxu0 0.0
      %4119 = vmatpush1.msra.mxu0 %v3685
      %4120 = vmatprep.subr.mxu0 0.0
      %4121 = vmatpush1.msra.mxu0 %v3686
      %4122 = vmatprep.subr.mxu0 0.0
      %4123 = vmatpush1.msra.mxu0 %v3687
      %4124 = vmatprep.subr.mxu0 0.0
      %4125 = vmatpush1.msra.mxu0 %v3688
      %4126 = vmatprep.subr.mxu0 0.0
      %4127 = vmatpush1.msra.mxu0 %v3689
      %4128 = vmatprep.subr.mxu0 0.0
      %4129 = vmatpush1.msra.mxu0 %v3690
      %4130 = vmatprep.subr.mxu0 0.0
      %4131 = vmatpush1.msra.mxu0 %v3691
      %4132 = vmatprep.mubr.f32.mxu0 %v3605
      %4133 = vmatmul.mubr.f32.gmra.mrb[0].mxu0 %v3596
      %v4134 = vpop.f32.mrb[0].mxu0
      %v4135 = vadd.f32 0.0, %v4134
      %v4136 = vpop.f32.mrb[0].mxu0
      %4137 = vdwg.mxu0
      %4138 = vmatprep.subr.mxu0 0.0
      %4139 = vmatpush1.msra.mxu0 %v3692
      %4140 = vmatprep.subr.mxu0 0.0
      %4141 = vmatpush1.msra.mxu0 %v3693
      %4142 = vmatprep.subr.mxu0 0.0
      %4143 = vmatpush1.msra.mxu0 %v3694
      %4144 = vmatprep.subr.mxu0 0.0
      %4145 = vmatpush1.msra.mxu0 %v3695
      %4146 = vmatprep.subr.mxu0 0.0
      %4147 = vmatpush1.msra.mxu0 %v3696
      %4148 = vmatprep.subr.mxu0 0.0
      %4149 = vmatpush1.msra.mxu0 %v3697
      %4150 = vmatprep.subr.mxu0 0.0
      %4151 = vmatpush1.msra.mxu0 %v3698
      %4152 = vmatprep.subr.mxu0 0.0
      %4153 = vmatpush1.msra.mxu0 %v3699
      %4154 = vmatprep.subr.mxu0 0.0
      %4155 = vmatpush1.msra.mxu0 %v3700
      %4156 = vmatprep.subr.mxu0 0.0
      %4157 = vmatpush1.msra.mxu0 %v3701
      %4158 = vmatprep.subr.mxu0 0.0
      %4159 = vmatpush1.msra.mxu0 %v3702
      %4160 = vmatprep.subr.mxu0 0.0
      %4161 = vmatpush1.msra.mxu0 %v3703
      %4162 = vmatprep.subr.mxu0 0.0
      %4163 = vmatpush1.msra.mxu0 %v3704
      %4164 = vmatprep.subr.mxu0 0.0
      %4165 = vmatpush1.msra.mxu0 %v3705
      %4166 = vmatprep.subr.mxu0 0.0
      %4167 = vmatpush1.msra.mxu0 %v3706
      %4168 = vmatprep.subr.mxu0 0.0
      %4169 = vmatpush1.msra.mxu0 %v3707
      %4170 = vmatprep.subr.mxu0 0.0
      %4171 = vmatpush1.msra.mxu0 %v3708
      %4172 = vmatprep.subr.mxu0 0.0
      %4173 = vmatpush1.msra.mxu0 %v3709
      %4174 = vmatprep.subr.mxu0 0.0
      %4175 = vmatpush1.msra.mxu0 %v3710
      %4176 = vmatprep.subr.mxu0 0.0
      %4177 = vmatpush1.msra.mxu0 %v3711
      %4178 = vmatprep.subr.mxu0 0.0
      %4179 = vmatpush1.msra.mxu0 %v3712
      %4180 = vmatprep.subr.mxu0 0.0
      %4181 = vmatpush1.msra.mxu0 %v3713
      %4182 = vmatprep.subr.mxu0 0.0
      %4183 = vmatpush1.msra.mxu0 %v3714
      %4184 = vmatprep.subr.mxu0 0.0
      %4185 = vmatpush1.msra.mxu0 %v3715
      %4186 = vmatprep.subr.mxu0 0.0
      %4187 = vmatpush1.msra.mxu0 %v3716
      %4188 = vmatprep.subr.mxu0 0.0
      %4189 = vmatpush1.msra.mxu0 %v3717
      %4190 = vmatprep.subr.mxu0 0.0
      %4191 = vmatpush1.msra.mxu0 %v3718
      %4192 = vmatprep.subr.mxu0 0.0
      %4193 = vmatpush1.msra.mxu0 %v3719
      %4194 = vmatprep.subr.mxu0 0.0
      %4195 = vmatpush1.msra.mxu0 %v3720
      %4196 = vmatprep.subr.mxu0 0.0
      %4197 = vmatpush1.msra.mxu0 %v3721
      %4198 = vmatprep.subr.mxu0 0.0
      %4199 = vmatpush1.msra.mxu0 %v3722
      %4200 = vmatprep.subr.mxu0 0.0
      %4201 = vmatpush1.msra.mxu0 %v3723
      %4202 = vmatprep.mubr.f32.mxu0 %v3623
      %4203 = vmatmul.mubr.f32.gmra.mrb[0].mxu0 %v3614
      %v4204 = vpop.f32.mrb[0].mxu0
      %v4205 = vadd.f32 %v4135, %v4204
      %v4206 = vpop.f32.mrb[0].mxu0
      %4207 = vdwg.mxu0
      %4208 = vmatprep.subr.mxu0 0.0
      %4209 = vmatpush1.msra.mxu0 %v3724
      %4210 = vmatprep.subr.mxu0 0.0
      %4211 = vmatpush1.msra.mxu0 %v3725
      %4212 = vmatprep.subr.mxu0 0.0
      %4213 = vmatpush1.msra.mxu0 %v3726
      %4214 = vmatprep.subr.mxu0 0.0
      %4215 = vmatpush1.msra.mxu0 %v3727
      %4216 = vmatprep.subr.mxu0 0.0
      %4217 = vmatpush1.msra.mxu0 %v3728
      %4218 = vmatprep.subr.mxu0 0.0
      %4219 = vmatpush1.msra.mxu0 %v3729
      %4220 = vmatprep.subr.mxu0 0.0
      %4221 = vmatpush1.msra.mxu0 %v3730
      %4222 = vmatprep.subr.mxu0 0.0
      %4223 = vmatpush1.msra.mxu0 %v3731
      %4224 = vmatprep.subr.mxu0 0.0
      %4225 = vmatpush1.msra.mxu0 %v3732
      %4226 = vmatprep.subr.mxu0 0.0
      %4227 = vmatpush1.msra.mxu0 %v3733
      %4228 = vmatprep.subr.mxu0 0.0
      %4229 = vmatpush1.msra.mxu0 %v3734
      %4230 = vmatprep.subr.mxu0 0.0
      %4231 = vmatpush1.msra.mxu0 %v3735
      %4232 = vmatprep.subr.mxu0 0.0
      %4233 = vmatpush1.msra.mxu0 %v3736
      %4234 = vmatprep.subr.mxu0 0.0
      %4235 = vmatpush1.msra.mxu0 %v3737
      %4236 = vmatprep.subr.mxu0 0.0
      %4237 = vmatpush1.msra.mxu0 %v3738
      %4238 = vmatprep.subr.mxu0 0.0
      %4239 = vmatpush1.msra.mxu0 %v3739
      %4240 = vmatprep.subr.mxu0 0.0
      %4241 = vmatpush1.msra.mxu0 %v3740
      %4242 = vmatprep.subr.mxu0 0.0
      %4243 = vmatpush1.msra.mxu0 %v3741
      %4244 = vmatprep.subr.mxu0 0.0
      %4245 = vmatpush1.msra.mxu0 %v3742
      %4246 = vmatprep.subr.mxu0 0.0
      %4247 = vmatpush1.msra.mxu0 %v3743
      %4248 = vmatprep.subr.mxu0 0.0
      %4249 = vmatpush1.msra.mxu0 %v3744
      %4250 = vmatprep.subr.mxu0 0.0
      %4251 = vmatpush1.msra.mxu0 %v3745
      %4252 = vmatprep.subr.mxu0 0.0
      %4253 = vmatpush1.msra.mxu0 %v3746
      %4254 = vmatprep.subr.mxu0 0.0
      %4255 = vmatpush1.msra.mxu0 %v3747
      %4256 = vmatprep.subr.mxu0 0.0
      %4257 = vmatpush1.msra.mxu0 %v3748
      %4258 = vmatprep.subr.mxu0 0.0
      %4259 = vmatpush1.msra.mxu0 %v3749
      %4260 = vmatprep.subr.mxu0 0.0
      %4261 = vmatpush1.msra.mxu0 %v3750
      %4262 = vmatprep.subr.mxu0 0.0
      %4263 = vmatpush1.msra.mxu0 %v3751
      %4264 = vmatprep.subr.mxu0 0.0
      %4265 = vmatpush1.msra.mxu0 %v3752
      %4266 = vmatprep.subr.mxu0 0.0
      %4267 = vmatpush1.msra.mxu0 %v3753
      %4268 = vmatprep.subr.mxu0 0.0
      %4269 = vmatpush1.msra.mxu0 %v3754
      %4270 = vmatprep.subr.mxu0 0.0
      %4271 = vmatpush1.msra.mxu0 %v3755
      %4272 = vmatprep.mubr.f32.mxu0 %v3641
      %4273 = vmatmul.mubr.f32.gmra.mrb[0].mxu0 %v3632
      %v4274 = vpop.f32.mrb[0].mxu0
      %v4275 = vadd.f32 %v4205, %v4274
      %v4276 = vpop.f32.mrb[0].mxu0
      %4277 = vdwg.mxu0
      %4278 = vmatprep.subr.mxu0 0.0
      %4279 = vmatpush1.msra.mxu0 %v3756
      %4280 = vmatprep.subr.mxu0 0.0
      %4281 = vmatpush1.msra.mxu0 %v3757
      %4282 = vmatprep.subr.mxu0 0.0
      %4283 = vmatpush1.msra.mxu0 %v3758
      %4284 = vmatprep.subr.mxu0 0.0
      %4285 = vmatpush1.msra.mxu0 %v3759
      %4286 = vmatprep.subr.mxu0 0.0
      %4287 = vmatpush1.msra.mxu0 %v3760
      %4288 = vmatprep.subr.mxu0 0.0
      %4289 = vmatpush1.msra.mxu0 %v3761
      %4290 = vmatprep.subr.mxu0 0.0
      %4291 = vmatpush1.msra.mxu0 %v3762
      %4292 = vmatprep.subr.mxu0 0.0
      %4293 = vmatpush1.msra.mxu0 %v3763
      %4294 = vmatprep.subr.mxu0 0.0
      %4295 = vmatpush1.msra.mxu0 %v3764
      %4296 = vmatprep.subr.mxu0 0.0
      %4297 = vmatpush1.msra.mxu0 %v3765
      %4298 = vmatprep.subr.mxu0 0.0
      %4299 = vmatpush1.msra.mxu0 %v3766
      %4300 = vmatprep.subr.mxu0 0.0
      %4301 = vmatpush1.msra.mxu0 %v3767
      %4302 = vmatprep.subr.mxu0 0.0
      %4303 = vmatpush1.msra.mxu0 %v3768
      %4304 = vmatprep.subr.mxu0 0.0
      %4305 = vmatpush1.msra.mxu0 %v3769
      %4306 = vmatprep.subr.mxu0 0.0
      %4307 = vmatpush1.msra.mxu0 %v3770
      %4308 = vmatprep.subr.mxu0 0.0
      %4309 = vmatpush1.msra.mxu0 %v3771
      %4310 = vmatprep.subr.mxu0 0.0
      %4311 = vmatpush1.msra.mxu0 %v3772
      %4312 = vmatprep.subr.mxu0 0.0
      %4313 = vmatpush1.msra.mxu0 %v3773
      %4314 = vmatprep.subr.mxu0 0.0
      %4315 = vmatpush1.msra.mxu0 %v3774
      %4316 = vmatprep.subr.mxu0 0.0
      %4317 = vmatpush1.msra.mxu0 %v3775
      %4318 = vmatprep.subr.mxu0 0.0
      %4319 = vmatpush1.msra.mxu0 %v3776
      %4320 = vmatprep.subr.mxu0 0.0
      %4321 = vmatpush1.msra.mxu0 %v3777
      %4322 = vmatprep.subr.mxu0 0.0
      %4323 = vmatpush1.msra.mxu0 %v3778
      %4324 = vmatprep.subr.mxu0 0.0
      %4325 = vmatpush1.msra.mxu0 %v3779
      %4326 = vmatprep.subr.mxu0 0.0
      %4327 = vmatpush1.msra.mxu0 %v3780
      %4328 = vmatprep.subr.mxu0 0.0
      %4329 = vmatpush1.msra.mxu0 %v3781
      %4330 = vmatprep.subr.mxu0 0.0
      %4331 = vmatpush1.msra.mxu0 %v3782
      %4332 = vmatprep.subr.mxu0 0.0
      %4333 = vmatpush1.msra.mxu0 %v3783
      %4334 = vmatprep.subr.mxu0 0.0
      %4335 = vmatpush1.msra.mxu0 %v3784
      %4336 = vmatprep.subr.mxu0 0.0
      %4337 = vmatpush1.msra.mxu0 %v3785
      %4338 = vmatprep.subr.mxu0 0.0
      %4339 = vmatpush1.msra.mxu0 %v3786
      %4340 = vmatprep.subr.mxu0 0.0
      %4341 = vmatpush1.msra.mxu0 %v3787
      %4342 = vmatprep.mubr.f32.mxu0 %v3659
      %4343 = vmatmul.mubr.f32.gmra.mrb[0].mxu0 %v3650
      %v4344 = vpop.f32.mrb[0].mxu0
      %v4345 = vadd.f32 %v4275, %v4344
      %v4346 = vpop.f32.mrb[0].mxu0
      %4347 = vdwg.mxu0
      %v4348 = vrcp.pop 512.0
      %v4349 = vmul.f32 %v4065, %v4348
      %v4350 = vmul.f32 %v4345, %v4348
      %v4351 = vmul.f32 %v4349, %v4349
      %v4352 = vsub.f32 %v4350, %v4351
      %v4353 = vmax.f32 %v4352, 0.0
      %v4354 = vadd.f32 %v4353, 1e-05
      %v4355 = vrsqrt.pop %v4354
      %v4356 = vld [vmem:[%s3] sm:$0xff]
      %v4357 = vld [vmem:[%s3 + $0x8] sm:$0xff]
      %v4358 = vld [vmem:[%s3 + $0x10] sm:$0xff]
      %v4359 = vld [vmem:[%s3 + $0x18] sm:$0xff]
      %v4360 = vld [vmem:[%s3 + $0x20] sm:$0xff]
      %v4361 = vld [vmem:[%s3 + $0x28] sm:$0xff]
      %v4362 = vld [vmem:[%s3 + $0x30] sm:$0xff]
      %v4363 = vld [vmem:[%s3 + $0x38] sm:$0xff]
      %v4364 = vld [vmem:[%s3 + $0x40] sm:$0xff]
      %v4365 = vld [vmem:[%s3 + $0x48] sm:$0xff]
      %v4366 = vld [vmem:[%s3 + $0x50] sm:$0xff]
      %v4367 = vld [vmem:[%s3 + $0x58] sm:$0xff]
      %v4368 = vld [vmem:[%s3 + $0x60] sm:$0xff]
      %v4369 = vld [vmem:[%s3 + $0x68] sm:$0xff]
      %v4370 = vld [vmem:[%s3 + $0x70] sm:$0xff]
      %v4371 = vld [vmem:[%s3 + $0x78] sm:$0xff]
      %v4372 = vld [vmem:[%s3 + $0x80] sm:$0xff]
      %v4373 = vld [vmem:[%s3 + $0x88] sm:$0xff]
      %v4374 = vld [vmem:[%s3 + $0x90] sm:$0xff]
      %v4375 = vld [vmem:[%s3 + $0x98] sm:$0xff]
      %v4376 = vld [vmem:[%s3 + $0xa0] sm:$0xff]
      %v4377 = vld [vmem:[%s3 + $0xa8] sm:$0xff]
      %v4378 = vld [vmem:[%s3 + $0xb0] sm:$0xff]
      %v4379 = vld [vmem:[%s3 + $0xb8] sm:$0xff]
      %v4380 = vld [vmem:[%s3 + $0xc0] sm:$0xff]
      %v4381 = vld [vmem:[%s3 + $0xc8] sm:$0xff]
      %v4382 = vld [vmem:[%s3 + $0xd0] sm:$0xff]
      %v4383 = vld [vmem:[%s3 + $0xd8] sm:$0xff]
      %v4384 = vld [vmem:[%s3 + $0xe0] sm:$0xff]
      %v4385 = vld [vmem:[%s3 + $0xe8] sm:$0xff]
      %v4386 = vld [vmem:[%s3 + $0xf0] sm:$0xff]
      %v4387 = vld [vmem:[%s3 + $0xf8] sm:$0xff]
      %v4388 = vld [vmem:[%s3 + $0x100] sm:$0xff]
      %v4389 = vld [vmem:[%s3 + $0x108] sm:$0xff]
      %v4390 = vld [vmem:[%s3 + $0x110] sm:$0xff]
      %v4391 = vld [vmem:[%s3 + $0x118] sm:$0xff]
      %v4392 = vld [vmem:[%s3 + $0x120] sm:$0xff]
      %v4393 = vld [vmem:[%s3 + $0x128] sm:$0xff]
      %v4394 = vld [vmem:[%s3 + $0x130] sm:$0xff]
      %v4395 = vld [vmem:[%s3 + $0x138] sm:$0xff]
      %v4396 = vld [vmem:[%s3 + $0x140] sm:$0xff]
      %v4397 = vld [vmem:[%s3 + $0x148] sm:$0xff]
      %v4398 = vld [vmem:[%s3 + $0x150] sm:$0xff]
      %v4399 = vld [vmem:[%s3 + $0x158] sm:$0xff]
      %v4400 = vld [vmem:[%s3 + $0x160] sm:$0xff]
      %v4401 = vld [vmem:[%s3 + $0x168] sm:$0xff]
      %v4402 = vld [vmem:[%s3 + $0x170] sm:$0xff]
      %v4403 = vld [vmem:[%s3 + $0x178] sm:$0xff]
      %v4404 = vld [vmem:[%s3 + $0x180] sm:$0xff]
      %v4405 = vld [vmem:[%s3 + $0x188] sm:$0xff]
      %v4406 = vld [vmem:[%s3 + $0x190] sm:$0xff]
      %v4407 = vld [vmem:[%s3 + $0x198] sm:$0xff]
      %v4408 = vld [vmem:[%s3 + $0x1a0] sm:$0xff]
      %v4409 = vld [vmem:[%s3 + $0x1a8] sm:$0xff]
      %v4410 = vld [vmem:[%s3 + $0x1b0] sm:$0xff]
      %v4411 = vld [vmem:[%s3 + $0x1b8] sm:$0xff]
      %v4412 = vld [vmem:[%s3 + $0x1c0] sm:$0xff]
      %v4413 = vld [vmem:[%s3 + $0x1c8] sm:$0xff]
      %v4414 = vld [vmem:[%s3 + $0x1d0] sm:$0xff]
      %v4415 = vld [vmem:[%s3 + $0x1d8] sm:$0xff]
      %v4416 = vld [vmem:[%s3 + $0x1e0] sm:$0xff]
      %v4417 = vld [vmem:[%s3 + $0x1e8] sm:$0xff]
      %v4418 = vld [vmem:[%s3 + $0x1f0] sm:$0xff]
      %v4419 = vld [vmem:[%s3 + $0x1f8] sm:$0xff]
      %vm4420 = vcmask 523264
      %v4422 = vsel %vm4420, %v4349, 0
      %4424 = vmatprep.subr.mxu0 %v4357
      %4425 = vmatpush1.msra.mxu0 %v4356
      %4426 = vmatprep.subr.mxu0 %v4365
      %4427 = vmatpush1.msra.mxu0 %v4364
      %4428 = vmatprep.subr.mxu0 %v4373
      %4429 = vmatpush1.msra.mxu0 %v4372
      %4430 = vmatprep.subr.mxu0 %v4381
      %4431 = vmatpush1.msra.mxu0 %v4380
      %4432 = vmatprep.subr.mxu0 %v4389
      %4433 = vmatpush1.msra.mxu0 %v4388
      %4434 = vmatprep.subr.mxu0 %v4397
      %4435 = vmatpush1.msra.mxu0 %v4396
      %4436 = vmatprep.subr.mxu0 %v4405
      %4437 = vmatpush1.msra.mxu0 %v4404
      %4438 = vmatprep.subr.mxu0 %v4413
      %4439 = vmatpush1.msra.mxu0 %v4412
      %4440 = vmatprep.subr.mxu0 0.0
      %4441 = vmatpush1.msra.mxu0 0.0
      %4442 = vmatprep.subr.mxu0 0.0
      %4443 = vmatpush1.msra.mxu0 0.0
      %4444 = vmatprep.subr.mxu0 0.0
      %4445 = vmatpush1.msra.mxu0 0.0
      %4446 = vmatprep.subr.mxu0 0.0
      %4447 = vmatpush1.msra.mxu0 0.0
      %4448 = vmatprep.subr.mxu0 0.0
      %4449 = vmatpush1.msra.mxu0 0.0
      %4450 = vmatprep.subr.mxu0 0.0
      %4451 = vmatpush1.msra.mxu0 0.0
      %4452 = vmatprep.subr.mxu0 0.0
      %4453 = vmatpush1.msra.mxu0 0.0
      %4454 = vmatprep.subr.mxu0 0.0
      %4455 = vmatpush1.msra.mxu0 0.0
      %4456 = vmatprep.subr.mxu0 0.0
      %4457 = vmatpush1.msra.mxu0 0.0
      %4458 = vmatprep.subr.mxu0 0.0
      %4459 = vmatpush1.msra.mxu0 0.0
      %4460 = vmatprep.subr.mxu0 0.0
      %4461 = vmatpush1.msra.mxu0 0.0
      %4462 = vmatprep.subr.mxu0 0.0
      %4463 = vmatpush1.msra.mxu0 0.0
      %4464 = vmatprep.subr.mxu0 0.0
      %4465 = vmatpush1.msra.mxu0 0.0
      %4466 = vmatprep.subr.mxu0 0.0
      %4467 = vmatpush1.msra.mxu0 0.0
      %4468 = vmatprep.subr.mxu0 0.0
      %4469 = vmatpush1.msra.mxu0 0.0
      %4470 = vmatprep.subr.mxu0 0.0
      %4471 = vmatpush1.msra.mxu0 0.0
      %4472 = vmatprep.subr.mxu0 0.0
      %4473 = vmatpush1.msra.mxu0 0.0
      %4474 = vmatprep.subr.mxu0 0.0
      %4475 = vmatpush1.msra.mxu0 0.0
      %4476 = vmatprep.subr.mxu0 0.0
      %4477 = vmatpush1.msra.mxu0 0.0
      %4478 = vmatprep.subr.mxu0 0.0
      %4479 = vmatpush1.msra.mxu0 0.0
      %4480 = vmatprep.subr.mxu0 0.0
      %4481 = vmatpush1.msra.mxu0 0.0
      %4482 = vmatprep.subr.mxu0 0.0
      %4483 = vmatpush1.msra.mxu0 0.0
      %4484 = vmatprep.subr.mxu0 0.0
      %4485 = vmatpush1.msra.mxu0 0.0
      %4486 = vmatprep.subr.mxu0 0.0
      %4487 = vmatpush1.msra.mxu0 0.0
      %4488 = vmatprep.mubr.f32.mxu0 0.0
      %4489 = vmatmul.mubr.f32.gmra.mrb[0].mxu0 %v4422
      %v4490 = vpop.f32.mrb[0].mxu0
      %v4491 = vadd.f32 0.0, %v4490
      %v4492 = vpop.f32.mrb[0].mxu0
      %v4493 = vadd.f32 0.0, %v4492
      %4494 = vdwg.mxu0
      %4495 = vmatprep.subr.mxu0 %v4359
      %4496 = vmatpush1.msra.mxu0 %v4358
      %4497 = vmatprep.subr.mxu0 %v4367
      %4498 = vmatpush1.msra.mxu0 %v4366
      %4499 = vmatprep.subr.mxu0 %v4375
      %4500 = vmatpush1.msra.mxu0 %v4374
      %4501 = vmatprep.subr.mxu0 %v4383
      %4502 = vmatpush1.msra.mxu0 %v4382
      %4503 = vmatprep.subr.mxu0 %v4391
      %4504 = vmatpush1.msra.mxu0 %v4390
      %4505 = vmatprep.subr.mxu0 %v4399
      %4506 = vmatpush1.msra.mxu0 %v4398
      %4507 = vmatprep.subr.mxu0 %v4407
      %4508 = vmatpush1.msra.mxu0 %v4406
      %4509 = vmatprep.subr.mxu0 %v4415
      %4510 = vmatpush1.msra.mxu0 %v4414
      %4511 = vmatprep.subr.mxu0 0.0
      %4512 = vmatpush1.msra.mxu0 0.0
      %4513 = vmatprep.subr.mxu0 0.0
      %4514 = vmatpush1.msra.mxu0 0.0
      %4515 = vmatprep.subr.mxu0 0.0
      %4516 = vmatpush1.msra.mxu0 0.0
      %4517 = vmatprep.subr.mxu0 0.0
      %4518 = vmatpush1.msra.mxu0 0.0
      %4519 = vmatprep.subr.mxu0 0.0
      %4520 = vmatpush1.msra.mxu0 0.0
      %4521 = vmatprep.subr.mxu0 0.0
      %4522 = vmatpush1.msra.mxu0 0.0
      %4523 = vmatprep.subr.mxu0 0.0
      %4524 = vmatpush1.msra.mxu0 0.0
      %4525 = vmatprep.subr.mxu0 0.0
      %4526 = vmatpush1.msra.mxu0 0.0
      %4527 = vmatprep.subr.mxu0 0.0
      %4528 = vmatpush1.msra.mxu0 0.0
      %4529 = vmatprep.subr.mxu0 0.0
      %4530 = vmatpush1.msra.mxu0 0.0
      %4531 = vmatprep.subr.mxu0 0.0
      %4532 = vmatpush1.msra.mxu0 0.0
      %4533 = vmatprep.subr.mxu0 0.0
      %4534 = vmatpush1.msra.mxu0 0.0
      %4535 = vmatprep.subr.mxu0 0.0
      %4536 = vmatpush1.msra.mxu0 0.0
      %4537 = vmatprep.subr.mxu0 0.0
      %4538 = vmatpush1.msra.mxu0 0.0
      %4539 = vmatprep.subr.mxu0 0.0
      %4540 = vmatpush1.msra.mxu0 0.0
      %4541 = vmatprep.subr.mxu0 0.0
      %4542 = vmatpush1.msra.mxu0 0.0
      %4543 = vmatprep.subr.mxu0 0.0
      %4544 = vmatpush1.msra.mxu0 0.0
      %4545 = vmatprep.subr.mxu0 0.0
      %4546 = vmatpush1.msra.mxu0 0.0
      %4547 = vmatprep.subr.mxu0 0.0
      %4548 = vmatpush1.msra.mxu0 0.0
      %4549 = vmatprep.subr.mxu0 0.0
      %4550 = vmatpush1.msra.mxu0 0.0
      %4551 = vmatprep.subr.mxu0 0.0
      %4552 = vmatpush1.msra.mxu0 0.0
      %4553 = vmatprep.subr.mxu0 0.0
      %4554 = vmatpush1.msra.mxu0 0.0
      %4555 = vmatprep.subr.mxu0 0.0
      %4556 = vmatpush1.msra.mxu0 0.0
      %4557 = vmatprep.subr.mxu0 0.0
      %4558 = vmatpush1.msra.mxu0 0.0
      %4559 = vmatprep.mubr.f32.mxu0 0.0
      %4560 = vmatmul.mubr.f32.gmra.mrb[0].mxu0 %v4422
      %v4561 = vpop.f32.mrb[0].mxu0
      %v4562 = vadd.f32 0.0, %v4561
      %v4563 = vpop.f32.mrb[0].mxu0
      %v4564 = vadd.f32 0.0, %v4563
      %4565 = vdwg.mxu0
      %4566 = vmatprep.subr.mxu0 %v4361
      %4567 = vmatpush1.msra.mxu0 %v4360
      %4568 = vmatprep.subr.mxu0 %v4369
      %4569 = vmatpush1.msra.mxu0 %v4368
      %4570 = vmatprep.subr.mxu0 %v4377
      %4571 = vmatpush1.msra.mxu0 %v4376
      %4572 = vmatprep.subr.mxu0 %v4385
      %4573 = vmatpush1.msra.mxu0 %v4384
      %4574 = vmatprep.subr.mxu0 %v4393
      %4575 = vmatpush1.msra.mxu0 %v4392
      %4576 = vmatprep.subr.mxu0 %v4401
      %4577 = vmatpush1.msra.mxu0 %v4400
      %4578 = vmatprep.subr.mxu0 %v4409
      %4579 = vmatpush1.msra.mxu0 %v4408
      %4580 = vmatprep.subr.mxu0 %v4417
      %4581 = vmatpush1.msra.mxu0 %v4416
      %4582 = vmatprep.subr.mxu0 0.0
      %4583 = vmatpush1.msra.mxu0 0.0
      %4584 = vmatprep.subr.mxu0 0.0
      %4585 = vmatpush1.msra.mxu0 0.0
      %4586 = vmatprep.subr.mxu0 0.0
      %4587 = vmatpush1.msra.mxu0 0.0
      %4588 = vmatprep.subr.mxu0 0.0
      %4589 = vmatpush1.msra.mxu0 0.0
      %4590 = vmatprep.subr.mxu0 0.0
      %4591 = vmatpush1.msra.mxu0 0.0
      %4592 = vmatprep.subr.mxu0 0.0
      %4593 = vmatpush1.msra.mxu0 0.0
      %4594 = vmatprep.subr.mxu0 0.0
      %4595 = vmatpush1.msra.mxu0 0.0
      %4596 = vmatprep.subr.mxu0 0.0
      %4597 = vmatpush1.msra.mxu0 0.0
      %4598 = vmatprep.subr.mxu0 0.0
      %4599 = vmatpush1.msra.mxu0 0.0
      %4600 = vmatprep.subr.mxu0 0.0
      %4601 = vmatpush1.msra.mxu0 0.0
      %4602 = vmatprep.subr.mxu0 0.0
      %4603 = vmatpush1.msra.mxu0 0.0
      %4604 = vmatprep.subr.mxu0 0.0
      %4605 = vmatpush1.msra.mxu0 0.0
      %4606 = vmatprep.subr.mxu0 0.0
      %4607 = vmatpush1.msra.mxu0 0.0
      %4608 = vmatprep.subr.mxu0 0.0
      %4609 = vmatpush1.msra.mxu0 0.0
      %4610 = vmatprep.subr.mxu0 0.0
      %4611 = vmatpush1.msra.mxu0 0.0
      %4612 = vmatprep.subr.mxu0 0.0
      %4613 = vmatpush1.msra.mxu0 0.0
      %4614 = vmatprep.subr.mxu0 0.0
      %4615 = vmatpush1.msra.mxu0 0.0
      %4616 = vmatprep.subr.mxu0 0.0
      %4617 = vmatpush1.msra.mxu0 0.0
      %4618 = vmatprep.subr.mxu0 0.0
      %4619 = vmatpush1.msra.mxu0 0.0
      %4620 = vmatprep.subr.mxu0 0.0
      %4621 = vmatpush1.msra.mxu0 0.0
      %4622 = vmatprep.subr.mxu0 0.0
      %4623 = vmatpush1.msra.mxu0 0.0
      %4624 = vmatprep.subr.mxu0 0.0
      %4625 = vmatpush1.msra.mxu0 0.0
      %4626 = vmatprep.subr.mxu0 0.0
      %4627 = vmatpush1.msra.mxu0 0.0
      %4628 = vmatprep.subr.mxu0 0.0
      %4629 = vmatpush1.msra.mxu0 0.0
      %4630 = vmatprep.mubr.f32.mxu0 0.0
      %4631 = vmatmul.mubr.f32.gmra.mrb[0].mxu0 %v4422
      %v4632 = vpop.f32.mrb[0].mxu0
      %v4633 = vadd.f32 0.0, %v4632
      %v4634 = vpop.f32.mrb[0].mxu0
      %v4635 = vadd.f32 0.0, %v4634
      %4636 = vdwg.mxu0
      %4637 = vmatprep.subr.mxu0 %v4363
      %4638 = vmatpush1.msra.mxu0 %v4362
      %4639 = vmatprep.subr.mxu0 %v4371
      %4640 = vmatpush1.msra.mxu0 %v4370
      %4641 = vmatprep.subr.mxu0 %v4379
      %4642 = vmatpush1.msra.mxu0 %v4378
      %4643 = vmatprep.subr.mxu0 %v4387
      %4644 = vmatpush1.msra.mxu0 %v4386
      %4645 = vmatprep.subr.mxu0 %v4395
      %4646 = vmatpush1.msra.mxu0 %v4394
      %4647 = vmatprep.subr.mxu0 %v4403
      %4648 = vmatpush1.msra.mxu0 %v4402
      %4649 = vmatprep.subr.mxu0 %v4411
      %4650 = vmatpush1.msra.mxu0 %v4410
      %4651 = vmatprep.subr.mxu0 %v4419
      %4652 = vmatpush1.msra.mxu0 %v4418
      %4653 = vmatprep.subr.mxu0 0.0
      %4654 = vmatpush1.msra.mxu0 0.0
      %4655 = vmatprep.subr.mxu0 0.0
      %4656 = vmatpush1.msra.mxu0 0.0
      %4657 = vmatprep.subr.mxu0 0.0
      %4658 = vmatpush1.msra.mxu0 0.0
      %4659 = vmatprep.subr.mxu0 0.0
      %4660 = vmatpush1.msra.mxu0 0.0
      %4661 = vmatprep.subr.mxu0 0.0
      %4662 = vmatpush1.msra.mxu0 0.0
      %4663 = vmatprep.subr.mxu0 0.0
      %4664 = vmatpush1.msra.mxu0 0.0
      %4665 = vmatprep.subr.mxu0 0.0
      %4666 = vmatpush1.msra.mxu0 0.0
      %4667 = vmatprep.subr.mxu0 0.0
      %4668 = vmatpush1.msra.mxu0 0.0
      %4669 = vmatprep.subr.mxu0 0.0
      %4670 = vmatpush1.msra.mxu0 0.0
      %4671 = vmatprep.subr.mxu0 0.0
      %4672 = vmatpush1.msra.mxu0 0.0
      %4673 = vmatprep.subr.mxu0 0.0
      %4674 = vmatpush1.msra.mxu0 0.0
      %4675 = vmatprep.subr.mxu0 0.0
      %4676 = vmatpush1.msra.mxu0 0.0
      %4677 = vmatprep.subr.mxu0 0.0
      %4678 = vmatpush1.msra.mxu0 0.0
      %4679 = vmatprep.subr.mxu0 0.0
      %4680 = vmatpush1.msra.mxu0 0.0
      %4681 = vmatprep.subr.mxu0 0.0
      %4682 = vmatpush1.msra.mxu0 0.0
      %4683 = vmatprep.subr.mxu0 0.0
      %4684 = vmatpush1.msra.mxu0 0.0
      %4685 = vmatprep.subr.mxu0 0.0
      %4686 = vmatpush1.msra.mxu0 0.0
      %4687 = vmatprep.subr.mxu0 0.0
      %4688 = vmatpush1.msra.mxu0 0.0
      %4689 = vmatprep.subr.mxu0 0.0
      %4690 = vmatpush1.msra.mxu0 0.0
      %4691 = vmatprep.subr.mxu0 0.0
      %4692 = vmatpush1.msra.mxu0 0.0
      %4693 = vmatprep.subr.mxu0 0.0
      %4694 = vmatpush1.msra.mxu0 0.0
      %4695 = vmatprep.subr.mxu0 0.0
      %4696 = vmatpush1.msra.mxu0 0.0
      %4697 = vmatprep.subr.mxu0 0.0
      %4698 = vmatpush1.msra.mxu0 0.0
      %4699 = vmatprep.subr.mxu0 0.0
      %4700 = vmatpush1.msra.mxu0 0.0
      %4701 = vmatprep.mubr.f32.mxu0 0.0
      %4702 = vmatmul.mubr.f32.gmra.mrb[0].mxu0 %v4422
      %v4703 = vpop.f32.mrb[0].mxu0
      %v4704 = vadd.f32 0.0, %v4703
      %v4705 = vpop.f32.mrb[0].mxu0
      %v4706 = vadd.f32 0.0, %v4705
      %4707 = vdwg.mxu0
      %v4709 = vsel %vm4420, %v4355, 0
      %4711 = vmatprep.subr.mxu0 %v4357
      %4712 = vmatpush1.msra.mxu0 %v4356
      %4713 = vmatprep.subr.mxu0 %v4365
      %4714 = vmatpush1.msra.mxu0 %v4364
      %4715 = vmatprep.subr.mxu0 %v4373
      %4716 = vmatpush1.msra.mxu0 %v4372
      %4717 = vmatprep.subr.mxu0 %v4381
      %4718 = vmatpush1.msra.mxu0 %v4380
      %4719 = vmatprep.subr.mxu0 %v4389
      %4720 = vmatpush1.msra.mxu0 %v4388
      %4721 = vmatprep.subr.mxu0 %v4397
      %4722 = vmatpush1.msra.mxu0 %v4396
      %4723 = vmatprep.subr.mxu0 %v4405
      %4724 = vmatpush1.msra.mxu0 %v4404
      %4725 = vmatprep.subr.mxu0 %v4413
      %4726 = vmatpush1.msra.mxu0 %v4412
      %4727 = vmatprep.subr.mxu0 0.0
      %4728 = vmatpush1.msra.mxu0 0.0
      %4729 = vmatprep.subr.mxu0 0.0
      %4730 = vmatpush1.msra.mxu0 0.0
      %4731 = vmatprep.subr.mxu0 0.0
      %4732 = vmatpush1.msra.mxu0 0.0
      %4733 = vmatprep.subr.mxu0 0.0
      %4734 = vmatpush1.msra.mxu0 0.0
      %4735 = vmatprep.subr.mxu0 0.0
      %4736 = vmatpush1.msra.mxu0 0.0
      %4737 = vmatprep.subr.mxu0 0.0
      %4738 = vmatpush1.msra.mxu0 0.0
      %4739 = vmatprep.subr.mxu0 0.0
      %4740 = vmatpush1.msra.mxu0 0.0
      %4741 = vmatprep.subr.mxu0 0.0
      %4742 = vmatpush1.msra.mxu0 0.0
      %4743 = vmatprep.subr.mxu0 0.0
      %4744 = vmatpush1.msra.mxu0 0.0
      %4745 = vmatprep.subr.mxu0 0.0
      %4746 = vmatpush1.msra.mxu0 0.0
      %4747 = vmatprep.subr.mxu0 0.0
      %4748 = vmatpush1.msra.mxu0 0.0
      %4749 = vmatprep.subr.mxu0 0.0
      %4750 = vmatpush1.msra.mxu0 0.0
      %4751 = vmatprep.subr.mxu0 0.0
      %4752 = vmatpush1.msra.mxu0 0.0
      %4753 = vmatprep.subr.mxu0 0.0
      %4754 = vmatpush1.msra.mxu0 0.0
      %4755 = vmatprep.subr.mxu0 0.0
      %4756 = vmatpush1.msra.mxu0 0.0
      %4757 = vmatprep.subr.mxu0 0.0
      %4758 = vmatpush1.msra.mxu0 0.0
      %4759 = vmatprep.subr.mxu0 0.0
      %4760 = vmatpush1.msra.mxu0 0.0
      %4761 = vmatprep.subr.mxu0 0.0
      %4762 = vmatpush1.msra.mxu0 0.0
      %4763 = vmatprep.subr.mxu0 0.0
      %4764 = vmatpush1.msra.mxu0 0.0
      %4765 = vmatprep.subr.mxu0 0.0
      %4766 = vmatpush1.msra.mxu0 0.0
      %4767 = vmatprep.subr.mxu0 0.0
      %4768 = vmatpush1.msra.mxu0 0.0
      %4769 = vmatprep.subr.mxu0 0.0
      %4770 = vmatpush1.msra.mxu0 0.0
      %4771 = vmatprep.subr.mxu0 0.0
      %4772 = vmatpush1.msra.mxu0 0.0
      %4773 = vmatprep.subr.mxu0 0.0
      %4774 = vmatpush1.msra.mxu0 0.0
      %4775 = vmatprep.mubr.f32.mxu0 0.0
      %4776 = vmatmul.mubr.f32.gmra.mrb[0].mxu0 %v4709
      %v4777 = vpop.f32.mrb[0].mxu0
      %v4778 = vadd.f32 0.0, %v4777
      %v4779 = vpop.f32.mrb[0].mxu0
      %v4780 = vadd.f32 0.0, %v4779
      %4781 = vdwg.mxu0
      %4782 = vmatprep.subr.mxu0 %v4359
      %4783 = vmatpush1.msra.mxu0 %v4358
      %4784 = vmatprep.subr.mxu0 %v4367
      %4785 = vmatpush1.msra.mxu0 %v4366
      %4786 = vmatprep.subr.mxu0 %v4375
      %4787 = vmatpush1.msra.mxu0 %v4374
      %4788 = vmatprep.subr.mxu0 %v4383
      %4789 = vmatpush1.msra.mxu0 %v4382
      %4790 = vmatprep.subr.mxu0 %v4391
      %4791 = vmatpush1.msra.mxu0 %v4390
      %4792 = vmatprep.subr.mxu0 %v4399
      %4793 = vmatpush1.msra.mxu0 %v4398
      %4794 = vmatprep.subr.mxu0 %v4407
      %4795 = vmatpush1.msra.mxu0 %v4406
      %4796 = vmatprep.subr.mxu0 %v4415
      %4797 = vmatpush1.msra.mxu0 %v4414
      %4798 = vmatprep.subr.mxu0 0.0
      %4799 = vmatpush1.msra.mxu0 0.0
      %4800 = vmatprep.subr.mxu0 0.0
      %4801 = vmatpush1.msra.mxu0 0.0
      %4802 = vmatprep.subr.mxu0 0.0
      %4803 = vmatpush1.msra.mxu0 0.0
      %4804 = vmatprep.subr.mxu0 0.0
      %4805 = vmatpush1.msra.mxu0 0.0
      %4806 = vmatprep.subr.mxu0 0.0
      %4807 = vmatpush1.msra.mxu0 0.0
      %4808 = vmatprep.subr.mxu0 0.0
      %4809 = vmatpush1.msra.mxu0 0.0
      %4810 = vmatprep.subr.mxu0 0.0
      %4811 = vmatpush1.msra.mxu0 0.0
      %4812 = vmatprep.subr.mxu0 0.0
      %4813 = vmatpush1.msra.mxu0 0.0
      %4814 = vmatprep.subr.mxu0 0.0
      %4815 = vmatpush1.msra.mxu0 0.0
      %4816 = vmatprep.subr.mxu0 0.0
      %4817 = vmatpush1.msra.mxu0 0.0
      %4818 = vmatprep.subr.mxu0 0.0
      %4819 = vmatpush1.msra.mxu0 0.0
      %4820 = vmatprep.subr.mxu0 0.0
      %4821 = vmatpush1.msra.mxu0 0.0
      %4822 = vmatprep.subr.mxu0 0.0
      %4823 = vmatpush1.msra.mxu0 0.0
      %4824 = vmatprep.subr.mxu0 0.0
      %4825 = vmatpush1.msra.mxu0 0.0
      %4826 = vmatprep.subr.mxu0 0.0
      %4827 = vmatpush1.msra.mxu0 0.0
      %4828 = vmatprep.subr.mxu0 0.0
      %4829 = vmatpush1.msra.mxu0 0.0
      %4830 = vmatprep.subr.mxu0 0.0
      %4831 = vmatpush1.msra.mxu0 0.0
      %4832 = vmatprep.subr.mxu0 0.0
      %4833 = vmatpush1.msra.mxu0 0.0
      %4834 = vmatprep.subr.mxu0 0.0
      %4835 = vmatpush1.msra.mxu0 0.0
      %4836 = vmatprep.subr.mxu0 0.0
      %4837 = vmatpush1.msra.mxu0 0.0
      %4838 = vmatprep.subr.mxu0 0.0
      %4839 = vmatpush1.msra.mxu0 0.0
      %4840 = vmatprep.subr.mxu0 0.0
      %4841 = vmatpush1.msra.mxu0 0.0
      %4842 = vmatprep.subr.mxu0 0.0
      %4843 = vmatpush1.msra.mxu0 0.0
      %4844 = vmatprep.subr.mxu0 0.0
      %4845 = vmatpush1.msra.mxu0 0.0
      %4846 = vmatprep.mubr.f32.mxu0 0.0
      %4847 = vmatmul.mubr.f32.gmra.mrb[0].mxu0 %v4709
      %v4848 = vpop.f32.mrb[0].mxu0
      %v4849 = vadd.f32 0.0, %v4848
      %v4850 = vpop.f32.mrb[0].mxu0
      %v4851 = vadd.f32 0.0, %v4850
      %4852 = vdwg.mxu0
      %4853 = vmatprep.subr.mxu0 %v4361
      %4854 = vmatpush1.msra.mxu0 %v4360
      %4855 = vmatprep.subr.mxu0 %v4369
      %4856 = vmatpush1.msra.mxu0 %v4368
      %4857 = vmatprep.subr.mxu0 %v4377
      %4858 = vmatpush1.msra.mxu0 %v4376
      %4859 = vmatprep.subr.mxu0 %v4385
      %4860 = vmatpush1.msra.mxu0 %v4384
      %4861 = vmatprep.subr.mxu0 %v4393
      %4862 = vmatpush1.msra.mxu0 %v4392
      %4863 = vmatprep.subr.mxu0 %v4401
      %4864 = vmatpush1.msra.mxu0 %v4400
      %4865 = vmatprep.subr.mxu0 %v4409
      %4866 = vmatpush1.msra.mxu0 %v4408
      %4867 = vmatprep.subr.mxu0 %v4417
      %4868 = vmatpush1.msra.mxu0 %v4416
      %4869 = vmatprep.subr.mxu0 0.0
      %4870 = vmatpush1.msra.mxu0 0.0
      %4871 = vmatprep.subr.mxu0 0.0
      %4872 = vmatpush1.msra.mxu0 0.0
      %4873 = vmatprep.subr.mxu0 0.0
      %4874 = vmatpush1.msra.mxu0 0.0
      %4875 = vmatprep.subr.mxu0 0.0
      %4876 = vmatpush1.msra.mxu0 0.0
      %4877 = vmatprep.subr.mxu0 0.0
      %4878 = vmatpush1.msra.mxu0 0.0
      %4879 = vmatprep.subr.mxu0 0.0
      %4880 = vmatpush1.msra.mxu0 0.0
      %4881 = vmatprep.subr.mxu0 0.0
      %4882 = vmatpush1.msra.mxu0 0.0
      %4883 = vmatprep.subr.mxu0 0.0
      %4884 = vmatpush1.msra.mxu0 0.0
      %4885 = vmatprep.subr.mxu0 0.0
      %4886 = vmatpush1.msra.mxu0 0.0
      %4887 = vmatprep.subr.mxu0 0.0
      %4888 = vmatpush1.msra.mxu0 0.0
      %4889 = vmatprep.subr.mxu0 0.0
      %4890 = vmatpush1.msra.mxu0 0.0
      %4891 = vmatprep.subr.mxu0 0.0
      %4892 = vmatpush1.msra.mxu0 0.0
      %4893 = vmatprep.subr.mxu0 0.0
      %4894 = vmatpush1.msra.mxu0 0.0
      %4895 = vmatprep.subr.mxu0 0.0
      %4896 = vmatpush1.msra.mxu0 0.0
      %4897 = vmatprep.subr.mxu0 0.0
      %4898 = vmatpush1.msra.mxu0 0.0
      %4899 = vmatprep.subr.mxu0 0.0
      %4900 = vmatpush1.msra.mxu0 0.0
      %4901 = vmatprep.subr.mxu0 0.0
      %4902 = vmatpush1.msra.mxu0 0.0
      %4903 = vmatprep.subr.mxu0 0.0
      %4904 = vmatpush1.msra.mxu0 0.0
      %4905 = vmatprep.subr.mxu0 0.0
      %4906 = vmatpush1.msra.mxu0 0.0
      %4907 = vmatprep.subr.mxu0 0.0
      %4908 = vmatpush1.msra.mxu0 0.0
      %4909 = vmatprep.subr.mxu0 0.0
      %4910 = vmatpush1.msra.mxu0 0.0
      %4911 = vmatprep.subr.mxu0 0.0
      %4912 = vmatpush1.msra.mxu0 0.0
      %4913 = vmatprep.subr.mxu0 0.0
      %4914 = vmatpush1.msra.mxu0 0.0
      %4915 = vmatprep.subr.mxu0 0.0
      %4916 = vmatpush1.msra.mxu0 0.0
      %4917 = vmatprep.mubr.f32.mxu0 0.0
      %4918 = vmatmul.mubr.f32.gmra.mrb[0].mxu0 %v4709
      %v4919 = vpop.f32.mrb[0].mxu0
      %v4920 = vadd.f32 0.0, %v4919
      %v4921 = vpop.f32.mrb[0].mxu0
      %v4922 = vadd.f32 0.0, %v4921
      %4923 = vdwg.mxu0
      %4924 = vmatprep.subr.mxu0 %v4363
      %4925 = vmatpush1.msra.mxu0 %v4362
      %4926 = vmatprep.subr.mxu0 %v4371
      %4927 = vmatpush1.msra.mxu0 %v4370
      %4928 = vmatprep.subr.mxu0 %v4379
      %4929 = vmatpush1.msra.mxu0 %v4378
      %4930 = vmatprep.subr.mxu0 %v4387
      %4931 = vmatpush1.msra.mxu0 %v4386
      %4932 = vmatprep.subr.mxu0 %v4395
      %4933 = vmatpush1.msra.mxu0 %v4394
      %4934 = vmatprep.subr.mxu0 %v4403
      %4935 = vmatpush1.msra.mxu0 %v4402
      %4936 = vmatprep.subr.mxu0 %v4411
      %4937 = vmatpush1.msra.mxu0 %v4410
      %4938 = vmatprep.subr.mxu0 %v4419
      %4939 = vmatpush1.msra.mxu0 %v4418
      %4940 = vmatprep.subr.mxu0 0.0
      %4941 = vmatpush1.msra.mxu0 0.0
      %4942 = vmatprep.subr.mxu0 0.0
      %4943 = vmatpush1.msra.mxu0 0.0
      %4944 = vmatprep.subr.mxu0 0.0
      %4945 = vmatpush1.msra.mxu0 0.0
      %4946 = vmatprep.subr.mxu0 0.0
      %4947 = vmatpush1.msra.mxu0 0.0
      %4948 = vmatprep.subr.mxu0 0.0
      %4949 = vmatpush1.msra.mxu0 0.0
      %4950 = vmatprep.subr.mxu0 0.0
      %4951 = vmatpush1.msra.mxu0 0.0
      %4952 = vmatprep.subr.mxu0 0.0
      %4953 = vmatpush1.msra.mxu0 0.0
      %4954 = vmatprep.subr.mxu0 0.0
      %4955 = vmatpush1.msra.mxu0 0.0
      %4956 = vmatprep.subr.mxu0 0.0
      %4957 = vmatpush1.msra.mxu0 0.0
      %4958 = vmatprep.subr.mxu0 0.0
      %4959 = vmatpush1.msra.mxu0 0.0
      %4960 = vmatprep.subr.mxu0 0.0
      %4961 = vmatpush1.msra.mxu0 0.0
      %4962 = vmatprep.subr.mxu0 0.0
      %4963 = vmatpush1.msra.mxu0 0.0
      %4964 = vmatprep.subr.mxu0 0.0
      %4965 = vmatpush1.msra.mxu0 0.0
      %4966 = vmatprep.subr.mxu0 0.0
      %4967 = vmatpush1.msra.mxu0 0.0
      %4968 = vmatprep.subr.mxu0 0.0
      %4969 = vmatpush1.msra.mxu0 0.0
      %4970 = vmatprep.subr.mxu0 0.0
      %4971 = vmatpush1.msra.mxu0 0.0
      %4972 = vmatprep.subr.mxu0 0.0
      %4973 = vmatpush1.msra.mxu0 0.0
      %4974 = vmatprep.subr.mxu0 0.0
      %4975 = vmatpush1.msra.mxu0 0.0
      %4976 = vmatprep.subr.mxu0 0.0
      %4977 = vmatpush1.msra.mxu0 0.0
      %4978 = vmatprep.subr.mxu0 0.0
      %4979 = vmatpush1.msra.mxu0 0.0
      %4980 = vmatprep.subr.mxu0 0.0
      %4981 = vmatpush1.msra.mxu0 0.0
      %4982 = vmatprep.subr.mxu0 0.0
      %4983 = vmatpush1.msra.mxu0 0.0
      %4984 = vmatprep.subr.mxu0 0.0
      %4985 = vmatpush1.msra.mxu0 0.0
      %4986 = vmatprep.subr.mxu0 0.0
      %4987 = vmatpush1.msra.mxu0 0.0
      %4988 = vmatprep.mubr.f32.mxu0 0.0
      %4989 = vmatmul.mubr.f32.gmra.mrb[0].mxu0 %v4709
      %v4990 = vpop.f32.mrb[0].mxu0
      %v4991 = vadd.f32 0.0, %v4990
      %v4992 = vpop.f32.mrb[0].mxu0
      %v4993 = vadd.f32 0.0, %v4992
      %4994 = vdwg.mxu0
      %v4995 = vlaneseq
      %v4996 = vshrl.u32 %v4995, 7
      %v4997 = vsub.s32 0, %v4996
      %v4998 = vrot.slane %v4491, %v4997
      %v4999 = vlaneseq
      %v5000 = vshrl.u32 %v4999, 7
      %v5001 = vsub.s32 0, %v5000
      %v5002 = vrot.slane %v4493, %v5001
      %v5003 = vlaneseq
      %v5004 = vshrl.u32 %v5003, 7
      %v5005 = vsub.s32 0, %v5004
      %v5006 = vrot.slane %v4562, %v5005
      %v5007 = vlaneseq
      %v5008 = vshrl.u32 %v5007, 7
      %v5009 = vsub.s32 0, %v5008
      %v5010 = vrot.slane %v4564, %v5009
      %v5011 = vlaneseq
      %v5012 = vshrl.u32 %v5011, 7
      %v5013 = vsub.s32 0, %v5012
      %v5014 = vrot.slane %v4633, %v5013
      %v5015 = vlaneseq
      %v5016 = vshrl.u32 %v5015, 7
      %v5017 = vsub.s32 0, %v5016
      %v5018 = vrot.slane %v4635, %v5017
      %v5019 = vlaneseq
      %v5020 = vshrl.u32 %v5019, 7
      %v5021 = vsub.s32 0, %v5020
      %v5022 = vrot.slane %v4704, %v5021
      %v5023 = vlaneseq
      %v5024 = vshrl.u32 %v5023, 7
      %v5025 = vsub.s32 0, %v5024
      %v5026 = vrot.slane %v4706, %v5025
      %v5027 = vsub.f32 %v3452, %v4998
      %v5028 = vsub.f32 %v3453, %v5002
      %v5029 = vsub.f32 %v3454, %v5006
      %v5030 = vsub.f32 %v3455, %v5010
      %v5031 = vsub.f32 %v3456, %v5014
      %v5032 = vsub.f32 %v3457, %v5018
      %v5033 = vsub.f32 %v3458, %v5022
      %v5034 = vsub.f32 %v3459, %v5026
      %v5035 = vsub.f32 %v3460, %v4998
      %v5036 = vsub.f32 %v3461, %v5002
      %v5037 = vsub.f32 %v3462, %v5006
      %v5038 = vsub.f32 %v3463, %v5010
      %v5039 = vsub.f32 %v3464, %v5014
      %v5040 = vsub.f32 %v3465, %v5018
      %v5041 = vsub.f32 %v3466, %v5022
      %v5042 = vsub.f32 %v3467, %v5026
      %v5043 = vsub.f32 %v3468, %v4998
      %v5044 = vsub.f32 %v3469, %v5002
      %v5045 = vsub.f32 %v3470, %v5006
      %v5046 = vsub.f32 %v3471, %v5010
      %v5047 = vsub.f32 %v3472, %v5014
      %v5048 = vsub.f32 %v3473, %v5018
      %v5049 = vsub.f32 %v3474, %v5022
      %v5050 = vsub.f32 %v3475, %v5026
      %v5051 = vsub.f32 %v3476, %v4998
      %v5052 = vsub.f32 %v3477, %v5002
      %v5053 = vsub.f32 %v3478, %v5006
      %v5054 = vsub.f32 %v3479, %v5010
      %v5055 = vsub.f32 %v3480, %v5014
      %v5056 = vsub.f32 %v3481, %v5018
      %v5057 = vsub.f32 %v3482, %v5022
      %v5058 = vsub.f32 %v3483, %v5026
      %v5059 = vld [vmem:[%s328] sm:$0xff]
      %v5061 = vlaneseq
      %v5062 = vshrl.u32 %v5061, 7
      %v5063 = vsub.s32 0, %v5062
      %v5064 = vrot.slane %v5059, %v5063
      %v5065 = vlaneseq
      %v5066 = vshrl.u32 %v5065, 7
      %v5067 = vsub.s32 1, %v5066
      %v5068 = vrot.slane %v5059, %v5067
      %v5069 = vlaneseq
      %v5070 = vshrl.u32 %v5069, 7
      %v5071 = vsub.s32 2, %v5070
      %v5072 = vrot.slane %v5059, %v5071
      %v5073 = vlaneseq
      %v5074 = vshrl.u32 %v5073, 7
      %v5075 = vsub.s32 3, %v5074
      %v5076 = vrot.slane %v5059, %v5075
      %v5077 = vlaneseq
      %v5078 = vshrl.u32 %v5077, 7
      %v5079 = vsub.s32 4, %v5078
      %v5080 = vrot.slane %v5059, %v5079
      %v5081 = vlaneseq
      %v5082 = vshrl.u32 %v5081, 7
      %v5083 = vsub.s32 5, %v5082
      %v5084 = vrot.slane %v5059, %v5083
      %v5085 = vlaneseq
      %v5086 = vshrl.u32 %v5085, 7
      %v5087 = vsub.s32 6, %v5086
      %v5088 = vrot.slane %v5059, %v5087
      %v5089 = vlaneseq
      %v5090 = vshrl.u32 %v5089, 7
      %v5091 = vsub.s32 7, %v5090
      %v5092 = vrot.slane %v5059, %v5091
      %v5101 = vmul.f32 %v4778, %v5064
      %v5102 = vmul.f32 %v4780, %v5068
      %v5103 = vmul.f32 %v4849, %v5072
      %v5104 = vmul.f32 %v4851, %v5076
      %v5105 = vmul.f32 %v4920, %v5080
      %v5106 = vmul.f32 %v4922, %v5084
      %v5107 = vmul.f32 %v4991, %v5088
      %v5108 = vmul.f32 %v4993, %v5092
      %v5109 = vlaneseq
      %v5110 = vshrl.u32 %v5109, 7
      %v5111 = vsub.s32 0, %v5110
      %v5112 = vrot.slane %v5101, %v5111
      %v5113 = vlaneseq
      %v5114 = vshrl.u32 %v5113, 7
      %v5115 = vsub.s32 0, %v5114
      %v5116 = vrot.slane %v5102, %v5115
      %v5117 = vlaneseq
      %v5118 = vshrl.u32 %v5117, 7
      %v5119 = vsub.s32 0, %v5118
      %v5120 = vrot.slane %v5103, %v5119
      %v5121 = vlaneseq
      %v5122 = vshrl.u32 %v5121, 7
      %v5123 = vsub.s32 0, %v5122
      %v5124 = vrot.slane %v5104, %v5123
      %v5125 = vlaneseq
      %v5126 = vshrl.u32 %v5125, 7
      %v5127 = vsub.s32 0, %v5126
      %v5128 = vrot.slane %v5105, %v5127
      %v5129 = vlaneseq
      %v5130 = vshrl.u32 %v5129, 7
      %v5131 = vsub.s32 0, %v5130
      %v5132 = vrot.slane %v5106, %v5131
      %v5133 = vlaneseq
      %v5134 = vshrl.u32 %v5133, 7
      %v5135 = vsub.s32 0, %v5134
      %v5136 = vrot.slane %v5107, %v5135
      %v5137 = vlaneseq
      %v5138 = vshrl.u32 %v5137, 7
      %v5139 = vsub.s32 0, %v5138
      %v5140 = vrot.slane %v5108, %v5139
      %v5141 = vmul.f32 %v5027, %v5112
      %v5142 = vmul.f32 %v5028, %v5116
      %v5143 = vmul.f32 %v5029, %v5120
      %v5144 = vmul.f32 %v5030, %v5124
      %v5145 = vmul.f32 %v5031, %v5128
      %v5146 = vmul.f32 %v5032, %v5132
      %v5147 = vmul.f32 %v5033, %v5136
      %v5148 = vmul.f32 %v5034, %v5140
      %v5149 = vmul.f32 %v5035, %v5112
      %v5150 = vmul.f32 %v5036, %v5116
      %v5151 = vmul.f32 %v5037, %v5120
      %v5152 = vmul.f32 %v5038, %v5124
      %v5153 = vmul.f32 %v5039, %v5128
      %v5154 = vmul.f32 %v5040, %v5132
      %v5155 = vmul.f32 %v5041, %v5136
      %v5156 = vmul.f32 %v5042, %v5140
      %v5157 = vmul.f32 %v5043, %v5112
      %v5158 = vmul.f32 %v5044, %v5116
      %v5159 = vmul.f32 %v5045, %v5120
      %v5160 = vmul.f32 %v5046, %v5124
      %v5161 = vmul.f32 %v5047, %v5128
      %v5162 = vmul.f32 %v5048, %v5132
      %v5163 = vmul.f32 %v5049, %v5136
      %v5164 = vmul.f32 %v5050, %v5140
      %v5165 = vmul.f32 %v5051, %v5112
      %v5166 = vmul.f32 %v5052, %v5116
      %v5167 = vmul.f32 %v5053, %v5120
      %v5168 = vmul.f32 %v5054, %v5124
      %v5169 = vmul.f32 %v5055, %v5128
      %v5170 = vmul.f32 %v5056, %v5132
      %v5171 = vmul.f32 %v5057, %v5136
      %v5172 = vmul.f32 %v5058, %v5140
      %v5173 = vld [vmem:[%s332] sm:$0xff]
      %v5175 = vlaneseq
      %v5176 = vshrl.u32 %v5175, 7
      %v5177 = vsub.s32 0, %v5176
      %v5178 = vrot.slane %v5173, %v5177
      %v5179 = vlaneseq
      %v5180 = vshrl.u32 %v5179, 7
      %v5181 = vsub.s32 1, %v5180
      %v5182 = vrot.slane %v5173, %v5181
      %v5183 = vlaneseq
      %v5184 = vshrl.u32 %v5183, 7
      %v5185 = vsub.s32 2, %v5184
      %v5186 = vrot.slane %v5173, %v5185
      %v5187 = vlaneseq
      %v5188 = vshrl.u32 %v5187, 7
      %v5189 = vsub.s32 3, %v5188
      %v5190 = vrot.slane %v5173, %v5189
      %v5191 = vlaneseq
      %v5192 = vshrl.u32 %v5191, 7
      %v5193 = vsub.s32 4, %v5192
      %v5194 = vrot.slane %v5173, %v5193
      %v5195 = vlaneseq
      %v5196 = vshrl.u32 %v5195, 7
      %v5197 = vsub.s32 5, %v5196
      %v5198 = vrot.slane %v5173, %v5197
      %v5199 = vlaneseq
      %v5200 = vshrl.u32 %v5199, 7
      %v5201 = vsub.s32 6, %v5200
      %v5202 = vrot.slane %v5173, %v5201
      %v5203 = vlaneseq
      %v5204 = vshrl.u32 %v5203, 7
      %v5205 = vsub.s32 7, %v5204
      %v5206 = vrot.slane %v5173, %v5205
      %v5215 = vadd.f32 %v5141, %v5178
      %v5216 = vadd.f32 %v5142, %v5182
      %v5217 = vadd.f32 %v5143, %v5186
      %v5218 = vadd.f32 %v5144, %v5190
      %v5219 = vadd.f32 %v5145, %v5194
      %v5220 = vadd.f32 %v5146, %v5198
      %v5221 = vadd.f32 %v5147, %v5202
      %v5222 = vadd.f32 %v5148, %v5206
      %v5223 = vadd.f32 %v5149, %v5178
      %v5224 = vadd.f32 %v5150, %v5182
      %v5225 = vadd.f32 %v5151, %v5186
      %v5226 = vadd.f32 %v5152, %v5190
      %v5227 = vadd.f32 %v5153, %v5194
      %v5228 = vadd.f32 %v5154, %v5198
      %v5229 = vadd.f32 %v5155, %v5202
      %v5230 = vadd.f32 %v5156, %v5206
      %v5231 = vadd.f32 %v5157, %v5178
      %v5232 = vadd.f32 %v5158, %v5182
      %v5233 = vadd.f32 %v5159, %v5186
      %v5234 = vadd.f32 %v5160, %v5190
      %v5235 = vadd.f32 %v5161, %v5194
      %v5236 = vadd.f32 %v5162, %v5198
      %v5237 = vadd.f32 %v5163, %v5202
      %v5238 = vadd.f32 %v5164, %v5206
      %v5239 = vadd.f32 %v5165, %v5178
      %v5240 = vadd.f32 %v5166, %v5182
      %v5241 = vadd.f32 %v5167, %v5186
      %v5242 = vadd.f32 %v5168, %v5190
      %v5243 = vadd.f32 %v5169, %v5194
      %v5244 = vadd.f32 %v5170, %v5198
      %v5245 = vadd.f32 %v5171, %v5202
      %v5246 = vadd.f32 %v5172, %v5206
      %v5247 = vxor.u32 %v5215, 2147483648
      %v5248 = vxor.u32 %v5216, 2147483648
      %v5249 = vxor.u32 %v5223, 2147483648
      %v5250 = vxor.u32 %v5224, 2147483648
      %v5251 = vxor.u32 %v5231, 2147483648
      %v5252 = vxor.u32 %v5232, 2147483648
      %v5253 = vxor.u32 %v5239, 2147483648
      %v5254 = vxor.u32 %v5240, 2147483648
      %v5255 = vmul.f32 %v5247, 1.442695
      %v5256 = vpow.pop %v5255
      %v5257 = vmul.f32 %v5248, 1.442695
      %v5258 = vpow.pop %v5257
      %v5259 = vmul.f32 %v5249, 1.442695
      %v5260 = vpow.pop %v5259
      %v5261 = vmul.f32 %v5250, 1.442695
      %v5262 = vpow.pop %v5261
      %v5263 = vmul.f32 %v5251, 1.442695
      %v5264 = vpow.pop %v5263
      %v5265 = vmul.f32 %v5252, 1.442695
      %v5266 = vpow.pop %v5265
      %v5267 = vmul.f32 %v5253, 1.442695
      %v5268 = vpow.pop %v5267
      %v5269 = vmul.f32 %v5254, 1.442695
      %v5270 = vpow.pop %v5269
      %v5271 = vadd.f32 %v5256, 1.0
      %v5272 = vadd.f32 %v5258, 1.0
      %v5273 = vadd.f32 %v5260, 1.0
      %v5274 = vadd.f32 %v5262, 1.0
      %v5275 = vadd.f32 %v5264, 1.0
      %v5276 = vadd.f32 %v5266, 1.0
      %v5277 = vadd.f32 %v5268, 1.0
      %v5278 = vadd.f32 %v5270, 1.0
      %v5279 = vrcp.pop %v5271
      %v5280 = vmul.f32 1.0, %v5279
      %v5281 = vrcp.pop %v5272
      %v5282 = vmul.f32 1.0, %v5281
      %v5283 = vrcp.pop %v5273
      %v5284 = vmul.f32 1.0, %v5283
      %v5285 = vrcp.pop %v5274
      %v5286 = vmul.f32 1.0, %v5285
      %v5287 = vrcp.pop %v5275
      %v5288 = vmul.f32 1.0, %v5287
      %v5289 = vrcp.pop %v5276
      %v5290 = vmul.f32 1.0, %v5289
      %v5291 = vrcp.pop %v5277
      %v5292 = vmul.f32 1.0, %v5291
      %v5293 = vrcp.pop %v5278
      %v5294 = vmul.f32 1.0, %v5293
      %v5295 = vxor.u32 %v5217, 2147483648
      %v5296 = vxor.u32 %v5218, 2147483648
      %v5297 = vxor.u32 %v5225, 2147483648
      %v5298 = vxor.u32 %v5226, 2147483648
      %v5299 = vxor.u32 %v5233, 2147483648
      %v5300 = vxor.u32 %v5234, 2147483648
      %v5301 = vxor.u32 %v5241, 2147483648
      %v5302 = vxor.u32 %v5242, 2147483648
      %v5303 = vmul.f32 %v5295, 1.442695
      %v5304 = vpow.pop %v5303
      %v5305 = vmul.f32 %v5296, 1.442695
      %v5306 = vpow.pop %v5305
      %v5307 = vmul.f32 %v5297, 1.442695
      %v5308 = vpow.pop %v5307
      %v5309 = vmul.f32 %v5298, 1.442695
      %v5310 = vpow.pop %v5309
      %v5311 = vmul.f32 %v5299, 1.442695
      %v5312 = vpow.pop %v5311
      %v5313 = vmul.f32 %v5300, 1.442695
      %v5314 = vpow.pop %v5313
      %v5315 = vmul.f32 %v5301, 1.442695
      %v5316 = vpow.pop %v5315
      %v5317 = vmul.f32 %v5302, 1.442695
      %v5318 = vpow.pop %v5317
      %v5319 = vadd.f32 %v5304, 1.0
      %v5320 = vadd.f32 %v5306, 1.0
      %v5321 = vadd.f32 %v5308, 1.0
      %v5322 = vadd.f32 %v5310, 1.0
      %v5323 = vadd.f32 %v5312, 1.0
      %v5324 = vadd.f32 %v5314, 1.0
      %v5325 = vadd.f32 %v5316, 1.0
      %v5326 = vadd.f32 %v5318, 1.0
      %v5327 = vrcp.pop %v5319
      %v5328 = vmul.f32 1.0, %v5327
      %v5329 = vrcp.pop %v5320
      %v5330 = vmul.f32 1.0, %v5329
      %v5331 = vrcp.pop %v5321
      %v5332 = vmul.f32 1.0, %v5331
      %v5333 = vrcp.pop %v5322
      %v5334 = vmul.f32 1.0, %v5333
      %v5335 = vrcp.pop %v5323
      %v5336 = vmul.f32 1.0, %v5335
      %v5337 = vrcp.pop %v5324
      %v5338 = vmul.f32 1.0, %v5337
      %v5339 = vrcp.pop %v5325
      %v5340 = vmul.f32 1.0, %v5339
      %v5341 = vrcp.pop %v5326
      %v5342 = vmul.f32 1.0, %v5341
      %v5343 = vxor.u32 %v5221, 2147483648
      %v5344 = vxor.u32 %v5222, 2147483648
      %v5345 = vxor.u32 %v5229, 2147483648
      %v5346 = vxor.u32 %v5230, 2147483648
      %v5347 = vxor.u32 %v5237, 2147483648
      %v5348 = vxor.u32 %v5238, 2147483648
      %v5349 = vxor.u32 %v5245, 2147483648
      %v5350 = vxor.u32 %v5246, 2147483648
      %v5351 = vmul.f32 %v5343, 1.442695
      %v5352 = vpow.pop %v5351
      %v5353 = vmul.f32 %v5344, 1.442695
      %v5354 = vpow.pop %v5353
      %v5355 = vmul.f32 %v5345, 1.442695
      %v5356 = vpow.pop %v5355
      %v5357 = vmul.f32 %v5346, 1.442695
      %v5358 = vpow.pop %v5357
      %v5359 = vmul.f32 %v5347, 1.442695
      %v5360 = vpow.pop %v5359
      %v5361 = vmul.f32 %v5348, 1.442695
      %v5362 = vpow.pop %v5361
      %v5363 = vmul.f32 %v5349, 1.442695
      %v5364 = vpow.pop %v5363
      %v5365 = vmul.f32 %v5350, 1.442695
      %v5366 = vpow.pop %v5365
      %v5367 = vadd.f32 %v5352, 1.0
      %v5368 = vadd.f32 %v5354, 1.0
      %v5369 = vadd.f32 %v5356, 1.0
      %v5370 = vadd.f32 %v5358, 1.0
      %v5371 = vadd.f32 %v5360, 1.0
      %v5372 = vadd.f32 %v5362, 1.0
      %v5373 = vadd.f32 %v5364, 1.0
      %v5374 = vadd.f32 %v5366, 1.0
      %v5375 = vrcp.pop %v5367
      %v5376 = vmul.f32 1.0, %v5375
      %v5377 = vrcp.pop %v5368
      %v5378 = vmul.f32 1.0, %v5377
      %v5379 = vrcp.pop %v5369
      %v5380 = vmul.f32 1.0, %v5379
      %v5381 = vrcp.pop %v5370
      %v5382 = vmul.f32 1.0, %v5381
      %v5383 = vrcp.pop %v5371
      %v5384 = vmul.f32 1.0, %v5383
      %v5385 = vrcp.pop %v5372
      %v5386 = vmul.f32 1.0, %v5385
      %v5387 = vrcp.pop %v5373
      %v5388 = vmul.f32 1.0, %v5387
      %v5389 = vrcp.pop %v5374
      %v5390 = vmul.f32 1.0, %v5389
      %v5391 = vld [vmem:[#allocation3] sm:$0xff]
      %v5392 = vld [vmem:[#allocation3 + $0x8] sm:$0xff]
      %v5393 = vld [vmem:[#allocation3 + $0x10] sm:$0xff]
      %v5394 = vld [vmem:[#allocation3 + $0x18] sm:$0xff]
      %v5395 = vld [vmem:[#allocation3 + $0x20] sm:$0xff]
      %v5396 = vld [vmem:[#allocation3 + $0x28] sm:$0xff]
      %v5397 = vld [vmem:[#allocation3 + $0x30] sm:$0xff]
      %v5398 = vld [vmem:[#allocation3 + $0x38] sm:$0xff]
      %v5399 = vmul.f32 %v5328, %v5391
      %v5400 = vmul.f32 %v5330, %v5392
      %v5401 = vmul.f32 %v5332, %v5393
      %v5402 = vmul.f32 %v5334, %v5394
      %v5403 = vmul.f32 %v5336, %v5395
      %v5404 = vmul.f32 %v5338, %v5396
      %v5405 = vmul.f32 %v5340, %v5397
      %v5406 = vmul.f32 %v5342, %v5398
      %v5407 = vmul.f32 %v5280, %v5219
      %v5408 = vmul.f32 %v5282, %v5220
      %v5409 = vmul.f32 %v5284, %v5227
      %v5410 = vmul.f32 %v5286, %v5228
      %v5411 = vmul.f32 %v5288, %v5235
      %v5412 = vmul.f32 %v5290, %v5236
      %v5413 = vmul.f32 %v5292, %v5243
      %v5414 = vmul.f32 %v5294, %v5244
      %v5415 = vadd.f32 %v5399, %v5407
      %v5416 = vadd.f32 %v5400, %v5408
      %v5417 = vadd.f32 %v5401, %v5409
      %v5418 = vadd.f32 %v5402, %v5410
      %v5419 = vadd.f32 %v5403, %v5411
      %v5420 = vadd.f32 %v5404, %v5412
      %v5421 = vadd.f32 %v5405, %v5413
      %v5422 = vadd.f32 %v5406, %v5414
      %v5423 = vtanh.pop %v5415
      %v5424 = vtanh.pop %v5416
      %v5425 = vtanh.pop %v5417
      %v5426 = vtanh.pop %v5418
      %v5427 = vtanh.pop %v5419
      %v5428 = vtanh.pop %v5420
      %v5429 = vtanh.pop %v5421
      %v5430 = vtanh.pop %v5422
      %v5431 = vmul.f32 %v5376, %v5423
      %v5432 = vmul.f32 %v5378, %v5424
      %v5433 = vmul.f32 %v5380, %v5425
      %v5434 = vmul.f32 %v5382, %v5426
      %v5435 = vmul.f32 %v5384, %v5427
      %v5436 = vmul.f32 %v5386, %v5428
      %v5437 = vmul.f32 %v5388, %v5429
      %v5438 = vmul.f32 %v5390, %v5430
      %5439 = vst [vmem:[#allocation3] sm:$0xff] %v5415
      %5440 = vst [vmem:[#allocation3 + $0x8] sm:$0xff] %v5416
      %5441 = vst [vmem:[#allocation3 + $0x10] sm:$0xff] %v5417
      %5442 = vst [vmem:[#allocation3 + $0x18] sm:$0xff] %v5418
      %5443 = vst [vmem:[#allocation3 + $0x20] sm:$0xff] %v5419
      %5444 = vst [vmem:[#allocation3 + $0x28] sm:$0xff] %v5420
      %5445 = vst [vmem:[#allocation3 + $0x30] sm:$0xff] %v5421
      %5446 = vst [vmem:[#allocation3 + $0x38] sm:$0xff] %v5422
      %vm5455 = vcmask 1040384
      %v5456 = vrot.slane %v5431, 7
      %v5457 = vrot.slane %v5432, 7
      %v5458 = vrot.slane %v5433, 7
      %v5459 = vsel %vm5455, %v5456, %v5458
      %v5460 = vrot.slane %v5434, 7
      %v5461 = vsel %vm5455, %v5457, %v5460
      %v5462 = vrot.slane %v5435, 7
      %v5463 = vrot.slane %v5436, 7
      %v5464 = vrot.slane %v5437, 7
      %v5465 = vsel %vm5455, %v5462, %v5464
      %v5466 = vrot.slane %v5438, 7
      %v5467 = vsel %vm5455, %v5463, %v5466
      %5480 = vst [vmem:[#allocation2] sm:$0xfe] %v5456
      %5481 = vst [vmem:[#allocation2 + $0x8] sm:$0xfe] %v5457
      %5482 = vst [vmem:[#allocation2 + $0x10] sm:$0xff] %v5459
      %5483 = vst [vmem:[#allocation2 + $0x18] sm:$0xff] %v5461
      %5484 = vst [vmem:[#allocation2 + $0x20] sm:$0x1] %v5458
      %5485 = vst [vmem:[#allocation2 + $0x28] sm:$0x1] %v5460
      %5486 = vst [vmem:[#allocation2 + $0x30] sm:$0xfe] %v5462
      %5487 = vst [vmem:[#allocation2 + $0x38] sm:$0xfe] %v5463
      %5488 = vst [vmem:[#allocation2 + $0x40] sm:$0xff] %v5465
      %5489 = vst [vmem:[#allocation2 + $0x48] sm:$0xff] %v5467
      %5490 = vst [vmem:[#allocation2 + $0x50] sm:$0x1] %v5464
      %5491 = vst [vmem:[#allocation2 + $0x58] sm:$0x1] %v5466
      %5492 = vst [vmem:[%s341] sm:$0xff] %v5431
      %5493 = vst [vmem:[%s341 + $0x8] sm:$0xff] %v5432
      %5494 = vst [vmem:[%s341 + $0x10] sm:$0xff] %v5433
      %5495 = vst [vmem:[%s341 + $0x18] sm:$0xff] %v5434
      %5496 = vst [vmem:[%s341 + $0x20] sm:$0xff] %v5435
      %5497 = vst [vmem:[%s341 + $0x28] sm:$0xff] %v5436
      %5498 = vst [vmem:[%s341 + $0x30] sm:$0xff] %v5437
      %5499 = vst [vmem:[%s341 + $0x38] sm:$0xff] %v5438
      %p5500 = scmp.lt.s32.totalorder %s21, 1
      %s5501 = scalar_select %p5500, %s21, 1
      %p5502 = scmp.lt.s32.totalorder %s22, 7
      %s5503 = scalar_select %p5502, %s22, 7
      %s5504 = smul.addr %s5503, 8
      %s5505 = smul.addr %s5501, 64
      %s5506 = sadd.s32 %s5504, %s5505
      %s5507 = smul.addr %s5506, 8
      %s5508 = scalar_lea.vmem %s6, %s5507
      // Predicated region
      $region49: #{conv_bilstm_layer.1} parent=43 // pred_check
        %p5509 = pneg %p197
      $region50: #{conv_bilstm_layer.1} parent=43 // pred_check_branch
        %5511 = sbr.rel (%p5509) target = $region52
      $region51: #{conv_bilstm_layer.1} parent=43 // pred_region
        _
      $region52: #{conv_bilstm_layer.1} parent=43 // pred_fallthru
        _
    $region44: #{conv_bilstm_layer.1} parent=5 // pred_fallthru
      _
    %p5512 = scmp.le.s32.totalorder 2, %s12
    // Predicated region
    $region53: #{conv_bilstm_layer.1} parent=5 // pred_check
      %p5513 = pneg %p5512
    $region54: #{conv_bilstm_layer.1} parent=5 // pred_check_branch
      %5515 = sbr.rel (%p5513) target = $region56
    $region55: #{conv_bilstm_layer.1} parent=5 // pred_region
      %s5516 = ssub.s32 %s12, 2
      // Predicated region
      $region57: #{conv_bilstm_layer.1} parent=55 // pred_check
        %p5517 = pneg %p203
      $region58: #{conv_bilstm_layer.1} parent=55 // pred_check_branch
        %5519 = sbr.rel (%p5517) target = $region60
      $region59: #{conv_bilstm_layer.1} parent=55 // pred_region
        %p5520 = scmp.lt.s32.totalorder %s23, 1
        %s5521 = scalar_select %p5520, %s23, 1
        %p5522 = scmp.lt.s32.totalorder %s24, 7
        %s5523 = scalar_select %p5522, %s24, 7
        %s5524 = smul.addr %s5523, 8
        %s5525 = smul.addr %s5521, 64
        %s5526 = sadd.s32 %s5524, %s5525
        %s5527 = smul.addr %s5526, 8
        %s5528 = scalar_lea.vmem %s6, %s5527
      $region60: #{conv_bilstm_layer.1} parent=55 // pred_fallthru
        _
    $region56: #{conv_bilstm_layer.1} parent=5 // pred_fallthru
      _
  $region6: #{conv_bilstm_layer.1} parent=0 // loop_footer
    %s16 = sadd.s32 1, %s12
  $region7: #{conv_bilstm_layer.1} parent=0 // loop_footer_branch
    %11 = sbr.rel target = $region3
  $region8: #{conv_bilstm_layer.1} parent=0 // loop_exit
    _

// kernel: squeeze.2
$region0: #{squeeze.2}
  %s0 = inlined_call_operand.vmem [shape: f32[1,8,32,256], index: 0, kind: input, shape index: {}]
  %s1 = inlined_call_operand.vmem [shape: f32[8,2,16,16,16], index: 1, kind: output, shape index: {}]
  %v2 = vld [vmem:[%s0] sm:$0xff]
  %vm3 = vcmask 130048
  %4 = vst.msk [vmem:[%s1] ss:$16 sm:$0x3] %vm3, %v2
  %5 = vst.msk [vmem:[%s1] ss:$16 sm:$0xc] %vm3, %v2
  %6 = vst.msk [vmem:[%s1] ss:$16 sm:$0x30] %vm3, %v2
  %7 = vst.msk [vmem:[%s1] ss:$16 sm:$0xc0] %vm3, %v2
  %s8 = scalar_lea.vmem %s0, 8
  %v9 = vld [vmem:[%s8] sm:$0xff]
  %vm10 = vcmask 130048
  %s11 = scalar_lea.vmem %s1, 8
  %12 = vst.msk [vmem:[%s11] ss:$16 sm:$0x3] %vm10, %v9
  %s13 = scalar_lea.vmem %s1, 8
  %14 = vst.msk [vmem:[%s13] ss:$16 sm:$0xc] %vm10, %v9
  %s15 = scalar_lea.vmem %s1, 8
  %16 = vst.msk [vmem:[%s15] ss:$16 sm:$0x30] %vm10, %v9
  %s17 = scalar_lea.vmem %s1, 8
  %18 = vst.msk [vmem:[%s17] ss:$16 sm:$0xc0] %vm10, %v9
  %s19 = scalar_lea.vmem %s0, 16
  %v20 = vld [vmem:[%s19] sm:$0xff]
  %vm21 = vcmask 130048
  %s22 = scalar_lea.vmem %s1, 128
  %23 = vst.msk [vmem:[%s22] ss:$16 sm:$0x3] %vm21, %v20
  %s24 = scalar_lea.vmem %s1, 128
  %25 = vst.msk [vmem:[%s24] ss:$16 sm:$0xc] %vm21, %v20
  %s26 = scalar_lea.vmem %s1, 128
  %27 = vst.msk [vmem:[%s26] ss:$16 sm:$0x30] %vm21, %v20
  %s28 = scalar_lea.vmem %s1, 128
  %29 = vst.msk [vmem:[%s28] ss:$16 sm:$0xc0] %vm21, %v20
  %s30 = scalar_lea.vmem %s0, 24
  %v31 = vld [vmem:[%s30] sm:$0xff]
  %vm32 = vcmask 130048
  %s33 = scalar_lea.vmem %s1, 136
  %34 = vst.msk [vmem:[%s33] ss:$16 sm:$0x3] %vm32, %v31
  %s35 = scalar_lea.vmem %s1, 136
  %36 = vst.msk [vmem:[%s35] ss:$16 sm:$0xc] %vm32, %v31
  %s37 = scalar_lea.vmem %s1, 136
  %38 = vst.msk [vmem:[%s37] ss:$16 sm:$0x30] %vm32, %v31
  %s39 = scalar_lea.vmem %s1, 136
  %40 = vst.msk [vmem:[%s39] ss:$16 sm:$0xc0] %vm32, %v31
  %s41 = scalar_lea.vmem %s0, 32
  %v42 = vld [vmem:[%s41] sm:$0xff]
  %vm43 = vcmask 130048
  %s44 = scalar_lea.vmem %s1, 256
  %45 = vst.msk [vmem:[%s44] ss:$16 sm:$0x3] %vm43, %v42
  %s46 = scalar_lea.vmem %s1, 256
  %47 = vst.msk [vmem:[%s46] ss:$16 sm:$0xc] %vm43, %v42
  %s48 = scalar_lea.vmem %s1, 256
  %49 = vst.msk [vmem:[%s48] ss:$16 sm:$0x30] %vm43, %v42
  %s50 = scalar_lea.vmem %s1, 256
  %51 = vst.msk [vmem:[%s50] ss:$16 sm:$0xc0] %vm43, %v42
  %s52 = scalar_lea.vmem %s0, 40
  %v53 = vld [vmem:[%s52] sm:$0xff]
  %vm54 = vcmask 130048
  %s55 = scalar_lea.vmem %s1, 264
  %56 = vst.msk [vmem:[%s55] ss:$16 sm:$0x3] %vm54, %v53
  %s57 = scalar_lea.vmem %s1, 264
  %58 = vst.msk [vmem:[%s57] ss:$16 sm:$0xc] %vm54, %v53
  %s59 = scalar_lea.vmem %s1, 264
  %60 = vst.msk [vmem:[%s59] ss:$16 sm:$0x30] %vm54, %v53
  %s61 = scalar_lea.vmem %s1, 264
  %62 = vst.msk [vmem:[%s61] ss:$16 sm:$0xc0] %vm54, %v53
  %s63 = scalar_lea.vmem %s0, 48
  %v64 = vld [vmem:[%s63] sm:$0xff]
  %vm65 = vcmask 130048
  %s66 = scalar_lea.vmem %s1, 384
  %67 = vst.msk [vmem:[%s66] ss:$16 sm:$0x3] %vm65, %v64
  %s68 = scalar_lea.vmem %s1, 384
  %69 = vst.msk [vmem:[%s68] ss:$16 sm:$0xc] %vm65, %v64
  %s70 = scalar_lea.vmem %s1, 384
  %71 = vst.msk [vmem:[%s70] ss:$16 sm:$0x30] %vm65, %v64
  %s72 = scalar_lea.vmem %s1, 384
  %73 = vst.msk [vmem:[%s72] ss:$16 sm:$0xc0] %vm65, %v64
  %s74 = scalar_lea.vmem %s0, 56
  %v75 = vld [vmem:[%s74] sm:$0xff]
  %vm76 = vcmask 130048
  %s77 = scalar_lea.vmem %s1, 392
  %78 = vst.msk [vmem:[%s77] ss:$16 sm:$0x3] %vm76, %v75
  %s79 = scalar_lea.vmem %s1, 392
  %80 = vst.msk [vmem:[%s79] ss:$16 sm:$0xc] %vm76, %v75
  %s81 = scalar_lea.vmem %s1, 392
  %82 = vst.msk [vmem:[%s81] ss:$16 sm:$0x30] %vm76, %v75
  %s83 = scalar_lea.vmem %s1, 392
  %84 = vst.msk [vmem:[%s83] ss:$16 sm:$0xc0] %vm76, %v75
  %s85 = scalar_lea.vmem %s0, 64
  %v86 = vld [vmem:[%s85] sm:$0xff]
  %vm87 = vcmask 130048
  %s88 = scalar_lea.vmem %s1, 512
  %89 = vst.msk [vmem:[%s88] ss:$16 sm:$0x3] %vm87, %v86
  %s90 = scalar_lea.vmem %s1, 512
  %91 = vst.msk [vmem:[%s90] ss:$16 sm:$0xc] %vm87, %v86
  %s92 = scalar_lea.vmem %s1, 512
  %93 = vst.msk [vmem:[%s92] ss:$16 sm:$0x30] %vm87, %v86
  %s94 = scalar_lea.vmem %s1, 512
  %95 = vst.msk [vmem:[%s94] ss:$16 sm:$0xc0] %vm87, %v86
  %s96 = scalar_lea.vmem %s0, 72
  %v97 = vld [vmem:[%s96] sm:$0xff]
  %vm98 = vcmask 130048
  %s99 = scalar_lea.vmem %s1, 520
  %100 = vst.msk [vmem:[%s99] ss:$16 sm:$0x3] %vm98, %v97
  %s101 = scalar_lea.vmem %s1, 520
  %102 = vst.msk [vmem:[%s101] ss:$16 sm:$0xc] %vm98, %v97
  %s103 = scalar_lea.vmem %s1, 520
  %104 = vst.msk [vmem:[%s103] ss:$16 sm:$0x30] %vm98, %v97
  %s105 = scalar_lea.vmem %s1, 520
  %106 = vst.msk [vmem:[%s105] ss:$16 sm:$0xc0] %vm98, %v97
  %s107 = scalar_lea.vmem %s0, 80
  %v108 = vld [vmem:[%s107] sm:$0xff]
  %vm109 = vcmask 130048
  %s110 = scalar_lea.vmem %s1, 640
  %111 = vst.msk [vmem:[%s110] ss:$16 sm:$0x3] %vm109, %v108
  %s112 = scalar_lea.vmem %s1, 640
  %113 = vst.msk [vmem:[%s112] ss:$16 sm:$0xc] %vm109, %v108
  %s114 = scalar_lea.vmem %s1, 640
  %115 = vst.msk [vmem:[%s114] ss:$16 sm:$0x30] %vm109, %v108
  %s116 = scalar_lea.vmem %s1, 640
  %117 = vst.msk [vmem:[%s116] ss:$16 sm:$0xc0] %vm109, %v108
  %s118 = scalar_lea.vmem %s0, 88
  %v119 = vld [vmem:[%s118] sm:$0xff]
  %vm120 = vcmask 130048
  %s121 = scalar_lea.vmem %s1, 648
  %122 = vst.msk [vmem:[%s121] ss:$16 sm:$0x3] %vm120, %v119
  %s123 = scalar_lea.vmem %s1, 648
  %124 = vst.msk [vmem:[%s123] ss:$16 sm:$0xc] %vm120, %v119
  %s125 = scalar_lea.vmem %s1, 648
  %126 = vst.msk [vmem:[%s125] ss:$16 sm:$0x30] %vm120, %v119
  %s127 = scalar_lea.vmem %s1, 648
  %128 = vst.msk [vmem:[%s127] ss:$16 sm:$0xc0] %vm120, %v119
  %s129 = scalar_lea.vmem %s0, 96
  %v130 = vld [vmem:[%s129] sm:$0xff]
  %vm131 = vcmask 130048
  %s132 = scalar_lea.vmem %s1, 768
  %133 = vst.msk [vmem:[%s132] ss:$16 sm:$0x3] %vm131, %v130
  %s134 = scalar_lea.vmem %s1, 768
  %135 = vst.msk [vmem:[%s134] ss:$16 sm:$0xc] %vm131, %v130
  %s136 = scalar_lea.vmem %s1, 768
  %137 = vst.msk [vmem:[%s136] ss:$16 sm:$0x30] %vm131, %v130
  %s138 = scalar_lea.vmem %s1, 768
  %139 = vst.msk [vmem:[%s138] ss:$16 sm:$0xc0] %vm131, %v130
  %s140 = scalar_lea.vmem %s0, 104
  %v141 = vld [vmem:[%s140] sm:$0xff]
  %vm142 = vcmask 130048
  %s143 = scalar_lea.vmem %s1, 776
  %144 = vst.msk [vmem:[%s143] ss:$16 sm:$0x3] %vm142, %v141
  %s145 = scalar_lea.vmem %s1, 776
  %146 = vst.msk [vmem:[%s145] ss:$16 sm:$0xc] %vm142, %v141
  %s147 = scalar_lea.vmem %s1, 776
  %148 = vst.msk [vmem:[%s147] ss:$16 sm:$0x30] %vm142, %v141
  %s149 = scalar_lea.vmem %s1, 776
  %150 = vst.msk [vmem:[%s149] ss:$16 sm:$0xc0] %vm142, %v141
  %s151 = scalar_lea.vmem %s0, 112
  %v152 = vld [vmem:[%s151] sm:$0xff]
  %vm153 = vcmask 130048
  %s154 = scalar_lea.vmem %s1, 896
  %155 = vst.msk [vmem:[%s154] ss:$16 sm:$0x3] %vm153, %v152
  %s156 = scalar_lea.vmem %s1, 896
  %157 = vst.msk [vmem:[%s156] ss:$16 sm:$0xc] %vm153, %v152
  %s158 = scalar_lea.vmem %s1, 896
  %159 = vst.msk [vmem:[%s158] ss:$16 sm:$0x30] %vm153, %v152
  %s160 = scalar_lea.vmem %s1, 896
  %161 = vst.msk [vmem:[%s160] ss:$16 sm:$0xc0] %vm153, %v152
  %s162 = scalar_lea.vmem %s0, 120
  %v163 = vld [vmem:[%s162] sm:$0xff]
  %vm164 = vcmask 130048
  %s165 = scalar_lea.vmem %s1, 904
  %166 = vst.msk [vmem:[%s165] ss:$16 sm:$0x3] %vm164, %v163
  %s167 = scalar_lea.vmem %s1, 904
  %168 = vst.msk [vmem:[%s167] ss:$16 sm:$0xc] %vm164, %v163
  %s169 = scalar_lea.vmem %s1, 904
  %170 = vst.msk [vmem:[%s169] ss:$16 sm:$0x30] %vm164, %v163
  %s171 = scalar_lea.vmem %s1, 904
  %172 = vst.msk [vmem:[%s171] ss:$16 sm:$0xc0] %vm164, %v163
  %s173 = scalar_lea.vmem %s0, 128
  %v174 = vld [vmem:[%s173] sm:$0xff]
  %vm175 = vcmask 130048
  %s176 = scalar_lea.vmem %s1, 1024
  %177 = vst.msk [vmem:[%s176] ss:$16 sm:$0x3] %vm175, %v174
  %s178 = scalar_lea.vmem %s1, 1024
  %179 = vst.msk [vmem:[%s178] ss:$16 sm:$0xc] %vm175, %v174
  %s180 = scalar_lea.vmem %s1, 1024
  %181 = vst.msk [vmem:[%s180] ss:$16 sm:$0x30] %vm175, %v174
  %s182 = scalar_lea.vmem %s1, 1024
  %183 = vst.msk [vmem:[%s182] ss:$16 sm:$0xc0] %vm175, %v174
  %s184 = scalar_lea.vmem %s0, 136
  %v185 = vld [vmem:[%s184] sm:$0xff]
  %vm186 = vcmask 130048
  %s187 = scalar_lea.vmem %s1, 1032
  %188 = vst.msk [vmem:[%s187] ss:$16 sm:$0x3] %vm186, %v185
  %s189 = scalar_lea.vmem %s1, 1032
  %190 = vst.msk [vmem:[%s189] ss:$16 sm:$0xc] %vm186, %v185
  %s191 = scalar_lea.vmem %s1, 1032
  %192 = vst.msk [vmem:[%s191] ss:$16 sm:$0x30] %vm186, %v185
  %s193 = scalar_lea.vmem %s1, 1032
  %194 = vst.msk [vmem:[%s193] ss:$16 sm:$0xc0] %vm186, %v185
  %s195 = scalar_lea.vmem %s0, 144
  %v196 = vld [vmem:[%s195] sm:$0xff]
  %vm197 = vcmask 130048
  %s198 = scalar_lea.vmem %s1, 1152
  %199 = vst.msk [vmem:[%s198] ss:$16 sm:$0x3] %vm197, %v196
  %s200 = scalar_lea.vmem %s1, 1152
  %201 = vst.msk [vmem:[%s200] ss:$16 sm:$0xc] %vm197, %v196
  %s202 = scalar_lea.vmem %s1, 1152
  %203 = vst.msk [vmem:[%s202] ss:$16 sm:$0x30] %vm197, %v196
  %s204 = scalar_lea.vmem %s1, 1152
  %205 = vst.msk [vmem:[%s204] ss:$16 sm:$0xc0] %vm197, %v196
  %s206 = scalar_lea.vmem %s0, 152
  %v207 = vld [vmem:[%s206] sm:$0xff]
  %vm208 = vcmask 130048
  %s209 = scalar_lea.vmem %s1, 1160
  %210 = vst.msk [vmem:[%s209] ss:$16 sm:$0x3] %vm208, %v207
  %s211 = scalar_lea.vmem %s1, 1160
  %212 = vst.msk [vmem:[%s211] ss:$16 sm:$0xc] %vm208, %v207
  %s213 = scalar_lea.vmem %s1, 1160
  %214 = vst.msk [vmem:[%s213] ss:$16 sm:$0x30] %vm208, %v207
  %s215 = scalar_lea.vmem %s1, 1160
  %216 = vst.msk [vmem:[%s215] ss:$16 sm:$0xc0] %vm208, %v207
  %s217 = scalar_lea.vmem %s0, 160
  %v218 = vld [vmem:[%s217] sm:$0xff]
  %vm219 = vcmask 130048
  %s220 = scalar_lea.vmem %s1, 1280
  %221 = vst.msk [vmem:[%s220] ss:$16 sm:$0x3] %vm219, %v218
  %s222 = scalar_lea.vmem %s1, 1280
  %223 = vst.msk [vmem:[%s222] ss:$16 sm:$0xc] %vm219, %v218
  %s224 = scalar_lea.vmem %s1, 1280
  %225 = vst.msk [vmem:[%s224] ss:$16 sm:$0x30] %vm219, %v218
  %s226 = scalar_lea.vmem %s1, 1280
  %227 = vst.msk [vmem:[%s226] ss:$16 sm:$0xc0] %vm219, %v218
  %s228 = scalar_lea.vmem %s0, 168
  %v229 = vld [vmem:[%s228] sm:$0xff]
  %vm230 = vcmask 130048
  %s231 = scalar_lea.vmem %s1, 1288
  %232 = vst.msk [vmem:[%s231] ss:$16 sm:$0x3] %vm230, %v229
  %s233 = scalar_lea.vmem %s1, 1288
  %234 = vst.msk [vmem:[%s233] ss:$16 sm:$0xc] %vm230, %v229
  %s235 = scalar_lea.vmem %s1, 1288
  %236 = vst.msk [vmem:[%s235] ss:$16 sm:$0x30] %vm230, %v229
  %s237 = scalar_lea.vmem %s1, 1288
  %238 = vst.msk [vmem:[%s237] ss:$16 sm:$0xc0] %vm230, %v229
  %s239 = scalar_lea.vmem %s0, 176
  %v240 = vld [vmem:[%s239] sm:$0xff]
  %vm241 = vcmask 130048
  %s242 = scalar_lea.vmem %s1, 1408
  %243 = vst.msk [vmem:[%s242] ss:$16 sm:$0x3] %vm241, %v240
  %s244 = scalar_lea.vmem %s1, 1408
  %245 = vst.msk [vmem:[%s244] ss:$16 sm:$0xc] %vm241, %v240
  %s246 = scalar_lea.vmem %s1, 1408
  %247 = vst.msk [vmem:[%s246] ss:$16 sm:$0x30] %vm241, %v240
  %s248 = scalar_lea.vmem %s1, 1408
  %249 = vst.msk [vmem:[%s248] ss:$16 sm:$0xc0] %vm241, %v240
  %s250 = scalar_lea.vmem %s0, 184
  %v251 = vld [vmem:[%s250] sm:$0xff]
  %vm252 = vcmask 130048
  %s253 = scalar_lea.vmem %s1, 1416
  %254 = vst.msk [vmem:[%s253] ss:$16 sm:$0x3] %vm252, %v251
  %s255 = scalar_lea.vmem %s1, 1416
  %256 = vst.msk [vmem:[%s255] ss:$16 sm:$0xc] %vm252, %v251
  %s257 = scalar_lea.vmem %s1, 1416
  %258 = vst.msk [vmem:[%s257] ss:$16 sm:$0x30] %vm252, %v251
  %s259 = scalar_lea.vmem %s1, 1416
  %260 = vst.msk [vmem:[%s259] ss:$16 sm:$0xc0] %vm252, %v251
  %s261 = scalar_lea.vmem %s0, 192
  %v262 = vld [vmem:[%s261] sm:$0xff]
  %vm263 = vcmask 130048
  %s264 = scalar_lea.vmem %s1, 1536
  %265 = vst.msk [vmem:[%s264] ss:$16 sm:$0x3] %vm263, %v262
  %s266 = scalar_lea.vmem %s1, 1536
  %267 = vst.msk [vmem:[%s266] ss:$16 sm:$0xc] %vm263, %v262
  %s268 = scalar_lea.vmem %s1, 1536
  %269 = vst.msk [vmem:[%s268] ss:$16 sm:$0x30] %vm263, %v262
  %s270 = scalar_lea.vmem %s1, 1536
  %271 = vst.msk [vmem:[%s270] ss:$16 sm:$0xc0] %vm263, %v262
  %s272 = scalar_lea.vmem %s0, 200
  %v273 = vld [vmem:[%s272] sm:$0xff]
  %vm274 = vcmask 130048
  %s275 = scalar_lea.vmem %s1, 1544
  %276 = vst.msk [vmem:[%s275] ss:$16 sm:$0x3] %vm274, %v273
  %s277 = scalar_lea.vmem %s1, 1544
  %278 = vst.msk [vmem:[%s277] ss:$16 sm:$0xc] %vm274, %v273
  %s279 = scalar_lea.vmem %s1, 1544
  %280 = vst.msk [vmem:[%s279] ss:$16 sm:$0x30] %vm274, %v273
  %s281 = scalar_lea.vmem %s1, 1544
  %282 = vst.msk [vmem:[%s281] ss:$16 sm:$0xc0] %vm274, %v273
  %s283 = scalar_lea.vmem %s0, 208
  %v284 = vld [vmem:[%s283] sm:$0xff]
  %vm285 = vcmask 130048
  %s286 = scalar_lea.vmem %s1, 1664
  %287 = vst.msk [vmem:[%s286] ss:$16 sm:$0x3] %vm285, %v284
  %s288 = scalar_lea.vmem %s1, 1664
  %289 = vst.msk [vmem:[%s288] ss:$16 sm:$0xc] %vm285, %v284
  %s290 = scalar_lea.vmem %s1, 1664
  %291 = vst.msk [vmem:[%s290] ss:$16 sm:$0x30] %vm285, %v284
  %s292 = scalar_lea.vmem %s1, 1664
  %293 = vst.msk [vmem:[%s292] ss:$16 sm:$0xc0] %vm285, %v284
  %s294 = scalar_lea.vmem %s0, 216
  %v295 = vld [vmem:[%s294] sm:$0xff]
  %vm296 = vcmask 130048
  %s297 = scalar_lea.vmem %s1, 1672
  %298 = vst.msk [vmem:[%s297] ss:$16 sm:$0x3] %vm296, %v295
  %s299 = scalar_lea.vmem %s1, 1672
  %300 = vst.msk [vmem:[%s299] ss:$16 sm:$0xc] %vm296, %v295
  %s301 = scalar_lea.vmem %s1, 1672
  %302 = vst.msk [vmem:[%s301] ss:$16 sm:$0x30] %vm296, %v295
  %s303 = scalar_lea.vmem %s1, 1672
  %304 = vst.msk [vmem:[%s303] ss:$16 sm:$0xc0] %vm296, %v295
  %s305 = scalar_lea.vmem %s0, 224
  %v306 = vld [vmem:[%s305] sm:$0xff]
  %vm307 = vcmask 130048
  %s308 = scalar_lea.vmem %s1, 1792
  %309 = vst.msk [vmem:[%s308] ss:$16 sm:$0x3] %vm307, %v306
  %s310 = scalar_lea.vmem %s1, 1792
  %311 = vst.msk [vmem:[%s310] ss:$16 sm:$0xc] %vm307, %v306
  %s312 = scalar_lea.vmem %s1, 1792
  %313 = vst.msk [vmem:[%s312] ss:$16 sm:$0x30] %vm307, %v306
  %s314 = scalar_lea.vmem %s1, 1792
  %315 = vst.msk [vmem:[%s314] ss:$16 sm:$0xc0] %vm307, %v306
  %s316 = scalar_lea.vmem %s0, 232
  %v317 = vld [vmem:[%s316] sm:$0xff]
  %vm318 = vcmask 130048
  %s319 = scalar_lea.vmem %s1, 1800
  %320 = vst.msk [vmem:[%s319] ss:$16 sm:$0x3] %vm318, %v317
  %s321 = scalar_lea.vmem %s1, 1800
  %322 = vst.msk [vmem:[%s321] ss:$16 sm:$0xc] %vm318, %v317
  %s323 = scalar_lea.vmem %s1, 1800
  %324 = vst.msk [vmem:[%s323] ss:$16 sm:$0x30] %vm318, %v317
  %s325 = scalar_lea.vmem %s1, 1800
  %326 = vst.msk [vmem:[%s325] ss:$16 sm:$0xc0] %vm318, %v317
  %s327 = scalar_lea.vmem %s0, 240
  %v328 = vld [vmem:[%s327] sm:$0xff]
  %vm329 = vcmask 130048
  %s330 = scalar_lea.vmem %s1, 1920
  %331 = vst.msk [vmem:[%s330] ss:$16 sm:$0x3] %vm329, %v328
  %s332 = scalar_lea.vmem %s1, 1920
  %333 = vst.msk [vmem:[%s332] ss:$16 sm:$0xc] %vm329, %v328
  %s334 = scalar_lea.vmem %s1, 1920
  %335 = vst.msk [vmem:[%s334] ss:$16 sm:$0x30] %vm329, %v328
  %s336 = scalar_lea.vmem %s1, 1920
  %337 = vst.msk [vmem:[%s336] ss:$16 sm:$0xc0] %vm329, %v328
  %s338 = scalar_lea.vmem %s0, 248
  %v339 = vld [vmem:[%s338] sm:$0xff]
  %vm340 = vcmask 130048
  %s341 = scalar_lea.vmem %s1, 1928
  %342 = vst.msk [vmem:[%s341] ss:$16 sm:$0x3] %vm340, %v339
  %s343 = scalar_lea.vmem %s1, 1928
  %344 = vst.msk [vmem:[%s343] ss:$16 sm:$0xc] %vm340, %v339
  %s345 = scalar_lea.vmem %s1, 1928
  %346 = vst.msk [vmem:[%s345] ss:$16 sm:$0x30] %vm340, %v339
  %s347 = scalar_lea.vmem %s1, 1928
  %348 = vst.msk [vmem:[%s347] ss:$16 sm:$0xc0] %vm340, %v339
  %s349 = scalar_lea.vmem %s0, 256
  %v350 = vld [vmem:[%s349] sm:$0xff]
  %vm351 = vcmask 130048
  %s352 = scalar_lea.vmem %s1, 2048
  %353 = vst.msk [vmem:[%s352] ss:$16 sm:$0x3] %vm351, %v350
  %s354 = scalar_lea.vmem %s1, 2048
  %355 = vst.msk [vmem:[%s354] ss:$16 sm:$0xc] %vm351, %v350
  %s356 = scalar_lea.vmem %s1, 2048
  %357 = vst.msk [vmem:[%s356] ss:$16 sm:$0x30] %vm351, %v350
  %s358 = scalar_lea.vmem %s1, 2048
  %359 = vst.msk [vmem:[%s358] ss:$16 sm:$0xc0] %vm351, %v350
  %s360 = scalar_lea.vmem %s0, 264
  %v361 = vld [vmem:[%s360] sm:$0xff]
  %vm362 = vcmask 130048
  %s363 = scalar_lea.vmem %s1, 2056
  %364 = vst.msk [vmem:[%s363] ss:$16 sm:$0x3] %vm362, %v361
  %s365 = scalar_lea.vmem %s1, 2056
  %366 = vst.msk [vmem:[%s365] ss:$16 sm:$0xc] %vm362, %v361
  %s367 = scalar_lea.vmem %s1, 2056
  %368 = vst.msk [vmem:[%s367] ss:$16 sm:$0x30] %vm362, %v361
  %s369 = scalar_lea.vmem %s1, 2056
  %370 = vst.msk [vmem:[%s369] ss:$16 sm:$0xc0] %vm362, %v361
  %s371 = scalar_lea.vmem %s0, 272
  %v372 = vld [vmem:[%s371] sm:$0xff]
  %vm373 = vcmask 130048
  %s374 = scalar_lea.vmem %s1, 2176
  %375 = vst.msk [vmem:[%s374] ss:$16 sm:$0x3] %vm373, %v372
  %s376 = scalar_lea.vmem %s1, 2176
  %377 = vst.msk [vmem:[%s376] ss:$16 sm:$0xc] %vm373, %v372
  %s378 = scalar_lea.vmem %s1, 2176
  %379 = vst.msk [vmem:[%s378] ss:$16 sm:$0x30] %vm373, %v372
  %s380 = scalar_lea.vmem %s1, 2176
  %381 = vst.msk [vmem:[%s380] ss:$16 sm:$0xc0] %vm373, %v372
  %s382 = scalar_lea.vmem %s0, 280
  %v383 = vld [vmem:[%s382] sm:$0xff]
  %vm384 = vcmask 130048
  %s385 = scalar_lea.vmem %s1, 2184
  %386 = vst.msk [vmem:[%s385] ss:$16 sm:$0x3] %vm384, %v383
  %s387 = scalar_lea.vmem %s1, 2184
  %388 = vst.msk [vmem:[%s387] ss:$16 sm:$0xc] %vm384, %v383
  %s389 = scalar_lea.vmem %s1, 2184
  %390 = vst.msk [vmem:[%s389] ss:$16 sm:$0x30] %vm384, %v383
  %s391 = scalar_lea.vmem %s1, 2184
  %392 = vst.msk [vmem:[%s391] ss:$16 sm:$0xc0] %vm384, %v383
  %s393 = scalar_lea.vmem %s0, 288
  %v394 = vld [vmem:[%s393] sm:$0xff]
  %vm395 = vcmask 130048
  %s396 = scalar_lea.vmem %s1, 2304
  %397 = vst.msk [vmem:[%s396] ss:$16 sm:$0x3] %vm395, %v394
  %s398 = scalar_lea.vmem %s1, 2304
  %399 = vst.msk [vmem:[%s398] ss:$16 sm:$0xc] %vm395, %v394
  %s400 = scalar_lea.vmem %s1, 2304
  %401 = vst.msk [vmem:[%s400] ss:$16 sm:$0x30] %vm395, %v394
  %s402 = scalar_lea.vmem %s1, 2304
  %403 = vst.msk [vmem:[%s402] ss:$16 sm:$0xc0] %vm395, %v394
  %s404 = scalar_lea.vmem %s0, 296
  %v405 = vld [vmem:[%s404] sm:$0xff]
  %vm406 = vcmask 130048
  %s407 = scalar_lea.vmem %s1, 2312
  %408 = vst.msk [vmem:[%s407] ss:$16 sm:$0x3] %vm406, %v405
  %s409 = scalar_lea.vmem %s1, 2312
  %410 = vst.msk [vmem:[%s409] ss:$16 sm:$0xc] %vm406, %v405
  %s411 = scalar_lea.vmem %s1, 2312
  %412 = vst.msk [vmem:[%s411] ss:$16 sm:$0x30] %vm406, %v405
  %s413 = scalar_lea.vmem %s1, 2312
  %414 = vst.msk [vmem:[%s413] ss:$16 sm:$0xc0] %vm406, %v405
  %s415 = scalar_lea.vmem %s0, 304
  %v416 = vld [vmem:[%s415] sm:$0xff]
  %vm417 = vcmask 130048
  %s418 = scalar_lea.vmem %s1, 2432
  %419 = vst.msk [vmem:[%s418] ss:$16 sm:$0x3] %vm417, %v416
  %s420 = scalar_lea.vmem %s1, 2432
  %421 = vst.msk [vmem:[%s420] ss:$16 sm:$0xc] %vm417, %v416
  %s422 = scalar_lea.vmem %s1, 2432
  %423 = vst.msk [vmem:[%s422] ss:$16 sm:$0x30] %vm417, %v416
  %s424 = scalar_lea.vmem %s1, 2432
  %425 = vst.msk [vmem:[%s424] ss:$16 sm:$0xc0] %vm417, %v416
  %s426 = scalar_lea.vmem %s0, 312
  %v427 = vld [vmem:[%s426] sm:$0xff]
  %vm428 = vcmask 130048
  %s429 = scalar_lea.vmem %s1, 2440
  %430 = vst.msk [vmem:[%s429] ss:$16 sm:$0x3] %vm428, %v427
  %s431 = scalar_lea.vmem %s1, 2440
  %432 = vst.msk [vmem:[%s431] ss:$16 sm:$0xc] %vm428, %v427
  %s433 = scalar_lea.vmem %s1, 2440
  %434 = vst.msk [vmem:[%s433] ss:$16 sm:$0x30] %vm428, %v427
  %s435 = scalar_lea.vmem %s1, 2440
  %436 = vst.msk [vmem:[%s435] ss:$16 sm:$0xc0] %vm428, %v427
  %s437 = scalar_lea.vmem %s0, 320
  %v438 = vld [vmem:[%s437] sm:$0xff]
  %vm439 = vcmask 130048
  %s440 = scalar_lea.vmem %s1, 2560
  %441 = vst.msk [vmem:[%s440] ss:$16 sm:$0x3] %vm439, %v438
  %s442 = scalar_lea.vmem %s1, 2560
  %443 = vst.msk [vmem:[%s442] ss:$16 sm:$0xc] %vm439, %v438
  %s444 = scalar_lea.vmem %s1, 2560
  %445 = vst.msk [vmem:[%s444] ss:$16 sm:$0x30] %vm439, %v438
  %s446 = scalar_lea.vmem %s1, 2560
  %447 = vst.msk [vmem:[%s446] ss:$16 sm:$0xc0] %vm439, %v438
  %s448 = scalar_lea.vmem %s0, 328
  %v449 = vld [vmem:[%s448] sm:$0xff]
  %vm450 = vcmask 130048
  %s451 = scalar_lea.vmem %s1, 2568
  %452 = vst.msk [vmem:[%s451] ss:$16 sm:$0x3] %vm450, %v449
  %s453 = scalar_lea.vmem %s1, 2568
  %454 = vst.msk [vmem:[%s453] ss:$16 sm:$0xc] %vm450, %v449
  %s455 = scalar_lea.vmem %s1, 2568
  %456 = vst.msk [vmem:[%s455] ss:$16 sm:$0x30] %vm450, %v449
  %s457 = scalar_lea.vmem %s1, 2568
  %458 = vst.msk [vmem:[%s457] ss:$16 sm:$0xc0] %vm450, %v449
  %s459 = scalar_lea.vmem %s0, 336
  %v460 = vld [vmem:[%s459] sm:$0xff]
  %vm461 = vcmask 130048
  %s462 = scalar_lea.vmem %s1, 2688
  %463 = vst.msk [vmem:[%s462] ss:$16 sm:$0x3] %vm461, %v460
  %s464 = scalar_lea.vmem %s1, 2688
  %465 = vst.msk [vmem:[%s464] ss:$16 sm:$0xc] %vm461, %v460
  %s466 = scalar_lea.vmem %s1, 2688
  %467 = vst.msk [vmem:[%s466] ss:$16 sm:$0x30] %vm461, %v460
  %s468 = scalar_lea.vmem %s1, 2688
  %469 = vst.msk [vmem:[%s468] ss:$16 sm:$0xc0] %vm461, %v460
  %s470 = scalar_lea.vmem %s0, 344
  %v471 = vld [vmem:[%s470] sm:$0xff]
  %vm472 = vcmask 130048
  %s473 = scalar_lea.vmem %s1, 2696
  %474 = vst.msk [vmem:[%s473] ss:$16 sm:$0x3] %vm472, %v471
  %s475 = scalar_lea.vmem %s1, 2696
  %476 = vst.msk [vmem:[%s475] ss:$16 sm:$0xc] %vm472, %v471
  %s477 = scalar_lea.vmem %s1, 2696
  %478 = vst.msk [vmem:[%s477] ss:$16 sm:$0x30] %vm472, %v471
  %s479 = scalar_lea.vmem %s1, 2696
  %480 = vst.msk [vmem:[%s479] ss:$16 sm:$0xc0] %vm472, %v471
  %s481 = scalar_lea.vmem %s0, 352
  %v482 = vld [vmem:[%s481] sm:$0xff]
  %vm483 = vcmask 130048
  %s484 = scalar_lea.vmem %s1, 2816
  %485 = vst.msk [vmem:[%s484] ss:$16 sm:$0x3] %vm483, %v482
  %s486 = scalar_lea.vmem %s1, 2816
  %487 = vst.msk [vmem:[%s486] ss:$16 sm:$0xc] %vm483, %v482
  %s488 = scalar_lea.vmem %s1, 2816
  %489 = vst.msk [vmem:[%s488] ss:$16 sm:$0x30] %vm483, %v482
  %s490 = scalar_lea.vmem %s1, 2816
  %491 = vst.msk [vmem:[%s490] ss:$16 sm:$0xc0] %vm483, %v482
  %s492 = scalar_lea.vmem %s0, 360
  %v493 = vld [vmem:[%s492] sm:$0xff]
  %vm494 = vcmask 130048
  %s495 = scalar_lea.vmem %s1, 2824
  %496 = vst.msk [vmem:[%s495] ss:$16 sm:$0x3] %vm494, %v493
  %s497 = scalar_lea.vmem %s1, 2824
  %498 = vst.msk [vmem:[%s497] ss:$16 sm:$0xc] %vm494, %v493
  %s499 = scalar_lea.vmem %s1, 2824
  %500 = vst.msk [vmem:[%s499] ss:$16 sm:$0x30] %vm494, %v493
  %s501 = scalar_lea.vmem %s1, 2824
  %502 = vst.msk [vmem:[%s501] ss:$16 sm:$0xc0] %vm494, %v493
  %s503 = scalar_lea.vmem %s0, 368
  %v504 = vld [vmem:[%s503] sm:$0xff]
  %vm505 = vcmask 130048
  %s506 = scalar_lea.vmem %s1, 2944
  %507 = vst.msk [vmem:[%s506] ss:$16 sm:$0x3] %vm505, %v504
  %s508 = scalar_lea.vmem %s1, 2944
  %509 = vst.msk [vmem:[%s508] ss:$16 sm:$0xc] %vm505, %v504
  %s510 = scalar_lea.vmem %s1, 2944
  %511 = vst.msk [vmem:[%s510] ss:$16 sm:$0x30] %vm505, %v504
  %s512 = scalar_lea.vmem %s1, 2944
  %513 = vst.msk [vmem:[%s512] ss:$16 sm:$0xc0] %vm505, %v504
  %s514 = scalar_lea.vmem %s0, 376
  %v515 = vld [vmem:[%s514] sm:$0xff]
  %vm516 = vcmask 130048
  %s517 = scalar_lea.vmem %s1, 2952
  %518 = vst.msk [vmem:[%s517] ss:$16 sm:$0x3] %vm516, %v515
  %s519 = scalar_lea.vmem %s1, 2952
  %520 = vst.msk [vmem:[%s519] ss:$16 sm:$0xc] %vm516, %v515
  %s521 = scalar_lea.vmem %s1, 2952
  %522 = vst.msk [vmem:[%s521] ss:$16 sm:$0x30] %vm516, %v515
  %s523 = scalar_lea.vmem %s1, 2952
  %524 = vst.msk [vmem:[%s523] ss:$16 sm:$0xc0] %vm516, %v515
  %s525 = scalar_lea.vmem %s0, 384
  %v526 = vld [vmem:[%s525] sm:$0xff]
  %vm527 = vcmask 130048
  %s528 = scalar_lea.vmem %s1, 3072
  %529 = vst.msk [vmem:[%s528] ss:$16 sm:$0x3] %vm527, %v526
  %s530 = scalar_lea.vmem %s1, 3072
  %531 = vst.msk [vmem:[%s530] ss:$16 sm:$0xc] %vm527, %v526
  %s532 = scalar_lea.vmem %s1, 3072
  %533 = vst.msk [vmem:[%s532] ss:$16 sm:$0x30] %vm527, %v526
  %s534 = scalar_lea.vmem %s1, 3072
  %535 = vst.msk [vmem:[%s534] ss:$16 sm:$0xc0] %vm527, %v526
  %s536 = scalar_lea.vmem %s0, 392
  %v537 = vld [vmem:[%s536] sm:$0xff]
  %vm538 = vcmask 130048
  %s539 = scalar_lea.vmem %s1, 3080
  %540 = vst.msk [vmem:[%s539] ss:$16 sm:$0x3] %vm538, %v537
  %s541 = scalar_lea.vmem %s1, 3080
  %542 = vst.msk [vmem:[%s541] ss:$16 sm:$0xc] %vm538, %v537
  %s543 = scalar_lea.vmem %s1, 3080
  %544 = vst.msk [vmem:[%s543] ss:$16 sm:$0x30] %vm538, %v537
  %s545 = scalar_lea.vmem %s1, 3080
  %546 = vst.msk [vmem:[%s545] ss:$16 sm:$0xc0] %vm538, %v537
  %s547 = scalar_lea.vmem %s0, 400
  %v548 = vld [vmem:[%s547] sm:$0xff]
  %vm549 = vcmask 130048
  %s550 = scalar_lea.vmem %s1, 3200
  %551 = vst.msk [vmem:[%s550] ss:$16 sm:$0x3] %vm549, %v548
  %s552 = scalar_lea.vmem %s1, 3200
  %553 = vst.msk [vmem:[%s552] ss:$16 sm:$0xc] %vm549, %v548
  %s554 = scalar_lea.vmem %s1, 3200
  %555 = vst.msk [vmem:[%s554] ss:$16 sm:$0x30] %vm549, %v548
  %s556 = scalar_lea.vmem %s1, 3200
  %557 = vst.msk [vmem:[%s556] ss:$16 sm:$0xc0] %vm549, %v548
  %s558 = scalar_lea.vmem %s0, 408
  %v559 = vld [vmem:[%s558] sm:$0xff]
  %vm560 = vcmask 130048
  %s561 = scalar_lea.vmem %s1, 3208
  %562 = vst.msk [vmem:[%s561] ss:$16 sm:$0x3] %vm560, %v559
  %s563 = scalar_lea.vmem %s1, 3208
  %564 = vst.msk [vmem:[%s563] ss:$16 sm:$0xc] %vm560, %v559
  %s565 = scalar_lea.vmem %s1, 3208
  %566 = vst.msk [vmem:[%s565] ss:$16 sm:$0x30] %vm560, %v559
  %s567 = scalar_lea.vmem %s1, 3208
  %568 = vst.msk [vmem:[%s567] ss:$16 sm:$0xc0] %vm560, %v559
  %s569 = scalar_lea.vmem %s0, 416
  %v570 = vld [vmem:[%s569] sm:$0xff]
  %vm571 = vcmask 130048
  %s572 = scalar_lea.vmem %s1, 3328
  %573 = vst.msk [vmem:[%s572] ss:$16 sm:$0x3] %vm571, %v570
  %s574 = scalar_lea.vmem %s1, 3328
  %575 = vst.msk [vmem:[%s574] ss:$16 sm:$0xc] %vm571, %v570
  %s576 = scalar_lea.vmem %s1, 3328
  %577 = vst.msk [vmem:[%s576] ss:$16 sm:$0x30] %vm571, %v570
  %s578 = scalar_lea.vmem %s1, 3328
  %579 = vst.msk [vmem:[%s578] ss:$16 sm:$0xc0] %vm571, %v570
  %s580 = scalar_lea.vmem %s0, 424
  %v581 = vld [vmem:[%s580] sm:$0xff]
  %vm582 = vcmask 130048
  %s583 = scalar_lea.vmem %s1, 3336
  %584 = vst.msk [vmem:[%s583] ss:$16 sm:$0x3] %vm582, %v581
  %s585 = scalar_lea.vmem %s1, 3336
  %586 = vst.msk [vmem:[%s585] ss:$16 sm:$0xc] %vm582, %v581
  %s587 = scalar_lea.vmem %s1, 3336
  %588 = vst.msk [vmem:[%s587] ss:$16 sm:$0x30] %vm582, %v581
  %s589 = scalar_lea.vmem %s1, 3336
  %590 = vst.msk [vmem:[%s589] ss:$16 sm:$0xc0] %vm582, %v581
  %s591 = scalar_lea.vmem %s0, 432
  %v592 = vld [vmem:[%s591] sm:$0xff]
  %vm593 = vcmask 130048
  %s594 = scalar_lea.vmem %s1, 3456
  %595 = vst.msk [vmem:[%s594] ss:$16 sm:$0x3] %vm593, %v592
  %s596 = scalar_lea.vmem %s1, 3456
  %597 = vst.msk [vmem:[%s596] ss:$16 sm:$0xc] %vm593, %v592
  %s598 = scalar_lea.vmem %s1, 3456
  %599 = vst.msk [vmem:[%s598] ss:$16 sm:$0x30] %vm593, %v592
  %s600 = scalar_lea.vmem %s1, 3456
  %601 = vst.msk [vmem:[%s600] ss:$16 sm:$0xc0] %vm593, %v592
  %s602 = scalar_lea.vmem %s0, 440
  %v603 = vld [vmem:[%s602] sm:$0xff]
  %vm604 = vcmask 130048
  %s605 = scalar_lea.vmem %s1, 3464
  %606 = vst.msk [vmem:[%s605] ss:$16 sm:$0x3] %vm604, %v603
  %s607 = scalar_lea.vmem %s1, 3464
  %608 = vst.msk [vmem:[%s607] ss:$16 sm:$0xc] %vm604, %v603
  %s609 = scalar_lea.vmem %s1, 3464
  %610 = vst.msk [vmem:[%s609] ss:$16 sm:$0x30] %vm604, %v603
  %s611 = scalar_lea.vmem %s1, 3464
  %612 = vst.msk [vmem:[%s611] ss:$16 sm:$0xc0] %vm604, %v603
  %s613 = scalar_lea.vmem %s0, 448
  %v614 = vld [vmem:[%s613] sm:$0xff]
  %vm615 = vcmask 130048
  %s616 = scalar_lea.vmem %s1, 3584
  %617 = vst.msk [vmem:[%s616] ss:$16 sm:$0x3] %vm615, %v614
  %s618 = scalar_lea.vmem %s1, 3584
  %619 = vst.msk [vmem:[%s618] ss:$16 sm:$0xc] %vm615, %v614
  %s620 = scalar_lea.vmem %s1, 3584
  %621 = vst.msk [vmem:[%s620] ss:$16 sm:$0x30] %vm615, %v614
  %s622 = scalar_lea.vmem %s1, 3584
  %623 = vst.msk [vmem:[%s622] ss:$16 sm:$0xc0] %vm615, %v614
  %s624 = scalar_lea.vmem %s0, 456
  %v625 = vld [vmem:[%s624] sm:$0xff]
  %vm626 = vcmask 130048
  %s627 = scalar_lea.vmem %s1, 3592
  %628 = vst.msk [vmem:[%s627] ss:$16 sm:$0x3] %vm626, %v625
  %s629 = scalar_lea.vmem %s1, 3592
  %630 = vst.msk [vmem:[%s629] ss:$16 sm:$0xc] %vm626, %v625
  %s631 = scalar_lea.vmem %s1, 3592
  %632 = vst.msk [vmem:[%s631] ss:$16 sm:$0x30] %vm626, %v625
  %s633 = scalar_lea.vmem %s1, 3592
  %634 = vst.msk [vmem:[%s633] ss:$16 sm:$0xc0] %vm626, %v625
  %s635 = scalar_lea.vmem %s0, 464
  %v636 = vld [vmem:[%s635] sm:$0xff]
  %vm637 = vcmask 130048
  %s638 = scalar_lea.vmem %s1, 3712
  %639 = vst.msk [vmem:[%s638] ss:$16 sm:$0x3] %vm637, %v636
  %s640 = scalar_lea.vmem %s1, 3712
  %641 = vst.msk [vmem:[%s640] ss:$16 sm:$0xc] %vm637, %v636
  %s642 = scalar_lea.vmem %s1, 3712
  %643 = vst.msk [vmem:[%s642] ss:$16 sm:$0x30] %vm637, %v636
  %s644 = scalar_lea.vmem %s1, 3712
  %645 = vst.msk [vmem:[%s644] ss:$16 sm:$0xc0] %vm637, %v636
  %s646 = scalar_lea.vmem %s0, 472
  %v647 = vld [vmem:[%s646] sm:$0xff]
  %vm648 = vcmask 130048
  %s649 = scalar_lea.vmem %s1, 3720
  %650 = vst.msk [vmem:[%s649] ss:$16 sm:$0x3] %vm648, %v647
  %s651 = scalar_lea.vmem %s1, 3720
  %652 = vst.msk [vmem:[%s651] ss:$16 sm:$0xc] %vm648, %v647
  %s653 = scalar_lea.vmem %s1, 3720
  %654 = vst.msk [vmem:[%s653] ss:$16 sm:$0x30] %vm648, %v647
  %s655 = scalar_lea.vmem %s1, 3720
  %656 = vst.msk [vmem:[%s655] ss:$16 sm:$0xc0] %vm648, %v647
  %s657 = scalar_lea.vmem %s0, 480
  %v658 = vld [vmem:[%s657] sm:$0xff]
  %vm659 = vcmask 130048
  %s660 = scalar_lea.vmem %s1, 3840
  %661 = vst.msk [vmem:[%s660] ss:$16 sm:$0x3] %vm659, %v658
  %s662 = scalar_lea.vmem %s1, 3840
  %663 = vst.msk [vmem:[%s662] ss:$16 sm:$0xc] %vm659, %v658
  %s664 = scalar_lea.vmem %s1, 3840
  %665 = vst.msk [vmem:[%s664] ss:$16 sm:$0x30] %vm659, %v658
  %s666 = scalar_lea.vmem %s1, 3840
  %667 = vst.msk [vmem:[%s666] ss:$16 sm:$0xc0] %vm659, %v658
  %s668 = scalar_lea.vmem %s0, 488
  %v669 = vld [vmem:[%s668] sm:$0xff]
  %vm670 = vcmask 130048
  %s671 = scalar_lea.vmem %s1, 3848
  %672 = vst.msk [vmem:[%s671] ss:$16 sm:$0x3] %vm670, %v669
  %s673 = scalar_lea.vmem %s1, 3848
  %674 = vst.msk [vmem:[%s673] ss:$16 sm:$0xc] %vm670, %v669
  %s675 = scalar_lea.vmem %s1, 3848
  %676 = vst.msk [vmem:[%s675] ss:$16 sm:$0x30] %vm670, %v669
  %s677 = scalar_lea.vmem %s1, 3848
  %678 = vst.msk [vmem:[%s677] ss:$16 sm:$0xc0] %vm670, %v669
  %s679 = scalar_lea.vmem %s0, 496
  %v680 = vld [vmem:[%s679] sm:$0xff]
  %vm681 = vcmask 130048
  %s682 = scalar_lea.vmem %s1, 3968
  %683 = vst.msk [vmem:[%s682] ss:$16 sm:$0x3] %vm681, %v680
  %s684 = scalar_lea.vmem %s1, 3968
  %685 = vst.msk [vmem:[%s684] ss:$16 sm:$0xc] %vm681, %v680
  %s686 = scalar_lea.vmem %s1, 3968
  %687 = vst.msk [vmem:[%s686] ss:$16 sm:$0x30] %vm681, %v680
  %s688 = scalar_lea.vmem %s1, 3968
  %689 = vst.msk [vmem:[%s688] ss:$16 sm:$0xc0] %vm681, %v680
  %s690 = scalar_lea.vmem %s0, 504
  %v691 = vld [vmem:[%s690] sm:$0xff]
  %vm692 = vcmask 130048
  %s693 = scalar_lea.vmem %s1, 3976
  %694 = vst.msk [vmem:[%s693] ss:$16 sm:$0x3] %vm692, %v691
  %s695 = scalar_lea.vmem %s1, 3976
  %696 = vst.msk [vmem:[%s695] ss:$16 sm:$0xc] %vm692, %v691
  %s697 = scalar_lea.vmem %s1, 3976
  %698 = vst.msk [vmem:[%s697] ss:$16 sm:$0x30] %vm692, %v691
  %s699 = scalar_lea.vmem %s1, 3976
  %700 = vst.msk [vmem:[%s699] ss:$16 sm:$0xc0] %vm692, %v691
  %v701 = vld.sshfl [vmem:[%s0] sm:$0xff pattern:$0xb3a29180]
  %702 = vrot.lane.b32.xlu0 %v701, 112
  %v703 = vpop.permute.xlu0 %702
  %vm704 = vcmask 130048
  %s705 = scalar_lea.vmem %s1, 1
  %706 = vst.msk [vmem:[%s705] ss:$8 sm:$0xf] %vm704, %v703
  %s707 = scalar_lea.vmem %s1, 1
  %708 = vst.msk [vmem:[%s707] ss:$8 sm:$0xf0] %vm704, %v703
  %s709 = scalar_lea.vmem %s0, 4
  %v710 = vld.sshfl [vmem:[%s709] sm:$0xff pattern:$0xb3a29180]
  %711 = vrot.lane.b32.xlu0 %v710, 112
  %v712 = vpop.permute.xlu0 %711
  %vm713 = vcmask 130048
  %s714 = scalar_lea.vmem %s1, 65
  %715 = vst.msk [vmem:[%s714] ss:$8 sm:$0xf] %vm713, %v712
  %s716 = scalar_lea.vmem %s1, 65
  %717 = vst.msk [vmem:[%s716] ss:$8 sm:$0xf0] %vm713, %v712
  %s718 = scalar_lea.vmem %s0, 16
  %v719 = vld.sshfl [vmem:[%s718] sm:$0xff pattern:$0xb3a29180]
  %720 = vrot.lane.b32.xlu0 %v719, 112
  %v721 = vpop.permute.xlu0 %720
  %vm722 = vcmask 130048
  %s723 = scalar_lea.vmem %s1, 129
  %724 = vst.msk [vmem:[%s723] ss:$8 sm:$0xf] %vm722, %v721
  %s725 = scalar_lea.vmem %s1, 129
  %726 = vst.msk [vmem:[%s725] ss:$8 sm:$0xf0] %vm722, %v721
  %s727 = scalar_lea.vmem %s0, 20
  %v728 = vld.sshfl [vmem:[%s727] sm:$0xff pattern:$0xb3a29180]
  %729 = vrot.lane.b32.xlu0 %v728, 112
  %v730 = vpop.permute.xlu0 %729
  %vm731 = vcmask 130048
  %s732 = scalar_lea.vmem %s1, 193
  %733 = vst.msk [vmem:[%s732] ss:$8 sm:$0xf] %vm731, %v730
  %s734 = scalar_lea.vmem %s1, 193
  %735 = vst.msk [vmem:[%s734] ss:$8 sm:$0xf0] %vm731, %v730
  %s736 = scalar_lea.vmem %s0, 32
  %v737 = vld.sshfl [vmem:[%s736] sm:$0xff pattern:$0xb3a29180]
  %738 = vrot.lane.b32.xlu0 %v737, 112
  %v739 = vpop.permute.xlu0 %738
  %vm740 = vcmask 130048
  %s741 = scalar_lea.vmem %s1, 257
  %742 = vst.msk [vmem:[%s741] ss:$8 sm:$0xf] %vm740, %v739
  %s743 = scalar_lea.vmem %s1, 257
  %744 = vst.msk [vmem:[%s743] ss:$8 sm:$0xf0] %vm740, %v739
  %s745 = scalar_lea.vmem %s0, 36
  %v746 = vld.sshfl [vmem:[%s745] sm:$0xff pattern:$0xb3a29180]
  %747 = vrot.lane.b32.xlu0 %v746, 112
  %v748 = vpop.permute.xlu0 %747
  %vm749 = vcmask 130048
  %s750 = scalar_lea.vmem %s1, 321
  %751 = vst.msk [vmem:[%s750] ss:$8 sm:$0xf] %vm749, %v748
  %s752 = scalar_lea.vmem %s1, 321
  %753 = vst.msk [vmem:[%s752] ss:$8 sm:$0xf0] %vm749, %v748
  %s754 = scalar_lea.vmem %s0, 48
  %v755 = vld.sshfl [vmem:[%s754] sm:$0xff pattern:$0xb3a29180]
  %756 = vrot.lane.b32.xlu0 %v755, 112
  %v757 = vpop.permute.xlu0 %756
  %vm758 = vcmask 130048
  %s759 = scalar_lea.vmem %s1, 385
  %760 = vst.msk [vmem:[%s759] ss:$8 sm:$0xf] %vm758, %v757
  %s761 = scalar_lea.vmem %s1, 385
  %762 = vst.msk [vmem:[%s761] ss:$8 sm:$0xf0] %vm758, %v757
  %s763 = scalar_lea.vmem %s0, 52
  %v764 = vld.sshfl [vmem:[%s763] sm:$0xff pattern:$0xb3a29180]
  %765 = vrot.lane.b32.xlu0 %v764, 112
  %v766 = vpop.permute.xlu0 %765
  %vm767 = vcmask 130048
  %s768 = scalar_lea.vmem %s1, 449
  %769 = vst.msk [vmem:[%s768] ss:$8 sm:$0xf] %vm767, %v766
  %s770 = scalar_lea.vmem %s1, 449
  %771 = vst.msk [vmem:[%s770] ss:$8 sm:$0xf0] %vm767, %v766
  %s772 = scalar_lea.vmem %s0, 64
  %v773 = vld.sshfl [vmem:[%s772] sm:$0xff pattern:$0xb3a29180]
  %774 = vrot.lane.b32.xlu0 %v773, 112
  %v775 = vpop.permute.xlu0 %774
  %vm776 = vcmask 130048
  %s777 = scalar_lea.vmem %s1, 513
  %778 = vst.msk [vmem:[%s777] ss:$8 sm:$0xf] %vm776, %v775
  %s779 = scalar_lea.vmem %s1, 513
  %780 = vst.msk [vmem:[%s779] ss:$8 sm:$0xf0] %vm776, %v775
  %s781 = scalar_lea.vmem %s0, 68
  %v782 = vld.sshfl [vmem:[%s781] sm:$0xff pattern:$0xb3a29180]
  %783 = vrot.lane.b32.xlu0 %v782, 112
  %v784 = vpop.permute.xlu0 %783
  %vm785 = vcmask 130048
  %s786 = scalar_lea.vmem %s1, 577
  %787 = vst.msk [vmem:[%s786] ss:$8 sm:$0xf] %vm785, %v784
  %s788 = scalar_lea.vmem %s1, 577
  %789 = vst.msk [vmem:[%s788] ss:$8 sm:$0xf0] %vm785, %v784
  %s790 = scalar_lea.vmem %s0, 80
  %v791 = vld.sshfl [vmem:[%s790] sm:$0xff pattern:$0xb3a29180]
  %792 = vrot.lane.b32.xlu0 %v791, 112
  %v793 = vpop.permute.xlu0 %792
  %vm794 = vcmask 130048
  %s795 = scalar_lea.vmem %s1, 641
  %796 = vst.msk [vmem:[%s795] ss:$8 sm:$0xf] %vm794, %v793
  %s797 = scalar_lea.vmem %s1, 641
  %798 = vst.msk [vmem:[%s797] ss:$8 sm:$0xf0] %vm794, %v793
  %s799 = scalar_lea.vmem %s0, 84
  %v800 = vld.sshfl [vmem:[%s799] sm:$0xff pattern:$0xb3a29180]
  %801 = vrot.lane.b32.xlu0 %v800, 112
  %v802 = vpop.permute.xlu0 %801
  %vm803 = vcmask 130048
  %s804 = scalar_lea.vmem %s1, 705
  %805 = vst.msk [vmem:[%s804] ss:$8 sm:$0xf] %vm803, %v802
  %s806 = scalar_lea.vmem %s1, 705
  %807 = vst.msk [vmem:[%s806] ss:$8 sm:$0xf0] %vm803, %v802
  %s808 = scalar_lea.vmem %s0, 96
  %v809 = vld.sshfl [vmem:[%s808] sm:$0xff pattern:$0xb3a29180]
  %810 = vrot.lane.b32.xlu0 %v809, 112
  %v811 = vpop.permute.xlu0 %810
  %vm812 = vcmask 130048
  %s813 = scalar_lea.vmem %s1, 769
  %814 = vst.msk [vmem:[%s813] ss:$8 sm:$0xf] %vm812, %v811
  %s815 = scalar_lea.vmem %s1, 769
  %816 = vst.msk [vmem:[%s815] ss:$8 sm:$0xf0] %vm812, %v811
  %s817 = scalar_lea.vmem %s0, 100
  %v818 = vld.sshfl [vmem:[%s817] sm:$0xff pattern:$0xb3a29180]
  %819 = vrot.lane.b32.xlu0 %v818, 112
  %v820 = vpop.permute.xlu0 %819
  %vm821 = vcmask 130048
  %s822 = scalar_lea.vmem %s1, 833
  %823 = vst.msk [vmem:[%s822] ss:$8 sm:$0xf] %vm821, %v820
  %s824 = scalar_lea.vmem %s1, 833
  %825 = vst.msk [vmem:[%s824] ss:$8 sm:$0xf0] %vm821, %v820
  %s826 = scalar_lea.vmem %s0, 112
  %v827 = vld.sshfl [vmem:[%s826] sm:$0xff pattern:$0xb3a29180]
  %828 = vrot.lane.b32.xlu0 %v827, 112
  %v829 = vpop.permute.xlu0 %828
  %vm830 = vcmask 130048
  %s831 = scalar_lea.vmem %s1, 897
  %832 = vst.msk [vmem:[%s831] ss:$8 sm:$0xf] %vm830, %v829
  %s833 = scalar_lea.vmem %s1, 897
  %834 = vst.msk [vmem:[%s833] ss:$8 sm:$0xf0] %vm830, %v829
  %s835 = scalar_lea.vmem %s0, 116
  %v836 = vld.sshfl [vmem:[%s835] sm:$0xff pattern:$0xb3a29180]
  %837 = vrot.lane.b32.xlu0 %v836, 112
  %v838 = vpop.permute.xlu0 %837
  %vm839 = vcmask 130048
  %s840 = scalar_lea.vmem %s1, 961
  %841 = vst.msk [vmem:[%s840] ss:$8 sm:$0xf] %vm839, %v838
  %s842 = scalar_lea.vmem %s1, 961
  %843 = vst.msk [vmem:[%s842] ss:$8 sm:$0xf0] %vm839, %v838
  %s844 = scalar_lea.vmem %s0, 128
  %v845 = vld.sshfl [vmem:[%s844] sm:$0xff pattern:$0xb3a29180]
  %846 = vrot.lane.b32.xlu0 %v845, 112
  %v847 = vpop.permute.xlu0 %846
  %vm848 = vcmask 130048
  %s849 = scalar_lea.vmem %s1, 1025
  %850 = vst.msk [vmem:[%s849] ss:$8 sm:$0xf] %vm848, %v847
  %s851 = scalar_lea.vmem %s1, 1025
  %852 = vst.msk [vmem:[%s851] ss:$8 sm:$0xf0] %vm848, %v847
  %s853 = scalar_lea.vmem %s0, 132
  %v854 = vld.sshfl [vmem:[%s853] sm:$0xff pattern:$0xb3a29180]
  %855 = vrot.lane.b32.xlu0 %v854, 112
  %v856 = vpop.permute.xlu0 %855
  %vm857 = vcmask 130048
  %s858 = scalar_lea.vmem %s1, 1089
  %859 = vst.msk [vmem:[%s858] ss:$8 sm:$0xf] %vm857, %v856
  %s860 = scalar_lea.vmem %s1, 1089
  %861 = vst.msk [vmem:[%s860] ss:$8 sm:$0xf0] %vm857, %v856
  %s862 = scalar_lea.vmem %s0, 144
  %v863 = vld.sshfl [vmem:[%s862] sm:$0xff pattern:$0xb3a29180]
  %864 = vrot.lane.b32.xlu0 %v863, 112
  %v865 = vpop.permute.xlu0 %864
  %vm866 = vcmask 130048
  %s867 = scalar_lea.vmem %s1, 1153
  %868 = vst.msk [vmem:[%s867] ss:$8 sm:$0xf] %vm866, %v865
  %s869 = scalar_lea.vmem %s1, 1153
  %870 = vst.msk [vmem:[%s869] ss:$8 sm:$0xf0] %vm866, %v865
  %s871 = scalar_lea.vmem %s0, 148
  %v872 = vld.sshfl [vmem:[%s871] sm:$0xff pattern:$0xb3a29180]
  %873 = vrot.lane.b32.xlu0 %v872, 112
  %v874 = vpop.permute.xlu0 %873
  %vm875 = vcmask 130048
  %s876 = scalar_lea.vmem %s1, 1217
  %877 = vst.msk [vmem:[%s876] ss:$8 sm:$0xf] %vm875, %v874
  %s878 = scalar_lea.vmem %s1, 1217
  %879 = vst.msk [vmem:[%s878] ss:$8 sm:$0xf0] %vm875, %v874
  %s880 = scalar_lea.vmem %s0, 160
  %v881 = vld.sshfl [vmem:[%s880] sm:$0xff pattern:$0xb3a29180]
  %882 = vrot.lane.b32.xlu0 %v881, 112
  %v883 = vpop.permute.xlu0 %882
  %vm884 = vcmask 130048
  %s885 = scalar_lea.vmem %s1, 1281
  %886 = vst.msk [vmem:[%s885] ss:$8 sm:$0xf] %vm884, %v883
  %s887 = scalar_lea.vmem %s1, 1281
  %888 = vst.msk [vmem:[%s887] ss:$8 sm:$0xf0] %vm884, %v883
  %s889 = scalar_lea.vmem %s0, 164
  %v890 = vld.sshfl [vmem:[%s889] sm:$0xff pattern:$0xb3a29180]
  %891 = vrot.lane.b32.xlu0 %v890, 112
  %v892 = vpop.permute.xlu0 %891
  %vm893 = vcmask 130048
  %s894 = scalar_lea.vmem %s1, 1345
  %895 = vst.msk [vmem:[%s894] ss:$8 sm:$0xf] %vm893, %v892
  %s896 = scalar_lea.vmem %s1, 1345
  %897 = vst.msk [vmem:[%s896] ss:$8 sm:$0xf0] %vm893, %v892
  %s898 = scalar_lea.vmem %s0, 176
  %v899 = vld.sshfl [vmem:[%s898] sm:$0xff pattern:$0xb3a29180]
  %900 = vrot.lane.b32.xlu0 %v899, 112
  %v901 = vpop.permute.xlu0 %900
  %vm902 = vcmask 130048
  %s903 = scalar_lea.vmem %s1, 1409
  %904 = vst.msk [vmem:[%s903] ss:$8 sm:$0xf] %vm902, %v901
  %s905 = scalar_lea.vmem %s1, 1409
  %906 = vst.msk [vmem:[%s905] ss:$8 sm:$0xf0] %vm902, %v901
  %s907 = scalar_lea.vmem %s0, 180
  %v908 = vld.sshfl [vmem:[%s907] sm:$0xff pattern:$0xb3a29180]
  %909 = vrot.lane.b32.xlu0 %v908, 112
  %v910 = vpop.permute.xlu0 %909
  %vm911 = vcmask 130048
  %s912 = scalar_lea.vmem %s1, 1473
  %913 = vst.msk [vmem:[%s912] ss:$8 sm:$0xf] %vm911, %v910
  %s914 = scalar_lea.vmem %s1, 1473
  %915 = vst.msk [vmem:[%s914] ss:$8 sm:$0xf0] %vm911, %v910
  %s916 = scalar_lea.vmem %s0, 192
  %v917 = vld.sshfl [vmem:[%s916] sm:$0xff pattern:$0xb3a29180]
  %918 = vrot.lane.b32.xlu0 %v917, 112
  %v919 = vpop.permute.xlu0 %918
  %vm920 = vcmask 130048
  %s921 = scalar_lea.vmem %s1, 1537
  %922 = vst.msk [vmem:[%s921] ss:$8 sm:$0xf] %vm920, %v919
  %s923 = scalar_lea.vmem %s1, 1537
  %924 = vst.msk [vmem:[%s923] ss:$8 sm:$0xf0] %vm920, %v919
  %s925 = scalar_lea.vmem %s0, 196
  %v926 = vld.sshfl [vmem:[%s925] sm:$0xff pattern:$0xb3a29180]
  %927 = vrot.lane.b32.xlu0 %v926, 112
  %v928 = vpop.permute.xlu0 %927
  %vm929 = vcmask 130048
  %s930 = scalar_lea.vmem %s1, 1601
  %931 = vst.msk [vmem:[%s930] ss:$8 sm:$0xf] %vm929, %v928
  %s932 = scalar_lea.vmem %s1, 1601
  %933 = vst.msk [vmem:[%s932] ss:$8 sm:$0xf0] %vm929, %v928
  %s934 = scalar_lea.vmem %s0, 208
  %v935 = vld.sshfl [vmem:[%s934] sm:$0xff pattern:$0xb3a29180]
  %936 = vrot.lane.b32.xlu0 %v935, 112
  %v937 = vpop.permute.xlu0 %936
  %vm938 = vcmask 130048
  %s939 = scalar_lea.vmem %s1, 1665
  %940 = vst.msk [vmem:[%s939] ss:$8 sm:$0xf] %vm938, %v937
  %s941 = scalar_lea.vmem %s1, 1665
  %942 = vst.msk [vmem:[%s941] ss:$8 sm:$0xf0] %vm938, %v937
  %s943 = scalar_lea.vmem %s0, 212
  %v944 = vld.sshfl [vmem:[%s943] sm:$0xff pattern:$0xb3a29180]
  %945 = vrot.lane.b32.xlu0 %v944, 112
  %v946 = vpop.permute.xlu0 %945
  %vm947 = vcmask 130048
  %s948 = scalar_lea.vmem %s1, 1729
  %949 = vst.msk [vmem:[%s948] ss:$8 sm:$0xf] %vm947, %v946
  %s950 = scalar_lea.vmem %s1, 1729
  %951 = vst.msk [vmem:[%s950] ss:$8 sm:$0xf0] %vm947, %v946
  %s952 = scalar_lea.vmem %s0, 224
  %v953 = vld.sshfl [vmem:[%s952] sm:$0xff pattern:$0xb3a29180]
  %954 = vrot.lane.b32.xlu0 %v953, 112
  %v955 = vpop.permute.xlu0 %954
  %vm956 = vcmask 130048
  %s957 = scalar_lea.vmem %s1, 1793
  %958 = vst.msk [vmem:[%s957] ss:$8 sm:$0xf] %vm956, %v955
  %s959 = scalar_lea.vmem %s1, 1793
  %960 = vst.msk [vmem:[%s959] ss:$8 sm:$0xf0] %vm956, %v955
  %s961 = scalar_lea.vmem %s0, 228
  %v962 = vld.sshfl [vmem:[%s961] sm:$0xff pattern:$0xb3a29180]
  %963 = vrot.lane.b32.xlu0 %v962, 112
  %v964 = vpop.permute.xlu0 %963
  %vm965 = vcmask 130048
  %s966 = scalar_lea.vmem %s1, 1857
  %967 = vst.msk [vmem:[%s966] ss:$8 sm:$0xf] %vm965, %v964
  %s968 = scalar_lea.vmem %s1, 1857
  %969 = vst.msk [vmem:[%s968] ss:$8 sm:$0xf0] %vm965, %v964
  %s970 = scalar_lea.vmem %s0, 240
  %v971 = vld.sshfl [vmem:[%s970] sm:$0xff pattern:$0xb3a29180]
  %972 = vrot.lane.b32.xlu0 %v971, 112
  %v973 = vpop.permute.xlu0 %972
  %vm974 = vcmask 130048
  %s975 = scalar_lea.vmem %s1, 1921
  %976 = vst.msk [vmem:[%s975] ss:$8 sm:$0xf] %vm974, %v973
  %s977 = scalar_lea.vmem %s1, 1921
  %978 = vst.msk [vmem:[%s977] ss:$8 sm:$0xf0] %vm974, %v973
  %s979 = scalar_lea.vmem %s0, 244
  %v980 = vld.sshfl [vmem:[%s979] sm:$0xff pattern:$0xb3a29180]
  %981 = vrot.lane.b32.xlu0 %v980, 112
  %v982 = vpop.permute.xlu0 %981
  %vm983 = vcmask 130048
  %s984 = scalar_lea.vmem %s1, 1985
  %985 = vst.msk [vmem:[%s984] ss:$8 sm:$0xf] %vm983, %v982
  %s986 = scalar_lea.vmem %s1, 1985
  %987 = vst.msk [vmem:[%s986] ss:$8 sm:$0xf0] %vm983, %v982
  %s988 = scalar_lea.vmem %s0, 256
  %v989 = vld.sshfl [vmem:[%s988] sm:$0xff pattern:$0xb3a29180]
  %990 = vrot.lane.b32.xlu0 %v989, 112
  %v991 = vpop.permute.xlu0 %990
  %vm992 = vcmask 130048
  %s993 = scalar_lea.vmem %s1, 2049
  %994 = vst.msk [vmem:[%s993] ss:$8 sm:$0xf] %vm992, %v991
  %s995 = scalar_lea.vmem %s1, 2049
  %996 = vst.msk [vmem:[%s995] ss:$8 sm:$0xf0] %vm992, %v991
  %s997 = scalar_lea.vmem %s0, 260
  %v998 = vld.sshfl [vmem:[%s997] sm:$0xff pattern:$0xb3a29180]
  %999 = vrot.lane.b32.xlu0 %v998, 112
  %v1000 = vpop.permute.xlu0 %999
  %vm1001 = vcmask 130048
  %s1002 = scalar_lea.vmem %s1, 2113
  %1003 = vst.msk [vmem:[%s1002] ss:$8 sm:$0xf] %vm1001, %v1000
  %s1004 = scalar_lea.vmem %s1, 2113
  %1005 = vst.msk [vmem:[%s1004] ss:$8 sm:$0xf0] %vm1001, %v1000
  %s1006 = scalar_lea.vmem %s0, 272
  %v1007 = vld.sshfl [vmem:[%s1006] sm:$0xff pattern:$0xb3a29180]
  %1008 = vrot.lane.b32.xlu0 %v1007, 112
  %v1009 = vpop.permute.xlu0 %1008
  %vm1010 = vcmask 130048
  %s1011 = scalar_lea.vmem %s1, 2177
  %1012 = vst.msk [vmem:[%s1011] ss:$8 sm:$0xf] %vm1010, %v1009
  %s1013 = scalar_lea.vmem %s1, 2177
  %1014 = vst.msk [vmem:[%s1013] ss:$8 sm:$0xf0] %vm1010, %v1009
  %s1015 = scalar_lea.vmem %s0, 276
  %v1016 = vld.sshfl [vmem:[%s1015] sm:$0xff pattern:$0xb3a29180]
  %1017 = vrot.lane.b32.xlu0 %v1016, 112
  %v1018 = vpop.permute.xlu0 %1017
  %vm1019 = vcmask 130048
  %s1020 = scalar_lea.vmem %s1, 2241
  %1021 = vst.msk [vmem:[%s1020] ss:$8 sm:$0xf] %vm1019, %v1018
  %s1022 = scalar_lea.vmem %s1, 2241
  %1023 = vst.msk [vmem:[%s1022] ss:$8 sm:$0xf0] %vm1019, %v1018
  %s1024 = scalar_lea.vmem %s0, 288
  %v1025 = vld.sshfl [vmem:[%s1024] sm:$0xff pattern:$0xb3a29180]
  %1026 = vrot.lane.b32.xlu0 %v1025, 112
  %v1027 = vpop.permute.xlu0 %1026
  %vm1028 = vcmask 130048
  %s1029 = scalar_lea.vmem %s1, 2305
  %1030 = vst.msk [vmem:[%s1029] ss:$8 sm:$0xf] %vm1028, %v1027
  %s1031 = scalar_lea.vmem %s1, 2305
  %1032 = vst.msk [vmem:[%s1031] ss:$8 sm:$0xf0] %vm1028, %v1027
  %s1033 = scalar_lea.vmem %s0, 292
  %v1034 = vld.sshfl [vmem:[%s1033] sm:$0xff pattern:$0xb3a29180]
  %1035 = vrot.lane.b32.xlu0 %v1034, 112
  %v1036 = vpop.permute.xlu0 %1035
  %vm1037 = vcmask 130048
  %s1038 = scalar_lea.vmem %s1, 2369
  %1039 = vst.msk [vmem:[%s1038] ss:$8 sm:$0xf] %vm1037, %v1036
  %s1040 = scalar_lea.vmem %s1, 2369
  %1041 = vst.msk [vmem:[%s1040] ss:$8 sm:$0xf0] %vm1037, %v1036
  %s1042 = scalar_lea.vmem %s0, 304
  %v1043 = vld.sshfl [vmem:[%s1042] sm:$0xff pattern:$0xb3a29180]
  %1044 = vrot.lane.b32.xlu0 %v1043, 112
  %v1045 = vpop.permute.xlu0 %1044
  %vm1046 = vcmask 130048
  %s1047 = scalar_lea.vmem %s1, 2433
  %1048 = vst.msk [vmem:[%s1047] ss:$8 sm:$0xf] %vm1046, %v1045
  %s1049 = scalar_lea.vmem %s1, 2433
  %1050 = vst.msk [vmem:[%s1049] ss:$8 sm:$0xf0] %vm1046, %v1045
  %s1051 = scalar_lea.vmem %s0, 308
  %v1052 = vld.sshfl [vmem:[%s1051] sm:$0xff pattern:$0xb3a29180]
  %1053 = vrot.lane.b32.xlu0 %v1052, 112
  %v1054 = vpop.permute.xlu0 %1053
  %vm1055 = vcmask 130048
  %s1056 = scalar_lea.vmem %s1, 2497
  %1057 = vst.msk [vmem:[%s1056] ss:$8 sm:$0xf] %vm1055, %v1054
  %s1058 = scalar_lea.vmem %s1, 2497
  %1059 = vst.msk [vmem:[%s1058] ss:$8 sm:$0xf0] %vm1055, %v1054
  %s1060 = scalar_lea.vmem %s0, 320
  %v1061 = vld.sshfl [vmem:[%s1060] sm:$0xff pattern:$0xb3a29180]
  %1062 = vrot.lane.b32.xlu0 %v1061, 112
  %v1063 = vpop.permute.xlu0 %1062
  %vm1064 = vcmask 130048
  %s1065 = scalar_lea.vmem %s1, 2561
  %1066 = vst.msk [vmem:[%s1065] ss:$8 sm:$0xf] %vm1064, %v1063
  %s1067 = scalar_lea.vmem %s1, 2561
  %1068 = vst.msk [vmem:[%s1067] ss:$8 sm:$0xf0] %vm1064, %v1063
  %s1069 = scalar_lea.vmem %s0, 324
  %v1070 = vld.sshfl [vmem:[%s1069] sm:$0xff pattern:$0xb3a29180]
  %1071 = vrot.lane.b32.xlu0 %v1070, 112
  %v1072 = vpop.permute.xlu0 %1071
  %vm1073 = vcmask 130048
  %s1074 = scalar_lea.vmem %s1, 2625
  %1075 = vst.msk [vmem:[%s1074] ss:$8 sm:$0xf] %vm1073, %v1072
  %s1076 = scalar_lea.vmem %s1, 2625
  %1077 = vst.msk [vmem:[%s1076] ss:$8 sm:$0xf0] %vm1073, %v1072
  %s1078 = scalar_lea.vmem %s0, 336
  %v1079 = vld.sshfl [vmem:[%s1078] sm:$0xff pattern:$0xb3a29180]
  %1080 = vrot.lane.b32.xlu0 %v1079, 112
  %v1081 = vpop.permute.xlu0 %1080
  %vm1082 = vcmask 130048
  %s1083 = scalar_lea.vmem %s1, 2689
  %1084 = vst.msk [vmem:[%s1083] ss:$8 sm:$0xf] %vm1082, %v1081
  %s1085 = scalar_lea.vmem %s1, 2689
  %1086 = vst.msk [vmem:[%s1085] ss:$8 sm:$0xf0] %vm1082, %v1081
  %s1087 = scalar_lea.vmem %s0, 340
  %v1088 = vld.sshfl [vmem:[%s1087] sm:$0xff pattern:$0xb3a29180]
  %1089 = vrot.lane.b32.xlu0 %v1088, 112
  %v1090 = vpop.permute.xlu0 %1089
  %vm1091 = vcmask 130048
  %s1092 = scalar_lea.vmem %s1, 2753
  %1093 = vst.msk [vmem:[%s1092] ss:$8 sm:$0xf] %vm1091, %v1090
  %s1094 = scalar_lea.vmem %s1, 2753
  %1095 = vst.msk [vmem:[%s1094] ss:$8 sm:$0xf0] %vm1091, %v1090
  %s1096 = scalar_lea.vmem %s0, 352
  %v1097 = vld.sshfl [vmem:[%s1096] sm:$0xff pattern:$0xb3a29180]
  %1098 = vrot.lane.b32.xlu0 %v1097, 112
  %v1099 = vpop.permute.xlu0 %1098
  %vm1100 = vcmask 130048
  %s1101 = scalar_lea.vmem %s1, 2817
  %1102 = vst.msk [vmem:[%s1101] ss:$8 sm:$0xf] %vm1100, %v1099
  %s1103 = scalar_lea.vmem %s1, 2817
  %1104 = vst.msk [vmem:[%s1103] ss:$8 sm:$0xf0] %vm1100, %v1099
  %s1105 = scalar_lea.vmem %s0, 356
  %v1106 = vld.sshfl [vmem:[%s1105] sm:$0xff pattern:$0xb3a29180]
  %1107 = vrot.lane.b32.xlu0 %v1106, 112
  %v1108 = vpop.permute.xlu0 %1107
  %vm1109 = vcmask 130048
  %s1110 = scalar_lea.vmem %s1, 2881
  %1111 = vst.msk [vmem:[%s1110] ss:$8 sm:$0xf] %vm1109, %v1108
  %s1112 = scalar_lea.vmem %s1, 2881
  %1113 = vst.msk [vmem:[%s1112] ss:$8 sm:$0xf0] %vm1109, %v1108
  %s1114 = scalar_lea.vmem %s0, 368
  %v1115 = vld.sshfl [vmem:[%s1114] sm:$0xff pattern:$0xb3a29180]
  %1116 = vrot.lane.b32.xlu0 %v1115, 112
  %v1117 = vpop.permute.xlu0 %1116
  %vm1118 = vcmask 130048
  %s1119 = scalar_lea.vmem %s1, 2945
  %1120 = vst.msk [vmem:[%s1119] ss:$8 sm:$0xf] %vm1118, %v1117
  %s1121 = scalar_lea.vmem %s1, 2945
  %1122 = vst.msk [vmem:[%s1121] ss:$8 sm:$0xf0] %vm1118, %v1117
  %s1123 = scalar_lea.vmem %s0, 372
  %v1124 = vld.sshfl [vmem:[%s1123] sm:$0xff pattern:$0xb3a29180]
  %1125 = vrot.lane.b32.xlu0 %v1124, 112
  %v1126 = vpop.permute.xlu0 %1125
  %vm1127 = vcmask 130048
  %s1128 = scalar_lea.vmem %s1, 3009
  %1129 = vst.msk [vmem:[%s1128] ss:$8 sm:$0xf] %vm1127, %v1126
  %s1130 = scalar_lea.vmem %s1, 3009
  %1131 = vst.msk [vmem:[%s1130] ss:$8 sm:$0xf0] %vm1127, %v1126
  %s1132 = scalar_lea.vmem %s0, 384
  %v1133 = vld.sshfl [vmem:[%s1132] sm:$0xff pattern:$0xb3a29180]
  %1134 = vrot.lane.b32.xlu0 %v1133, 112
  %v1135 = vpop.permute.xlu0 %1134
  %vm1136 = vcmask 130048
  %s1137 = scalar_lea.vmem %s1, 3073
  %1138 = vst.msk [vmem:[%s1137] ss:$8 sm:$0xf] %vm1136, %v1135
  %s1139 = scalar_lea.vmem %s1, 3073
  %1140 = vst.msk [vmem:[%s1139] ss:$8 sm:$0xf0] %vm1136, %v1135
  %s1141 = scalar_lea.vmem %s0, 388
  %v1142 = vld.sshfl [vmem:[%s1141] sm:$0xff pattern:$0xb3a29180]
  %1143 = vrot.lane.b32.xlu0 %v1142, 112
  %v1144 = vpop.permute.xlu0 %1143
  %vm1145 = vcmask 130048
  %s1146 = scalar_lea.vmem %s1, 3137
  %1147 = vst.msk [vmem:[%s1146] ss:$8 sm:$0xf] %vm1145, %v1144
  %s1148 = scalar_lea.vmem %s1, 3137
  %1149 = vst.msk [vmem:[%s1148] ss:$8 sm:$0xf0] %vm1145, %v1144
  %s1150 = scalar_lea.vmem %s0, 400
  %v1151 = vld.sshfl [vmem:[%s1150] sm:$0xff pattern:$0xb3a29180]
  %1152 = vrot.lane.b32.xlu0 %v1151, 112
  %v1153 = vpop.permute.xlu0 %1152
  %vm1154 = vcmask 130048
  %s1155 = scalar_lea.vmem %s1, 3201
  %1156 = vst.msk [vmem:[%s1155] ss:$8 sm:$0xf] %vm1154, %v1153
  %s1157 = scalar_lea.vmem %s1, 3201
  %1158 = vst.msk [vmem:[%s1157] ss:$8 sm:$0xf0] %vm1154, %v1153
  %s1159 = scalar_lea.vmem %s0, 404
  %v1160 = vld.sshfl [vmem:[%s1159] sm:$0xff pattern:$0xb3a29180]
  %1161 = vrot.lane.b32.xlu0 %v1160, 112
  %v1162 = vpop.permute.xlu0 %1161
  %vm1163 = vcmask 130048
  %s1164 = scalar_lea.vmem %s1, 3265
  %1165 = vst.msk [vmem:[%s1164] ss:$8 sm:$0xf] %vm1163, %v1162
  %s1166 = scalar_lea.vmem %s1, 3265
  %1167 = vst.msk [vmem:[%s1166] ss:$8 sm:$0xf0] %vm1163, %v1162
  %s1168 = scalar_lea.vmem %s0, 416
  %v1169 = vld.sshfl [vmem:[%s1168] sm:$0xff pattern:$0xb3a29180]
  %1170 = vrot.lane.b32.xlu0 %v1169, 112
  %v1171 = vpop.permute.xlu0 %1170
  %vm1172 = vcmask 130048
  %s1173 = scalar_lea.vmem %s1, 3329
  %1174 = vst.msk [vmem:[%s1173] ss:$8 sm:$0xf] %vm1172, %v1171
  %s1175 = scalar_lea.vmem %s1, 3329
  %1176 = vst.msk [vmem:[%s1175] ss:$8 sm:$0xf0] %vm1172, %v1171
  %s1177 = scalar_lea.vmem %s0, 420
  %v1178 = vld.sshfl [vmem:[%s1177] sm:$0xff pattern:$0xb3a29180]
  %1179 = vrot.lane.b32.xlu0 %v1178, 112
  %v1180 = vpop.permute.xlu0 %1179
  %vm1181 = vcmask 130048
  %s1182 = scalar_lea.vmem %s1, 3393
  %1183 = vst.msk [vmem:[%s1182] ss:$8 sm:$0xf] %vm1181, %v1180
  %s1184 = scalar_lea.vmem %s1, 3393
  %1185 = vst.msk [vmem:[%s1184] ss:$8 sm:$0xf0] %vm1181, %v1180
  %s1186 = scalar_lea.vmem %s0, 432
  %v1187 = vld.sshfl [vmem:[%s1186] sm:$0xff pattern:$0xb3a29180]
  %1188 = vrot.lane.b32.xlu0 %v1187, 112
  %v1189 = vpop.permute.xlu0 %1188
  %vm1190 = vcmask 130048
  %s1191 = scalar_lea.vmem %s1, 3457
  %1192 = vst.msk [vmem:[%s1191] ss:$8 sm:$0xf] %vm1190, %v1189
  %s1193 = scalar_lea.vmem %s1, 3457
  %1194 = vst.msk [vmem:[%s1193] ss:$8 sm:$0xf0] %vm1190, %v1189
  %s1195 = scalar_lea.vmem %s0, 436
  %v1196 = vld.sshfl [vmem:[%s1195] sm:$0xff pattern:$0xb3a29180]
  %1197 = vrot.lane.b32.xlu0 %v1196, 112
  %v1198 = vpop.permute.xlu0 %1197
  %vm1199 = vcmask 130048
  %s1200 = scalar_lea.vmem %s1, 3521
  %1201 = vst.msk [vmem:[%s1200] ss:$8 sm:$0xf] %vm1199, %v1198
  %s1202 = scalar_lea.vmem %s1, 3521
  %1203 = vst.msk [vmem:[%s1202] ss:$8 sm:$0xf0] %vm1199, %v1198
  %s1204 = scalar_lea.vmem %s0, 448
  %v1205 = vld.sshfl [vmem:[%s1204] sm:$0xff pattern:$0xb3a29180]
  %1206 = vrot.lane.b32.xlu0 %v1205, 112
  %v1207 = vpop.permute.xlu0 %1206
  %vm1208 = vcmask 130048
  %s1209 = scalar_lea.vmem %s1, 3585
  %1210 = vst.msk [vmem:[%s1209] ss:$8 sm:$0xf] %vm1208, %v1207
  %s1211 = scalar_lea.vmem %s1, 3585
  %1212 = vst.msk [vmem:[%s1211] ss:$8 sm:$0xf0] %vm1208, %v1207
  %s1213 = scalar_lea.vmem %s0, 452
  %v1214 = vld.sshfl [vmem:[%s1213] sm:$0xff pattern:$0xb3a29180]
  %1215 = vrot.lane.b32.xlu0 %v1214, 112
  %v1216 = vpop.permute.xlu0 %1215
  %vm1217 = vcmask 130048
  %s1218 = scalar_lea.vmem %s1, 3649
  %1219 = vst.msk [vmem:[%s1218] ss:$8 sm:$0xf] %vm1217, %v1216
  %s1220 = scalar_lea.vmem %s1, 3649
  %1221 = vst.msk [vmem:[%s1220] ss:$8 sm:$0xf0] %vm1217, %v1216
  %s1222 = scalar_lea.vmem %s0, 464
  %v1223 = vld.sshfl [vmem:[%s1222] sm:$0xff pattern:$0xb3a29180]
  %1224 = vrot.lane.b32.xlu0 %v1223, 112
  %v1225 = vpop.permute.xlu0 %1224
  %vm1226 = vcmask 130048
  %s1227 = scalar_lea.vmem %s1, 3713
  %1228 = vst.msk [vmem:[%s1227] ss:$8 sm:$0xf] %vm1226, %v1225
  %s1229 = scalar_lea.vmem %s1, 3713
  %1230 = vst.msk [vmem:[%s1229] ss:$8 sm:$0xf0] %vm1226, %v1225
  %s1231 = scalar_lea.vmem %s0, 468
  %v1232 = vld.sshfl [vmem:[%s1231] sm:$0xff pattern:$0xb3a29180]
  %1233 = vrot.lane.b32.xlu0 %v1232, 112
  %v1234 = vpop.permute.xlu0 %1233
  %vm1235 = vcmask 130048
  %s1236 = scalar_lea.vmem %s1, 3777
  %1237 = vst.msk [vmem:[%s1236] ss:$8 sm:$0xf] %vm1235, %v1234
  %s1238 = scalar_lea.vmem %s1, 3777
  %1239 = vst.msk [vmem:[%s1238] ss:$8 sm:$0xf0] %vm1235, %v1234
  %s1240 = scalar_lea.vmem %s0, 480
  %v1241 = vld.sshfl [vmem:[%s1240] sm:$0xff pattern:$0xb3a29180]
  %1242 = vrot.lane.b32.xlu0 %v1241, 112
  %v1243 = vpop.permute.xlu0 %1242
  %vm1244 = vcmask 130048
  %s1245 = scalar_lea.vmem %s1, 3841
  %1246 = vst.msk [vmem:[%s1245] ss:$8 sm:$0xf] %vm1244, %v1243
  %s1247 = scalar_lea.vmem %s1, 3841
  %1248 = vst.msk [vmem:[%s1247] ss:$8 sm:$0xf0] %vm1244, %v1243
  %s1249 = scalar_lea.vmem %s0, 484
  %v1250 = vld.sshfl [vmem:[%s1249] sm:$0xff pattern:$0xb3a29180]
  %1251 = vrot.lane.b32.xlu0 %v1250, 112
  %v1252 = vpop.permute.xlu0 %1251
  %vm1253 = vcmask 130048
  %s1254 = scalar_lea.vmem %s1, 3905
  %1255 = vst.msk [vmem:[%s1254] ss:$8 sm:$0xf] %vm1253, %v1252
  %s1256 = scalar_lea.vmem %s1, 3905
  %1257 = vst.msk [vmem:[%s1256] ss:$8 sm:$0xf0] %vm1253, %v1252
  %s1258 = scalar_lea.vmem %s0, 496
  %v1259 = vld.sshfl [vmem:[%s1258] sm:$0xff pattern:$0xb3a29180]
  %1260 = vrot.lane.b32.xlu0 %v1259, 112
  %v1261 = vpop.permute.xlu0 %1260
  %vm1262 = vcmask 130048
  %s1263 = scalar_lea.vmem %s1, 3969
  %1264 = vst.msk [vmem:[%s1263] ss:$8 sm:$0xf] %vm1262, %v1261
  %s1265 = scalar_lea.vmem %s1, 3969
  %1266 = vst.msk [vmem:[%s1265] ss:$8 sm:$0xf0] %vm1262, %v1261
  %s1267 = scalar_lea.vmem %s0, 500
  %v1268 = vld.sshfl [vmem:[%s1267] sm:$0xff pattern:$0xb3a29180]
  %1269 = vrot.lane.b32.xlu0 %v1268, 112
  %v1270 = vpop.permute.xlu0 %1269
  %vm1271 = vcmask 130048
  %s1272 = scalar_lea.vmem %s1, 4033
  %1273 = vst.msk [vmem:[%s1272] ss:$8 sm:$0xf] %vm1271, %v1270
  %s1274 = scalar_lea.vmem %s1, 4033
  %1275 = vst.msk [vmem:[%s1274] ss:$8 sm:$0xf0] %vm1271, %v1270
  %v1276 = vld.sshfl [vmem:[%s0] sm:$0xff pattern:$0xb3a29180]
  %1277 = vrot.lane.b32.xlu0 %v1276, 96
  %v1278 = vpop.permute.xlu0 %1277
  %vm1279 = vcmask 130048
  %s1280 = scalar_lea.vmem %s1, 2
  %1281 = vst.msk [vmem:[%s1280] ss:$8 sm:$0xf] %vm1279, %v1278
  %s1282 = scalar_lea.vmem %s1, 2
  %1283 = vst.msk [vmem:[%s1282] ss:$8 sm:$0xf0] %vm1279, %v1278
  %s1284 = scalar_lea.vmem %s0, 4
  %v1285 = vld.sshfl [vmem:[%s1284] sm:$0xff pattern:$0xb3a29180]
  %1286 = vrot.lane.b32.xlu0 %v1285, 96
  %v1287 = vpop.permute.xlu0 %1286
  %vm1288 = vcmask 130048
  %s1289 = scalar_lea.vmem %s1, 66
  %1290 = vst.msk [vmem:[%s1289] ss:$8 sm:$0xf] %vm1288, %v1287
  %s1291 = scalar_lea.vmem %s1, 66
  %1292 = vst.msk [vmem:[%s1291] ss:$8 sm:$0xf0] %vm1288, %v1287
  %s1293 = scalar_lea.vmem %s0, 16
  %v1294 = vld.sshfl [vmem:[%s1293] sm:$0xff pattern:$0xb3a29180]
  %1295 = vrot.lane.b32.xlu0 %v1294, 96
  %v1296 = vpop.permute.xlu0 %1295
  %vm1297 = vcmask 130048
  %s1298 = scalar_lea.vmem %s1, 130
  %1299 = vst.msk [vmem:[%s1298] ss:$8 sm:$0xf] %vm1297, %v1296
  %s1300 = scalar_lea.vmem %s1, 130
  %1301 = vst.msk [vmem:[%s1300] ss:$8 sm:$0xf0] %vm1297, %v1296
  %s1302 = scalar_lea.vmem %s0, 20
  %v1303 = vld.sshfl [vmem:[%s1302] sm:$0xff pattern:$0xb3a29180]
  %1304 = vrot.lane.b32.xlu0 %v1303, 96
  %v1305 = vpop.permute.xlu0 %1304
  %vm1306 = vcmask 130048
  %s1307 = scalar_lea.vmem %s1, 194
  %1308 = vst.msk [vmem:[%s1307] ss:$8 sm:$0xf] %vm1306, %v1305
  %s1309 = scalar_lea.vmem %s1, 194
  %1310 = vst.msk [vmem:[%s1309] ss:$8 sm:$0xf0] %vm1306, %v1305
  %s1311 = scalar_lea.vmem %s0, 32
  %v1312 = vld.sshfl [vmem:[%s1311] sm:$0xff pattern:$0xb3a29180]
  %1313 = vrot.lane.b32.xlu0 %v1312, 96
  %v1314 = vpop.permute.xlu0 %1313
  %vm1315 = vcmask 130048
  %s1316 = scalar_lea.vmem %s1, 258
  %1317 = vst.msk [vmem:[%s1316] ss:$8 sm:$0xf] %vm1315, %v1314
  %s1318 = scalar_lea.vmem %s1, 258
  %1319 = vst.msk [vmem:[%s1318] ss:$8 sm:$0xf0] %vm1315, %v1314
  %s1320 = scalar_lea.vmem %s0, 36
  %v1321 = vld.sshfl [vmem:[%s1320] sm:$0xff pattern:$0xb3a29180]
  %1322 = vrot.lane.b32.xlu0 %v1321, 96
  %v1323 = vpop.permute.xlu0 %1322
  %vm1324 = vcmask 130048
  %s1325 = scalar_lea.vmem %s1, 322
  %1326 = vst.msk [vmem:[%s1325] ss:$8 sm:$0xf] %vm1324, %v1323
  %s1327 = scalar_lea.vmem %s1, 322
  %1328 = vst.msk [vmem:[%s1327] ss:$8 sm:$0xf0] %vm1324, %v1323
  %s1329 = scalar_lea.vmem %s0, 48
  %v1330 = vld.sshfl [vmem:[%s1329] sm:$0xff pattern:$0xb3a29180]
  %1331 = vrot.lane.b32.xlu0 %v1330, 96
  %v1332 = vpop.permute.xlu0 %1331
  %vm1333 = vcmask 130048
  %s1334 = scalar_lea.vmem %s1, 386
  %1335 = vst.msk [vmem:[%s1334] ss:$8 sm:$0xf] %vm1333, %v1332
  %s1336 = scalar_lea.vmem %s1, 386
  %1337 = vst.msk [vmem:[%s1336] ss:$8 sm:$0xf0] %vm1333, %v1332
  %s1338 = scalar_lea.vmem %s0, 52
  %v1339 = vld.sshfl [vmem:[%s1338] sm:$0xff pattern:$0xb3a29180]
  %1340 = vrot.lane.b32.xlu0 %v1339, 96
  %v1341 = vpop.permute.xlu0 %1340
  %vm1342 = vcmask 130048
  %s1343 = scalar_lea.vmem %s1, 450
  %1344 = vst.msk [vmem:[%s1343] ss:$8 sm:$0xf] %vm1342, %v1341
  %s1345 = scalar_lea.vmem %s1, 450
  %1346 = vst.msk [vmem:[%s1345] ss:$8 sm:$0xf0] %vm1342, %v1341
  %s1347 = scalar_lea.vmem %s0, 64
  %v1348 = vld.sshfl [vmem:[%s1347] sm:$0xff pattern:$0xb3a29180]
  %1349 = vrot.lane.b32.xlu0 %v1348, 96
  %v1350 = vpop.permute.xlu0 %1349
  %vm1351 = vcmask 130048
  %s1352 = scalar_lea.vmem %s1, 514
  %1353 = vst.msk [vmem:[%s1352] ss:$8 sm:$0xf] %vm1351, %v1350
  %s1354 = scalar_lea.vmem %s1, 514
  %1355 = vst.msk [vmem:[%s1354] ss:$8 sm:$0xf0] %vm1351, %v1350
  %s1356 = scalar_lea.vmem %s0, 68
  %v1357 = vld.sshfl [vmem:[%s1356] sm:$0xff pattern:$0xb3a29180]
  %1358 = vrot.lane.b32.xlu0 %v1357, 96
  %v1359 = vpop.permute.xlu0 %1358
  %vm1360 = vcmask 130048
  %s1361 = scalar_lea.vmem %s1, 578
  %1362 = vst.msk [vmem:[%s1361] ss:$8 sm:$0xf] %vm1360, %v1359
  %s1363 = scalar_lea.vmem %s1, 578
  %1364 = vst.msk [vmem:[%s1363] ss:$8 sm:$0xf0] %vm1360, %v1359
  %s1365 = scalar_lea.vmem %s0, 80
  %v1366 = vld.sshfl [vmem:[%s1365] sm:$0xff pattern:$0xb3a29180]
  %1367 = vrot.lane.b32.xlu0 %v1366, 96
  %v1368 = vpop.permute.xlu0 %1367
  %vm1369 = vcmask 130048
  %s1370 = scalar_lea.vmem %s1, 642
  %1371 = vst.msk [vmem:[%s1370] ss:$8 sm:$0xf] %vm1369, %v1368
  %s1372 = scalar_lea.vmem %s1, 642
  %1373 = vst.msk [vmem:[%s1372] ss:$8 sm:$0xf0] %vm1369, %v1368
  %s1374 = scalar_lea.vmem %s0, 84
  %v1375 = vld.sshfl [vmem:[%s1374] sm:$0xff pattern:$0xb3a29180]
  %1376 = vrot.lane.b32.xlu0 %v1375, 96
  %v1377 = vpop.permute.xlu0 %1376
  %vm1378 = vcmask 130048
  %s1379 = scalar_lea.vmem %s1, 706
  %1380 = vst.msk [vmem:[%s1379] ss:$8 sm:$0xf] %vm1378, %v1377
  %s1381 = scalar_lea.vmem %s1, 706
  %1382 = vst.msk [vmem:[%s1381] ss:$8 sm:$0xf0] %vm1378, %v1377
  %s1383 = scalar_lea.vmem %s0, 96
  %v1384 = vld.sshfl [vmem:[%s1383] sm:$0xff pattern:$0xb3a29180]
  %1385 = vrot.lane.b32.xlu0 %v1384, 96
  %v1386 = vpop.permute.xlu0 %1385
  %vm1387 = vcmask 130048
  %s1388 = scalar_lea.vmem %s1, 770
  %1389 = vst.msk [vmem:[%s1388] ss:$8 sm:$0xf] %vm1387, %v1386
  %s1390 = scalar_lea.vmem %s1, 770
  %1391 = vst.msk [vmem:[%s1390] ss:$8 sm:$0xf0] %vm1387, %v1386
  %s1392 = scalar_lea.vmem %s0, 100
  %v1393 = vld.sshfl [vmem:[%s1392] sm:$0xff pattern:$0xb3a29180]
  %1394 = vrot.lane.b32.xlu0 %v1393, 96
  %v1395 = vpop.permute.xlu0 %1394
  %vm1396 = vcmask 130048
  %s1397 = scalar_lea.vmem %s1, 834
  %1398 = vst.msk [vmem:[%s1397] ss:$8 sm:$0xf] %vm1396, %v1395
  %s1399 = scalar_lea.vmem %s1, 834
  %1400 = vst.msk [vmem:[%s1399] ss:$8 sm:$0xf0] %vm1396, %v1395
  %s1401 = scalar_lea.vmem %s0, 112
  %v1402 = vld.sshfl [vmem:[%s1401] sm:$0xff pattern:$0xb3a29180]
  %1403 = vrot.lane.b32.xlu0 %v1402, 96
  %v1404 = vpop.permute.xlu0 %1403
  %vm1405 = vcmask 130048
  %s1406 = scalar_lea.vmem %s1, 898
  %1407 = vst.msk [vmem:[%s1406] ss:$8 sm:$0xf] %vm1405, %v1404
  %s1408 = scalar_lea.vmem %s1, 898
  %1409 = vst.msk [vmem:[%s1408] ss:$8 sm:$0xf0] %vm1405, %v1404
  %s1410 = scalar_lea.vmem %s0, 116
  %v1411 = vld.sshfl [vmem:[%s1410] sm:$0xff pattern:$0xb3a29180]
  %1412 = vrot.lane.b32.xlu0 %v1411, 96
  %v1413 = vpop.permute.xlu0 %1412
  %vm1414 = vcmask 130048
  %s1415 = scalar_lea.vmem %s1, 962
  %1416 = vst.msk [vmem:[%s1415] ss:$8 sm:$0xf] %vm1414, %v1413
  %s1417 = scalar_lea.vmem %s1, 962
  %1418 = vst.msk [vmem:[%s1417] ss:$8 sm:$0xf0] %vm1414, %v1413
  %s1419 = scalar_lea.vmem %s0, 128
  %v1420 = vld.sshfl [vmem:[%s1419] sm:$0xff pattern:$0xb3a29180]
  %1421 = vrot.lane.b32.xlu0 %v1420, 96
  %v1422 = vpop.permute.xlu0 %1421
  %vm1423 = vcmask 130048
  %s1424 = scalar_lea.vmem %s1, 1026
  %1425 = vst.msk [vmem:[%s1424] ss:$8 sm:$0xf] %vm1423, %v1422
  %s1426 = scalar_lea.vmem %s1, 1026
  %1427 = vst.msk [vmem:[%s1426] ss:$8 sm:$0xf0] %vm1423, %v1422
  %s1428 = scalar_lea.vmem %s0, 132
  %v1429 = vld.sshfl [vmem:[%s1428] sm:$0xff pattern:$0xb3a29180]
  %1430 = vrot.lane.b32.xlu0 %v1429, 96
  %v1431 = vpop.permute.xlu0 %1430
  %vm1432 = vcmask 130048
  %s1433 = scalar_lea.vmem %s1, 1090
  %1434 = vst.msk [vmem:[%s1433] ss:$8 sm:$0xf] %vm1432, %v1431
  %s1435 = scalar_lea.vmem %s1, 1090
  %1436 = vst.msk [vmem:[%s1435] ss:$8 sm:$0xf0] %vm1432, %v1431
  %s1437 = scalar_lea.vmem %s0, 144
  %v1438 = vld.sshfl [vmem:[%s1437] sm:$0xff pattern:$0xb3a29180]
  %1439 = vrot.lane.b32.xlu0 %v1438, 96
  %v1440 = vpop.permute.xlu0 %1439
  %vm1441 = vcmask 130048
  %s1442 = scalar_lea.vmem %s1, 1154
  %1443 = vst.msk [vmem:[%s1442] ss:$8 sm:$0xf] %vm1441, %v1440
  %s1444 = scalar_lea.vmem %s1, 1154
  %1445 = vst.msk [vmem:[%s1444] ss:$8 sm:$0xf0] %vm1441, %v1440
  %s1446 = scalar_lea.vmem %s0, 148
  %v1447 = vld.sshfl [vmem:[%s1446] sm:$0xff pattern:$0xb3a29180]
  %1448 = vrot.lane.b32.xlu0 %v1447, 96
  %v1449 = vpop.permute.xlu0 %1448
  %vm1450 = vcmask 130048
  %s1451 = scalar_lea.vmem %s1, 1218
  %1452 = vst.msk [vmem:[%s1451] ss:$8 sm:$0xf] %vm1450, %v1449
  %s1453 = scalar_lea.vmem %s1, 1218
  %1454 = vst.msk [vmem:[%s1453] ss:$8 sm:$0xf0] %vm1450, %v1449
  %s1455 = scalar_lea.vmem %s0, 160
  %v1456 = vld.sshfl [vmem:[%s1455] sm:$0xff pattern:$0xb3a29180]
  %1457 = vrot.lane.b32.xlu0 %v1456, 96
  %v1458 = vpop.permute.xlu0 %1457
  %vm1459 = vcmask 130048
  %s1460 = scalar_lea.vmem %s1, 1282
  %1461 = vst.msk [vmem:[%s1460] ss:$8 sm:$0xf] %vm1459, %v1458
  %s1462 = scalar_lea.vmem %s1, 1282
  %1463 = vst.msk [vmem:[%s1462] ss:$8 sm:$0xf0] %vm1459, %v1458
  %s1464 = scalar_lea.vmem %s0, 164
  %v1465 = vld.sshfl [vmem:[%s1464] sm:$0xff pattern:$0xb3a29180]
  %1466 = vrot.lane.b32.xlu0 %v1465, 96
  %v1467 = vpop.permute.xlu0 %1466
  %vm1468 = vcmask 130048
  %s1469 = scalar_lea.vmem %s1, 1346
  %1470 = vst.msk [vmem:[%s1469] ss:$8 sm:$0xf] %vm1468, %v1467
  %s1471 = scalar_lea.vmem %s1, 1346
  %1472 = vst.msk [vmem:[%s1471] ss:$8 sm:$0xf0] %vm1468, %v1467
  %s1473 = scalar_lea.vmem %s0, 176
  %v1474 = vld.sshfl [vmem:[%s1473] sm:$0xff pattern:$0xb3a29180]
  %1475 = vrot.lane.b32.xlu0 %v1474, 96
  %v1476 = vpop.permute.xlu0 %1475
  %vm1477 = vcmask 130048
  %s1478 = scalar_lea.vmem %s1, 1410
  %1479 = vst.msk [vmem:[%s1478] ss:$8 sm:$0xf] %vm1477, %v1476
  %s1480 = scalar_lea.vmem %s1, 1410
  %1481 = vst.msk [vmem:[%s1480] ss:$8 sm:$0xf0] %vm1477, %v1476
  %s1482 = scalar_lea.vmem %s0, 180
  %v1483 = vld.sshfl [vmem:[%s1482] sm:$0xff pattern:$0xb3a29180]
  %1484 = vrot.lane.b32.xlu0 %v1483, 96
  %v1485 = vpop.permute.xlu0 %1484
  %vm1486 = vcmask 130048
  %s1487 = scalar_lea.vmem %s1, 1474
  %1488 = vst.msk [vmem:[%s1487] ss:$8 sm:$0xf] %vm1486, %v1485
  %s1489 = scalar_lea.vmem %s1, 1474
  %1490 = vst.msk [vmem:[%s1489] ss:$8 sm:$0xf0] %vm1486, %v1485
  %s1491 = scalar_lea.vmem %s0, 192
  %v1492 = vld.sshfl [vmem:[%s1491] sm:$0xff pattern:$0xb3a29180]
  %1493 = vrot.lane.b32.xlu0 %v1492, 96
  %v1494 = vpop.permute.xlu0 %1493
  %vm1495 = vcmask 130048
  %s1496 = scalar_lea.vmem %s1, 1538
  %1497 = vst.msk [vmem:[%s1496] ss:$8 sm:$0xf] %vm1495, %v1494
  %s1498 = scalar_lea.vmem %s1, 1538
  %1499 = vst.msk [vmem:[%s1498] ss:$8 sm:$0xf0] %vm1495, %v1494
  %s1500 = scalar_lea.vmem %s0, 196
  %v1501 = vld.sshfl [vmem:[%s1500] sm:$0xff pattern:$0xb3a29180]
  %1502 = vrot.lane.b32.xlu0 %v1501, 96
  %v1503 = vpop.permute.xlu0 %1502
  %vm1504 = vcmask 130048
  %s1505 = scalar_lea.vmem %s1, 1602
  %1506 = vst.msk [vmem:[%s1505] ss:$8 sm:$0xf] %vm1504, %v1503
  %s1507 = scalar_lea.vmem %s1, 1602
  %1508 = vst.msk [vmem:[%s1507] ss:$8 sm:$0xf0] %vm1504, %v1503
  %s1509 = scalar_lea.vmem %s0, 208
  %v1510 = vld.sshfl [vmem:[%s1509] sm:$0xff pattern:$0xb3a29180]
  %1511 = vrot.lane.b32.xlu0 %v1510, 96
  %v1512 = vpop.permute.xlu0 %1511
  %vm1513 = vcmask 130048
  %s1514 = scalar_lea.vmem %s1, 1666
  %1515 = vst.msk [vmem:[%s1514] ss:$8 sm:$0xf] %vm1513, %v1512
  %s1516 = scalar_lea.vmem %s1, 1666
  %1517 = vst.msk [vmem:[%s1516] ss:$8 sm:$0xf0] %vm1513, %v1512
  %s1518 = scalar_lea.vmem %s0, 212
  %v1519 = vld.sshfl [vmem:[%s1518] sm:$0xff pattern:$0xb3a29180]
  %1520 = vrot.lane.b32.xlu0 %v1519, 96
  %v1521 = vpop.permute.xlu0 %1520
  %vm1522 = vcmask 130048
  %s1523 = scalar_lea.vmem %s1, 1730
  %1524 = vst.msk [vmem:[%s1523] ss:$8 sm:$0xf] %vm1522, %v1521
  %s1525 = scalar_lea.vmem %s1, 1730
  %1526 = vst.msk [vmem:[%s1525] ss:$8 sm:$0xf0] %vm1522, %v1521
  %s1527 = scalar_lea.vmem %s0, 224
  %v1528 = vld.sshfl [vmem:[%s1527] sm:$0xff pattern:$0xb3a29180]
  %1529 = vrot.lane.b32.xlu0 %v1528, 96
  %v1530 = vpop.permute.xlu0 %1529
  %vm1531 = vcmask 130048
  %s1532 = scalar_lea.vmem %s1, 1794
  %1533 = vst.msk [vmem:[%s1532] ss:$8 sm:$0xf] %vm1531, %v1530
  %s1534 = scalar_lea.vmem %s1, 1794
  %1535 = vst.msk [vmem:[%s1534] ss:$8 sm:$0xf0] %vm1531, %v1530
  %s1536 = scalar_lea.vmem %s0, 228
  %v1537 = vld.sshfl [vmem:[%s1536] sm:$0xff pattern:$0xb3a29180]
  %1538 = vrot.lane.b32.xlu0 %v1537, 96
  %v1539 = vpop.permute.xlu0 %1538
  %vm1540 = vcmask 130048
  %s1541 = scalar_lea.vmem %s1, 1858
  %1542 = vst.msk [vmem:[%s1541] ss:$8 sm:$0xf] %vm1540, %v1539
  %s1543 = scalar_lea.vmem %s1, 1858
  %1544 = vst.msk [vmem:[%s1543] ss:$8 sm:$0xf0] %vm1540, %v1539
  %s1545 = scalar_lea.vmem %s0, 240
  %v1546 = vld.sshfl [vmem:[%s1545] sm:$0xff pattern:$0xb3a29180]
  %1547 = vrot.lane.b32.xlu0 %v1546, 96
  %v1548 = vpop.permute.xlu0 %1547
  %vm1549 = vcmask 130048
  %s1550 = scalar_lea.vmem %s1, 1922
  %1551 = vst.msk [vmem:[%s1550] ss:$8 sm:$0xf] %vm1549, %v1548
  %s1552 = scalar_lea.vmem %s1, 1922
  %1553 = vst.msk [vmem:[%s1552] ss:$8 sm:$0xf0] %vm1549, %v1548
  %s1554 = scalar_lea.vmem %s0, 244
  %v1555 = vld.sshfl [vmem:[%s1554] sm:$0xff pattern:$0xb3a29180]
  %1556 = vrot.lane.b32.xlu0 %v1555, 96
  %v1557 = vpop.permute.xlu0 %1556
  %vm1558 = vcmask 130048
  %s1559 = scalar_lea.vmem %s1, 1986
  %1560 = vst.msk [vmem:[%s1559] ss:$8 sm:$0xf] %vm1558, %v1557
  %s1561 = scalar_lea.vmem %s1, 1986
  %1562 = vst.msk [vmem:[%s1561] ss:$8 sm:$0xf0] %vm1558, %v1557
  %s1563 = scalar_lea.vmem %s0, 256
  %v1564 = vld.sshfl [vmem:[%s1563] sm:$0xff pattern:$0xb3a29180]
  %1565 = vrot.lane.b32.xlu0 %v1564, 96
  %v1566 = vpop.permute.xlu0 %1565
  %vm1567 = vcmask 130048
  %s1568 = scalar_lea.vmem %s1, 2050
  %1569 = vst.msk [vmem:[%s1568] ss:$8 sm:$0xf] %vm1567, %v1566
  %s1570 = scalar_lea.vmem %s1, 2050
  %1571 = vst.msk [vmem:[%s1570] ss:$8 sm:$0xf0] %vm1567, %v1566
  %s1572 = scalar_lea.vmem %s0, 260
  %v1573 = vld.sshfl [vmem:[%s1572] sm:$0xff pattern:$0xb3a29180]
  %1574 = vrot.lane.b32.xlu0 %v1573, 96
  %v1575 = vpop.permute.xlu0 %1574
  %vm1576 = vcmask 130048
  %s1577 = scalar_lea.vmem %s1, 2114
  %1578 = vst.msk [vmem:[%s1577] ss:$8 sm:$0xf] %vm1576, %v1575
  %s1579 = scalar_lea.vmem %s1, 2114
  %1580 = vst.msk [vmem:[%s1579] ss:$8 sm:$0xf0] %vm1576, %v1575
  %s1581 = scalar_lea.vmem %s0, 272
  %v1582 = vld.sshfl [vmem:[%s1581] sm:$0xff pattern:$0xb3a29180]
  %1583 = vrot.lane.b32.xlu0 %v1582, 96
  %v1584 = vpop.permute.xlu0 %1583
  %vm1585 = vcmask 130048
  %s1586 = scalar_lea.vmem %s1, 2178
  %1587 = vst.msk [vmem:[%s1586] ss:$8 sm:$0xf] %vm1585, %v1584
  %s1588 = scalar_lea.vmem %s1, 2178
  %1589 = vst.msk [vmem:[%s1588] ss:$8 sm:$0xf0] %vm1585, %v1584
  %s1590 = scalar_lea.vmem %s0, 276
  %v1591 = vld.sshfl [vmem:[%s1590] sm:$0xff pattern:$0xb3a29180]
  %1592 = vrot.lane.b32.xlu0 %v1591, 96
  %v1593 = vpop.permute.xlu0 %1592
  %vm1594 = vcmask 130048
  %s1595 = scalar_lea.vmem %s1, 2242
  %1596 = vst.msk [vmem:[%s1595] ss:$8 sm:$0xf] %vm1594, %v1593
  %s1597 = scalar_lea.vmem %s1, 2242
  %1598 = vst.msk [vmem:[%s1597] ss:$8 sm:$0xf0] %vm1594, %v1593
  %s1599 = scalar_lea.vmem %s0, 288
  %v1600 = vld.sshfl [vmem:[%s1599] sm:$0xff pattern:$0xb3a29180]
  %1601 = vrot.lane.b32.xlu0 %v1600, 96
  %v1602 = vpop.permute.xlu0 %1601
  %vm1603 = vcmask 130048
  %s1604 = scalar_lea.vmem %s1, 2306
  %1605 = vst.msk [vmem:[%s1604] ss:$8 sm:$0xf] %vm1603, %v1602
  %s1606 = scalar_lea.vmem %s1, 2306
  %1607 = vst.msk [vmem:[%s1606] ss:$8 sm:$0xf0] %vm1603, %v1602
  %s1608 = scalar_lea.vmem %s0, 292
  %v1609 = vld.sshfl [vmem:[%s1608] sm:$0xff pattern:$0xb3a29180]
  %1610 = vrot.lane.b32.xlu0 %v1609, 96
  %v1611 = vpop.permute.xlu0 %1610
  %vm1612 = vcmask 130048
  %s1613 = scalar_lea.vmem %s1, 2370
  %1614 = vst.msk [vmem:[%s1613] ss:$8 sm:$0xf] %vm1612, %v1611
  %s1615 = scalar_lea.vmem %s1, 2370
  %1616 = vst.msk [vmem:[%s1615] ss:$8 sm:$0xf0] %vm1612, %v1611
  %s1617 = scalar_lea.vmem %s0, 304
  %v1618 = vld.sshfl [vmem:[%s1617] sm:$0xff pattern:$0xb3a29180]
  %1619 = vrot.lane.b32.xlu0 %v1618, 96
  %v1620 = vpop.permute.xlu0 %1619
  %vm1621 = vcmask 130048
  %s1622 = scalar_lea.vmem %s1, 2434
  %1623 = vst.msk [vmem:[%s1622] ss:$8 sm:$0xf] %vm1621, %v1620
  %s1624 = scalar_lea.vmem %s1, 2434
  %1625 = vst.msk [vmem:[%s1624] ss:$8 sm:$0xf0] %vm1621, %v1620
  %s1626 = scalar_lea.vmem %s0, 308
  %v1627 = vld.sshfl [vmem:[%s1626] sm:$0xff pattern:$0xb3a29180]
  %1628 = vrot.lane.b32.xlu0 %v1627, 96
  %v1629 = vpop.permute.xlu0 %1628
  %vm1630 = vcmask 130048
  %s1631 = scalar_lea.vmem %s1, 2498
  %1632 = vst.msk [vmem:[%s1631] ss:$8 sm:$0xf] %vm1630, %v1629
  %s1633 = scalar_lea.vmem %s1, 2498
  %1634 = vst.msk [vmem:[%s1633] ss:$8 sm:$0xf0] %vm1630, %v1629
  %s1635 = scalar_lea.vmem %s0, 320
  %v1636 = vld.sshfl [vmem:[%s1635] sm:$0xff pattern:$0xb3a29180]
  %1637 = vrot.lane.b32.xlu0 %v1636, 96
  %v1638 = vpop.permute.xlu0 %1637
  %vm1639 = vcmask 130048
  %s1640 = scalar_lea.vmem %s1, 2562
  %1641 = vst.msk [vmem:[%s1640] ss:$8 sm:$0xf] %vm1639, %v1638
  %s1642 = scalar_lea.vmem %s1, 2562
  %1643 = vst.msk [vmem:[%s1642] ss:$8 sm:$0xf0] %vm1639, %v1638
  %s1644 = scalar_lea.vmem %s0, 324
  %v1645 = vld.sshfl [vmem:[%s1644] sm:$0xff pattern:$0xb3a29180]
  %1646 = vrot.lane.b32.xlu0 %v1645, 96
  %v1647 = vpop.permute.xlu0 %1646
  %vm1648 = vcmask 130048
  %s1649 = scalar_lea.vmem %s1, 2626
  %1650 = vst.msk [vmem:[%s1649] ss:$8 sm:$0xf] %vm1648, %v1647
  %s1651 = scalar_lea.vmem %s1, 2626
  %1652 = vst.msk [vmem:[%s1651] ss:$8 sm:$0xf0] %vm1648, %v1647
  %s1653 = scalar_lea.vmem %s0, 336
  %v1654 = vld.sshfl [vmem:[%s1653] sm:$0xff pattern:$0xb3a29180]
  %1655 = vrot.lane.b32.xlu0 %v1654, 96
  %v1656 = vpop.permute.xlu0 %1655
  %vm1657 = vcmask 130048
  %s1658 = scalar_lea.vmem %s1, 2690
  %1659 = vst.msk [vmem:[%s1658] ss:$8 sm:$0xf] %vm1657, %v1656
  %s1660 = scalar_lea.vmem %s1, 2690
  %1661 = vst.msk [vmem:[%s1660] ss:$8 sm:$0xf0] %vm1657, %v1656
  %s1662 = scalar_lea.vmem %s0, 340
  %v1663 = vld.sshfl [vmem:[%s1662] sm:$0xff pattern:$0xb3a29180]
  %1664 = vrot.lane.b32.xlu0 %v1663, 96
  %v1665 = vpop.permute.xlu0 %1664
  %vm1666 = vcmask 130048
  %s1667 = scalar_lea.vmem %s1, 2754
  %1668 = vst.msk [vmem:[%s1667] ss:$8 sm:$0xf] %vm1666, %v1665
  %s1669 = scalar_lea.vmem %s1, 2754
  %1670 = vst.msk [vmem:[%s1669] ss:$8 sm:$0xf0] %vm1666, %v1665
  %s1671 = scalar_lea.vmem %s0, 352
  %v1672 = vld.sshfl [vmem:[%s1671] sm:$0xff pattern:$0xb3a29180]
  %1673 = vrot.lane.b32.xlu0 %v1672, 96
  %v1674 = vpop.permute.xlu0 %1673
  %vm1675 = vcmask 130048
  %s1676 = scalar_lea.vmem %s1, 2818
  %1677 = vst.msk [vmem:[%s1676] ss:$8 sm:$0xf] %vm1675, %v1674
  %s1678 = scalar_lea.vmem %s1, 2818
  %1679 = vst.msk [vmem:[%s1678] ss:$8 sm:$0xf0] %vm1675, %v1674
  %s1680 = scalar_lea.vmem %s0, 356
  %v1681 = vld.sshfl [vmem:[%s1680] sm:$0xff pattern:$0xb3a29180]
  %1682 = vrot.lane.b32.xlu0 %v1681, 96
  %v1683 = vpop.permute.xlu0 %1682
  %vm1684 = vcmask 130048
  %s1685 = scalar_lea.vmem %s1, 2882
  %1686 = vst.msk [vmem:[%s1685] ss:$8 sm:$0xf] %vm1684, %v1683
  %s1687 = scalar_lea.vmem %s1, 2882
  %1688 = vst.msk [vmem:[%s1687] ss:$8 sm:$0xf0] %vm1684, %v1683
  %s1689 = scalar_lea.vmem %s0, 368
  %v1690 = vld.sshfl [vmem:[%s1689] sm:$0xff pattern:$0xb3a29180]
  %1691 = vrot.lane.b32.xlu0 %v1690, 96
  %v1692 = vpop.permute.xlu0 %1691
  %vm1693 = vcmask 130048
  %s1694 = scalar_lea.vmem %s1, 2946
  %1695 = vst.msk [vmem:[%s1694] ss:$8 sm:$0xf] %vm1693, %v1692
  %s1696 = scalar_lea.vmem %s1, 2946
  %1697 = vst.msk [vmem:[%s1696] ss:$8 sm:$0xf0] %vm1693, %v1692
  %s1698 = scalar_lea.vmem %s0, 372
  %v1699 = vld.sshfl [vmem:[%s1698] sm:$0xff pattern:$0xb3a29180]
  %1700 = vrot.lane.b32.xlu0 %v1699, 96
  %v1701 = vpop.permute.xlu0 %1700
  %vm1702 = vcmask 130048
  %s1703 = scalar_lea.vmem %s1, 3010
  %1704 = vst.msk [vmem:[%s1703] ss:$8 sm:$0xf] %vm1702, %v1701
  %s1705 = scalar_lea.vmem %s1, 3010
  %1706 = vst.msk [vmem:[%s1705] ss:$8 sm:$0xf0] %vm1702, %v1701
  %s1707 = scalar_lea.vmem %s0, 384
  %v1708 = vld.sshfl [vmem:[%s1707] sm:$0xff pattern:$0xb3a29180]
  %1709 = vrot.lane.b32.xlu0 %v1708, 96
  %v1710 = vpop.permute.xlu0 %1709
  %vm1711 = vcmask 130048
  %s1712 = scalar_lea.vmem %s1, 3074
  %1713 = vst.msk [vmem:[%s1712] ss:$8 sm:$0xf] %vm1711, %v1710
  %s1714 = scalar_lea.vmem %s1, 3074
  %1715 = vst.msk [vmem:[%s1714] ss:$8 sm:$0xf0] %vm1711, %v1710
  %s1716 = scalar_lea.vmem %s0, 388
  %v1717 = vld.sshfl [vmem:[%s1716] sm:$0xff pattern:$0xb3a29180]
  %1718 = vrot.lane.b32.xlu0 %v1717, 96
  %v1719 = vpop.permute.xlu0 %1718
  %vm1720 = vcmask 130048
  %s1721 = scalar_lea.vmem %s1, 3138
  %1722 = vst.msk [vmem:[%s1721] ss:$8 sm:$0xf] %vm1720, %v1719
  %s1723 = scalar_lea.vmem %s1, 3138
  %1724 = vst.msk [vmem:[%s1723] ss:$8 sm:$0xf0] %vm1720, %v1719
  %s1725 = scalar_lea.vmem %s0, 400
  %v1726 = vld.sshfl [vmem:[%s1725] sm:$0xff pattern:$0xb3a29180]
  %1727 = vrot.lane.b32.xlu0 %v1726, 96
  %v1728 = vpop.permute.xlu0 %1727
  %vm1729 = vcmask 130048
  %s1730 = scalar_lea.vmem %s1, 3202
  %1731 = vst.msk [vmem:[%s1730] ss:$8 sm:$0xf] %vm1729, %v1728
  %s1732 = scalar_lea.vmem %s1, 3202
  %1733 = vst.msk [vmem:[%s1732] ss:$8 sm:$0xf0] %vm1729, %v1728
  %s1734 = scalar_lea.vmem %s0, 404
  %v1735 = vld.sshfl [vmem:[%s1734] sm:$0xff pattern:$0xb3a29180]
  %1736 = vrot.lane.b32.xlu0 %v1735, 96
  %v1737 = vpop.permute.xlu0 %1736
  %vm1738 = vcmask 130048
  %s1739 = scalar_lea.vmem %s1, 3266
  %1740 = vst.msk [vmem:[%s1739] ss:$8 sm:$0xf] %vm1738, %v1737
  %s1741 = scalar_lea.vmem %s1, 3266
  %1742 = vst.msk [vmem:[%s1741] ss:$8 sm:$0xf0] %vm1738, %v1737
  %s1743 = scalar_lea.vmem %s0, 416
  %v1744 = vld.sshfl [vmem:[%s1743] sm:$0xff pattern:$0xb3a29180]
  %1745 = vrot.lane.b32.xlu0 %v1744, 96
  %v1746 = vpop.permute.xlu0 %1745
  %vm1747 = vcmask 130048
  %s1748 = scalar_lea.vmem %s1, 3330
  %1749 = vst.msk [vmem:[%s1748] ss:$8 sm:$0xf] %vm1747, %v1746
  %s1750 = scalar_lea.vmem %s1, 3330
  %1751 = vst.msk [vmem:[%s1750] ss:$8 sm:$0xf0] %vm1747, %v1746
  %s1752 = scalar_lea.vmem %s0, 420
  %v1753 = vld.sshfl [vmem:[%s1752] sm:$0xff pattern:$0xb3a29180]
  %1754 = vrot.lane.b32.xlu0 %v1753, 96
  %v1755 = vpop.permute.xlu0 %1754
  %vm1756 = vcmask 130048
  %s1757 = scalar_lea.vmem %s1, 3394
  %1758 = vst.msk [vmem:[%s1757] ss:$8 sm:$0xf] %vm1756, %v1755
  %s1759 = scalar_lea.vmem %s1, 3394
  %1760 = vst.msk [vmem:[%s1759] ss:$8 sm:$0xf0] %vm1756, %v1755
  %s1761 = scalar_lea.vmem %s0, 432
  %v1762 = vld.sshfl [vmem:[%s1761] sm:$0xff pattern:$0xb3a29180]
  %1763 = vrot.lane.b32.xlu0 %v1762, 96
  %v1764 = vpop.permute.xlu0 %1763
  %vm1765 = vcmask 130048
  %s1766 = scalar_lea.vmem %s1, 3458
  %1767 = vst.msk [vmem:[%s1766] ss:$8 sm:$0xf] %vm1765, %v1764
  %s1768 = scalar_lea.vmem %s1, 3458
  %1769 = vst.msk [vmem:[%s1768] ss:$8 sm:$0xf0] %vm1765, %v1764
  %s1770 = scalar_lea.vmem %s0, 436
  %v1771 = vld.sshfl [vmem:[%s1770] sm:$0xff pattern:$0xb3a29180]
  %1772 = vrot.lane.b32.xlu0 %v1771, 96
  %v1773 = vpop.permute.xlu0 %1772
  %vm1774 = vcmask 130048
  %s1775 = scalar_lea.vmem %s1, 3522
  %1776 = vst.msk [vmem:[%s1775] ss:$8 sm:$0xf] %vm1774, %v1773
  %s1777 = scalar_lea.vmem %s1, 3522
  %1778 = vst.msk [vmem:[%s1777] ss:$8 sm:$0xf0] %vm1774, %v1773
  %s1779 = scalar_lea.vmem %s0, 448
  %v1780 = vld.sshfl [vmem:[%s1779] sm:$0xff pattern:$0xb3a29180]
  %1781 = vrot.lane.b32.xlu0 %v1780, 96
  %v1782 = vpop.permute.xlu0 %1781
  %vm1783 = vcmask 130048
  %s1784 = scalar_lea.vmem %s1, 3586
  %1785 = vst.msk [vmem:[%s1784] ss:$8 sm:$0xf] %vm1783, %v1782
  %s1786 = scalar_lea.vmem %s1, 3586
  %1787 = vst.msk [vmem:[%s1786] ss:$8 sm:$0xf0] %vm1783, %v1782
  %s1788 = scalar_lea.vmem %s0, 452
  %v1789 = vld.sshfl [vmem:[%s1788] sm:$0xff pattern:$0xb3a29180]
  %1790 = vrot.lane.b32.xlu0 %v1789, 96
  %v1791 = vpop.permute.xlu0 %1790
  %vm1792 = vcmask 130048
  %s1793 = scalar_lea.vmem %s1, 3650
  %1794 = vst.msk [vmem:[%s1793] ss:$8 sm:$0xf] %vm1792, %v1791
  %s1795 = scalar_lea.vmem %s1, 3650
  %1796 = vst.msk [vmem:[%s1795] ss:$8 sm:$0xf0] %vm1792, %v1791
  %s1797 = scalar_lea.vmem %s0, 464
  %v1798 = vld.sshfl [vmem:[%s1797] sm:$0xff pattern:$0xb3a29180]
  %1799 = vrot.lane.b32.xlu0 %v1798, 96
  %v1800 = vpop.permute.xlu0 %1799
  %vm1801 = vcmask 130048
  %s1802 = scalar_lea.vmem %s1, 3714
  %1803 = vst.msk [vmem:[%s1802] ss:$8 sm:$0xf] %vm1801, %v1800
  %s1804 = scalar_lea.vmem %s1, 3714
  %1805 = vst.msk [vmem:[%s1804] ss:$8 sm:$0xf0] %vm1801, %v1800
  %s1806 = scalar_lea.vmem %s0, 468
  %v1807 = vld.sshfl [vmem:[%s1806] sm:$0xff pattern:$0xb3a29180]
  %1808 = vrot.lane.b32.xlu0 %v1807, 96
  %v1809 = vpop.permute.xlu0 %1808
  %vm1810 = vcmask 130048
  %s1811 = scalar_lea.vmem %s1, 3778
  %1812 = vst.msk [vmem:[%s1811] ss:$8 sm:$0xf] %vm1810, %v1809
  %s1813 = scalar_lea.vmem %s1, 3778
  %1814 = vst.msk [vmem:[%s1813] ss:$8 sm:$0xf0] %vm1810, %v1809
  %s1815 = scalar_lea.vmem %s0, 480
  %v1816 = vld.sshfl [vmem:[%s1815] sm:$0xff pattern:$0xb3a29180]
  %1817 = vrot.lane.b32.xlu0 %v1816, 96
  %v1818 = vpop.permute.xlu0 %1817
  %vm1819 = vcmask 130048
  %s1820 = scalar_lea.vmem %s1, 3842
  %1821 = vst.msk [vmem:[%s1820] ss:$8 sm:$0xf] %vm1819, %v1818
  %s1822 = scalar_lea.vmem %s1, 3842
  %1823 = vst.msk [vmem:[%s1822] ss:$8 sm:$0xf0] %vm1819, %v1818
  %s1824 = scalar_lea.vmem %s0, 484
  %v1825 = vld.sshfl [vmem:[%s1824] sm:$0xff pattern:$0xb3a29180]
  %1826 = vrot.lane.b32.xlu0 %v1825, 96
  %v1827 = vpop.permute.xlu0 %1826
  %vm1828 = vcmask 130048
  %s1829 = scalar_lea.vmem %s1, 3906
  %1830 = vst.msk [vmem:[%s1829] ss:$8 sm:$0xf] %vm1828, %v1827
  %s1831 = scalar_lea.vmem %s1, 3906
  %1832 = vst.msk [vmem:[%s1831] ss:$8 sm:$0xf0] %vm1828, %v1827
  %s1833 = scalar_lea.vmem %s0, 496
  %v1834 = vld.sshfl [vmem:[%s1833] sm:$0xff pattern:$0xb3a29180]
  %1835 = vrot.lane.b32.xlu0 %v1834, 96
  %v1836 = vpop.permute.xlu0 %1835
  %vm1837 = vcmask 130048
  %s1838 = scalar_lea.vmem %s1, 3970
  %1839 = vst.msk [vmem:[%s1838] ss:$8 sm:$0xf] %vm1837, %v1836
  %s1840 = scalar_lea.vmem %s1, 3970
  %1841 = vst.msk [vmem:[%s1840] ss:$8 sm:$0xf0] %vm1837, %v1836
  %s1842 = scalar_lea.vmem %s0, 500
  %v1843 = vld.sshfl [vmem:[%s1842] sm:$0xff pattern:$0xb3a29180]
  %1844 = vrot.lane.b32.xlu0 %v1843, 96
  %v1845 = vpop.permute.xlu0 %1844
  %vm1846 = vcmask 130048
  %s1847 = scalar_lea.vmem %s1, 4034
  %1848 = vst.msk [vmem:[%s1847] ss:$8 sm:$0xf] %vm1846, %v1845
  %s1849 = scalar_lea.vmem %s1, 4034
  %1850 = vst.msk [vmem:[%s1849] ss:$8 sm:$0xf0] %vm1846, %v1845
  %v1851 = vld.sshfl [vmem:[%s0] sm:$0xff pattern:$0xb3a29180]
  %1852 = vrot.lane.b32.xlu0 %v1851, 80
  %v1853 = vpop.permute.xlu0 %1852
  %vm1854 = vcmask 130048
  %s1855 = scalar_lea.vmem %s1, 3
  %1856 = vst.msk [vmem:[%s1855] ss:$8 sm:$0xf] %vm1854, %v1853
  %s1857 = scalar_lea.vmem %s1, 3
  %1858 = vst.msk [vmem:[%s1857] ss:$8 sm:$0xf0] %vm1854, %v1853
  %s1859 = scalar_lea.vmem %s0, 4
  %v1860 = vld.sshfl [vmem:[%s1859] sm:$0xff pattern:$0xb3a29180]
  %1861 = vrot.lane.b32.xlu0 %v1860, 80
  %v1862 = vpop.permute.xlu0 %1861
  %vm1863 = vcmask 130048
  %s1864 = scalar_lea.vmem %s1, 67
  %1865 = vst.msk [vmem:[%s1864] ss:$8 sm:$0xf] %vm1863, %v1862
  %s1866 = scalar_lea.vmem %s1, 67
  %1867 = vst.msk [vmem:[%s1866] ss:$8 sm:$0xf0] %vm1863, %v1862
  %s1868 = scalar_lea.vmem %s0, 16
  %v1869 = vld.sshfl [vmem:[%s1868] sm:$0xff pattern:$0xb3a29180]
  %1870 = vrot.lane.b32.xlu0 %v1869, 80
  %v1871 = vpop.permute.xlu0 %1870
  %vm1872 = vcmask 130048
  %s1873 = scalar_lea.vmem %s1, 131
  %1874 = vst.msk [vmem:[%s1873] ss:$8 sm:$0xf] %vm1872, %v1871
  %s1875 = scalar_lea.vmem %s1, 131
  %1876 = vst.msk [vmem:[%s1875] ss:$8 sm:$0xf0] %vm1872, %v1871
  %s1877 = scalar_lea.vmem %s0, 20
  %v1878 = vld.sshfl [vmem:[%s1877] sm:$0xff pattern:$0xb3a29180]
  %1879 = vrot.lane.b32.xlu0 %v1878, 80
  %v1880 = vpop.permute.xlu0 %1879
  %vm1881 = vcmask 130048
  %s1882 = scalar_lea.vmem %s1, 195
  %1883 = vst.msk [vmem:[%s1882] ss:$8 sm:$0xf] %vm1881, %v1880
  %s1884 = scalar_lea.vmem %s1, 195
  %1885 = vst.msk [vmem:[%s1884] ss:$8 sm:$0xf0] %vm1881, %v1880
  %s1886 = scalar_lea.vmem %s0, 32
  %v1887 = vld.sshfl [vmem:[%s1886] sm:$0xff pattern:$0xb3a29180]
  %1888 = vrot.lane.b32.xlu0 %v1887, 80
  %v1889 = vpop.permute.xlu0 %1888
  %vm1890 = vcmask 130048
  %s1891 = scalar_lea.vmem %s1, 259
  %1892 = vst.msk [vmem:[%s1891] ss:$8 sm:$0xf] %vm1890, %v1889
  %s1893 = scalar_lea.vmem %s1, 259
  %1894 = vst.msk [vmem:[%s1893] ss:$8 sm:$0xf0] %vm1890, %v1889
  %s1895 = scalar_lea.vmem %s0, 36
  %v1896 = vld.sshfl [vmem:[%s1895] sm:$0xff pattern:$0xb3a29180]
  %1897 = vrot.lane.b32.xlu0 %v1896, 80
  %v1898 = vpop.permute.xlu0 %1897
  %vm1899 = vcmask 130048
  %s1900 = scalar_lea.vmem %s1, 323
  %1901 = vst.msk [vmem:[%s1900] ss:$8 sm:$0xf] %vm1899, %v1898
  %s1902 = scalar_lea.vmem %s1, 323
  %1903 = vst.msk [vmem:[%s1902] ss:$8 sm:$0xf0] %vm1899, %v1898
  %s1904 = scalar_lea.vmem %s0, 48
  %v1905 = vld.sshfl [vmem:[%s1904] sm:$0xff pattern:$0xb3a29180]
  %1906 = vrot.lane.b32.xlu0 %v1905, 80
  %v1907 = vpop.permute.xlu0 %1906
  %vm1908 = vcmask 130048
  %s1909 = scalar_lea.vmem %s1, 387
  %1910 = vst.msk [vmem:[%s1909] ss:$8 sm:$0xf] %vm1908, %v1907
  %s1911 = scalar_lea.vmem %s1, 387
  %1912 = vst.msk [vmem:[%s1911] ss:$8 sm:$0xf0] %vm1908, %v1907
  %s1913 = scalar_lea.vmem %s0, 52
  %v1914 = vld.sshfl [vmem:[%s1913] sm:$0xff pattern:$0xb3a29180]
  %1915 = vrot.lane.b32.xlu0 %v1914, 80
  %v1916 = vpop.permute.xlu0 %1915
  %vm1917 = vcmask 130048
  %s1918 = scalar_lea.vmem %s1, 451
  %1919 = vst.msk [vmem:[%s1918] ss:$8 sm:$0xf] %vm1917, %v1916
  %s1920 = scalar_lea.vmem %s1, 451
  %1921 = vst.msk [vmem:[%s1920] ss:$8 sm:$0xf0] %vm1917, %v1916
  %s1922 = scalar_lea.vmem %s0, 64
  %v1923 = vld.sshfl [vmem:[%s1922] sm:$0xff pattern:$0xb3a29180]
  %1924 = vrot.lane.b32.xlu0 %v1923, 80
  %v1925 = vpop.permute.xlu0 %1924
  %vm1926 = vcmask 130048
  %s1927 = scalar_lea.vmem %s1, 515
  %1928 = vst.msk [vmem:[%s1927] ss:$8 sm:$0xf] %vm1926, %v1925
  %s1929 = scalar_lea.vmem %s1, 515
  %1930 = vst.msk [vmem:[%s1929] ss:$8 sm:$0xf0] %vm1926, %v1925
  %s1931 = scalar_lea.vmem %s0, 68
  %v1932 = vld.sshfl [vmem:[%s1931] sm:$0xff pattern:$0xb3a29180]
  %1933 = vrot.lane.b32.xlu0 %v1932, 80
  %v1934 = vpop.permute.xlu0 %1933
  %vm1935 = vcmask 130048
  %s1936 = scalar_lea.vmem %s1, 579
  %1937 = vst.msk [vmem:[%s1936] ss:$8 sm:$0xf] %vm1935, %v1934
  %s1938 = scalar_lea.vmem %s1, 579
  %1939 = vst.msk [vmem:[%s1938] ss:$8 sm:$0xf0] %vm1935, %v1934
  %s1940 = scalar_lea.vmem %s0, 80
  %v1941 = vld.sshfl [vmem:[%s1940] sm:$0xff pattern:$0xb3a29180]
  %1942 = vrot.lane.b32.xlu0 %v1941, 80
  %v1943 = vpop.permute.xlu0 %1942
  %vm1944 = vcmask 130048
  %s1945 = scalar_lea.vmem %s1, 643
  %1946 = vst.msk [vmem:[%s1945] ss:$8 sm:$0xf] %vm1944, %v1943
  %s1947 = scalar_lea.vmem %s1, 643
  %1948 = vst.msk [vmem:[%s1947] ss:$8 sm:$0xf0] %vm1944, %v1943
  %s1949 = scalar_lea.vmem %s0, 84
  %v1950 = vld.sshfl [vmem:[%s1949] sm:$0xff pattern:$0xb3a29180]
  %1951 = vrot.lane.b32.xlu0 %v1950, 80
  %v1952 = vpop.permute.xlu0 %1951
  %vm1953 = vcmask 130048
  %s1954 = scalar_lea.vmem %s1, 707
  %1955 = vst.msk [vmem:[%s1954] ss:$8 sm:$0xf] %vm1953, %v1952
  %s1956 = scalar_lea.vmem %s1, 707
  %1957 = vst.msk [vmem:[%s1956] ss:$8 sm:$0xf0] %vm1953, %v1952
  %s1958 = scalar_lea.vmem %s0, 96
  %v1959 = vld.sshfl [vmem:[%s1958] sm:$0xff pattern:$0xb3a29180]
  %1960 = vrot.lane.b32.xlu0 %v1959, 80
  %v1961 = vpop.permute.xlu0 %1960
  %vm1962 = vcmask 130048
  %s1963 = scalar_lea.vmem %s1, 771
  %1964 = vst.msk [vmem:[%s1963] ss:$8 sm:$0xf] %vm1962, %v1961
  %s1965 = scalar_lea.vmem %s1, 771
  %1966 = vst.msk [vmem:[%s1965] ss:$8 sm:$0xf0] %vm1962, %v1961
  %s1967 = scalar_lea.vmem %s0, 100
  %v1968 = vld.sshfl [vmem:[%s1967] sm:$0xff pattern:$0xb3a29180]
  %1969 = vrot.lane.b32.xlu0 %v1968, 80
  %v1970 = vpop.permute.xlu0 %1969
  %vm1971 = vcmask 130048
  %s1972 = scalar_lea.vmem %s1, 835
  %1973 = vst.msk [vmem:[%s1972] ss:$8 sm:$0xf] %vm1971, %v1970
  %s1974 = scalar_lea.vmem %s1, 835
  %1975 = vst.msk [vmem:[%s1974] ss:$8 sm:$0xf0] %vm1971, %v1970
  %s1976 = scalar_lea.vmem %s0, 112
  %v1977 = vld.sshfl [vmem:[%s1976] sm:$0xff pattern:$0xb3a29180]
  %1978 = vrot.lane.b32.xlu0 %v1977, 80
  %v1979 = vpop.permute.xlu0 %1978
  %vm1980 = vcmask 130048
  %s1981 = scalar_lea.vmem %s1, 899
  %1982 = vst.msk [vmem:[%s1981] ss:$8 sm:$0xf] %vm1980, %v1979
  %s1983 = scalar_lea.vmem %s1, 899
  %1984 = vst.msk [vmem:[%s1983] ss:$8 sm:$0xf0] %vm1980, %v1979
  %s1985 = scalar_lea.vmem %s0, 116
  %v1986 = vld.sshfl [vmem:[%s1985] sm:$0xff pattern:$0xb3a29180]
  %1987 = vrot.lane.b32.xlu0 %v1986, 80
  %v1988 = vpop.permute.xlu0 %1987
  %vm1989 = vcmask 130048
  %s1990 = scalar_lea.vmem %s1, 963
  %1991 = vst.msk [vmem:[%s1990] ss:$8 sm:$0xf] %vm1989, %v1988
  %s1992 = scalar_lea.vmem %s1, 963
  %1993 = vst.msk [vmem:[%s1992] ss:$8 sm:$0xf0] %vm1989, %v1988
  %s1994 = scalar_lea.vmem %s0, 128
  %v1995 = vld.sshfl [vmem:[%s1994] sm:$0xff pattern:$0xb3a29180]
  %1996 = vrot.lane.b32.xlu0 %v1995, 80
  %v1997 = vpop.permute.xlu0 %1996
  %vm1998 = vcmask 130048
  %s1999 = scalar_lea.vmem %s1, 1027
  %2000 = vst.msk [vmem:[%s1999] ss:$8 sm:$0xf] %vm1998, %v1997
  %s2001 = scalar_lea.vmem %s1, 1027
  %2002 = vst.msk [vmem:[%s2001] ss:$8 sm:$0xf0] %vm1998, %v1997
  %s2003 = scalar_lea.vmem %s0, 132
  %v2004 = vld.sshfl [vmem:[%s2003] sm:$0xff pattern:$0xb3a29180]
  %2005 = vrot.lane.b32.xlu0 %v2004, 80
  %v2006 = vpop.permute.xlu0 %2005
  %vm2007 = vcmask 130048
  %s2008 = scalar_lea.vmem %s1, 1091
  %2009 = vst.msk [vmem:[%s2008] ss:$8 sm:$0xf] %vm2007, %v2006
  %s2010 = scalar_lea.vmem %s1, 1091
  %2011 = vst.msk [vmem:[%s2010] ss:$8 sm:$0xf0] %vm2007, %v2006
  %s2012 = scalar_lea.vmem %s0, 144
  %v2013 = vld.sshfl [vmem:[%s2012] sm:$0xff pattern:$0xb3a29180]
  %2014 = vrot.lane.b32.xlu0 %v2013, 80
  %v2015 = vpop.permute.xlu0 %2014
  %vm2016 = vcmask 130048
  %s2017 = scalar_lea.vmem %s1, 1155
  %2018 = vst.msk [vmem:[%s2017] ss:$8 sm:$0xf] %vm2016, %v2015
  %s2019 = scalar_lea.vmem %s1, 1155
  %2020 = vst.msk [vmem:[%s2019] ss:$8 sm:$0xf0] %vm2016, %v2015
  %s2021 = scalar_lea.vmem %s0, 148
  %v2022 = vld.sshfl [vmem:[%s2021] sm:$0xff pattern:$0xb3a29180]
  %2023 = vrot.lane.b32.xlu0 %v2022, 80
  %v2024 = vpop.permute.xlu0 %2023
  %vm2025 = vcmask 130048
  %s2026 = scalar_lea.vmem %s1, 1219
  %2027 = vst.msk [vmem:[%s2026] ss:$8 sm:$0xf] %vm2025, %v2024
  %s2028 = scalar_lea.vmem %s1, 1219
  %2029 = vst.msk [vmem:[%s2028] ss:$8 sm:$0xf0] %vm2025, %v2024
  %s2030 = scalar_lea.vmem %s0, 160
  %v2031 = vld.sshfl [vmem:[%s2030] sm:$0xff pattern:$0xb3a29180]
  %2032 = vrot.lane.b32.xlu0 %v2031, 80
  %v2033 = vpop.permute.xlu0 %2032
  %vm2034 = vcmask 130048
  %s2035 = scalar_lea.vmem %s1, 1283
  %2036 = vst.msk [vmem:[%s2035] ss:$8 sm:$0xf] %vm2034, %v2033
  %s2037 = scalar_lea.vmem %s1, 1283
  %2038 = vst.msk [vmem:[%s2037] ss:$8 sm:$0xf0] %vm2034, %v2033
  %s2039 = scalar_lea.vmem %s0, 164
  %v2040 = vld.sshfl [vmem:[%s2039] sm:$0xff pattern:$0xb3a29180]
  %2041 = vrot.lane.b32.xlu0 %v2040, 80
  %v2042 = vpop.permute.xlu0 %2041
  %vm2043 = vcmask 130048
  %s2044 = scalar_lea.vmem %s1, 1347
  %2045 = vst.msk [vmem:[%s2044] ss:$8 sm:$0xf] %vm2043, %v2042
  %s2046 = scalar_lea.vmem %s1, 1347
  %2047 = vst.msk [vmem:[%s2046] ss:$8 sm:$0xf0] %vm2043, %v2042
  %s2048 = scalar_lea.vmem %s0, 176
  %v2049 = vld.sshfl [vmem:[%s2048] sm:$0xff pattern:$0xb3a29180]
  %2050 = vrot.lane.b32.xlu0 %v2049, 80
  %v2051 = vpop.permute.xlu0 %2050
  %vm2052 = vcmask 130048
  %s2053 = scalar_lea.vmem %s1, 1411
  %2054 = vst.msk [vmem:[%s2053] ss:$8 sm:$0xf] %vm2052, %v2051
  %s2055 = scalar_lea.vmem %s1, 1411
  %2056 = vst.msk [vmem:[%s2055] ss:$8 sm:$0xf0] %vm2052, %v2051
  %s2057 = scalar_lea.vmem %s0, 180
  %v2058 = vld.sshfl [vmem:[%s2057] sm:$0xff pattern:$0xb3a29180]
  %2059 = vrot.lane.b32.xlu0 %v2058, 80
  %v2060 = vpop.permute.xlu0 %2059
  %vm2061 = vcmask 130048
  %s2062 = scalar_lea.vmem %s1, 1475
  %2063 = vst.msk [vmem:[%s2062] ss:$8 sm:$0xf] %vm2061, %v2060
  %s2064 = scalar_lea.vmem %s1, 1475
  %2065 = vst.msk [vmem:[%s2064] ss:$8 sm:$0xf0] %vm2061, %v2060
  %s2066 = scalar_lea.vmem %s0, 192
  %v2067 = vld.sshfl [vmem:[%s2066] sm:$0xff pattern:$0xb3a29180]
  %2068 = vrot.lane.b32.xlu0 %v2067, 80
  %v2069 = vpop.permute.xlu0 %2068
  %vm2070 = vcmask 130048
  %s2071 = scalar_lea.vmem %s1, 1539
  %2072 = vst.msk [vmem:[%s2071] ss:$8 sm:$0xf] %vm2070, %v2069
  %s2073 = scalar_lea.vmem %s1, 1539
  %2074 = vst.msk [vmem:[%s2073] ss:$8 sm:$0xf0] %vm2070, %v2069
  %s2075 = scalar_lea.vmem %s0, 196
  %v2076 = vld.sshfl [vmem:[%s2075] sm:$0xff pattern:$0xb3a29180]
  %2077 = vrot.lane.b32.xlu0 %v2076, 80
  %v2078 = vpop.permute.xlu0 %2077
  %vm2079 = vcmask 130048
  %s2080 = scalar_lea.vmem %s1, 1603
  %2081 = vst.msk [vmem:[%s2080] ss:$8 sm:$0xf] %vm2079, %v2078
  %s2082 = scalar_lea.vmem %s1, 1603
  %2083 = vst.msk [vmem:[%s2082] ss:$8 sm:$0xf0] %vm2079, %v2078
  %s2084 = scalar_lea.vmem %s0, 208
  %v2085 = vld.sshfl [vmem:[%s2084] sm:$0xff pattern:$0xb3a29180]
  %2086 = vrot.lane.b32.xlu0 %v2085, 80
  %v2087 = vpop.permute.xlu0 %2086
  %vm2088 = vcmask 130048
  %s2089 = scalar_lea.vmem %s1, 1667
  %2090 = vst.msk [vmem:[%s2089] ss:$8 sm:$0xf] %vm2088, %v2087
  %s2091 = scalar_lea.vmem %s1, 1667
  %2092 = vst.msk [vmem:[%s2091] ss:$8 sm:$0xf0] %vm2088, %v2087
  %s2093 = scalar_lea.vmem %s0, 212
  %v2094 = vld.sshfl [vmem:[%s2093] sm:$0xff pattern:$0xb3a29180]
  %2095 = vrot.lane.b32.xlu0 %v2094, 80
  %v2096 = vpop.permute.xlu0 %2095
  %vm2097 = vcmask 130048
  %s2098 = scalar_lea.vmem %s1, 1731
  %2099 = vst.msk [vmem:[%s2098] ss:$8 sm:$0xf] %vm2097, %v2096
  %s2100 = scalar_lea.vmem %s1, 1731
  %2101 = vst.msk [vmem:[%s2100] ss:$8 sm:$0xf0] %vm2097, %v2096
  %s2102 = scalar_lea.vmem %s0, 224
  %v2103 = vld.sshfl [vmem:[%s2102] sm:$0xff pattern:$0xb3a29180]
  %2104 = vrot.lane.b32.xlu0 %v2103, 80
  %v2105 = vpop.permute.xlu0 %2104
  %vm2106 = vcmask 130048
  %s2107 = scalar_lea.vmem %s1, 1795
  %2108 = vst.msk [vmem:[%s2107] ss:$8 sm:$0xf] %vm2106, %v2105
  %s2109 = scalar_lea.vmem %s1, 1795
  %2110 = vst.msk [vmem:[%s2109] ss:$8 sm:$0xf0] %vm2106, %v2105
  %s2111 = scalar_lea.vmem %s0, 228
  %v2112 = vld.sshfl [vmem:[%s2111] sm:$0xff pattern:$0xb3a29180]
  %2113 = vrot.lane.b32.xlu0 %v2112, 80
  %v2114 = vpop.permute.xlu0 %2113
  %vm2115 = vcmask 130048
  %s2116 = scalar_lea.vmem %s1, 1859
  %2117 = vst.msk [vmem:[%s2116] ss:$8 sm:$0xf] %vm2115, %v2114
  %s2118 = scalar_lea.vmem %s1, 1859
  %2119 = vst.msk [vmem:[%s2118] ss:$8 sm:$0xf0] %vm2115, %v2114
  %s2120 = scalar_lea.vmem %s0, 240
  %v2121 = vld.sshfl [vmem:[%s2120] sm:$0xff pattern:$0xb3a29180]
  %2122 = vrot.lane.b32.xlu0 %v2121, 80
  %v2123 = vpop.permute.xlu0 %2122
  %vm2124 = vcmask 130048
  %s2125 = scalar_lea.vmem %s1, 1923
  %2126 = vst.msk [vmem:[%s2125] ss:$8 sm:$0xf] %vm2124, %v2123
  %s2127 = scalar_lea.vmem %s1, 1923
  %2128 = vst.msk [vmem:[%s2127] ss:$8 sm:$0xf0] %vm2124, %v2123
  %s2129 = scalar_lea.vmem %s0, 244
  %v2130 = vld.sshfl [vmem:[%s2129] sm:$0xff pattern:$0xb3a29180]
  %2131 = vrot.lane.b32.xlu0 %v2130, 80
  %v2132 = vpop.permute.xlu0 %2131
  %vm2133 = vcmask 130048
  %s2134 = scalar_lea.vmem %s1, 1987
  %2135 = vst.msk [vmem:[%s2134] ss:$8 sm:$0xf] %vm2133, %v2132
  %s2136 = scalar_lea.vmem %s1, 1987
  %2137 = vst.msk [vmem:[%s2136] ss:$8 sm:$0xf0] %vm2133, %v2132
  %s2138 = scalar_lea.vmem %s0, 256
  %v2139 = vld.sshfl [vmem:[%s2138] sm:$0xff pattern:$0xb3a29180]
  %2140 = vrot.lane.b32.xlu0 %v2139, 80
  %v2141 = vpop.permute.xlu0 %2140
  %vm2142 = vcmask 130048
  %s2143 = scalar_lea.vmem %s1, 2051
  %2144 = vst.msk [vmem:[%s2143] ss:$8 sm:$0xf] %vm2142, %v2141
  %s2145 = scalar_lea.vmem %s1, 2051
  %2146 = vst.msk [vmem:[%s2145] ss:$8 sm:$0xf0] %vm2142, %v2141
  %s2147 = scalar_lea.vmem %s0, 260
  %v2148 = vld.sshfl [vmem:[%s2147] sm:$0xff pattern:$0xb3a29180]
  %2149 = vrot.lane.b32.xlu0 %v2148, 80
  %v2150 = vpop.permute.xlu0 %2149
  %vm2151 = vcmask 130048
  %s2152 = scalar_lea.vmem %s1, 2115
  %2153 = vst.msk [vmem:[%s2152] ss:$8 sm:$0xf] %vm2151, %v2150
  %s2154 = scalar_lea.vmem %s1, 2115
  %2155 = vst.msk [vmem:[%s2154] ss:$8 sm:$0xf0] %vm2151, %v2150
  %s2156 = scalar_lea.vmem %s0, 272
  %v2157 = vld.sshfl [vmem:[%s2156] sm:$0xff pattern:$0xb3a29180]
  %2158 = vrot.lane.b32.xlu0 %v2157, 80
  %v2159 = vpop.permute.xlu0 %2158
  %vm2160 = vcmask 130048
  %s2161 = scalar_lea.vmem %s1, 2179
  %2162 = vst.msk [vmem:[%s2161] ss:$8 sm:$0xf] %vm2160, %v2159
  %s2163 = scalar_lea.vmem %s1, 2179
  %2164 = vst.msk [vmem:[%s2163] ss:$8 sm:$0xf0] %vm2160, %v2159
  %s2165 = scalar_lea.vmem %s0, 276
  %v2166 = vld.sshfl [vmem:[%s2165] sm:$0xff pattern:$0xb3a29180]
  %2167 = vrot.lane.b32.xlu0 %v2166, 80
  %v2168 = vpop.permute.xlu0 %2167
  %vm2169 = vcmask 130048
  %s2170 = scalar_lea.vmem %s1, 2243
  %2171 = vst.msk [vmem:[%s2170] ss:$8 sm:$0xf] %vm2169, %v2168
  %s2172 = scalar_lea.vmem %s1, 2243
  %2173 = vst.msk [vmem:[%s2172] ss:$8 sm:$0xf0] %vm2169, %v2168
  %s2174 = scalar_lea.vmem %s0, 288
  %v2175 = vld.sshfl [vmem:[%s2174] sm:$0xff pattern:$0xb3a29180]
  %2176 = vrot.lane.b32.xlu0 %v2175, 80
  %v2177 = vpop.permute.xlu0 %2176
  %vm2178 = vcmask 130048
  %s2179 = scalar_lea.vmem %s1, 2307
  %2180 = vst.msk [vmem:[%s2179] ss:$8 sm:$0xf] %vm2178, %v2177
  %s2181 = scalar_lea.vmem %s1, 2307
  %2182 = vst.msk [vmem:[%s2181] ss:$8 sm:$0xf0] %vm2178, %v2177
  %s2183 = scalar_lea.vmem %s0, 292
  %v2184 = vld.sshfl [vmem:[%s2183] sm:$0xff pattern:$0xb3a29180]
  %2185 = vrot.lane.b32.xlu0 %v2184, 80
  %v2186 = vpop.permute.xlu0 %2185
  %vm2187 = vcmask 130048
  %s2188 = scalar_lea.vmem %s1, 2371
  %2189 = vst.msk [vmem:[%s2188] ss:$8 sm:$0xf] %vm2187, %v2186
  %s2190 = scalar_lea.vmem %s1, 2371
  %2191 = vst.msk [vmem:[%s2190] ss:$8 sm:$0xf0] %vm2187, %v2186
  %s2192 = scalar_lea.vmem %s0, 304
  %v2193 = vld.sshfl [vmem:[%s2192] sm:$0xff pattern:$0xb3a29180]
  %2194 = vrot.lane.b32.xlu0 %v2193, 80
  %v2195 = vpop.permute.xlu0 %2194
  %vm2196 = vcmask 130048
  %s2197 = scalar_lea.vmem %s1, 2435
  %2198 = vst.msk [vmem:[%s2197] ss:$8 sm:$0xf] %vm2196, %v2195
  %s2199 = scalar_lea.vmem %s1, 2435
  %2200 = vst.msk [vmem:[%s2199] ss:$8 sm:$0xf0] %vm2196, %v2195
  %s2201 = scalar_lea.vmem %s0, 308
  %v2202 = vld.sshfl [vmem:[%s2201] sm:$0xff pattern:$0xb3a29180]
  %2203 = vrot.lane.b32.xlu0 %v2202, 80
  %v2204 = vpop.permute.xlu0 %2203
  %vm2205 = vcmask 130048
  %s2206 = scalar_lea.vmem %s1, 2499
  %2207 = vst.msk [vmem:[%s2206] ss:$8 sm:$0xf] %vm2205, %v2204
  %s2208 = scalar_lea.vmem %s1, 2499
  %2209 = vst.msk [vmem:[%s2208] ss:$8 sm:$0xf0] %vm2205, %v2204
  %s2210 = scalar_lea.vmem %s0, 320
  %v2211 = vld.sshfl [vmem:[%s2210] sm:$0xff pattern:$0xb3a29180]
  %2212 = vrot.lane.b32.xlu0 %v2211, 80
  %v2213 = vpop.permute.xlu0 %2212
  %vm2214 = vcmask 130048
  %s2215 = scalar_lea.vmem %s1, 2563
  %2216 = vst.msk [vmem:[%s2215] ss:$8 sm:$0xf] %vm2214, %v2213
  %s2217 = scalar_lea.vmem %s1, 2563
  %2218 = vst.msk [vmem:[%s2217] ss:$8 sm:$0xf0] %vm2214, %v2213
  %s2219 = scalar_lea.vmem %s0, 324
  %v2220 = vld.sshfl [vmem:[%s2219] sm:$0xff pattern:$0xb3a29180]
  %2221 = vrot.lane.b32.xlu0 %v2220, 80
  %v2222 = vpop.permute.xlu0 %2221
  %vm2223 = vcmask 130048
  %s2224 = scalar_lea.vmem %s1, 2627
  %2225 = vst.msk [vmem:[%s2224] ss:$8 sm:$0xf] %vm2223, %v2222
  %s2226 = scalar_lea.vmem %s1, 2627
  %2227 = vst.msk [vmem:[%s2226] ss:$8 sm:$0xf0] %vm2223, %v2222
  %s2228 = scalar_lea.vmem %s0, 336
  %v2229 = vld.sshfl [vmem:[%s2228] sm:$0xff pattern:$0xb3a29180]
  %2230 = vrot.lane.b32.xlu0 %v2229, 80
  %v2231 = vpop.permute.xlu0 %2230
  %vm2232 = vcmask 130048
  %s2233 = scalar_lea.vmem %s1, 2691
  %2234 = vst.msk [vmem:[%s2233] ss:$8 sm:$0xf] %vm2232, %v2231
  %s2235 = scalar_lea.vmem %s1, 2691
  %2236 = vst.msk [vmem:[%s2235] ss:$8 sm:$0xf0] %vm2232, %v2231
  %s2237 = scalar_lea.vmem %s0, 340
  %v2238 = vld.sshfl [vmem:[%s2237] sm:$0xff pattern:$0xb3a29180]
  %2239 = vrot.lane.b32.xlu0 %v2238, 80
  %v2240 = vpop.permute.xlu0 %2239
  %vm2241 = vcmask 130048
  %s2242 = scalar_lea.vmem %s1, 2755
  %2243 = vst.msk [vmem:[%s2242] ss:$8 sm:$0xf] %vm2241, %v2240
  %s2244 = scalar_lea.vmem %s1, 2755
  %2245 = vst.msk [vmem:[%s2244] ss:$8 sm:$0xf0] %vm2241, %v2240
  %s2246 = scalar_lea.vmem %s0, 352
  %v2247 = vld.sshfl [vmem:[%s2246] sm:$0xff pattern:$0xb3a29180]
  %2248 = vrot.lane.b32.xlu0 %v2247, 80
  %v2249 = vpop.permute.xlu0 %2248
  %vm2250 = vcmask 130048
  %s2251 = scalar_lea.vmem %s1, 2819
  %2252 = vst.msk [vmem:[%s2251] ss:$8 sm:$0xf] %vm2250, %v2249
  %s2253 = scalar_lea.vmem %s1, 2819
  %2254 = vst.msk [vmem:[%s2253] ss:$8 sm:$0xf0] %vm2250, %v2249
  %s2255 = scalar_lea.vmem %s0, 356
  %v2256 = vld.sshfl [vmem:[%s2255] sm:$0xff pattern:$0xb3a29180]
  %2257 = vrot.lane.b32.xlu0 %v2256, 80
  %v2258 = vpop.permute.xlu0 %2257
  %vm2259 = vcmask 130048
  %s2260 = scalar_lea.vmem %s1, 2883
  %2261 = vst.msk [vmem:[%s2260] ss:$8 sm:$0xf] %vm2259, %v2258
  %s2262 = scalar_lea.vmem %s1, 2883
  %2263 = vst.msk [vmem:[%s2262] ss:$8 sm:$0xf0] %vm2259, %v2258
  %s2264 = scalar_lea.vmem %s0, 368
  %v2265 = vld.sshfl [vmem:[%s2264] sm:$0xff pattern:$0xb3a29180]
  %2266 = vrot.lane.b32.xlu0 %v2265, 80
  %v2267 = vpop.permute.xlu0 %2266
  %vm2268 = vcmask 130048
  %s2269 = scalar_lea.vmem %s1, 2947
  %2270 = vst.msk [vmem:[%s2269] ss:$8 sm:$0xf] %vm2268, %v2267
  %s2271 = scalar_lea.vmem %s1, 2947
  %2272 = vst.msk [vmem:[%s2271] ss:$8 sm:$0xf0] %vm2268, %v2267
  %s2273 = scalar_lea.vmem %s0, 372
  %v2274 = vld.sshfl [vmem:[%s2273] sm:$0xff pattern:$0xb3a29180]
  %2275 = vrot.lane.b32.xlu0 %v2274, 80
  %v2276 = vpop.permute.xlu0 %2275
  %vm2277 = vcmask 130048
  %s2278 = scalar_lea.vmem %s1, 3011
  %2279 = vst.msk [vmem:[%s2278] ss:$8 sm:$0xf] %vm2277, %v2276
  %s2280 = scalar_lea.vmem %s1, 3011
  %2281 = vst.msk [vmem:[%s2280] ss:$8 sm:$0xf0] %vm2277, %v2276
  %s2282 = scalar_lea.vmem %s0, 384
  %v2283 = vld.sshfl [vmem:[%s2282] sm:$0xff pattern:$0xb3a29180]
  %2284 = vrot.lane.b32.xlu0 %v2283, 80
  %v2285 = vpop.permute.xlu0 %2284
  %vm2286 = vcmask 130048
  %s2287 = scalar_lea.vmem %s1, 3075
  %2288 = vst.msk [vmem:[%s2287] ss:$8 sm:$0xf] %vm2286, %v2285
  %s2289 = scalar_lea.vmem %s1, 3075
  %2290 = vst.msk [vmem:[%s2289] ss:$8 sm:$0xf0] %vm2286, %v2285
  %s2291 = scalar_lea.vmem %s0, 388
  %v2292 = vld.sshfl [vmem:[%s2291] sm:$0xff pattern:$0xb3a29180]
  %2293 = vrot.lane.b32.xlu0 %v2292, 80
  %v2294 = vpop.permute.xlu0 %2293
  %vm2295 = vcmask 130048
  %s2296 = scalar_lea.vmem %s1, 3139
  %2297 = vst.msk [vmem:[%s2296] ss:$8 sm:$0xf] %vm2295, %v2294
  %s2298 = scalar_lea.vmem %s1, 3139
  %2299 = vst.msk [vmem:[%s2298] ss:$8 sm:$0xf0] %vm2295, %v2294
  %s2300 = scalar_lea.vmem %s0, 400
  %v2301 = vld.sshfl [vmem:[%s2300] sm:$0xff pattern:$0xb3a29180]
  %2302 = vrot.lane.b32.xlu0 %v2301, 80
  %v2303 = vpop.permute.xlu0 %2302
  %vm2304 = vcmask 130048
  %s2305 = scalar_lea.vmem %s1, 3203
  %2306 = vst.msk [vmem:[%s2305] ss:$8 sm:$0xf] %vm2304, %v2303
  %s2307 = scalar_lea.vmem %s1, 3203
  %2308 = vst.msk [vmem:[%s2307] ss:$8 sm:$0xf0] %vm2304, %v2303
  %s2309 = scalar_lea.vmem %s0, 404
  %v2310 = vld.sshfl [vmem:[%s2309] sm:$0xff pattern:$0xb3a29180]
  %2311 = vrot.lane.b32.xlu0 %v2310, 80
  %v2312 = vpop.permute.xlu0 %2311
  %vm2313 = vcmask 130048
  %s2314 = scalar_lea.vmem %s1, 3267
  %2315 = vst.msk [vmem:[%s2314] ss:$8 sm:$0xf] %vm2313, %v2312
  %s2316 = scalar_lea.vmem %s1, 3267
  %2317 = vst.msk [vmem:[%s2316] ss:$8 sm:$0xf0] %vm2313, %v2312
  %s2318 = scalar_lea.vmem %s0, 416
  %v2319 = vld.sshfl [vmem:[%s2318] sm:$0xff pattern:$0xb3a29180]
  %2320 = vrot.lane.b32.xlu0 %v2319, 80
  %v2321 = vpop.permute.xlu0 %2320
  %vm2322 = vcmask 130048
  %s2323 = scalar_lea.vmem %s1, 3331
  %2324 = vst.msk [vmem:[%s2323] ss:$8 sm:$0xf] %vm2322, %v2321
  %s2325 = scalar_lea.vmem %s1, 3331
  %2326 = vst.msk [vmem:[%s2325] ss:$8 sm:$0xf0] %vm2322, %v2321
  %s2327 = scalar_lea.vmem %s0, 420
  %v2328 = vld.sshfl [vmem:[%s2327] sm:$0xff pattern:$0xb3a29180]
  %2329 = vrot.lane.b32.xlu0 %v2328, 80
  %v2330 = vpop.permute.xlu0 %2329
  %vm2331 = vcmask 130048
  %s2332 = scalar_lea.vmem %s1, 3395
  %2333 = vst.msk [vmem:[%s2332] ss:$8 sm:$0xf] %vm2331, %v2330
  %s2334 = scalar_lea.vmem %s1, 3395
  %2335 = vst.msk [vmem:[%s2334] ss:$8 sm:$0xf0] %vm2331, %v2330
  %s2336 = scalar_lea.vmem %s0, 432
  %v2337 = vld.sshfl [vmem:[%s2336] sm:$0xff pattern:$0xb3a29180]
  %2338 = vrot.lane.b32.xlu0 %v2337, 80
  %v2339 = vpop.permute.xlu0 %2338
  %vm2340 = vcmask 130048
  %s2341 = scalar_lea.vmem %s1, 3459
  %2342 = vst.msk [vmem:[%s2341] ss:$8 sm:$0xf] %vm2340, %v2339
  %s2343 = scalar_lea.vmem %s1, 3459
  %2344 = vst.msk [vmem:[%s2343] ss:$8 sm:$0xf0] %vm2340, %v2339
  %s2345 = scalar_lea.vmem %s0, 436
  %v2346 = vld.sshfl [vmem:[%s2345] sm:$0xff pattern:$0xb3a29180]
  %2347 = vrot.lane.b32.xlu0 %v2346, 80
  %v2348 = vpop.permute.xlu0 %2347
  %vm2349 = vcmask 130048
  %s2350 = scalar_lea.vmem %s1, 3523
  %2351 = vst.msk [vmem:[%s2350] ss:$8 sm:$0xf] %vm2349, %v2348
  %s2352 = scalar_lea.vmem %s1, 3523
  %2353 = vst.msk [vmem:[%s2352] ss:$8 sm:$0xf0] %vm2349, %v2348
  %s2354 = scalar_lea.vmem %s0, 448
  %v2355 = vld.sshfl [vmem:[%s2354] sm:$0xff pattern:$0xb3a29180]
  %2356 = vrot.lane.b32.xlu0 %v2355, 80
  %v2357 = vpop.permute.xlu0 %2356
  %vm2358 = vcmask 130048
  %s2359 = scalar_lea.vmem %s1, 3587
  %2360 = vst.msk [vmem:[%s2359] ss:$8 sm:$0xf] %vm2358, %v2357
  %s2361 = scalar_lea.vmem %s1, 3587
  %2362 = vst.msk [vmem:[%s2361] ss:$8 sm:$0xf0] %vm2358, %v2357
  %s2363 = scalar_lea.vmem %s0, 452
  %v2364 = vld.sshfl [vmem:[%s2363] sm:$0xff pattern:$0xb3a29180]
  %2365 = vrot.lane.b32.xlu0 %v2364, 80
  %v2366 = vpop.permute.xlu0 %2365
  %vm2367 = vcmask 130048
  %s2368 = scalar_lea.vmem %s1, 3651
  %2369 = vst.msk [vmem:[%s2368] ss:$8 sm:$0xf] %vm2367, %v2366
  %s2370 = scalar_lea.vmem %s1, 3651
  %2371 = vst.msk [vmem:[%s2370] ss:$8 sm:$0xf0] %vm2367, %v2366
  %s2372 = scalar_lea.vmem %s0, 464
  %v2373 = vld.sshfl [vmem:[%s2372] sm:$0xff pattern:$0xb3a29180]
  %2374 = vrot.lane.b32.xlu0 %v2373, 80
  %v2375 = vpop.permute.xlu0 %2374
  %vm2376 = vcmask 130048
  %s2377 = scalar_lea.vmem %s1, 3715
  %2378 = vst.msk [vmem:[%s2377] ss:$8 sm:$0xf] %vm2376, %v2375
  %s2379 = scalar_lea.vmem %s1, 3715
  %2380 = vst.msk [vmem:[%s2379] ss:$8 sm:$0xf0] %vm2376, %v2375
  %s2381 = scalar_lea.vmem %s0, 468
  %v2382 = vld.sshfl [vmem:[%s2381] sm:$0xff pattern:$0xb3a29180]
  %2383 = vrot.lane.b32.xlu0 %v2382, 80
  %v2384 = vpop.permute.xlu0 %2383
  %vm2385 = vcmask 130048
  %s2386 = scalar_lea.vmem %s1, 3779
  %2387 = vst.msk [vmem:[%s2386] ss:$8 sm:$0xf] %vm2385, %v2384
  %s2388 = scalar_lea.vmem %s1, 3779
  %2389 = vst.msk [vmem:[%s2388] ss:$8 sm:$0xf0] %vm2385, %v2384
  %s2390 = scalar_lea.vmem %s0, 480
  %v2391 = vld.sshfl [vmem:[%s2390] sm:$0xff pattern:$0xb3a29180]
  %2392 = vrot.lane.b32.xlu0 %v2391, 80
  %v2393 = vpop.permute.xlu0 %2392
  %vm2394 = vcmask 130048
  %s2395 = scalar_lea.vmem %s1, 3843
  %2396 = vst.msk [vmem:[%s2395] ss:$8 sm:$0xf] %vm2394, %v2393
  %s2397 = scalar_lea.vmem %s1, 3843
  %2398 = vst.msk [vmem:[%s2397] ss:$8 sm:$0xf0] %vm2394, %v2393
  %s2399 = scalar_lea.vmem %s0, 484
  %v2400 = vld.sshfl [vmem:[%s2399] sm:$0xff pattern:$0xb3a29180]
  %2401 = vrot.lane.b32.xlu0 %v2400, 80
  %v2402 = vpop.permute.xlu0 %2401
  %vm2403 = vcmask 130048
  %s2404 = scalar_lea.vmem %s1, 3907
  %2405 = vst.msk [vmem:[%s2404] ss:$8 sm:$0xf] %vm2403, %v2402
  %s2406 = scalar_lea.vmem %s1, 3907
  %2407 = vst.msk [vmem:[%s2406] ss:$8 sm:$0xf0] %vm2403, %v2402
  %s2408 = scalar_lea.vmem %s0, 496
  %v2409 = vld.sshfl [vmem:[%s2408] sm:$0xff pattern:$0xb3a29180]
  %2410 = vrot.lane.b32.xlu0 %v2409, 80
  %v2411 = vpop.permute.xlu0 %2410
  %vm2412 = vcmask 130048
  %s2413 = scalar_lea.vmem %s1, 3971
  %2414 = vst.msk [vmem:[%s2413] ss:$8 sm:$0xf] %vm2412, %v2411
  %s2415 = scalar_lea.vmem %s1, 3971
  %2416 = vst.msk [vmem:[%s2415] ss:$8 sm:$0xf0] %vm2412, %v2411
  %s2417 = scalar_lea.vmem %s0, 500
  %v2418 = vld.sshfl [vmem:[%s2417] sm:$0xff pattern:$0xb3a29180]
  %2419 = vrot.lane.b32.xlu0 %v2418, 80
  %v2420 = vpop.permute.xlu0 %2419
  %vm2421 = vcmask 130048
  %s2422 = scalar_lea.vmem %s1, 4035
  %2423 = vst.msk [vmem:[%s2422] ss:$8 sm:$0xf] %vm2421, %v2420
  %s2424 = scalar_lea.vmem %s1, 4035
  %2425 = vst.msk [vmem:[%s2424] ss:$8 sm:$0xf0] %vm2421, %v2420
  %v2426 = vld.sshfl [vmem:[%s0] sm:$0xff pattern:$0xb3a29180]
  %2427 = vrot.lane.b32.xlu0 %v2426, 64
  %v2428 = vpop.permute.xlu0 %2427
  %vm2429 = vcmask 130048
  %s2430 = scalar_lea.vmem %s1, 4
  %2431 = vst.msk [vmem:[%s2430] ss:$8 sm:$0xf] %vm2429, %v2428
  %s2432 = scalar_lea.vmem %s1, 4
  %2433 = vst.msk [vmem:[%s2432] ss:$8 sm:$0xf0] %vm2429, %v2428
  %s2434 = scalar_lea.vmem %s0, 4
  %v2435 = vld.sshfl [vmem:[%s2434] sm:$0xff pattern:$0xb3a29180]
  %2436 = vrot.lane.b32.xlu0 %v2435, 64
  %v2437 = vpop.permute.xlu0 %2436
  %vm2438 = vcmask 130048
  %s2439 = scalar_lea.vmem %s1, 68
  %2440 = vst.msk [vmem:[%s2439] ss:$8 sm:$0xf] %vm2438, %v2437
  %s2441 = scalar_lea.vmem %s1, 68
  %2442 = vst.msk [vmem:[%s2441] ss:$8 sm:$0xf0] %vm2438, %v2437
  %s2443 = scalar_lea.vmem %s0, 16
  %v2444 = vld.sshfl [vmem:[%s2443] sm:$0xff pattern:$0xb3a29180]
  %2445 = vrot.lane.b32.xlu0 %v2444, 64
  %v2446 = vpop.permute.xlu0 %2445
  %vm2447 = vcmask 130048
  %s2448 = scalar_lea.vmem %s1, 132
  %2449 = vst.msk [vmem:[%s2448] ss:$8 sm:$0xf] %vm2447, %v2446
  %s2450 = scalar_lea.vmem %s1, 132
  %2451 = vst.msk [vmem:[%s2450] ss:$8 sm:$0xf0] %vm2447, %v2446
  %s2452 = scalar_lea.vmem %s0, 20
  %v2453 = vld.sshfl [vmem:[%s2452] sm:$0xff pattern:$0xb3a29180]
  %2454 = vrot.lane.b32.xlu0 %v2453, 64
  %v2455 = vpop.permute.xlu0 %2454
  %vm2456 = vcmask 130048
  %s2457 = scalar_lea.vmem %s1, 196
  %2458 = vst.msk [vmem:[%s2457] ss:$8 sm:$0xf] %vm2456, %v2455
  %s2459 = scalar_lea.vmem %s1, 196
  %2460 = vst.msk [vmem:[%s2459] ss:$8 sm:$0xf0] %vm2456, %v2455
  %s2461 = scalar_lea.vmem %s0, 32
  %v2462 = vld.sshfl [vmem:[%s2461] sm:$0xff pattern:$0xb3a29180]
  %2463 = vrot.lane.b32.xlu0 %v2462, 64
  %v2464 = vpop.permute.xlu0 %2463
  %vm2465 = vcmask 130048
  %s2466 = scalar_lea.vmem %s1, 260
  %2467 = vst.msk [vmem:[%s2466] ss:$8 sm:$0xf] %vm2465, %v2464
  %s2468 = scalar_lea.vmem %s1, 260
  %2469 = vst.msk [vmem:[%s2468] ss:$8 sm:$0xf0] %vm2465, %v2464
  %s2470 = scalar_lea.vmem %s0, 36
  %v2471 = vld.sshfl [vmem:[%s2470] sm:$0xff pattern:$0xb3a29180]
  %2472 = vrot.lane.b32.xlu0 %v2471, 64
  %v2473 = vpop.permute.xlu0 %2472
  %vm2474 = vcmask 130048
  %s2475 = scalar_lea.vmem %s1, 324
  %2476 = vst.msk [vmem:[%s2475] ss:$8 sm:$0xf] %vm2474, %v2473
  %s2477 = scalar_lea.vmem %s1, 324
  %2478 = vst.msk [vmem:[%s2477] ss:$8 sm:$0xf0] %vm2474, %v2473
  %s2479 = scalar_lea.vmem %s0, 48
  %v2480 = vld.sshfl [vmem:[%s2479] sm:$0xff pattern:$0xb3a29180]
  %2481 = vrot.lane.b32.xlu0 %v2480, 64
  %v2482 = vpop.permute.xlu0 %2481
  %vm2483 = vcmask 130048
  %s2484 = scalar_lea.vmem %s1, 388
  %2485 = vst.msk [vmem:[%s2484] ss:$8 sm:$0xf] %vm2483, %v2482
  %s2486 = scalar_lea.vmem %s1, 388
  %2487 = vst.msk [vmem:[%s2486] ss:$8 sm:$0xf0] %vm2483, %v2482
  %s2488 = scalar_lea.vmem %s0, 52
  %v2489 = vld.sshfl [vmem:[%s2488] sm:$0xff pattern:$0xb3a29180]
  %2490 = vrot.lane.b32.xlu0 %v2489, 64
  %v2491 = vpop.permute.xlu0 %2490
  %vm2492 = vcmask 130048
  %s2493 = scalar_lea.vmem %s1, 452
  %2494 = vst.msk [vmem:[%s2493] ss:$8 sm:$0xf] %vm2492, %v2491
  %s2495 = scalar_lea.vmem %s1, 452
  %2496 = vst.msk [vmem:[%s2495] ss:$8 sm:$0xf0] %vm2492, %v2491
  %s2497 = scalar_lea.vmem %s0, 64
  %v2498 = vld.sshfl [vmem:[%s2497] sm:$0xff pattern:$0xb3a29180]
  %2499 = vrot.lane.b32.xlu0 %v2498, 64
  %v2500 = vpop.permute.xlu0 %2499
  %vm2501 = vcmask 130048
  %s2502 = scalar_lea.vmem %s1, 516
  %2503 = vst.msk [vmem:[%s2502] ss:$8 sm:$0xf] %vm2501, %v2500
  %s2504 = scalar_lea.vmem %s1, 516
  %2505 = vst.msk [vmem:[%s2504] ss:$8 sm:$0xf0] %vm2501, %v2500
  %s2506 = scalar_lea.vmem %s0, 68
  %v2507 = vld.sshfl [vmem:[%s2506] sm:$0xff pattern:$0xb3a29180]
  %2508 = vrot.lane.b32.xlu0 %v2507, 64
  %v2509 = vpop.permute.xlu0 %2508
  %vm2510 = vcmask 130048
  %s2511 = scalar_lea.vmem %s1, 580
  %2512 = vst.msk [vmem:[%s2511] ss:$8 sm:$0xf] %vm2510, %v2509
  %s2513 = scalar_lea.vmem %s1, 580
  %2514 = vst.msk [vmem:[%s2513] ss:$8 sm:$0xf0] %vm2510, %v2509
  %s2515 = scalar_lea.vmem %s0, 80
  %v2516 = vld.sshfl [vmem:[%s2515] sm:$0xff pattern:$0xb3a29180]
  %2517 = vrot.lane.b32.xlu0 %v2516, 64
  %v2518 = vpop.permute.xlu0 %2517
  %vm2519 = vcmask 130048
  %s2520 = scalar_lea.vmem %s1, 644
  %2521 = vst.msk [vmem:[%s2520] ss:$8 sm:$0xf] %vm2519, %v2518
  %s2522 = scalar_lea.vmem %s1, 644
  %2523 = vst.msk [vmem:[%s2522] ss:$8 sm:$0xf0] %vm2519, %v2518
  %s2524 = scalar_lea.vmem %s0, 84
  %v2525 = vld.sshfl [vmem:[%s2524] sm:$0xff pattern:$0xb3a29180]
  %2526 = vrot.lane.b32.xlu0 %v2525, 64
  %v2527 = vpop.permute.xlu0 %2526
  %vm2528 = vcmask 130048
  %s2529 = scalar_lea.vmem %s1, 708
  %2530 = vst.msk [vmem:[%s2529] ss:$8 sm:$0xf] %vm2528, %v2527
  %s2531 = scalar_lea.vmem %s1, 708
  %2532 = vst.msk [vmem:[%s2531] ss:$8 sm:$0xf0] %vm2528, %v2527
  %s2533 = scalar_lea.vmem %s0, 96
  %v2534 = vld.sshfl [vmem:[%s2533] sm:$0xff pattern:$0xb3a29180]
  %2535 = vrot.lane.b32.xlu0 %v2534, 64
  %v2536 = vpop.permute.xlu0 %2535
  %vm2537 = vcmask 130048
  %s2538 = scalar_lea.vmem %s1, 772
  %2539 = vst.msk [vmem:[%s2538] ss:$8 sm:$0xf] %vm2537, %v2536
  %s2540 = scalar_lea.vmem %s1, 772
  %2541 = vst.msk [vmem:[%s2540] ss:$8 sm:$0xf0] %vm2537, %v2536
  %s2542 = scalar_lea.vmem %s0, 100
  %v2543 = vld.sshfl [vmem:[%s2542] sm:$0xff pattern:$0xb3a29180]
  %2544 = vrot.lane.b32.xlu0 %v2543, 64
  %v2545 = vpop.permute.xlu0 %2544
  %vm2546 = vcmask 130048
  %s2547 = scalar_lea.vmem %s1, 836
  %2548 = vst.msk [vmem:[%s2547] ss:$8 sm:$0xf] %vm2546, %v2545
  %s2549 = scalar_lea.vmem %s1, 836
  %2550 = vst.msk [vmem:[%s2549] ss:$8 sm:$0xf0] %vm2546, %v2545
  %s2551 = scalar_lea.vmem %s0, 112
  %v2552 = vld.sshfl [vmem:[%s2551] sm:$0xff pattern:$0xb3a29180]
  %2553 = vrot.lane.b32.xlu0 %v2552, 64
  %v2554 = vpop.permute.xlu0 %2553
  %vm2555 = vcmask 130048
  %s2556 = scalar_lea.vmem %s1, 900
  %2557 = vst.msk [vmem:[%s2556] ss:$8 sm:$0xf] %vm2555, %v2554
  %s2558 = scalar_lea.vmem %s1, 900
  %2559 = vst.msk [vmem:[%s2558] ss:$8 sm:$0xf0] %vm2555, %v2554
  %s2560 = scalar_lea.vmem %s0, 116
  %v2561 = vld.sshfl [vmem:[%s2560] sm:$0xff pattern:$0xb3a29180]
  %2562 = vrot.lane.b32.xlu0 %v2561, 64
  %v2563 = vpop.permute.xlu0 %2562
  %vm2564 = vcmask 130048
  %s2565 = scalar_lea.vmem %s1, 964
  %2566 = vst.msk [vmem:[%s2565] ss:$8 sm:$0xf] %vm2564, %v2563
  %s2567 = scalar_lea.vmem %s1, 964
  %2568 = vst.msk [vmem:[%s2567] ss:$8 sm:$0xf0] %vm2564, %v2563
  %s2569 = scalar_lea.vmem %s0, 128
  %v2570 = vld.sshfl [vmem:[%s2569] sm:$0xff pattern:$0xb3a29180]
  %2571 = vrot.lane.b32.xlu0 %v2570, 64
  %v2572 = vpop.permute.xlu0 %2571
  %vm2573 = vcmask 130048
  %s2574 = scalar_lea.vmem %s1, 1028
  %2575 = vst.msk [vmem:[%s2574] ss:$8 sm:$0xf] %vm2573, %v2572
  %s2576 = scalar_lea.vmem %s1, 1028
  %2577 = vst.msk [vmem:[%s2576] ss:$8 sm:$0xf0] %vm2573, %v2572
  %s2578 = scalar_lea.vmem %s0, 132
  %v2579 = vld.sshfl [vmem:[%s2578] sm:$0xff pattern:$0xb3a29180]
  %2580 = vrot.lane.b32.xlu0 %v2579, 64
  %v2581 = vpop.permute.xlu0 %2580
  %vm2582 = vcmask 130048
  %s2583 = scalar_lea.vmem %s1, 1092
  %2584 = vst.msk [vmem:[%s2583] ss:$8 sm:$0xf] %vm2582, %v2581
  %s2585 = scalar_lea.vmem %s1, 1092
  %2586 = vst.msk [vmem:[%s2585] ss:$8 sm:$0xf0] %vm2582, %v2581
  %s2587 = scalar_lea.vmem %s0, 144
  %v2588 = vld.sshfl [vmem:[%s2587] sm:$0xff pattern:$0xb3a29180]
  %2589 = vrot.lane.b32.xlu0 %v2588, 64
  %v2590 = vpop.permute.xlu0 %2589
  %vm2591 = vcmask 130048
  %s2592 = scalar_lea.vmem %s1, 1156
  %2593 = vst.msk [vmem:[%s2592] ss:$8 sm:$0xf] %vm2591, %v2590
  %s2594 = scalar_lea.vmem %s1, 1156
  %2595 = vst.msk [vmem:[%s2594] ss:$8 sm:$0xf0] %vm2591, %v2590
  %s2596 = scalar_lea.vmem %s0, 148
  %v2597 = vld.sshfl [vmem:[%s2596] sm:$0xff pattern:$0xb3a29180]
  %2598 = vrot.lane.b32.xlu0 %v2597, 64
  %v2599 = vpop.permute.xlu0 %2598
  %vm2600 = vcmask 130048
  %s2601 = scalar_lea.vmem %s1, 1220
  %2602 = vst.msk [vmem:[%s2601] ss:$8 sm:$0xf] %vm2600, %v2599
  %s2603 = scalar_lea.vmem %s1, 1220
  %2604 = vst.msk [vmem:[%s2603] ss:$8 sm:$0xf0] %vm2600, %v2599
  %s2605 = scalar_lea.vmem %s0, 160
  %v2606 = vld.sshfl [vmem:[%s2605] sm:$0xff pattern:$0xb3a29180]
  %2607 = vrot.lane.b32.xlu0 %v2606, 64
  %v2608 = vpop.permute.xlu0 %2607
  %vm2609 = vcmask 130048
  %s2610 = scalar_lea.vmem %s1, 1284
  %2611 = vst.msk [vmem:[%s2610] ss:$8 sm:$0xf] %vm2609, %v2608
  %s2612 = scalar_lea.vmem %s1, 1284
  %2613 = vst.msk [vmem:[%s2612] ss:$8 sm:$0xf0] %vm2609, %v2608
  %s2614 = scalar_lea.vmem %s0, 164
  %v2615 = vld.sshfl [vmem:[%s2614] sm:$0xff pattern:$0xb3a29180]
  %2616 = vrot.lane.b32.xlu0 %v2615, 64
  %v2617 = vpop.permute.xlu0 %2616
  %vm2618 = vcmask 130048
  %s2619 = scalar_lea.vmem %s1, 1348
  %2620 = vst.msk [vmem:[%s2619] ss:$8 sm:$0xf] %vm2618, %v2617
  %s2621 = scalar_lea.vmem %s1, 1348
  %2622 = vst.msk [vmem:[%s2621] ss:$8 sm:$0xf0] %vm2618, %v2617
  %s2623 = scalar_lea.vmem %s0, 176
  %v2624 = vld.sshfl [vmem:[%s2623] sm:$0xff pattern:$0xb3a29180]
  %2625 = vrot.lane.b32.xlu0 %v2624, 64
  %v2626 = vpop.permute.xlu0 %2625
  %vm2627 = vcmask 130048
  %s2628 = scalar_lea.vmem %s1, 1412
  %2629 = vst.msk [vmem:[%s2628] ss:$8 sm:$0xf] %vm2627, %v2626
  %s2630 = scalar_lea.vmem %s1, 1412
  %2631 = vst.msk [vmem:[%s2630] ss:$8 sm:$0xf0] %vm2627, %v2626
  %s2632 = scalar_lea.vmem %s0, 180
  %v2633 = vld.sshfl [vmem:[%s2632] sm:$0xff pattern:$0xb3a29180]
  %2634 = vrot.lane.b32.xlu0 %v2633, 64
  %v2635 = vpop.permute.xlu0 %2634
  %vm2636 = vcmask 130048
  %s2637 = scalar_lea.vmem %s1, 1476
  %2638 = vst.msk [vmem:[%s2637] ss:$8 sm:$0xf] %vm2636, %v2635
  %s2639 = scalar_lea.vmem %s1, 1476
  %2640 = vst.msk [vmem:[%s2639] ss:$8 sm:$0xf0] %vm2636, %v2635
  %s2641 = scalar_lea.vmem %s0, 192
  %v2642 = vld.sshfl [vmem:[%s2641] sm:$0xff pattern:$0xb3a29180]
  %2643 = vrot.lane.b32.xlu0 %v2642, 64
  %v2644 = vpop.permute.xlu0 %2643
  %vm2645 = vcmask 130048
  %s2646 = scalar_lea.vmem %s1, 1540
  %2647 = vst.msk [vmem:[%s2646] ss:$8 sm:$0xf] %vm2645, %v2644
  %s2648 = scalar_lea.vmem %s1, 1540
  %2649 = vst.msk [vmem:[%s2648] ss:$8 sm:$0xf0] %vm2645, %v2644
  %s2650 = scalar_lea.vmem %s0, 196
  %v2651 = vld.sshfl [vmem:[%s2650] sm:$0xff pattern:$0xb3a29180]
  %2652 = vrot.lane.b32.xlu0 %v2651, 64
  %v2653 = vpop.permute.xlu0 %2652
  %vm2654 = vcmask 130048
  %s2655 = scalar_lea.vmem %s1, 1604
  %2656 = vst.msk [vmem:[%s2655] ss:$8 sm:$0xf] %vm2654, %v2653
  %s2657 = scalar_lea.vmem %s1, 1604
  %2658 = vst.msk [vmem:[%s2657] ss:$8 sm:$0xf0] %vm2654, %v2653
  %s2659 = scalar_lea.vmem %s0, 208
  %v2660 = vld.sshfl [vmem:[%s2659] sm:$0xff pattern:$0xb3a29180]
  %2661 = vrot.lane.b32.xlu0 %v2660, 64
  %v2662 = vpop.permute.xlu0 %2661
  %vm2663 = vcmask 130048
  %s2664 = scalar_lea.vmem %s1, 1668
  %2665 = vst.msk [vmem:[%s2664] ss:$8 sm:$0xf] %vm2663, %v2662
  %s2666 = scalar_lea.vmem %s1, 1668
  %2667 = vst.msk [vmem:[%s2666] ss:$8 sm:$0xf0] %vm2663, %v2662
  %s2668 = scalar_lea.vmem %s0, 212
  %v2669 = vld.sshfl [vmem:[%s2668] sm:$0xff pattern:$0xb3a29180]
  %2670 = vrot.lane.b32.xlu0 %v2669, 64
  %v2671 = vpop.permute.xlu0 %2670
  %vm2672 = vcmask 130048
  %s2673 = scalar_lea.vmem %s1, 1732
  %2674 = vst.msk [vmem:[%s2673] ss:$8 sm:$0xf] %vm2672, %v2671
  %s2675 = scalar_lea.vmem %s1, 1732
  %2676 = vst.msk [vmem:[%s2675] ss:$8 sm:$0xf0] %vm2672, %v2671
  %s2677 = scalar_lea.vmem %s0, 224
  %v2678 = vld.sshfl [vmem:[%s2677] sm:$0xff pattern:$0xb3a29180]
  %2679 = vrot.lane.b32.xlu0 %v2678, 64
  %v2680 = vpop.permute.xlu0 %2679
  %vm2681 = vcmask 130048
  %s2682 = scalar_lea.vmem %s1, 1796
  %2683 = vst.msk [vmem:[%s2682] ss:$8 sm:$0xf] %vm2681, %v2680
  %s2684 = scalar_lea.vmem %s1, 1796
  %2685 = vst.msk [vmem:[%s2684] ss:$8 sm:$0xf0] %vm2681, %v2680
  %s2686 = scalar_lea.vmem %s0, 228
  %v2687 = vld.sshfl [vmem:[%s2686] sm:$0xff pattern:$0xb3a29180]
  %2688 = vrot.lane.b32.xlu0 %v2687, 64
  %v2689 = vpop.permute.xlu0 %2688
  %vm2690 = vcmask 130048
  %s2691 = scalar_lea.vmem %s1, 1860
  %2692 = vst.msk [vmem:[%s2691] ss:$8 sm:$0xf] %vm2690, %v2689
  %s2693 = scalar_lea.vmem %s1, 1860
  %2694 = vst.msk [vmem:[%s2693] ss:$8 sm:$0xf0] %vm2690, %v2689
  %s2695 = scalar_lea.vmem %s0, 240
  %v2696 = vld.sshfl [vmem:[%s2695] sm:$0xff pattern:$0xb3a29180]
  %2697 = vrot.lane.b32.xlu0 %v2696, 64
  %v2698 = vpop.permute.xlu0 %2697
  %vm2699 = vcmask 130048
  %s2700 = scalar_lea.vmem %s1, 1924
  %2701 = vst.msk [vmem:[%s2700] ss:$8 sm:$0xf] %vm2699, %v2698
  %s2702 = scalar_lea.vmem %s1, 1924
  %2703 = vst.msk [vmem:[%s2702] ss:$8 sm:$0xf0] %vm2699, %v2698
  %s2704 = scalar_lea.vmem %s0, 244
  %v2705 = vld.sshfl [vmem:[%s2704] sm:$0xff pattern:$0xb3a29180]
  %2706 = vrot.lane.b32.xlu0 %v2705, 64
  %v2707 = vpop.permute.xlu0 %2706
  %vm2708 = vcmask 130048
  %s2709 = scalar_lea.vmem %s1, 1988
  %2710 = vst.msk [vmem:[%s2709] ss:$8 sm:$0xf] %vm2708, %v2707
  %s2711 = scalar_lea.vmem %s1, 1988
  %2712 = vst.msk [vmem:[%s2711] ss:$8 sm:$0xf0] %vm2708, %v2707
  %s2713 = scalar_lea.vmem %s0, 256
  %v2714 = vld.sshfl [vmem:[%s2713] sm:$0xff pattern:$0xb3a29180]
  %2715 = vrot.lane.b32.xlu0 %v2714, 64
  %v2716 = vpop.permute.xlu0 %2715
  %vm2717 = vcmask 130048
  %s2718 = scalar_lea.vmem %s1, 2052
  %2719 = vst.msk [vmem:[%s2718] ss:$8 sm:$0xf] %vm2717, %v2716
  %s2720 = scalar_lea.vmem %s1, 2052
  %2721 = vst.msk [vmem:[%s2720] ss:$8 sm:$0xf0] %vm2717, %v2716
  %s2722 = scalar_lea.vmem %s0, 260
  %v2723 = vld.sshfl [vmem:[%s2722] sm:$0xff pattern:$0xb3a29180]
  %2724 = vrot.lane.b32.xlu0 %v2723, 64
  %v2725 = vpop.permute.xlu0 %2724
  %vm2726 = vcmask 130048
  %s2727 = scalar_lea.vmem %s1, 2116
  %2728 = vst.msk [vmem:[%s2727] ss:$8 sm:$0xf] %vm2726, %v2725
  %s2729 = scalar_lea.vmem %s1, 2116
  %2730 = vst.msk [vmem:[%s2729] ss:$8 sm:$0xf0] %vm2726, %v2725
  %s2731 = scalar_lea.vmem %s0, 272
  %v2732 = vld.sshfl [vmem:[%s2731] sm:$0xff pattern:$0xb3a29180]
  %2733 = vrot.lane.b32.xlu0 %v2732, 64
  %v2734 = vpop.permute.xlu0 %2733
  %vm2735 = vcmask 130048
  %s2736 = scalar_lea.vmem %s1, 2180
  %2737 = vst.msk [vmem:[%s2736] ss:$8 sm:$0xf] %vm2735, %v2734
  %s2738 = scalar_lea.vmem %s1, 2180
  %2739 = vst.msk [vmem:[%s2738] ss:$8 sm:$0xf0] %vm2735, %v2734
  %s2740 = scalar_lea.vmem %s0, 276
  %v2741 = vld.sshfl [vmem:[%s2740] sm:$0xff pattern:$0xb3a29180]
  %2742 = vrot.lane.b32.xlu0 %v2741, 64
  %v2743 = vpop.permute.xlu0 %2742
  %vm2744 = vcmask 130048
  %s2745 = scalar_lea.vmem %s1, 2244
  %2746 = vst.msk [vmem:[%s2745] ss:$8 sm:$0xf] %vm2744, %v2743
  %s2747 = scalar_lea.vmem %s1, 2244
  %2748 = vst.msk [vmem:[%s2747] ss:$8 sm:$0xf0] %vm2744, %v2743
  %s2749 = scalar_lea.vmem %s0, 288
  %v2750 = vld.sshfl [vmem:[%s2749] sm:$0xff pattern:$0xb3a29180]
  %2751 = vrot.lane.b32.xlu0 %v2750, 64
  %v2752 = vpop.permute.xlu0 %2751
  %vm2753 = vcmask 130048
  %s2754 = scalar_lea.vmem %s1, 2308
  %2755 = vst.msk [vmem:[%s2754] ss:$8 sm:$0xf] %vm2753, %v2752
  %s2756 = scalar_lea.vmem %s1, 2308
  %2757 = vst.msk [vmem:[%s2756] ss:$8 sm:$0xf0] %vm2753, %v2752
  %s2758 = scalar_lea.vmem %s0, 292
  %v2759 = vld.sshfl [vmem:[%s2758] sm:$0xff pattern:$0xb3a29180]
  %2760 = vrot.lane.b32.xlu0 %v2759, 64
  %v2761 = vpop.permute.xlu0 %2760
  %vm2762 = vcmask 130048
  %s2763 = scalar_lea.vmem %s1, 2372
  %2764 = vst.msk [vmem:[%s2763] ss:$8 sm:$0xf] %vm2762, %v2761
  %s2765 = scalar_lea.vmem %s1, 2372
  %2766 = vst.msk [vmem:[%s2765] ss:$8 sm:$0xf0] %vm2762, %v2761
  %s2767 = scalar_lea.vmem %s0, 304
  %v2768 = vld.sshfl [vmem:[%s2767] sm:$0xff pattern:$0xb3a29180]
  %2769 = vrot.lane.b32.xlu0 %v2768, 64
  %v2770 = vpop.permute.xlu0 %2769
  %vm2771 = vcmask 130048
  %s2772 = scalar_lea.vmem %s1, 2436
  %2773 = vst.msk [vmem:[%s2772] ss:$8 sm:$0xf] %vm2771, %v2770
  %s2774 = scalar_lea.vmem %s1, 2436
  %2775 = vst.msk [vmem:[%s2774] ss:$8 sm:$0xf0] %vm2771, %v2770
  %s2776 = scalar_lea.vmem %s0, 308
  %v2777 = vld.sshfl [vmem:[%s2776] sm:$0xff pattern:$0xb3a29180]
  %2778 = vrot.lane.b32.xlu0 %v2777, 64
  %v2779 = vpop.permute.xlu0 %2778
  %vm2780 = vcmask 130048
  %s2781 = scalar_lea.vmem %s1, 2500
  %2782 = vst.msk [vmem:[%s2781] ss:$8 sm:$0xf] %vm2780, %v2779
  %s2783 = scalar_lea.vmem %s1, 2500
  %2784 = vst.msk [vmem:[%s2783] ss:$8 sm:$0xf0] %vm2780, %v2779
  %s2785 = scalar_lea.vmem %s0, 320
  %v2786 = vld.sshfl [vmem:[%s2785] sm:$0xff pattern:$0xb3a29180]
  %2787 = vrot.lane.b32.xlu0 %v2786, 64
  %v2788 = vpop.permute.xlu0 %2787
  %vm2789 = vcmask 130048
  %s2790 = scalar_lea.vmem %s1, 2564
  %2791 = vst.msk [vmem:[%s2790] ss:$8 sm:$0xf] %vm2789, %v2788
  %s2792 = scalar_lea.vmem %s1, 2564
  %2793 = vst.msk [vmem:[%s2792] ss:$8 sm:$0xf0] %vm2789, %v2788
  %s2794 = scalar_lea.vmem %s0, 324
  %v2795 = vld.sshfl [vmem:[%s2794] sm:$0xff pattern:$0xb3a29180]
  %2796 = vrot.lane.b32.xlu0 %v2795, 64
  %v2797 = vpop.permute.xlu0 %2796
  %vm2798 = vcmask 130048
  %s2799 = scalar_lea.vmem %s1, 2628
  %2800 = vst.msk [vmem:[%s2799] ss:$8 sm:$0xf] %vm2798, %v2797
  %s2801 = scalar_lea.vmem %s1, 2628
  %2802 = vst.msk [vmem:[%s2801] ss:$8 sm:$0xf0] %vm2798, %v2797
  %s2803 = scalar_lea.vmem %s0, 336
  %v2804 = vld.sshfl [vmem:[%s2803] sm:$0xff pattern:$0xb3a29180]
  %2805 = vrot.lane.b32.xlu0 %v2804, 64
  %v2806 = vpop.permute.xlu0 %2805
  %vm2807 = vcmask 130048
  %s2808 = scalar_lea.vmem %s1, 2692
  %2809 = vst.msk [vmem:[%s2808] ss:$8 sm:$0xf] %vm2807, %v2806
  %s2810 = scalar_lea.vmem %s1, 2692
  %2811 = vst.msk [vmem:[%s2810] ss:$8 sm:$0xf0] %vm2807, %v2806
  %s2812 = scalar_lea.vmem %s0, 340
  %v2813 = vld.sshfl [vmem:[%s2812] sm:$0xff pattern:$0xb3a29180]
  %2814 = vrot.lane.b32.xlu0 %v2813, 64
  %v2815 = vpop.permute.xlu0 %2814
  %vm2816 = vcmask 130048
  %s2817 = scalar_lea.vmem %s1, 2756
  %2818 = vst.msk [vmem:[%s2817] ss:$8 sm:$0xf] %vm2816, %v2815
  %s2819 = scalar_lea.vmem %s1, 2756
  %2820 = vst.msk [vmem:[%s2819] ss:$8 sm:$0xf0] %vm2816, %v2815
  %s2821 = scalar_lea.vmem %s0, 352
  %v2822 = vld.sshfl [vmem:[%s2821] sm:$0xff pattern:$0xb3a29180]
  %2823 = vrot.lane.b32.xlu0 %v2822, 64
  %v2824 = vpop.permute.xlu0 %2823
  %vm2825 = vcmask 130048
  %s2826 = scalar_lea.vmem %s1, 2820
  %2827 = vst.msk [vmem:[%s2826] ss:$8 sm:$0xf] %vm2825, %v2824
  %s2828 = scalar_lea.vmem %s1, 2820
  %2829 = vst.msk [vmem:[%s2828] ss:$8 sm:$0xf0] %vm2825, %v2824
  %s2830 = scalar_lea.vmem %s0, 356
  %v2831 = vld.sshfl [vmem:[%s2830] sm:$0xff pattern:$0xb3a29180]
  %2832 = vrot.lane.b32.xlu0 %v2831, 64
  %v2833 = vpop.permute.xlu0 %2832
  %vm2834 = vcmask 130048
  %s2835 = scalar_lea.vmem %s1, 2884
  %2836 = vst.msk [vmem:[%s2835] ss:$8 sm:$0xf] %vm2834, %v2833
  %s2837 = scalar_lea.vmem %s1, 2884
  %2838 = vst.msk [vmem:[%s2837] ss:$8 sm:$0xf0] %vm2834, %v2833
  %s2839 = scalar_lea.vmem %s0, 368
  %v2840 = vld.sshfl [vmem:[%s2839] sm:$0xff pattern:$0xb3a29180]
  %2841 = vrot.lane.b32.xlu0 %v2840, 64
  %v2842 = vpop.permute.xlu0 %2841
  %vm2843 = vcmask 130048
  %s2844 = scalar_lea.vmem %s1, 2948
  %2845 = vst.msk [vmem:[%s2844] ss:$8 sm:$0xf] %vm2843, %v2842
  %s2846 = scalar_lea.vmem %s1, 2948
  %2847 = vst.msk [vmem:[%s2846] ss:$8 sm:$0xf0] %vm2843, %v2842
  %s2848 = scalar_lea.vmem %s0, 372
  %v2849 = vld.sshfl [vmem:[%s2848] sm:$0xff pattern:$0xb3a29180]
  %2850 = vrot.lane.b32.xlu0 %v2849, 64
  %v2851 = vpop.permute.xlu0 %2850
  %vm2852 = vcmask 130048
  %s2853 = scalar_lea.vmem %s1, 3012
  %2854 = vst.msk [vmem:[%s2853] ss:$8 sm:$0xf] %vm2852, %v2851
  %s2855 = scalar_lea.vmem %s1, 3012
  %2856 = vst.msk [vmem:[%s2855] ss:$8 sm:$0xf0] %vm2852, %v2851
  %s2857 = scalar_lea.vmem %s0, 384
  %v2858 = vld.sshfl [vmem:[%s2857] sm:$0xff pattern:$0xb3a29180]
  %2859 = vrot.lane.b32.xlu0 %v2858, 64
  %v2860 = vpop.permute.xlu0 %2859
  %vm2861 = vcmask 130048
  %s2862 = scalar_lea.vmem %s1, 3076
  %2863 = vst.msk [vmem:[%s2862] ss:$8 sm:$0xf] %vm2861, %v2860
  %s2864 = scalar_lea.vmem %s1, 3076
  %2865 = vst.msk [vmem:[%s2864] ss:$8 sm:$0xf0] %vm2861, %v2860
  %s2866 = scalar_lea.vmem %s0, 388
  %v2867 = vld.sshfl [vmem:[%s2866] sm:$0xff pattern:$0xb3a29180]
  %2868 = vrot.lane.b32.xlu0 %v2867, 64
  %v2869 = vpop.permute.xlu0 %2868
  %vm2870 = vcmask 130048
  %s2871 = scalar_lea.vmem %s1, 3140
  %2872 = vst.msk [vmem:[%s2871] ss:$8 sm:$0xf] %vm2870, %v2869
  %s2873 = scalar_lea.vmem %s1, 3140
  %2874 = vst.msk [vmem:[%s2873] ss:$8 sm:$0xf0] %vm2870, %v2869
  %s2875 = scalar_lea.vmem %s0, 400
  %v2876 = vld.sshfl [vmem:[%s2875] sm:$0xff pattern:$0xb3a29180]
  %2877 = vrot.lane.b32.xlu0 %v2876, 64
  %v2878 = vpop.permute.xlu0 %2877
  %vm2879 = vcmask 130048
  %s2880 = scalar_lea.vmem %s1, 3204
  %2881 = vst.msk [vmem:[%s2880] ss:$8 sm:$0xf] %vm2879, %v2878
  %s2882 = scalar_lea.vmem %s1, 3204
  %2883 = vst.msk [vmem:[%s2882] ss:$8 sm:$0xf0] %vm2879, %v2878
  %s2884 = scalar_lea.vmem %s0, 404
  %v2885 = vld.sshfl [vmem:[%s2884] sm:$0xff pattern:$0xb3a29180]
  %2886 = vrot.lane.b32.xlu0 %v2885, 64
  %v2887 = vpop.permute.xlu0 %2886
  %vm2888 = vcmask 130048
  %s2889 = scalar_lea.vmem %s1, 3268
  %2890 = vst.msk [vmem:[%s2889] ss:$8 sm:$0xf] %vm2888, %v2887
  %s2891 = scalar_lea.vmem %s1, 3268
  %2892 = vst.msk [vmem:[%s2891] ss:$8 sm:$0xf0] %vm2888, %v2887
  %s2893 = scalar_lea.vmem %s0, 416
  %v2894 = vld.sshfl [vmem:[%s2893] sm:$0xff pattern:$0xb3a29180]
  %2895 = vrot.lane.b32.xlu0 %v2894, 64
  %v2896 = vpop.permute.xlu0 %2895
  %vm2897 = vcmask 130048
  %s2898 = scalar_lea.vmem %s1, 3332
  %2899 = vst.msk [vmem:[%s2898] ss:$8 sm:$0xf] %vm2897, %v2896
  %s2900 = scalar_lea.vmem %s1, 3332
  %2901 = vst.msk [vmem:[%s2900] ss:$8 sm:$0xf0] %vm2897, %v2896
  %s2902 = scalar_lea.vmem %s0, 420
  %v2903 = vld.sshfl [vmem:[%s2902] sm:$0xff pattern:$0xb3a29180]
  %2904 = vrot.lane.b32.xlu0 %v2903, 64
  %v2905 = vpop.permute.xlu0 %2904
  %vm2906 = vcmask 130048
  %s2907 = scalar_lea.vmem %s1, 3396
  %2908 = vst.msk [vmem:[%s2907] ss:$8 sm:$0xf] %vm2906, %v2905
  %s2909 = scalar_lea.vmem %s1, 3396
  %2910 = vst.msk [vmem:[%s2909] ss:$8 sm:$0xf0] %vm2906, %v2905
  %s2911 = scalar_lea.vmem %s0, 432
  %v2912 = vld.sshfl [vmem:[%s2911] sm:$0xff pattern:$0xb3a29180]
  %2913 = vrot.lane.b32.xlu0 %v2912, 64
  %v2914 = vpop.permute.xlu0 %2913
  %vm2915 = vcmask 130048
  %s2916 = scalar_lea.vmem %s1, 3460
  %2917 = vst.msk [vmem:[%s2916] ss:$8 sm:$0xf] %vm2915, %v2914
  %s2918 = scalar_lea.vmem %s1, 3460
  %2919 = vst.msk [vmem:[%s2918] ss:$8 sm:$0xf0] %vm2915, %v2914
  %s2920 = scalar_lea.vmem %s0, 436
  %v2921 = vld.sshfl [vmem:[%s2920] sm:$0xff pattern:$0xb3a29180]
  %2922 = vrot.lane.b32.xlu0 %v2921, 64
  %v2923 = vpop.permute.xlu0 %2922
  %vm2924 = vcmask 130048
  %s2925 = scalar_lea.vmem %s1, 3524
  %2926 = vst.msk [vmem:[%s2925] ss:$8 sm:$0xf] %vm2924, %v2923
  %s2927 = scalar_lea.vmem %s1, 3524
  %2928 = vst.msk [vmem:[%s2927] ss:$8 sm:$0xf0] %vm2924, %v2923
  %s2929 = scalar_lea.vmem %s0, 448
  %v2930 = vld.sshfl [vmem:[%s2929] sm:$0xff pattern:$0xb3a29180]
  %2931 = vrot.lane.b32.xlu0 %v2930, 64
  %v2932 = vpop.permute.xlu0 %2931
  %vm2933 = vcmask 130048
  %s2934 = scalar_lea.vmem %s1, 3588
  %2935 = vst.msk [vmem:[%s2934] ss:$8 sm:$0xf] %vm2933, %v2932
  %s2936 = scalar_lea.vmem %s1, 3588
  %2937 = vst.msk [vmem:[%s2936] ss:$8 sm:$0xf0] %vm2933, %v2932
  %s2938 = scalar_lea.vmem %s0, 452
  %v2939 = vld.sshfl [vmem:[%s2938] sm:$0xff pattern:$0xb3a29180]
  %2940 = vrot.lane.b32.xlu0 %v2939, 64
  %v2941 = vpop.permute.xlu0 %2940
  %vm2942 = vcmask 130048
  %s2943 = scalar_lea.vmem %s1, 3652
  %2944 = vst.msk [vmem:[%s2943] ss:$8 sm:$0xf] %vm2942, %v2941
  %s2945 = scalar_lea.vmem %s1, 3652
  %2946 = vst.msk [vmem:[%s2945] ss:$8 sm:$0xf0] %vm2942, %v2941
  %s2947 = scalar_lea.vmem %s0, 464
  %v2948 = vld.sshfl [vmem:[%s2947] sm:$0xff pattern:$0xb3a29180]
  %2949 = vrot.lane.b32.xlu0 %v2948, 64
  %v2950 = vpop.permute.xlu0 %2949
  %vm2951 = vcmask 130048
  %s2952 = scalar_lea.vmem %s1, 3716
  %2953 = vst.msk [vmem:[%s2952] ss:$8 sm:$0xf] %vm2951, %v2950
  %s2954 = scalar_lea.vmem %s1, 3716
  %2955 = vst.msk [vmem:[%s2954] ss:$8 sm:$0xf0] %vm2951, %v2950
  %s2956 = scalar_lea.vmem %s0, 468
  %v2957 = vld.sshfl [vmem:[%s2956] sm:$0xff pattern:$0xb3a29180]
  %2958 = vrot.lane.b32.xlu0 %v2957, 64
  %v2959 = vpop.permute.xlu0 %2958
  %vm2960 = vcmask 130048
  %s2961 = scalar_lea.vmem %s1, 3780
  %2962 = vst.msk [vmem:[%s2961] ss:$8 sm:$0xf] %vm2960, %v2959
  %s2963 = scalar_lea.vmem %s1, 3780
  %2964 = vst.msk [vmem:[%s2963] ss:$8 sm:$0xf0] %vm2960, %v2959
  %s2965 = scalar_lea.vmem %s0, 480
  %v2966 = vld.sshfl [vmem:[%s2965] sm:$0xff pattern:$0xb3a29180]
  %2967 = vrot.lane.b32.xlu0 %v2966, 64
  %v2968 = vpop.permute.xlu0 %2967
  %vm2969 = vcmask 130048
  %s2970 = scalar_lea.vmem %s1, 3844
  %2971 = vst.msk [vmem:[%s2970] ss:$8 sm:$0xf] %vm2969, %v2968
  %s2972 = scalar_lea.vmem %s1, 3844
  %2973 = vst.msk [vmem:[%s2972] ss:$8 sm:$0xf0] %vm2969, %v2968
  %s2974 = scalar_lea.vmem %s0, 484
  %v2975 = vld.sshfl [vmem:[%s2974] sm:$0xff pattern:$0xb3a29180]
  %2976 = vrot.lane.b32.xlu0 %v2975, 64
  %v2977 = vpop.permute.xlu0 %2976
  %vm2978 = vcmask 130048
  %s2979 = scalar_lea.vmem %s1, 3908
  %2980 = vst.msk [vmem:[%s2979] ss:$8 sm:$0xf] %vm2978, %v2977
  %s2981 = scalar_lea.vmem %s1, 3908
  %2982 = vst.msk [vmem:[%s2981] ss:$8 sm:$0xf0] %vm2978, %v2977
  %s2983 = scalar_lea.vmem %s0, 496
  %v2984 = vld.sshfl [vmem:[%s2983] sm:$0xff pattern:$0xb3a29180]
  %2985 = vrot.lane.b32.xlu0 %v2984, 64
  %v2986 = vpop.permute.xlu0 %2985
  %vm2987 = vcmask 130048
  %s2988 = scalar_lea.vmem %s1, 3972
  %2989 = vst.msk [vmem:[%s2988] ss:$8 sm:$0xf] %vm2987, %v2986
  %s2990 = scalar_lea.vmem %s1, 3972
  %2991 = vst.msk [vmem:[%s2990] ss:$8 sm:$0xf0] %vm2987, %v2986
  %s2992 = scalar_lea.vmem %s0, 500
  %v2993 = vld.sshfl [vmem:[%s2992] sm:$0xff pattern:$0xb3a29180]
  %2994 = vrot.lane.b32.xlu0 %v2993, 64
  %v2995 = vpop.permute.xlu0 %2994
  %vm2996 = vcmask 130048
  %s2997 = scalar_lea.vmem %s1, 4036
  %2998 = vst.msk [vmem:[%s2997] ss:$8 sm:$0xf] %vm2996, %v2995
  %s2999 = scalar_lea.vmem %s1, 4036
  %3000 = vst.msk [vmem:[%s2999] ss:$8 sm:$0xf0] %vm2996, %v2995
  %v3001 = vld.sshfl [vmem:[%s0] sm:$0xff pattern:$0xb3a29180]
  %3002 = vrot.lane.b32.xlu0 %v3001, 48
  %v3003 = vpop.permute.xlu0 %3002
  %vm3004 = vcmask 130048
  %s3005 = scalar_lea.vmem %s1, 5
  %3006 = vst.msk [vmem:[%s3005] ss:$8 sm:$0xf] %vm3004, %v3003
  %s3007 = scalar_lea.vmem %s1, 5
  %3008 = vst.msk [vmem:[%s3007] ss:$8 sm:$0xf0] %vm3004, %v3003
  %s3009 = scalar_lea.vmem %s0, 4
  %v3010 = vld.sshfl [vmem:[%s3009] sm:$0xff pattern:$0xb3a29180]
  %3011 = vrot.lane.b32.xlu0 %v3010, 48
  %v3012 = vpop.permute.xlu0 %3011
  %vm3013 = vcmask 130048
  %s3014 = scalar_lea.vmem %s1, 69
  %3015 = vst.msk [vmem:[%s3014] ss:$8 sm:$0xf] %vm3013, %v3012
  %s3016 = scalar_lea.vmem %s1, 69
  %3017 = vst.msk [vmem:[%s3016] ss:$8 sm:$0xf0] %vm3013, %v3012
  %s3018 = scalar_lea.vmem %s0, 16
  %v3019 = vld.sshfl [vmem:[%s3018] sm:$0xff pattern:$0xb3a29180]
  %3020 = vrot.lane.b32.xlu0 %v3019, 48
  %v3021 = vpop.permute.xlu0 %3020
  %vm3022 = vcmask 130048
  %s3023 = scalar_lea.vmem %s1, 133
  %3024 = vst.msk [vmem:[%s3023] ss:$8 sm:$0xf] %vm3022, %v3021
  %s3025 = scalar_lea.vmem %s1, 133
  %3026 = vst.msk [vmem:[%s3025] ss:$8 sm:$0xf0] %vm3022, %v3021
  %s3027 = scalar_lea.vmem %s0, 20
  %v3028 = vld.sshfl [vmem:[%s3027] sm:$0xff pattern:$0xb3a29180]
  %3029 = vrot.lane.b32.xlu0 %v3028, 48
  %v3030 = vpop.permute.xlu0 %3029
  %vm3031 = vcmask 130048
  %s3032 = scalar_lea.vmem %s1, 197
  %3033 = vst.msk [vmem:[%s3032] ss:$8 sm:$0xf] %vm3031, %v3030
  %s3034 = scalar_lea.vmem %s1, 197
  %3035 = vst.msk [vmem:[%s3034] ss:$8 sm:$0xf0] %vm3031, %v3030
  %s3036 = scalar_lea.vmem %s0, 32
  %v3037 = vld.sshfl [vmem:[%s3036] sm:$0xff pattern:$0xb3a29180]
  %3038 = vrot.lane.b32.xlu0 %v3037, 48
  %v3039 = vpop.permute.xlu0 %3038
  %vm3040 = vcmask 130048
  %s3041 = scalar_lea.vmem %s1, 261
  %3042 = vst.msk [vmem:[%s3041] ss:$8 sm:$0xf] %vm3040, %v3039
  %s3043 = scalar_lea.vmem %s1, 261
  %3044 = vst.msk [vmem:[%s3043] ss:$8 sm:$0xf0] %vm3040, %v3039
  %s3045 = scalar_lea.vmem %s0, 36
  %v3046 = vld.sshfl [vmem:[%s3045] sm:$0xff pattern:$0xb3a29180]
  %3047 = vrot.lane.b32.xlu0 %v3046, 48
  %v3048 = vpop.permute.xlu0 %3047
  %vm3049 = vcmask 130048
  %s3050 = scalar_lea.vmem %s1, 325
  %3051 = vst.msk [vmem:[%s3050] ss:$8 sm:$0xf] %vm3049, %v3048
  %s3052 = scalar_lea.vmem %s1, 325
  %3053 = vst.msk [vmem:[%s3052] ss:$8 sm:$0xf0] %vm3049, %v3048
  %s3054 = scalar_lea.vmem %s0, 48
  %v3055 = vld.sshfl [vmem:[%s3054] sm:$0xff pattern:$0xb3a29180]
  %3056 = vrot.lane.b32.xlu0 %v3055, 48
  %v3057 = vpop.permute.xlu0 %3056
  %vm3058 = vcmask 130048
  %s3059 = scalar_lea.vmem %s1, 389
  %3060 = vst.msk [vmem:[%s3059] ss:$8 sm:$0xf] %vm3058, %v3057
  %s3061 = scalar_lea.vmem %s1, 389
  %3062 = vst.msk [vmem:[%s3061] ss:$8 sm:$0xf0] %vm3058, %v3057
  %s3063 = scalar_lea.vmem %s0, 52
  %v3064 = vld.sshfl [vmem:[%s3063] sm:$0xff pattern:$0xb3a29180]
  %3065 = vrot.lane.b32.xlu0 %v3064, 48
  %v3066 = vpop.permute.xlu0 %3065
  %vm3067 = vcmask 130048
  %s3068 = scalar_lea.vmem %s1, 453
  %3069 = vst.msk [vmem:[%s3068] ss:$8 sm:$0xf] %vm3067, %v3066
  %s3070 = scalar_lea.vmem %s1, 453
  %3071 = vst.msk [vmem:[%s3070] ss:$8 sm:$0xf0] %vm3067, %v3066
  %s3072 = scalar_lea.vmem %s0, 64
  %v3073 = vld.sshfl [vmem:[%s3072] sm:$0xff pattern:$0xb3a29180]
  %3074 = vrot.lane.b32.xlu0 %v3073, 48
  %v3075 = vpop.permute.xlu0 %3074
  %vm3076 = vcmask 130048
  %s3077 = scalar_lea.vmem %s1, 517
  %3078 = vst.msk [vmem:[%s3077] ss:$8 sm:$0xf] %vm3076, %v3075
  %s3079 = scalar_lea.vmem %s1, 517
  %3080 = vst.msk [vmem:[%s3079] ss:$8 sm:$0xf0] %vm3076, %v3075
  %s3081 = scalar_lea.vmem %s0, 68
  %v3082 = vld.sshfl [vmem:[%s3081] sm:$0xff pattern:$0xb3a29180]
  %3083 = vrot.lane.b32.xlu0 %v3082, 48
  %v3084 = vpop.permute.xlu0 %3083
  %vm3085 = vcmask 130048
  %s3086 = scalar_lea.vmem %s1, 581
  %3087 = vst.msk [vmem:[%s3086] ss:$8 sm:$0xf] %vm3085, %v3084
  %s3088 = scalar_lea.vmem %s1, 581
  %3089 = vst.msk [vmem:[%s3088] ss:$8 sm:$0xf0] %vm3085, %v3084
  %s3090 = scalar_lea.vmem %s0, 80
  %v3091 = vld.sshfl [vmem:[%s3090] sm:$0xff pattern:$0xb3a29180]
  %3092 = vrot.lane.b32.xlu0 %v3091, 48
  %v3093 = vpop.permute.xlu0 %3092
  %vm3094 = vcmask 130048
  %s3095 = scalar_lea.vmem %s1, 645
  %3096 = vst.msk [vmem:[%s3095] ss:$8 sm:$0xf] %vm3094, %v3093
  %s3097 = scalar_lea.vmem %s1, 645
  %3098 = vst.msk [vmem:[%s3097] ss:$8 sm:$0xf0] %vm3094, %v3093
  %s3099 = scalar_lea.vmem %s0, 84
  %v3100 = vld.sshfl [vmem:[%s3099] sm:$0xff pattern:$0xb3a29180]
  %3101 = vrot.lane.b32.xlu0 %v3100, 48
  %v3102 = vpop.permute.xlu0 %3101
  %vm3103 = vcmask 130048
  %s3104 = scalar_lea.vmem %s1, 709
  %3105 = vst.msk [vmem:[%s3104] ss:$8 sm:$0xf] %vm3103, %v3102
  %s3106 = scalar_lea.vmem %s1, 709
  %3107 = vst.msk [vmem:[%s3106] ss:$8 sm:$0xf0] %vm3103, %v3102
  %s3108 = scalar_lea.vmem %s0, 96
  %v3109 = vld.sshfl [vmem:[%s3108] sm:$0xff pattern:$0xb3a29180]
  %3110 = vrot.lane.b32.xlu0 %v3109, 48
  %v3111 = vpop.permute.xlu0 %3110
  %vm3112 = vcmask 130048
  %s3113 = scalar_lea.vmem %s1, 773
  %3114 = vst.msk [vmem:[%s3113] ss:$8 sm:$0xf] %vm3112, %v3111
  %s3115 = scalar_lea.vmem %s1, 773
  %3116 = vst.msk [vmem:[%s3115] ss:$8 sm:$0xf0] %vm3112, %v3111
  %s3117 = scalar_lea.vmem %s0, 100
  %v3118 = vld.sshfl [vmem:[%s3117] sm:$0xff pattern:$0xb3a29180]
  %3119 = vrot.lane.b32.xlu0 %v3118, 48
  %v3120 = vpop.permute.xlu0 %3119
  %vm3121 = vcmask 130048
  %s3122 = scalar_lea.vmem %s1, 837
  %3123 = vst.msk [vmem:[%s3122] ss:$8 sm:$0xf] %vm3121, %v3120
  %s3124 = scalar_lea.vmem %s1, 837
  %3125 = vst.msk [vmem:[%s3124] ss:$8 sm:$0xf0] %vm3121, %v3120
  %s3126 = scalar_lea.vmem %s0, 112
  %v3127 = vld.sshfl [vmem:[%s3126] sm:$0xff pattern:$0xb3a29180]
  %3128 = vrot.lane.b32.xlu0 %v3127, 48
  %v3129 = vpop.permute.xlu0 %3128
  %vm3130 = vcmask 130048
  %s3131 = scalar_lea.vmem %s1, 901
  %3132 = vst.msk [vmem:[%s3131] ss:$8 sm:$0xf] %vm3130, %v3129
  %s3133 = scalar_lea.vmem %s1, 901
  %3134 = vst.msk [vmem:[%s3133] ss:$8 sm:$0xf0] %vm3130, %v3129
  %s3135 = scalar_lea.vmem %s0, 116
  %v3136 = vld.sshfl [vmem:[%s3135] sm:$0xff pattern:$0xb3a29180]
  %3137 = vrot.lane.b32.xlu0 %v3136, 48
  %v3138 = vpop.permute.xlu0 %3137
  %vm3139 = vcmask 130048
  %s3140 = scalar_lea.vmem %s1, 965
  %3141 = vst.msk [vmem:[%s3140] ss:$8 sm:$0xf] %vm3139, %v3138
  %s3142 = scalar_lea.vmem %s1, 965
  %3143 = vst.msk [vmem:[%s3142] ss:$8 sm:$0xf0] %vm3139, %v3138
  %s3144 = scalar_lea.vmem %s0, 128
  %v3145 = vld.sshfl [vmem:[%s3144] sm:$0xff pattern:$0xb3a29180]
  %3146 = vrot.lane.b32.xlu0 %v3145, 48
  %v3147 = vpop.permute.xlu0 %3146
  %vm3148 = vcmask 130048
  %s3149 = scalar_lea.vmem %s1, 1029
  %3150 = vst.msk [vmem:[%s3149] ss:$8 sm:$0xf] %vm3148, %v3147
  %s3151 = scalar_lea.vmem %s1, 1029
  %3152 = vst.msk [vmem:[%s3151] ss:$8 sm:$0xf0] %vm3148, %v3147
  %s3153 = scalar_lea.vmem %s0, 132
  %v3154 = vld.sshfl [vmem:[%s3153] sm:$0xff pattern:$0xb3a29180]
  %3155 = vrot.lane.b32.xlu0 %v3154, 48
  %v3156 = vpop.permute.xlu0 %3155
  %vm3157 = vcmask 130048
  %s3158 = scalar_lea.vmem %s1, 1093
  %3159 = vst.msk [vmem:[%s3158] ss:$8 sm:$0xf] %vm3157, %v3156
  %s3160 = scalar_lea.vmem %s1, 1093
  %3161 = vst.msk [vmem:[%s3160] ss:$8 sm:$0xf0] %vm3157, %v3156
  %s3162 = scalar_lea.vmem %s0, 144
  %v3163 = vld.sshfl [vmem:[%s3162] sm:$0xff pattern:$0xb3a29180]
  %3164 = vrot.lane.b32.xlu0 %v3163, 48
  %v3165 = vpop.permute.xlu0 %3164
  %vm3166 = vcmask 130048
  %s3167 = scalar_lea.vmem %s1, 1157
  %3168 = vst.msk [vmem:[%s3167] ss:$8 sm:$0xf] %vm3166, %v3165
  %s3169 = scalar_lea.vmem %s1, 1157
  %3170 = vst.msk [vmem:[%s3169] ss:$8 sm:$0xf0] %vm3166, %v3165
  %s3171 = scalar_lea.vmem %s0, 148
  %v3172 = vld.sshfl [vmem:[%s3171] sm:$0xff pattern:$0xb3a29180]
  %3173 = vrot.lane.b32.xlu0 %v3172, 48
  %v3174 = vpop.permute.xlu0 %3173
  %vm3175 = vcmask 130048
  %s3176 = scalar_lea.vmem %s1, 1221
  %3177 = vst.msk [vmem:[%s3176] ss:$8 sm:$0xf] %vm3175, %v3174
  %s3178 = scalar_lea.vmem %s1, 1221
  %3179 = vst.msk [vmem:[%s3178] ss:$8 sm:$0xf0] %vm3175, %v3174
  %s3180 = scalar_lea.vmem %s0, 160
  %v3181 = vld.sshfl [vmem:[%s3180] sm:$0xff pattern:$0xb3a29180]
  %3182 = vrot.lane.b32.xlu0 %v3181, 48
  %v3183 = vpop.permute.xlu0 %3182
  %vm3184 = vcmask 130048
  %s3185 = scalar_lea.vmem %s1, 1285
  %3186 = vst.msk [vmem:[%s3185] ss:$8 sm:$0xf] %vm3184, %v3183
  %s3187 = scalar_lea.vmem %s1, 1285
  %3188 = vst.msk [vmem:[%s3187] ss:$8 sm:$0xf0] %vm3184, %v3183
  %s3189 = scalar_lea.vmem %s0, 164
  %v3190 = vld.sshfl [vmem:[%s3189] sm:$0xff pattern:$0xb3a29180]
  %3191 = vrot.lane.b32.xlu0 %v3190, 48
  %v3192 = vpop.permute.xlu0 %3191
  %vm3193 = vcmask 130048
  %s3194 = scalar_lea.vmem %s1, 1349
  %3195 = vst.msk [vmem:[%s3194] ss:$8 sm:$0xf] %vm3193, %v3192
  %s3196 = scalar_lea.vmem %s1, 1349
  %3197 = vst.msk [vmem:[%s3196] ss:$8 sm:$0xf0] %vm3193, %v3192
  %s3198 = scalar_lea.vmem %s0, 176
  %v3199 = vld.sshfl [vmem:[%s3198] sm:$0xff pattern:$0xb3a29180]
  %3200 = vrot.lane.b32.xlu0 %v3199, 48
  %v3201 = vpop.permute.xlu0 %3200
  %vm3202 = vcmask 130048
  %s3203 = scalar_lea.vmem %s1, 1413
  %3204 = vst.msk [vmem:[%s3203] ss:$8 sm:$0xf] %vm3202, %v3201
  %s3205 = scalar_lea.vmem %s1, 1413
  %3206 = vst.msk [vmem:[%s3205] ss:$8 sm:$0xf0] %vm3202, %v3201
  %s3207 = scalar_lea.vmem %s0, 180
  %v3208 = vld.sshfl [vmem:[%s3207] sm:$0xff pattern:$0xb3a29180]
  %3209 = vrot.lane.b32.xlu0 %v3208, 48
  %v3210 = vpop.permute.xlu0 %3209
  %vm3211 = vcmask 130048
  %s3212 = scalar_lea.vmem %s1, 1477
  %3213 = vst.msk [vmem:[%s3212] ss:$8 sm:$0xf] %vm3211, %v3210
  %s3214 = scalar_lea.vmem %s1, 1477
  %3215 = vst.msk [vmem:[%s3214] ss:$8 sm:$0xf0] %vm3211, %v3210
  %s3216 = scalar_lea.vmem %s0, 192
  %v3217 = vld.sshfl [vmem:[%s3216] sm:$0xff pattern:$0xb3a29180]
  %3218 = vrot.lane.b32.xlu0 %v3217, 48
  %v3219 = vpop.permute.xlu0 %3218
  %vm3220 = vcmask 130048
  %s3221 = scalar_lea.vmem %s1, 1541
  %3222 = vst.msk [vmem:[%s3221] ss:$8 sm:$0xf] %vm3220, %v3219
  %s3223 = scalar_lea.vmem %s1, 1541
  %3224 = vst.msk [vmem:[%s3223] ss:$8 sm:$0xf0] %vm3220, %v3219
  %s3225 = scalar_lea.vmem %s0, 196
  %v3226 = vld.sshfl [vmem:[%s3225] sm:$0xff pattern:$0xb3a29180]
  %3227 = vrot.lane.b32.xlu0 %v3226, 48
  %v3228 = vpop.permute.xlu0 %3227
  %vm3229 = vcmask 130048
  %s3230 = scalar_lea.vmem %s1, 1605
  %3231 = vst.msk [vmem:[%s3230] ss:$8 sm:$0xf] %vm3229, %v3228
  %s3232 = scalar_lea.vmem %s1, 1605
  %3233 = vst.msk [vmem:[%s3232] ss:$8 sm:$0xf0] %vm3229, %v3228
  %s3234 = scalar_lea.vmem %s0, 208
  %v3235 = vld.sshfl [vmem:[%s3234] sm:$0xff pattern:$0xb3a29180]
  %3236 = vrot.lane.b32.xlu0 %v3235, 48
  %v3237 = vpop.permute.xlu0 %3236
  %vm3238 = vcmask 130048
  %s3239 = scalar_lea.vmem %s1, 1669
  %3240 = vst.msk [vmem:[%s3239] ss:$8 sm:$0xf] %vm3238, %v3237
  %s3241 = scalar_lea.vmem %s1, 1669
  %3242 = vst.msk [vmem:[%s3241] ss:$8 sm:$0xf0] %vm3238, %v3237
  %s3243 = scalar_lea.vmem %s0, 212
  %v3244 = vld.sshfl [vmem:[%s3243] sm:$0xff pattern:$0xb3a29180]
  %3245 = vrot.lane.b32.xlu0 %v3244, 48
  %v3246 = vpop.permute.xlu0 %3245
  %vm3247 = vcmask 130048
  %s3248 = scalar_lea.vmem %s1, 1733
  %3249 = vst.msk [vmem:[%s3248] ss:$8 sm:$0xf] %vm3247, %v3246
  %s3250 = scalar_lea.vmem %s1, 1733
  %3251 = vst.msk [vmem:[%s3250] ss:$8 sm:$0xf0] %vm3247, %v3246
  %s3252 = scalar_lea.vmem %s0, 224
  %v3253 = vld.sshfl [vmem:[%s3252] sm:$0xff pattern:$0xb3a29180]
  %3254 = vrot.lane.b32.xlu0 %v3253, 48
  %v3255 = vpop.permute.xlu0 %3254
  %vm3256 = vcmask 130048
  %s3257 = scalar_lea.vmem %s1, 1797
  %3258 = vst.msk [vmem:[%s3257] ss:$8 sm:$0xf] %vm3256, %v3255
  %s3259 = scalar_lea.vmem %s1, 1797
  %3260 = vst.msk [vmem:[%s3259] ss:$8 sm:$0xf0] %vm3256, %v3255
  %s3261 = scalar_lea.vmem %s0, 228
  %v3262 = vld.sshfl [vmem:[%s3261] sm:$0xff pattern:$0xb3a29180]
  %3263 = vrot.lane.b32.xlu0 %v3262, 48
  %v3264 = vpop.permute.xlu0 %3263
  %vm3265 = vcmask 130048
  %s3266 = scalar_lea.vmem %s1, 1861
  %3267 = vst.msk [vmem:[%s3266] ss:$8 sm:$0xf] %vm3265, %v3264
  %s3268 = scalar_lea.vmem %s1, 1861
  %3269 = vst.msk [vmem:[%s3268] ss:$8 sm:$0xf0] %vm3265, %v3264
  %s3270 = scalar_lea.vmem %s0, 240
  %v3271 = vld.sshfl [vmem:[%s3270] sm:$0xff pattern:$0xb3a29180]
  %3272 = vrot.lane.b32.xlu0 %v3271, 48
  %v3273 = vpop.permute.xlu0 %3272
  %vm3274 = vcmask 130048
  %s3275 = scalar_lea.vmem %s1, 1925
  %3276 = vst.msk [vmem:[%s3275] ss:$8 sm:$0xf] %vm3274, %v3273
  %s3277 = scalar_lea.vmem %s1, 1925
  %3278 = vst.msk [vmem:[%s3277] ss:$8 sm:$0xf0] %vm3274, %v3273
  %s3279 = scalar_lea.vmem %s0, 244
  %v3280 = vld.sshfl [vmem:[%s3279] sm:$0xff pattern:$0xb3a29180]
  %3281 = vrot.lane.b32.xlu0 %v3280, 48
  %v3282 = vpop.permute.xlu0 %3281
  %vm3283 = vcmask 130048
  %s3284 = scalar_lea.vmem %s1, 1989
  %3285 = vst.msk [vmem:[%s3284] ss:$8 sm:$0xf] %vm3283, %v3282
  %s3286 = scalar_lea.vmem %s1, 1989
  %3287 = vst.msk [vmem:[%s3286] ss:$8 sm:$0xf0] %vm3283, %v3282
  %s3288 = scalar_lea.vmem %s0, 256
  %v3289 = vld.sshfl [vmem:[%s3288] sm:$0xff pattern:$0xb3a29180]
  %3290 = vrot.lane.b32.xlu0 %v3289, 48
  %v3291 = vpop.permute.xlu0 %3290
  %vm3292 = vcmask 130048
  %s3293 = scalar_lea.vmem %s1, 2053
  %3294 = vst.msk [vmem:[%s3293] ss:$8 sm:$0xf] %vm3292, %v3291
  %s3295 = scalar_lea.vmem %s1, 2053
  %3296 = vst.msk [vmem:[%s3295] ss:$8 sm:$0xf0] %vm3292, %v3291
  %s3297 = scalar_lea.vmem %s0, 260
  %v3298 = vld.sshfl [vmem:[%s3297] sm:$0xff pattern:$0xb3a29180]
  %3299 = vrot.lane.b32.xlu0 %v3298, 48
  %v3300 = vpop.permute.xlu0 %3299
  %vm3301 = vcmask 130048
  %s3302 = scalar_lea.vmem %s1, 2117
  %3303 = vst.msk [vmem:[%s3302] ss:$8 sm:$0xf] %vm3301, %v3300
  %s3304 = scalar_lea.vmem %s1, 2117
  %3305 = vst.msk [vmem:[%s3304] ss:$8 sm:$0xf0] %vm3301, %v3300
  %s3306 = scalar_lea.vmem %s0, 272
  %v3307 = vld.sshfl [vmem:[%s3306] sm:$0xff pattern:$0xb3a29180]
  %3308 = vrot.lane.b32.xlu0 %v3307, 48
  %v3309 = vpop.permute.xlu0 %3308
  %vm3310 = vcmask 130048
  %s3311 = scalar_lea.vmem %s1, 2181
  %3312 = vst.msk [vmem:[%s3311] ss:$8 sm:$0xf] %vm3310, %v3309
  %s3313 = scalar_lea.vmem %s1, 2181
  %3314 = vst.msk [vmem:[%s3313] ss:$8 sm:$0xf0] %vm3310, %v3309
  %s3315 = scalar_lea.vmem %s0, 276
  %v3316 = vld.sshfl [vmem:[%s3315] sm:$0xff pattern:$0xb3a29180]
  %3317 = vrot.lane.b32.xlu0 %v3316, 48
  %v3318 = vpop.permute.xlu0 %3317
  %vm3319 = vcmask 130048
  %s3320 = scalar_lea.vmem %s1, 2245
  %3321 = vst.msk [vmem:[%s3320] ss:$8 sm:$0xf] %vm3319, %v3318
  %s3322 = scalar_lea.vmem %s1, 2245
  %3323 = vst.msk [vmem:[%s3322] ss:$8 sm:$0xf0] %vm3319, %v3318
  %s3324 = scalar_lea.vmem %s0, 288
  %v3325 = vld.sshfl [vmem:[%s3324] sm:$0xff pattern:$0xb3a29180]
  %3326 = vrot.lane.b32.xlu0 %v3325, 48
  %v3327 = vpop.permute.xlu0 %3326
  %vm3328 = vcmask 130048
  %s3329 = scalar_lea.vmem %s1, 2309
  %3330 = vst.msk [vmem:[%s3329] ss:$8 sm:$0xf] %vm3328, %v3327
  %s3331 = scalar_lea.vmem %s1, 2309
  %3332 = vst.msk [vmem:[%s3331] ss:$8 sm:$0xf0] %vm3328, %v3327
  %s3333 = scalar_lea.vmem %s0, 292
  %v3334 = vld.sshfl [vmem:[%s3333] sm:$0xff pattern:$0xb3a29180]
  %3335 = vrot.lane.b32.xlu0 %v3334, 48
  %v3336 = vpop.permute.xlu0 %3335
  %vm3337 = vcmask 130048
  %s3338 = scalar_lea.vmem %s1, 2373
  %3339 = vst.msk [vmem:[%s3338] ss:$8 sm:$0xf] %vm3337, %v3336
  %s3340 = scalar_lea.vmem %s1, 2373
  %3341 = vst.msk [vmem:[%s3340] ss:$8 sm:$0xf0] %vm3337, %v3336
  %s3342 = scalar_lea.vmem %s0, 304
  %v3343 = vld.sshfl [vmem:[%s3342] sm:$0xff pattern:$0xb3a29180]
  %3344 = vrot.lane.b32.xlu0 %v3343, 48
  %v3345 = vpop.permute.xlu0 %3344
  %vm3346 = vcmask 130048
  %s3347 = scalar_lea.vmem %s1, 2437
  %3348 = vst.msk [vmem:[%s3347] ss:$8 sm:$0xf] %vm3346, %v3345
  %s3349 = scalar_lea.vmem %s1, 2437
  %3350 = vst.msk [vmem:[%s3349] ss:$8 sm:$0xf0] %vm3346, %v3345
  %s3351 = scalar_lea.vmem %s0, 308
  %v3352 = vld.sshfl [vmem:[%s3351] sm:$0xff pattern:$0xb3a29180]
  %3353 = vrot.lane.b32.xlu0 %v3352, 48
  %v3354 = vpop.permute.xlu0 %3353
  %vm3355 = vcmask 130048
  %s3356 = scalar_lea.vmem %s1, 2501
  %3357 = vst.msk [vmem:[%s3356] ss:$8 sm:$0xf] %vm3355, %v3354
  %s3358 = scalar_lea.vmem %s1, 2501
  %3359 = vst.msk [vmem:[%s3358] ss:$8 sm:$0xf0] %vm3355, %v3354
  %s3360 = scalar_lea.vmem %s0, 320
  %v3361 = vld.sshfl [vmem:[%s3360] sm:$0xff pattern:$0xb3a29180]
  %3362 = vrot.lane.b32.xlu0 %v3361, 48
  %v3363 = vpop.permute.xlu0 %3362
  %vm3364 = vcmask 130048
  %s3365 = scalar_lea.vmem %s1, 2565
  %3366 = vst.msk [vmem:[%s3365] ss:$8 sm:$0xf] %vm3364, %v3363
  %s3367 = scalar_lea.vmem %s1, 2565
  %3368 = vst.msk [vmem:[%s3367] ss:$8 sm:$0xf0] %vm3364, %v3363
  %s3369 = scalar_lea.vmem %s0, 324
  %v3370 = vld.sshfl [vmem:[%s3369] sm:$0xff pattern:$0xb3a29180]
  %3371 = vrot.lane.b32.xlu0 %v3370, 48
  %v3372 = vpop.permute.xlu0 %3371
  %vm3373 = vcmask 130048
  %s3374 = scalar_lea.vmem %s1, 2629
  %3375 = vst.msk [vmem:[%s3374] ss:$8 sm:$0xf] %vm3373, %v3372
  %s3376 = scalar_lea.vmem %s1, 2629
  %3377 = vst.msk [vmem:[%s3376] ss:$8 sm:$0xf0] %vm3373, %v3372
  %s3378 = scalar_lea.vmem %s0, 336
  %v3379 = vld.sshfl [vmem:[%s3378] sm:$0xff pattern:$0xb3a29180]
  %3380 = vrot.lane.b32.xlu0 %v3379, 48
  %v3381 = vpop.permute.xlu0 %3380
  %vm3382 = vcmask 130048
  %s3383 = scalar_lea.vmem %s1, 2693
  %3384 = vst.msk [vmem:[%s3383] ss:$8 sm:$0xf] %vm3382, %v3381
  %s3385 = scalar_lea.vmem %s1, 2693
  %3386 = vst.msk [vmem:[%s3385] ss:$8 sm:$0xf0] %vm3382, %v3381
  %s3387 = scalar_lea.vmem %s0, 340
  %v3388 = vld.sshfl [vmem:[%s3387] sm:$0xff pattern:$0xb3a29180]
  %3389 = vrot.lane.b32.xlu0 %v3388, 48
  %v3390 = vpop.permute.xlu0 %3389
  %vm3391 = vcmask 130048
  %s3392 = scalar_lea.vmem %s1, 2757
  %3393 = vst.msk [vmem:[%s3392] ss:$8 sm:$0xf] %vm3391, %v3390
  %s3394 = scalar_lea.vmem %s1, 2757
  %3395 = vst.msk [vmem:[%s3394] ss:$8 sm:$0xf0] %vm3391, %v3390
  %s3396 = scalar_lea.vmem %s0, 352
  %v3397 = vld.sshfl [vmem:[%s3396] sm:$0xff pattern:$0xb3a29180]
  %3398 = vrot.lane.b32.xlu0 %v3397, 48
  %v3399 = vpop.permute.xlu0 %3398
  %vm3400 = vcmask 130048
  %s3401 = scalar_lea.vmem %s1, 2821
  %3402 = vst.msk [vmem:[%s3401] ss:$8 sm:$0xf] %vm3400, %v3399
  %s3403 = scalar_lea.vmem %s1, 2821
  %3404 = vst.msk [vmem:[%s3403] ss:$8 sm:$0xf0] %vm3400, %v3399
  %s3405 = scalar_lea.vmem %s0, 356
  %v3406 = vld.sshfl [vmem:[%s3405] sm:$0xff pattern:$0xb3a29180]
  %3407 = vrot.lane.b32.xlu0 %v3406, 48
  %v3408 = vpop.permute.xlu0 %3407
  %vm3409 = vcmask 130048
  %s3410 = scalar_lea.vmem %s1, 2885
  %3411 = vst.msk [vmem:[%s3410] ss:$8 sm:$0xf] %vm3409, %v3408
  %s3412 = scalar_lea.vmem %s1, 2885
  %3413 = vst.msk [vmem:[%s3412] ss:$8 sm:$0xf0] %vm3409, %v3408
  %s3414 = scalar_lea.vmem %s0, 368
  %v3415 = vld.sshfl [vmem:[%s3414] sm:$0xff pattern:$0xb3a29180]
  %3416 = vrot.lane.b32.xlu0 %v3415, 48
  %v3417 = vpop.permute.xlu0 %3416
  %vm3418 = vcmask 130048
  %s3419 = scalar_lea.vmem %s1, 2949
  %3420 = vst.msk [vmem:[%s3419] ss:$8 sm:$0xf] %vm3418, %v3417
  %s3421 = scalar_lea.vmem %s1, 2949
  %3422 = vst.msk [vmem:[%s3421] ss:$8 sm:$0xf0] %vm3418, %v3417
  %s3423 = scalar_lea.vmem %s0, 372
  %v3424 = vld.sshfl [vmem:[%s3423] sm:$0xff pattern:$0xb3a29180]
  %3425 = vrot.lane.b32.xlu0 %v3424, 48
  %v3426 = vpop.permute.xlu0 %3425
  %vm3427 = vcmask 130048
  %s3428 = scalar_lea.vmem %s1, 3013
  %3429 = vst.msk [vmem:[%s3428] ss:$8 sm:$0xf] %vm3427, %v3426
  %s3430 = scalar_lea.vmem %s1, 3013
  %3431 = vst.msk [vmem:[%s3430] ss:$8 sm:$0xf0] %vm3427, %v3426
  %s3432 = scalar_lea.vmem %s0, 384
  %v3433 = vld.sshfl [vmem:[%s3432] sm:$0xff pattern:$0xb3a29180]
  %3434 = vrot.lane.b32.xlu0 %v3433, 48
  %v3435 = vpop.permute.xlu0 %3434
  %vm3436 = vcmask 130048
  %s3437 = scalar_lea.vmem %s1, 3077
  %3438 = vst.msk [vmem:[%s3437] ss:$8 sm:$0xf] %vm3436, %v3435
  %s3439 = scalar_lea.vmem %s1, 3077
  %3440 = vst.msk [vmem:[%s3439] ss:$8 sm:$0xf0] %vm3436, %v3435
  %s3441 = scalar_lea.vmem %s0, 388
  %v3442 = vld.sshfl [vmem:[%s3441] sm:$0xff pattern:$0xb3a29180]
  %3443 = vrot.lane.b32.xlu0 %v3442, 48
  %v3444 = vpop.permute.xlu0 %3443
  %vm3445 = vcmask 130048
  %s3446 = scalar_lea.vmem %s1, 3141
  %3447 = vst.msk [vmem:[%s3446] ss:$8 sm:$0xf] %vm3445, %v3444
  %s3448 = scalar_lea.vmem %s1, 3141
  %3449 = vst.msk [vmem:[%s3448] ss:$8 sm:$0xf0] %vm3445, %v3444
  %s3450 = scalar_lea.vmem %s0, 400
  %v3451 = vld.sshfl [vmem:[%s3450] sm:$0xff pattern:$0xb3a29180]
  %3452 = vrot.lane.b32.xlu0 %v3451, 48
  %v3453 = vpop.permute.xlu0 %3452
  %vm3454 = vcmask 130048
  %s3455 = scalar_lea.vmem %s1, 3205
  %3456 = vst.msk [vmem:[%s3455] ss:$8 sm:$0xf] %vm3454, %v3453
  %s3457 = scalar_lea.vmem %s1, 3205
  %3458 = vst.msk [vmem:[%s3457] ss:$8 sm:$0xf0] %vm3454, %v3453
  %s3459 = scalar_lea.vmem %s0, 404
  %v3460 = vld.sshfl [vmem:[%s3459] sm:$0xff pattern:$0xb3a29180]
  %3461 = vrot.lane.b32.xlu0 %v3460, 48
  %v3462 = vpop.permute.xlu0 %3461
  %vm3463 = vcmask 130048
  %s3464 = scalar_lea.vmem %s1, 3269
  %3465 = vst.msk [vmem:[%s3464] ss:$8 sm:$0xf] %vm3463, %v3462
  %s3466 = scalar_lea.vmem %s1, 3269
  %3467 = vst.msk [vmem:[%s3466] ss:$8 sm:$0xf0] %vm3463, %v3462
  %s3468 = scalar_lea.vmem %s0, 416
  %v3469 = vld.sshfl [vmem:[%s3468] sm:$0xff pattern:$0xb3a29180]
  %3470 = vrot.lane.b32.xlu0 %v3469, 48
  %v3471 = vpop.permute.xlu0 %3470
  %vm3472 = vcmask 130048
  %s3473 = scalar_lea.vmem %s1, 3333
  %3474 = vst.msk [vmem:[%s3473] ss:$8 sm:$0xf] %vm3472, %v3471
  %s3475 = scalar_lea.vmem %s1, 3333
  %3476 = vst.msk [vmem:[%s3475] ss:$8 sm:$0xf0] %vm3472, %v3471
  %s3477 = scalar_lea.vmem %s0, 420
  %v3478 = vld.sshfl [vmem:[%s3477] sm:$0xff pattern:$0xb3a29180]
  %3479 = vrot.lane.b32.xlu0 %v3478, 48
  %v3480 = vpop.permute.xlu0 %3479
  %vm3481 = vcmask 130048
  %s3482 = scalar_lea.vmem %s1, 3397
  %3483 = vst.msk [vmem:[%s3482] ss:$8 sm:$0xf] %vm3481, %v3480
  %s3484 = scalar_lea.vmem %s1, 3397
  %3485 = vst.msk [vmem:[%s3484] ss:$8 sm:$0xf0] %vm3481, %v3480
  %s3486 = scalar_lea.vmem %s0, 432
  %v3487 = vld.sshfl [vmem:[%s3486] sm:$0xff pattern:$0xb3a29180]
  %3488 = vrot.lane.b32.xlu0 %v3487, 48
  %v3489 = vpop.permute.xlu0 %3488
  %vm3490 = vcmask 130048
  %s3491 = scalar_lea.vmem %s1, 3461
  %3492 = vst.msk [vmem:[%s3491] ss:$8 sm:$0xf] %vm3490, %v3489
  %s3493 = scalar_lea.vmem %s1, 3461
  %3494 = vst.msk [vmem:[%s3493] ss:$8 sm:$0xf0] %vm3490, %v3489
  %s3495 = scalar_lea.vmem %s0, 436
  %v3496 = vld.sshfl [vmem:[%s3495] sm:$0xff pattern:$0xb3a29180]
  %3497 = vrot.lane.b32.xlu0 %v3496, 48
  %v3498 = vpop.permute.xlu0 %3497
  %vm3499 = vcmask 130048
  %s3500 = scalar_lea.vmem %s1, 3525
  %3501 = vst.msk [vmem:[%s3500] ss:$8 sm:$0xf] %vm3499, %v3498
  %s3502 = scalar_lea.vmem %s1, 3525
  %3503 = vst.msk [vmem:[%s3502] ss:$8 sm:$0xf0] %vm3499, %v3498
  %s3504 = scalar_lea.vmem %s0, 448
  %v3505 = vld.sshfl [vmem:[%s3504] sm:$0xff pattern:$0xb3a29180]
  %3506 = vrot.lane.b32.xlu0 %v3505, 48
  %v3507 = vpop.permute.xlu0 %3506
  %vm3508 = vcmask 130048
  %s3509 = scalar_lea.vmem %s1, 3589
  %3510 = vst.msk [vmem:[%s3509] ss:$8 sm:$0xf] %vm3508, %v3507
  %s3511 = scalar_lea.vmem %s1, 3589
  %3512 = vst.msk [vmem:[%s3511] ss:$8 sm:$0xf0] %vm3508, %v3507
  %s3513 = scalar_lea.vmem %s0, 452
  %v3514 = vld.sshfl [vmem:[%s3513] sm:$0xff pattern:$0xb3a29180]
  %3515 = vrot.lane.b32.xlu0 %v3514, 48
  %v3516 = vpop.permute.xlu0 %3515
  %vm3517 = vcmask 130048
  %s3518 = scalar_lea.vmem %s1, 3653
  %3519 = vst.msk [vmem:[%s3518] ss:$8 sm:$0xf] %vm3517, %v3516
  %s3520 = scalar_lea.vmem %s1, 3653
  %3521 = vst.msk [vmem:[%s3520] ss:$8 sm:$0xf0] %vm3517, %v3516
  %s3522 = scalar_lea.vmem %s0, 464
  %v3523 = vld.sshfl [vmem:[%s3522] sm:$0xff pattern:$0xb3a29180]
  %3524 = vrot.lane.b32.xlu0 %v3523, 48
  %v3525 = vpop.permute.xlu0 %3524
  %vm3526 = vcmask 130048
  %s3527 = scalar_lea.vmem %s1, 3717
  %3528 = vst.msk [vmem:[%s3527] ss:$8 sm:$0xf] %vm3526, %v3525
  %s3529 = scalar_lea.vmem %s1, 3717
  %3530 = vst.msk [vmem:[%s3529] ss:$8 sm:$0xf0] %vm3526, %v3525
  %s3531 = scalar_lea.vmem %s0, 468
  %v3532 = vld.sshfl [vmem:[%s3531] sm:$0xff pattern:$0xb3a29180]
  %3533 = vrot.lane.b32.xlu0 %v3532, 48
  %v3534 = vpop.permute.xlu0 %3533
  %vm3535 = vcmask 130048
  %s3536 = scalar_lea.vmem %s1, 3781
  %3537 = vst.msk [vmem:[%s3536] ss:$8 sm:$0xf] %vm3535, %v3534
  %s3538 = scalar_lea.vmem %s1, 3781
  %3539 = vst.msk [vmem:[%s3538] ss:$8 sm:$0xf0] %vm3535, %v3534
  %s3540 = scalar_lea.vmem %s0, 480
  %v3541 = vld.sshfl [vmem:[%s3540] sm:$0xff pattern:$0xb3a29180]
  %3542 = vrot.lane.b32.xlu0 %v3541, 48
  %v3543 = vpop.permute.xlu0 %3542
  %vm3544 = vcmask 130048
  %s3545 = scalar_lea.vmem %s1, 3845
  %3546 = vst.msk [vmem:[%s3545] ss:$8 sm:$0xf] %vm3544, %v3543
  %s3547 = scalar_lea.vmem %s1, 3845
  %3548 = vst.msk [vmem:[%s3547] ss:$8 sm:$0xf0] %vm3544, %v3543
  %s3549 = scalar_lea.vmem %s0, 484
  %v3550 = vld.sshfl [vmem:[%s3549] sm:$0xff pattern:$0xb3a29180]
  %3551 = vrot.lane.b32.xlu0 %v3550, 48
  %v3552 = vpop.permute.xlu0 %3551
  %vm3553 = vcmask 130048
  %s3554 = scalar_lea.vmem %s1, 3909
  %3555 = vst.msk [vmem:[%s3554] ss:$8 sm:$0xf] %vm3553, %v3552
  %s3556 = scalar_lea.vmem %s1, 3909
  %3557 = vst.msk [vmem:[%s3556] ss:$8 sm:$0xf0] %vm3553, %v3552
  %s3558 = scalar_lea.vmem %s0, 496
  %v3559 = vld.sshfl [vmem:[%s3558] sm:$0xff pattern:$0xb3a29180]
  %3560 = vrot.lane.b32.xlu0 %v3559, 48
  %v3561 = vpop.permute.xlu0 %3560
  %vm3562 = vcmask 130048
  %s3563 = scalar_lea.vmem %s1, 3973
  %3564 = vst.msk [vmem:[%s3563] ss:$8 sm:$0xf] %vm3562, %v3561
  %s3565 = scalar_lea.vmem %s1, 3973
  %3566 = vst.msk [vmem:[%s3565] ss:$8 sm:$0xf0] %vm3562, %v3561
  %s3567 = scalar_lea.vmem %s0, 500
  %v3568 = vld.sshfl [vmem:[%s3567] sm:$0xff pattern:$0xb3a29180]
  %3569 = vrot.lane.b32.xlu0 %v3568, 48
  %v3570 = vpop.permute.xlu0 %3569
  %vm3571 = vcmask 130048
  %s3572 = scalar_lea.vmem %s1, 4037
  %3573 = vst.msk [vmem:[%s3572] ss:$8 sm:$0xf] %vm3571, %v3570
  %s3574 = scalar_lea.vmem %s1, 4037
  %3575 = vst.msk [vmem:[%s3574] ss:$8 sm:$0xf0] %vm3571, %v3570
  %v3576 = vld.sshfl [vmem:[%s0] sm:$0xff pattern:$0xb3a29180]
  %3577 = vrot.lane.b32.xlu0 %v3576, 32
  %v3578 = vpop.permute.xlu0 %3577
  %vm3579 = vcmask 130048
  %s3580 = scalar_lea.vmem %s1, 6
  %3581 = vst.msk [vmem:[%s3580] ss:$8 sm:$0xf] %vm3579, %v3578
  %s3582 = scalar_lea.vmem %s1, 6
  %3583 = vst.msk [vmem:[%s3582] ss:$8 sm:$0xf0] %vm3579, %v3578
  %s3584 = scalar_lea.vmem %s0, 4
  %v3585 = vld.sshfl [vmem:[%s3584] sm:$0xff pattern:$0xb3a29180]
  %3586 = vrot.lane.b32.xlu0 %v3585, 32
  %v3587 = vpop.permute.xlu0 %3586
  %vm3588 = vcmask 130048
  %s3589 = scalar_lea.vmem %s1, 70
  %3590 = vst.msk [vmem:[%s3589] ss:$8 sm:$0xf] %vm3588, %v3587
  %s3591 = scalar_lea.vmem %s1, 70
  %3592 = vst.msk [vmem:[%s3591] ss:$8 sm:$0xf0] %vm3588, %v3587
  %s3593 = scalar_lea.vmem %s0, 16
  %v3594 = vld.sshfl [vmem:[%s3593] sm:$0xff pattern:$0xb3a29180]
  %3595 = vrot.lane.b32.xlu0 %v3594, 32
  %v3596 = vpop.permute.xlu0 %3595
  %vm3597 = vcmask 130048
  %s3598 = scalar_lea.vmem %s1, 134
  %3599 = vst.msk [vmem:[%s3598] ss:$8 sm:$0xf] %vm3597, %v3596
  %s3600 = scalar_lea.vmem %s1, 134
  %3601 = vst.msk [vmem:[%s3600] ss:$8 sm:$0xf0] %vm3597, %v3596
  %s3602 = scalar_lea.vmem %s0, 20
  %v3603 = vld.sshfl [vmem:[%s3602] sm:$0xff pattern:$0xb3a29180]
  %3604 = vrot.lane.b32.xlu0 %v3603, 32
  %v3605 = vpop.permute.xlu0 %3604
  %vm3606 = vcmask 130048
  %s3607 = scalar_lea.vmem %s1, 198
  %3608 = vst.msk [vmem:[%s3607] ss:$8 sm:$0xf] %vm3606, %v3605
  %s3609 = scalar_lea.vmem %s1, 198
  %3610 = vst.msk [vmem:[%s3609] ss:$8 sm:$0xf0] %vm3606, %v3605
  %s3611 = scalar_lea.vmem %s0, 32
  %v3612 = vld.sshfl [vmem:[%s3611] sm:$0xff pattern:$0xb3a29180]
  %3613 = vrot.lane.b32.xlu0 %v3612, 32
  %v3614 = vpop.permute.xlu0 %3613
  %vm3615 = vcmask 130048
  %s3616 = scalar_lea.vmem %s1, 262
  %3617 = vst.msk [vmem:[%s3616] ss:$8 sm:$0xf] %vm3615, %v3614
  %s3618 = scalar_lea.vmem %s1, 262
  %3619 = vst.msk [vmem:[%s3618] ss:$8 sm:$0xf0] %vm3615, %v3614
  %s3620 = scalar_lea.vmem %s0, 36
  %v3621 = vld.sshfl [vmem:[%s3620] sm:$0xff pattern:$0xb3a29180]
  %3622 = vrot.lane.b32.xlu0 %v3621, 32
  %v3623 = vpop.permute.xlu0 %3622
  %vm3624 = vcmask 130048
  %s3625 = scalar_lea.vmem %s1, 326
  %3626 = vst.msk [vmem:[%s3625] ss:$8 sm:$0xf] %vm3624, %v3623
  %s3627 = scalar_lea.vmem %s1, 326
  %3628 = vst.msk [vmem:[%s3627] ss:$8 sm:$0xf0] %vm3624, %v3623
  %s3629 = scalar_lea.vmem %s0, 48
  %v3630 = vld.sshfl [vmem:[%s3629] sm:$0xff pattern:$0xb3a29180]
  %3631 = vrot.lane.b32.xlu0 %v3630, 32
  %v3632 = vpop.permute.xlu0 %3631
  %vm3633 = vcmask 130048
  %s3634 = scalar_lea.vmem %s1, 390
  %3635 = vst.msk [vmem:[%s3634] ss:$8 sm:$0xf] %vm3633, %v3632
  %s3636 = scalar_lea.vmem %s1, 390
  %3637 = vst.msk [vmem:[%s3636] ss:$8 sm:$0xf0] %vm3633, %v3632
  %s3638 = scalar_lea.vmem %s0, 52
  %v3639 = vld.sshfl [vmem:[%s3638] sm:$0xff pattern:$0xb3a29180]
  %3640 = vrot.lane.b32.xlu0 %v3639, 32
  %v3641 = vpop.permute.xlu0 %3640
  %vm3642 = vcmask 130048
  %s3643 = scalar_lea.vmem %s1, 454
  %3644 = vst.msk [vmem:[%s3643] ss:$8 sm:$0xf] %vm3642, %v3641
  %s3645 = scalar_lea.vmem %s1, 454
  %3646 = vst.msk [vmem:[%s3645] ss:$8 sm:$0xf0] %vm3642, %v3641
  %s3647 = scalar_lea.vmem %s0, 64
  %v3648 = vld.sshfl [vmem:[%s3647] sm:$0xff pattern:$0xb3a29180]
  %3649 = vrot.lane.b32.xlu0 %v3648, 32
  %v3650 = vpop.permute.xlu0 %3649
  %vm3651 = vcmask 130048
  %s3652 = scalar_lea.vmem %s1, 518
  %3653 = vst.msk [vmem:[%s3652] ss:$8 sm:$0xf] %vm3651, %v3650
  %s3654 = scalar_lea.vmem %s1, 518
  %3655 = vst.msk [vmem:[%s3654] ss:$8 sm:$0xf0] %vm3651, %v3650
  %s3656 = scalar_lea.vmem %s0, 68
  %v3657 = vld.sshfl [vmem:[%s3656] sm:$0xff pattern:$0xb3a29180]
  %3658 = vrot.lane.b32.xlu0 %v3657, 32
  %v3659 = vpop.permute.xlu0 %3658
  %vm3660 = vcmask 130048
  %s3661 = scalar_lea.vmem %s1, 582
  %3662 = vst.msk [vmem:[%s3661] ss:$8 sm:$0xf] %vm3660, %v3659
  %s3663 = scalar_lea.vmem %s1, 582
  %3664 = vst.msk [vmem:[%s3663] ss:$8 sm:$0xf0] %vm3660, %v3659
  %s3665 = scalar_lea.vmem %s0, 80
  %v3666 = vld.sshfl [vmem:[%s3665] sm:$0xff pattern:$0xb3a29180]
  %3667 = vrot.lane.b32.xlu0 %v3666, 32
  %v3668 = vpop.permute.xlu0 %3667
  %vm3669 = vcmask 130048
  %s3670 = scalar_lea.vmem %s1, 646
  %3671 = vst.msk [vmem:[%s3670] ss:$8 sm:$0xf] %vm3669, %v3668
  %s3672 = scalar_lea.vmem %s1, 646
  %3673 = vst.msk [vmem:[%s3672] ss:$8 sm:$0xf0] %vm3669, %v3668
  %s3674 = scalar_lea.vmem %s0, 84
  %v3675 = vld.sshfl [vmem:[%s3674] sm:$0xff pattern:$0xb3a29180]
  %3676 = vrot.lane.b32.xlu0 %v3675, 32
  %v3677 = vpop.permute.xlu0 %3676
  %vm3678 = vcmask 130048
  %s3679 = scalar_lea.vmem %s1, 710
  %3680 = vst.msk [vmem:[%s3679] ss:$8 sm:$0xf] %vm3678, %v3677
  %s3681 = scalar_lea.vmem %s1, 710
  %3682 = vst.msk [vmem:[%s3681] ss:$8 sm:$0xf0] %vm3678, %v3677
  %s3683 = scalar_lea.vmem %s0, 96
  %v3684 = vld.sshfl [vmem:[%s3683] sm:$0xff pattern:$0xb3a29180]
  %3685 = vrot.lane.b32.xlu0 %v3684, 32
  %v3686 = vpop.permute.xlu0 %3685
  %vm3687 = vcmask 130048
  %s3688 = scalar_lea.vmem %s1, 774
  %3689 = vst.msk [vmem:[%s3688] ss:$8 sm:$0xf] %vm3687, %v3686
  %s3690 = scalar_lea.vmem %s1, 774
  %3691 = vst.msk [vmem:[%s3690] ss:$8 sm:$0xf0] %vm3687, %v3686
  %s3692 = scalar_lea.vmem %s0, 100
  %v3693 = vld.sshfl [vmem:[%s3692] sm:$0xff pattern:$0xb3a29180]
  %3694 = vrot.lane.b32.xlu0 %v3693, 32
  %v3695 = vpop.permute.xlu0 %3694
  %vm3696 = vcmask 130048
  %s3697 = scalar_lea.vmem %s1, 838
  %3698 = vst.msk [vmem:[%s3697] ss:$8 sm:$0xf] %vm3696, %v3695
  %s3699 = scalar_lea.vmem %s1, 838
  %3700 = vst.msk [vmem:[%s3699] ss:$8 sm:$0xf0] %vm3696, %v3695
  %s3701 = scalar_lea.vmem %s0, 112
  %v3702 = vld.sshfl [vmem:[%s3701] sm:$0xff pattern:$0xb3a29180]
  %3703 = vrot.lane.b32.xlu0 %v3702, 32
  %v3704 = vpop.permute.xlu0 %3703
  %vm3705 = vcmask 130048
  %s3706 = scalar_lea.vmem %s1, 902
  %3707 = vst.msk [vmem:[%s3706] ss:$8 sm:$0xf] %vm3705, %v3704
  %s3708 = scalar_lea.vmem %s1, 902
  %3709 = vst.msk [vmem:[%s3708] ss:$8 sm:$0xf0] %vm3705, %v3704
  %s3710 = scalar_lea.vmem %s0, 116
  %v3711 = vld.sshfl [vmem:[%s3710] sm:$0xff pattern:$0xb3a29180]
  %3712 = vrot.lane.b32.xlu0 %v3711, 32
  %v3713 = vpop.permute.xlu0 %3712
  %vm3714 = vcmask 130048
  %s3715 = scalar_lea.vmem %s1, 966
  %3716 = vst.msk [vmem:[%s3715] ss:$8 sm:$0xf] %vm3714, %v3713
  %s3717 = scalar_lea.vmem %s1, 966
  %3718 = vst.msk [vmem:[%s3717] ss:$8 sm:$0xf0] %vm3714, %v3713
  %s3719 = scalar_lea.vmem %s0, 128
  %v3720 = vld.sshfl [vmem:[%s3719] sm:$0xff pattern:$0xb3a29180]
  %3721 = vrot.lane.b32.xlu0 %v3720, 32
  %v3722 = vpop.permute.xlu0 %3721
  %vm3723 = vcmask 130048
  %s3724 = scalar_lea.vmem %s1, 1030
  %3725 = vst.msk [vmem:[%s3724] ss:$8 sm:$0xf] %vm3723, %v3722
  %s3726 = scalar_lea.vmem %s1, 1030
  %3727 = vst.msk [vmem:[%s3726] ss:$8 sm:$0xf0] %vm3723, %v3722
  %s3728 = scalar_lea.vmem %s0, 132
  %v3729 = vld.sshfl [vmem:[%s3728] sm:$0xff pattern:$0xb3a29180]
  %3730 = vrot.lane.b32.xlu0 %v3729, 32
  %v3731 = vpop.permute.xlu0 %3730
  %vm3732 = vcmask 130048
  %s3733 = scalar_lea.vmem %s1, 1094
  %3734 = vst.msk [vmem:[%s3733] ss:$8 sm:$0xf] %vm3732, %v3731
  %s3735 = scalar_lea.vmem %s1, 1094
  %3736 = vst.msk [vmem:[%s3735] ss:$8 sm:$0xf0] %vm3732, %v3731
  %s3737 = scalar_lea.vmem %s0, 144
  %v3738 = vld.sshfl [vmem:[%s3737] sm:$0xff pattern:$0xb3a29180]
  %3739 = vrot.lane.b32.xlu0 %v3738, 32
  %v3740 = vpop.permute.xlu0 %3739
  %vm3741 = vcmask 130048
  %s3742 = scalar_lea.vmem %s1, 1158
  %3743 = vst.msk [vmem:[%s3742] ss:$8 sm:$0xf] %vm3741, %v3740
  %s3744 = scalar_lea.vmem %s1, 1158
  %3745 = vst.msk [vmem:[%s3744] ss:$8 sm:$0xf0] %vm3741, %v3740
  %s3746 = scalar_lea.vmem %s0, 148
  %v3747 = vld.sshfl [vmem:[%s3746] sm:$0xff pattern:$0xb3a29180]
  %3748 = vrot.lane.b32.xlu0 %v3747, 32
  %v3749 = vpop.permute.xlu0 %3748
  %vm3750 = vcmask 130048
  %s3751 = scalar_lea.vmem %s1, 1222
  %3752 = vst.msk [vmem:[%s3751] ss:$8 sm:$0xf] %vm3750, %v3749
  %s3753 = scalar_lea.vmem %s1, 1222
  %3754 = vst.msk [vmem:[%s3753] ss:$8 sm:$0xf0] %vm3750, %v3749
  %s3755 = scalar_lea.vmem %s0, 160
  %v3756 = vld.sshfl [vmem:[%s3755] sm:$0xff pattern:$0xb3a29180]
  %3757 = vrot.lane.b32.xlu0 %v3756, 32
  %v3758 = vpop.permute.xlu0 %3757
  %vm3759 = vcmask 130048
  %s3760 = scalar_lea.vmem %s1, 1286
  %3761 = vst.msk [vmem:[%s3760] ss:$8 sm:$0xf] %vm3759, %v3758
  %s3762 = scalar_lea.vmem %s1, 1286
  %3763 = vst.msk [vmem:[%s3762] ss:$8 sm:$0xf0] %vm3759, %v3758
  %s3764 = scalar_lea.vmem %s0, 164
  %v3765 = vld.sshfl [vmem:[%s3764] sm:$0xff pattern:$0xb3a29180]
  %3766 = vrot.lane.b32.xlu0 %v3765, 32
  %v3767 = vpop.permute.xlu0 %3766
  %vm3768 = vcmask 130048
  %s3769 = scalar_lea.vmem %s1, 1350
  %3770 = vst.msk [vmem:[%s3769] ss:$8 sm:$0xf] %vm3768, %v3767
  %s3771 = scalar_lea.vmem %s1, 1350
  %3772 = vst.msk [vmem:[%s3771] ss:$8 sm:$0xf0] %vm3768, %v3767
  %s3773 = scalar_lea.vmem %s0, 176
  %v3774 = vld.sshfl [vmem:[%s3773] sm:$0xff pattern:$0xb3a29180]
  %3775 = vrot.lane.b32.xlu0 %v3774, 32
  %v3776 = vpop.permute.xlu0 %3775
  %vm3777 = vcmask 130048
  %s3778 = scalar_lea.vmem %s1, 1414
  %3779 = vst.msk [vmem:[%s3778] ss:$8 sm:$0xf] %vm3777, %v3776
  %s3780 = scalar_lea.vmem %s1, 1414
  %3781 = vst.msk [vmem:[%s3780] ss:$8 sm:$0xf0] %vm3777, %v3776
  %s3782 = scalar_lea.vmem %s0, 180
  %v3783 = vld.sshfl [vmem:[%s3782] sm:$0xff pattern:$0xb3a29180]
  %3784 = vrot.lane.b32.xlu0 %v3783, 32
  %v3785 = vpop.permute.xlu0 %3784
  %vm3786 = vcmask 130048
  %s3787 = scalar_lea.vmem %s1, 1478
  %3788 = vst.msk [vmem:[%s3787] ss:$8 sm:$0xf] %vm3786, %v3785
  %s3789 = scalar_lea.vmem %s1, 1478
  %3790 = vst.msk [vmem:[%s3789] ss:$8 sm:$0xf0] %vm3786, %v3785
  %s3791 = scalar_lea.vmem %s0, 192
  %v3792 = vld.sshfl [vmem:[%s3791] sm:$0xff pattern:$0xb3a29180]
  %3793 = vrot.lane.b32.xlu0 %v3792, 32
  %v3794 = vpop.permute.xlu0 %3793
  %vm3795 = vcmask 130048
  %s3796 = scalar_lea.vmem %s1, 1542
  %3797 = vst.msk [vmem:[%s3796] ss:$8 sm:$0xf] %vm3795, %v3794
  %s3798 = scalar_lea.vmem %s1, 1542
  %3799 = vst.msk [vmem:[%s3798] ss:$8 sm:$0xf0] %vm3795, %v3794
  %s3800 = scalar_lea.vmem %s0, 196
  %v3801 = vld.sshfl [vmem:[%s3800] sm:$0xff pattern:$0xb3a29180]
  %3802 = vrot.lane.b32.xlu0 %v3801, 32
  %v3803 = vpop.permute.xlu0 %3802
  %vm3804 = vcmask 130048
  %s3805 = scalar_lea.vmem %s1, 1606
  %3806 = vst.msk [vmem:[%s3805] ss:$8 sm:$0xf] %vm3804, %v3803
  %s3807 = scalar_lea.vmem %s1, 1606
  %3808 = vst.msk [vmem:[%s3807] ss:$8 sm:$0xf0] %vm3804, %v3803
  %s3809 = scalar_lea.vmem %s0, 208
  %v3810 = vld.sshfl [vmem:[%s3809] sm:$0xff pattern:$0xb3a29180]
  %3811 = vrot.lane.b32.xlu0 %v3810, 32
  %v3812 = vpop.permute.xlu0 %3811
  %vm3813 = vcmask 130048
  %s3814 = scalar_lea.vmem %s1, 1670
  %3815 = vst.msk [vmem:[%s3814] ss:$8 sm:$0xf] %vm3813, %v3812
  %s3816 = scalar_lea.vmem %s1, 1670
  %3817 = vst.msk [vmem:[%s3816] ss:$8 sm:$0xf0] %vm3813, %v3812
  %s3818 = scalar_lea.vmem %s0, 212
  %v3819 = vld.sshfl [vmem:[%s3818] sm:$0xff pattern:$0xb3a29180]
  %3820 = vrot.lane.b32.xlu0 %v3819, 32
  %v3821 = vpop.permute.xlu0 %3820
  %vm3822 = vcmask 130048
  %s3823 = scalar_lea.vmem %s1, 1734
  %3824 = vst.msk [vmem:[%s3823] ss:$8 sm:$0xf] %vm3822, %v3821
  %s3825 = scalar_lea.vmem %s1, 1734
  %3826 = vst.msk [vmem:[%s3825] ss:$8 sm:$0xf0] %vm3822, %v3821
  %s3827 = scalar_lea.vmem %s0, 224
  %v3828 = vld.sshfl [vmem:[%s3827] sm:$0xff pattern:$0xb3a29180]
  %3829 = vrot.lane.b32.xlu0 %v3828, 32
  %v3830 = vpop.permute.xlu0 %3829
  %vm3831 = vcmask 130048
  %s3832 = scalar_lea.vmem %s1, 1798
  %3833 = vst.msk [vmem:[%s3832] ss:$8 sm:$0xf] %vm3831, %v3830
  %s3834 = scalar_lea.vmem %s1, 1798
  %3835 = vst.msk [vmem:[%s3834] ss:$8 sm:$0xf0] %vm3831, %v3830
  %s3836 = scalar_lea.vmem %s0, 228
  %v3837 = vld.sshfl [vmem:[%s3836] sm:$0xff pattern:$0xb3a29180]
  %3838 = vrot.lane.b32.xlu0 %v3837, 32
  %v3839 = vpop.permute.xlu0 %3838
  %vm3840 = vcmask 130048
  %s3841 = scalar_lea.vmem %s1, 1862
  %3842 = vst.msk [vmem:[%s3841] ss:$8 sm:$0xf] %vm3840, %v3839
  %s3843 = scalar_lea.vmem %s1, 1862
  %3844 = vst.msk [vmem:[%s3843] ss:$8 sm:$0xf0] %vm3840, %v3839
  %s3845 = scalar_lea.vmem %s0, 240
  %v3846 = vld.sshfl [vmem:[%s3845] sm:$0xff pattern:$0xb3a29180]
  %3847 = vrot.lane.b32.xlu0 %v3846, 32
  %v3848 = vpop.permute.xlu0 %3847
  %vm3849 = vcmask 130048
  %s3850 = scalar_lea.vmem %s1, 1926
  %3851 = vst.msk [vmem:[%s3850] ss:$8 sm:$0xf] %vm3849, %v3848
  %s3852 = scalar_lea.vmem %s1, 1926
  %3853 = vst.msk [vmem:[%s3852] ss:$8 sm:$0xf0] %vm3849, %v3848
  %s3854 = scalar_lea.vmem %s0, 244
  %v3855 = vld.sshfl [vmem:[%s3854] sm:$0xff pattern:$0xb3a29180]
  %3856 = vrot.lane.b32.xlu0 %v3855, 32
  %v3857 = vpop.permute.xlu0 %3856
  %vm3858 = vcmask 130048
  %s3859 = scalar_lea.vmem %s1, 1990
  %3860 = vst.msk [vmem:[%s3859] ss:$8 sm:$0xf] %vm3858, %v3857
  %s3861 = scalar_lea.vmem %s1, 1990
  %3862 = vst.msk [vmem:[%s3861] ss:$8 sm:$0xf0] %vm3858, %v3857
  %s3863 = scalar_lea.vmem %s0, 256
  %v3864 = vld.sshfl [vmem:[%s3863] sm:$0xff pattern:$0xb3a29180]
  %3865 = vrot.lane.b32.xlu0 %v3864, 32
  %v3866 = vpop.permute.xlu0 %3865
  %vm3867 = vcmask 130048
  %s3868 = scalar_lea.vmem %s1, 2054
  %3869 = vst.msk [vmem:[%s3868] ss:$8 sm:$0xf] %vm3867, %v3866
  %s3870 = scalar_lea.vmem %s1, 2054
  %3871 = vst.msk [vmem:[%s3870] ss:$8 sm:$0xf0] %vm3867, %v3866
  %s3872 = scalar_lea.vmem %s0, 260
  %v3873 = vld.sshfl [vmem:[%s3872] sm:$0xff pattern:$0xb3a29180]
  %3874 = vrot.lane.b32.xlu0 %v3873, 32
  %v3875 = vpop.permute.xlu0 %3874
  %vm3876 = vcmask 130048
  %s3877 = scalar_lea.vmem %s1, 2118
  %3878 = vst.msk [vmem:[%s3877] ss:$8 sm:$0xf] %vm3876, %v3875
  %s3879 = scalar_lea.vmem %s1, 2118
  %3880 = vst.msk [vmem:[%s3879] ss:$8 sm:$0xf0] %vm3876, %v3875
  %s3881 = scalar_lea.vmem %s0, 272
  %v3882 = vld.sshfl [vmem:[%s3881] sm:$0xff pattern:$0xb3a29180]
  %3883 = vrot.lane.b32.xlu0 %v3882, 32
  %v3884 = vpop.permute.xlu0 %3883
  %vm3885 = vcmask 130048
  %s3886 = scalar_lea.vmem %s1, 2182
  %3887 = vst.msk [vmem:[%s3886] ss:$8 sm:$0xf] %vm3885, %v3884
  %s3888 = scalar_lea.vmem %s1, 2182
  %3889 = vst.msk [vmem:[%s3888] ss:$8 sm:$0xf0] %vm3885, %v3884
  %s3890 = scalar_lea.vmem %s0, 276
  %v3891 = vld.sshfl [vmem:[%s3890] sm:$0xff pattern:$0xb3a29180]
  %3892 = vrot.lane.b32.xlu0 %v3891, 32
  %v3893 = vpop.permute.xlu0 %3892
  %vm3894 = vcmask 130048
  %s3895 = scalar_lea.vmem %s1, 2246
  %3896 = vst.msk [vmem:[%s3895] ss:$8 sm:$0xf] %vm3894, %v3893
  %s3897 = scalar_lea.vmem %s1, 2246
  %3898 = vst.msk [vmem:[%s3897] ss:$8 sm:$0xf0] %vm3894, %v3893
  %s3899 = scalar_lea.vmem %s0, 288
  %v3900 = vld.sshfl [vmem:[%s3899] sm:$0xff pattern:$0xb3a29180]
  %3901 = vrot.lane.b32.xlu0 %v3900, 32
  %v3902 = vpop.permute.xlu0 %3901
  %vm3903 = vcmask 130048
  %s3904 = scalar_lea.vmem %s1, 2310
  %3905 = vst.msk [vmem:[%s3904] ss:$8 sm:$0xf] %vm3903, %v3902
  %s3906 = scalar_lea.vmem %s1, 2310
  %3907 = vst.msk [vmem:[%s3906] ss:$8 sm:$0xf0] %vm3903, %v3902
  %s3908 = scalar_lea.vmem %s0, 292
  %v3909 = vld.sshfl [vmem:[%s3908] sm:$0xff pattern:$0xb3a29180]
  %3910 = vrot.lane.b32.xlu0 %v3909, 32
  %v3911 = vpop.permute.xlu0 %3910
  %vm3912 = vcmask 130048
  %s3913 = scalar_lea.vmem %s1, 2374
  %3914 = vst.msk [vmem:[%s3913] ss:$8 sm:$0xf] %vm3912, %v3911
  %s3915 = scalar_lea.vmem %s1, 2374
  %3916 = vst.msk [vmem:[%s3915] ss:$8 sm:$0xf0] %vm3912, %v3911
  %s3917 = scalar_lea.vmem %s0, 304
  %v3918 = vld.sshfl [vmem:[%s3917] sm:$0xff pattern:$0xb3a29180]
  %3919 = vrot.lane.b32.xlu0 %v3918, 32
  %v3920 = vpop.permute.xlu0 %3919
  %vm3921 = vcmask 130048
  %s3922 = scalar_lea.vmem %s1, 2438
  %3923 = vst.msk [vmem:[%s3922] ss:$8 sm:$0xf] %vm3921, %v3920
  %s3924 = scalar_lea.vmem %s1, 2438
  %3925 = vst.msk [vmem:[%s3924] ss:$8 sm:$0xf0] %vm3921, %v3920
  %s3926 = scalar_lea.vmem %s0, 308
  %v3927 = vld.sshfl [vmem:[%s3926] sm:$0xff pattern:$0xb3a29180]
  %3928 = vrot.lane.b32.xlu0 %v3927, 32
  %v3929 = vpop.permute.xlu0 %3928
  %vm3930 = vcmask 130048
  %s3931 = scalar_lea.vmem %s1, 2502
  %3932 = vst.msk [vmem:[%s3931] ss:$8 sm:$0xf] %vm3930, %v3929
  %s3933 = scalar_lea.vmem %s1, 2502
  %3934 = vst.msk [vmem:[%s3933] ss:$8 sm:$0xf0] %vm3930, %v3929
  %s3935 = scalar_lea.vmem %s0, 320
  %v3936 = vld.sshfl [vmem:[%s3935] sm:$0xff pattern:$0xb3a29180]
  %3937 = vrot.lane.b32.xlu0 %v3936, 32
  %v3938 = vpop.permute.xlu0 %3937
  %vm3939 = vcmask 130048
  %s3940 = scalar_lea.vmem %s1, 2566
  %3941 = vst.msk [vmem:[%s3940] ss:$8 sm:$0xf] %vm3939, %v3938
  %s3942 = scalar_lea.vmem %s1, 2566
  %3943 = vst.msk [vmem:[%s3942] ss:$8 sm:$0xf0] %vm3939, %v3938
  %s3944 = scalar_lea.vmem %s0, 324
  %v3945 = vld.sshfl [vmem:[%s3944] sm:$0xff pattern:$0xb3a29180]
  %3946 = vrot.lane.b32.xlu0 %v3945, 32
  %v3947 = vpop.permute.xlu0 %3946
  %vm3948 = vcmask 130048
  %s3949 = scalar_lea.vmem %s1, 2630
  %3950 = vst.msk [vmem:[%s3949] ss:$8 sm:$0xf] %vm3948, %v3947
  %s3951 = scalar_lea.vmem %s1, 2630
  %3952 = vst.msk [vmem:[%s3951] ss:$8 sm:$0xf0] %vm3948, %v3947
  %s3953 = scalar_lea.vmem %s0, 336
  %v3954 = vld.sshfl [vmem:[%s3953] sm:$0xff pattern:$0xb3a29180]
  %3955 = vrot.lane.b32.xlu0 %v3954, 32
  %v3956 = vpop.permute.xlu0 %3955
  %vm3957 = vcmask 130048
  %s3958 = scalar_lea.vmem %s1, 2694
  %3959 = vst.msk [vmem:[%s3958] ss:$8 sm:$0xf] %vm3957, %v3956
  %s3960 = scalar_lea.vmem %s1, 2694
  %3961 = vst.msk [vmem:[%s3960] ss:$8 sm:$0xf0] %vm3957, %v3956
  %s3962 = scalar_lea.vmem %s0, 340
  %v3963 = vld.sshfl [vmem:[%s3962] sm:$0xff pattern:$0xb3a29180]
  %3964 = vrot.lane.b32.xlu0 %v3963, 32
  %v3965 = vpop.permute.xlu0 %3964
  %vm3966 = vcmask 130048
  %s3967 = scalar_lea.vmem %s1, 2758
  %3968 = vst.msk [vmem:[%s3967] ss:$8 sm:$0xf] %vm3966, %v3965
  %s3969 = scalar_lea.vmem %s1, 2758
  %3970 = vst.msk [vmem:[%s3969] ss:$8 sm:$0xf0] %vm3966, %v3965
  %s3971 = scalar_lea.vmem %s0, 352
  %v3972 = vld.sshfl [vmem:[%s3971] sm:$0xff pattern:$0xb3a29180]
  %3973 = vrot.lane.b32.xlu0 %v3972, 32
  %v3974 = vpop.permute.xlu0 %3973
  %vm3975 = vcmask 130048
  %s3976 = scalar_lea.vmem %s1, 2822
  %3977 = vst.msk [vmem:[%s3976] ss:$8 sm:$0xf] %vm3975, %v3974
  %s3978 = scalar_lea.vmem %s1, 2822
  %3979 = vst.msk [vmem:[%s3978] ss:$8 sm:$0xf0] %vm3975, %v3974
  %s3980 = scalar_lea.vmem %s0, 356
  %v3981 = vld.sshfl [vmem:[%s3980] sm:$0xff pattern:$0xb3a29180]
  %3982 = vrot.lane.b32.xlu0 %v3981, 32
  %v3983 = vpop.permute.xlu0 %3982
  %vm3984 = vcmask 130048
  %s3985 = scalar_lea.vmem %s1, 2886
  %3986 = vst.msk [vmem:[%s3985] ss:$8 sm:$0xf] %vm3984, %v3983
  %s3987 = scalar_lea.vmem %s1, 2886
  %3988 = vst.msk [vmem:[%s3987] ss:$8 sm:$0xf0] %vm3984, %v3983
  %s3989 = scalar_lea.vmem %s0, 368
  %v3990 = vld.sshfl [vmem:[%s3989] sm:$0xff pattern:$0xb3a29180]
  %3991 = vrot.lane.b32.xlu0 %v3990, 32
  %v3992 = vpop.permute.xlu0 %3991
  %vm3993 = vcmask 130048
  %s3994 = scalar_lea.vmem %s1, 2950
  %3995 = vst.msk [vmem:[%s3994] ss:$8 sm:$0xf] %vm3993, %v3992
  %s3996 = scalar_lea.vmem %s1, 2950
  %3997 = vst.msk [vmem:[%s3996] ss:$8 sm:$0xf0] %vm3993, %v3992
  %s3998 = scalar_lea.vmem %s0, 372
  %v3999 = vld.sshfl [vmem:[%s3998] sm:$0xff pattern:$0xb3a29180]
  %4000 = vrot.lane.b32.xlu0 %v3999, 32
  %v4001 = vpop.permute.xlu0 %4000
  %vm4002 = vcmask 130048
  %s4003 = scalar_lea.vmem %s1, 3014
  %4004 = vst.msk [vmem:[%s4003] ss:$8 sm:$0xf] %vm4002, %v4001
  %s4005 = scalar_lea.vmem %s1, 3014
  %4006 = vst.msk [vmem:[%s4005] ss:$8 sm:$0xf0] %vm4002, %v4001
  %s4007 = scalar_lea.vmem %s0, 384
  %v4008 = vld.sshfl [vmem:[%s4007] sm:$0xff pattern:$0xb3a29180]
  %4009 = vrot.lane.b32.xlu0 %v4008, 32
  %v4010 = vpop.permute.xlu0 %4009
  %vm4011 = vcmask 130048
  %s4012 = scalar_lea.vmem %s1, 3078
  %4013 = vst.msk [vmem:[%s4012] ss:$8 sm:$0xf] %vm4011, %v4010
  %s4014 = scalar_lea.vmem %s1, 3078
  %4015 = vst.msk [vmem:[%s4014] ss:$8 sm:$0xf0] %vm4011, %v4010
  %s4016 = scalar_lea.vmem %s0, 388
  %v4017 = vld.sshfl [vmem:[%s4016] sm:$0xff pattern:$0xb3a29180]
  %4018 = vrot.lane.b32.xlu0 %v4017, 32
  %v4019 = vpop.permute.xlu0 %4018
  %vm4020 = vcmask 130048
  %s4021 = scalar_lea.vmem %s1, 3142
  %4022 = vst.msk [vmem:[%s4021] ss:$8 sm:$0xf] %vm4020, %v4019
  %s4023 = scalar_lea.vmem %s1, 3142
  %4024 = vst.msk [vmem:[%s4023] ss:$8 sm:$0xf0] %vm4020, %v4019
  %s4025 = scalar_lea.vmem %s0, 400
  %v4026 = vld.sshfl [vmem:[%s4025] sm:$0xff pattern:$0xb3a29180]
  %4027 = vrot.lane.b32.xlu0 %v4026, 32
  %v4028 = vpop.permute.xlu0 %4027
  %vm4029 = vcmask 130048
  %s4030 = scalar_lea.vmem %s1, 3206
  %4031 = vst.msk [vmem:[%s4030] ss:$8 sm:$0xf] %vm4029, %v4028
  %s4032 = scalar_lea.vmem %s1, 3206
  %4033 = vst.msk [vmem:[%s4032] ss:$8 sm:$0xf0] %vm4029, %v4028
  %s4034 = scalar_lea.vmem %s0, 404
  %v4035 = vld.sshfl [vmem:[%s4034] sm:$0xff pattern:$0xb3a29180]
  %4036 = vrot.lane.b32.xlu0 %v4035, 32
  %v4037 = vpop.permute.xlu0 %4036
  %vm4038 = vcmask 130048
  %s4039 = scalar_lea.vmem %s1, 3270
  %4040 = vst.msk [vmem:[%s4039] ss:$8 sm:$0xf] %vm4038, %v4037
  %s4041 = scalar_lea.vmem %s1, 3270
  %4042 = vst.msk [vmem:[%s4041] ss:$8 sm:$0xf0] %vm4038, %v4037
  %s4043 = scalar_lea.vmem %s0, 416
  %v4044 = vld.sshfl [vmem:[%s4043] sm:$0xff pattern:$0xb3a29180]
  %4045 = vrot.lane.b32.xlu0 %v4044, 32
  %v4046 = vpop.permute.xlu0 %4045
  %vm4047 = vcmask 130048
  %s4048 = scalar_lea.vmem %s1, 3334
  %4049 = vst.msk [vmem:[%s4048] ss:$8 sm:$0xf] %vm4047, %v4046
  %s4050 = scalar_lea.vmem %s1, 3334
  %4051 = vst.msk [vmem:[%s4050] ss:$8 sm:$0xf0] %vm4047, %v4046
  %s4052 = scalar_lea.vmem %s0, 420
  %v4053 = vld.sshfl [vmem:[%s4052] sm:$0xff pattern:$0xb3a29180]
  %4054 = vrot.lane.b32.xlu0 %v4053, 32
  %v4055 = vpop.permute.xlu0 %4054
  %vm4056 = vcmask 130048
  %s4057 = scalar_lea.vmem %s1, 3398
  %4058 = vst.msk [vmem:[%s4057] ss:$8 sm:$0xf] %vm4056, %v4055
  %s4059 = scalar_lea.vmem %s1, 3398
  %4060 = vst.msk [vmem:[%s4059] ss:$8 sm:$0xf0] %vm4056, %v4055
  %s4061 = scalar_lea.vmem %s0, 432
  %v4062 = vld.sshfl [vmem:[%s4061] sm:$0xff pattern:$0xb3a29180]
  %4063 = vrot.lane.b32.xlu0 %v4062, 32
  %v4064 = vpop.permute.xlu0 %4063
  %vm4065 = vcmask 130048
  %s4066 = scalar_lea.vmem %s1, 3462
  %4067 = vst.msk [vmem:[%s4066] ss:$8 sm:$0xf] %vm4065, %v4064
  %s4068 = scalar_lea.vmem %s1, 3462
  %4069 = vst.msk [vmem:[%s4068] ss:$8 sm:$0xf0] %vm4065, %v4064
  %s4070 = scalar_lea.vmem %s0, 436
  %v4071 = vld.sshfl [vmem:[%s4070] sm:$0xff pattern:$0xb3a29180]
  %4072 = vrot.lane.b32.xlu0 %v4071, 32
  %v4073 = vpop.permute.xlu0 %4072
  %vm4074 = vcmask 130048
  %s4075 = scalar_lea.vmem %s1, 3526
  %4076 = vst.msk [vmem:[%s4075] ss:$8 sm:$0xf] %vm4074, %v4073
  %s4077 = scalar_lea.vmem %s1, 3526
  %4078 = vst.msk [vmem:[%s4077] ss:$8 sm:$0xf0] %vm4074, %v4073
  %s4079 = scalar_lea.vmem %s0, 448
  %v4080 = vld.sshfl [vmem:[%s4079] sm:$0xff pattern:$0xb3a29180]
  %4081 = vrot.lane.b32.xlu0 %v4080, 32
  %v4082 = vpop.permute.xlu0 %4081
  %vm4083 = vcmask 130048
  %s4084 = scalar_lea.vmem %s1, 3590
  %4085 = vst.msk [vmem:[%s4084] ss:$8 sm:$0xf] %vm4083, %v4082
  %s4086 = scalar_lea.vmem %s1, 3590
  %4087 = vst.msk [vmem:[%s4086] ss:$8 sm:$0xf0] %vm4083, %v4082
  %s4088 = scalar_lea.vmem %s0, 452
  %v4089 = vld.sshfl [vmem:[%s4088] sm:$0xff pattern:$0xb3a29180]
  %4090 = vrot.lane.b32.xlu0 %v4089, 32
  %v4091 = vpop.permute.xlu0 %4090
  %vm4092 = vcmask 130048
  %s4093 = scalar_lea.vmem %s1, 3654
  %4094 = vst.msk [vmem:[%s4093] ss:$8 sm:$0xf] %vm4092, %v4091
  %s4095 = scalar_lea.vmem %s1, 3654
  %4096 = vst.msk [vmem:[%s4095] ss:$8 sm:$0xf0] %vm4092, %v4091
  %s4097 = scalar_lea.vmem %s0, 464
  %v4098 = vld.sshfl [vmem:[%s4097] sm:$0xff pattern:$0xb3a29180]
  %4099 = vrot.lane.b32.xlu0 %v4098, 32
  %v4100 = vpop.permute.xlu0 %4099
  %vm4101 = vcmask 130048
  %s4102 = scalar_lea.vmem %s1, 3718
  %4103 = vst.msk [vmem:[%s4102] ss:$8 sm:$0xf] %vm4101, %v4100
  %s4104 = scalar_lea.vmem %s1, 3718
  %4105 = vst.msk [vmem:[%s4104] ss:$8 sm:$0xf0] %vm4101, %v4100
  %s4106 = scalar_lea.vmem %s0, 468
  %v4107 = vld.sshfl [vmem:[%s4106] sm:$0xff pattern:$0xb3a29180]
  %4108 = vrot.lane.b32.xlu0 %v4107, 32
  %v4109 = vpop.permute.xlu0 %4108
  %vm4110 = vcmask 130048
  %s4111 = scalar_lea.vmem %s1, 3782
  %4112 = vst.msk [vmem:[%s4111] ss:$8 sm:$0xf] %vm4110, %v4109
  %s4113 = scalar_lea.vmem %s1, 3782
  %4114 = vst.msk [vmem:[%s4113] ss:$8 sm:$0xf0] %vm4110, %v4109
  %s4115 = scalar_lea.vmem %s0, 480
  %v4116 = vld.sshfl [vmem:[%s4115] sm:$0xff pattern:$0xb3a29180]
  %4117 = vrot.lane.b32.xlu0 %v4116, 32
  %v4118 = vpop.permute.xlu0 %4117
  %vm4119 = vcmask 130048
  %s4120 = scalar_lea.vmem %s1, 3846
  %4121 = vst.msk [vmem:[%s4120] ss:$8 sm:$0xf] %vm4119, %v4118
  %s4122 = scalar_lea.vmem %s1, 3846
  %4123 = vst.msk [vmem:[%s4122] ss:$8 sm:$0xf0] %vm4119, %v4118
  %s4124 = scalar_lea.vmem %s0, 484
  %v4125 = vld.sshfl [vmem:[%s4124] sm:$0xff pattern:$0xb3a29180]
  %4126 = vrot.lane.b32.xlu0 %v4125, 32
  %v4127 = vpop.permute.xlu0 %4126
  %vm4128 = vcmask 130048
  %s4129 = scalar_lea.vmem %s1, 3910
  %4130 = vst.msk [vmem:[%s4129] ss:$8 sm:$0xf] %vm4128, %v4127
  %s4131 = scalar_lea.vmem %s1, 3910
  %4132 = vst.msk [vmem:[%s4131] ss:$8 sm:$0xf0] %vm4128, %v4127
  %s4133 = scalar_lea.vmem %s0, 496
  %v4134 = vld.sshfl [vmem:[%s4133] sm:$0xff pattern:$0xb3a29180]
  %4135 = vrot.lane.b32.xlu0 %v4134, 32
  %v4136 = vpop.permute.xlu0 %4135
  %vm4137 = vcmask 130048
  %s4138 = scalar_lea.vmem %s1, 3974
  %4139 = vst.msk [vmem:[%s4138] ss:$8 sm:$0xf] %vm4137, %v4136
  %s4140 = scalar_lea.vmem %s1, 3974
  %4141 = vst.msk [vmem:[%s4140] ss:$8 sm:$0xf0] %vm4137, %v4136
  %s4142 = scalar_lea.vmem %s0, 500
  %v4143 = vld.sshfl [vmem:[%s4142] sm:$0xff pattern:$0xb3a29180]
  %4144 = vrot.lane.b32.xlu0 %v4143, 32
  %v4145 = vpop.permute.xlu0 %4144
  %vm4146 = vcmask 130048
  %s4147 = scalar_lea.vmem %s1, 4038
  %4148 = vst.msk [vmem:[%s4147] ss:$8 sm:$0xf] %vm4146, %v4145
  %s4149 = scalar_lea.vmem %s1, 4038
  %4150 = vst.msk [vmem:[%s4149] ss:$8 sm:$0xf0] %vm4146, %v4145
  %v4151 = vld.sshfl [vmem:[%s0] sm:$0xff pattern:$0xb3a29180]
  %4152 = vrot.lane.b32.xlu0 %v4151, 16
  %v4153 = vpop.permute.xlu0 %4152
  %vm4154 = vcmask 130048
  %s4155 = scalar_lea.vmem %s1, 7
  %4156 = vst.msk [vmem:[%s4155] ss:$8 sm:$0xf] %vm4154, %v4153
  %s4157 = scalar_lea.vmem %s1, 7
  %4158 = vst.msk [vmem:[%s4157] ss:$8 sm:$0xf0] %vm4154, %v4153
  %s4159 = scalar_lea.vmem %s0, 4
  %v4160 = vld.sshfl [vmem:[%s4159] sm:$0xff pattern:$0xb3a29180]
  %4161 = vrot.lane.b32.xlu0 %v4160, 16
  %v4162 = vpop.permute.xlu0 %4161
  %vm4163 = vcmask 130048
  %s4164 = scalar_lea.vmem %s1, 71
  %4165 = vst.msk [vmem:[%s4164] ss:$8 sm:$0xf] %vm4163, %v4162
  %s4166 = scalar_lea.vmem %s1, 71
  %4167 = vst.msk [vmem:[%s4166] ss:$8 sm:$0xf0] %vm4163, %v4162
  %s4168 = scalar_lea.vmem %s0, 16
  %v4169 = vld.sshfl [vmem:[%s4168] sm:$0xff pattern:$0xb3a29180]
  %4170 = vrot.lane.b32.xlu0 %v4169, 16
  %v4171 = vpop.permute.xlu0 %4170
  %vm4172 = vcmask 130048
  %s4173 = scalar_lea.vmem %s1, 135
  %4174 = vst.msk [vmem:[%s4173] ss:$8 sm:$0xf] %vm4172, %v4171
  %s4175 = scalar_lea.vmem %s1, 135
  %4176 = vst.msk [vmem:[%s4175] ss:$8 sm:$0xf0] %vm4172, %v4171
  %s4177 = scalar_lea.vmem %s0, 20
  %v4178 = vld.sshfl [vmem:[%s4177] sm:$0xff pattern:$0xb3a29180]
  %4179 = vrot.lane.b32.xlu0 %v4178, 16
  %v4180 = vpop.permute.xlu0 %4179
  %vm4181 = vcmask 130048
  %s4182 = scalar_lea.vmem %s1, 199
  %4183 = vst.msk [vmem:[%s4182] ss:$8 sm:$0xf] %vm4181, %v4180
  %s4184 = scalar_lea.vmem %s1, 199
  %4185 = vst.msk [vmem:[%s4184] ss:$8 sm:$0xf0] %vm4181, %v4180
  %s4186 = scalar_lea.vmem %s0, 32
  %v4187 = vld.sshfl [vmem:[%s4186] sm:$0xff pattern:$0xb3a29180]
  %4188 = vrot.lane.b32.xlu0 %v4187, 16
  %v4189 = vpop.permute.xlu0 %4188
  %vm4190 = vcmask 130048
  %s4191 = scalar_lea.vmem %s1, 263
  %4192 = vst.msk [vmem:[%s4191] ss:$8 sm:$0xf] %vm4190, %v4189
  %s4193 = scalar_lea.vmem %s1, 263
  %4194 = vst.msk [vmem:[%s4193] ss:$8 sm:$0xf0] %vm4190, %v4189
  %s4195 = scalar_lea.vmem %s0, 36
  %v4196 = vld.sshfl [vmem:[%s4195] sm:$0xff pattern:$0xb3a29180]
  %4197 = vrot.lane.b32.xlu0 %v4196, 16
  %v4198 = vpop.permute.xlu0 %4197
  %vm4199 = vcmask 130048
  %s4200 = scalar_lea.vmem %s1, 327
  %4201 = vst.msk [vmem:[%s4200] ss:$8 sm:$0xf] %vm4199, %v4198
  %s4202 = scalar_lea.vmem %s1, 327
  %4203 = vst.msk [vmem:[%s4202] ss:$8 sm:$0xf0] %vm4199, %v4198
  %s4204 = scalar_lea.vmem %s0, 48
  %v4205 = vld.sshfl [vmem:[%s4204] sm:$0xff pattern:$0xb3a29180]
  %4206 = vrot.lane.b32.xlu0 %v4205, 16
  %v4207 = vpop.permute.xlu0 %4206
  %vm4208 = vcmask 130048
  %s4209 = scalar_lea.vmem %s1, 391
  %4210 = vst.msk [vmem:[%s4209] ss:$8 sm:$0xf] %vm4208, %v4207
  %s4211 = scalar_lea.vmem %s1, 391
  %4212 = vst.msk [vmem:[%s4211] ss:$8 sm:$0xf0] %vm4208, %v4207
  %s4213 = scalar_lea.vmem %s0, 52
  %v4214 = vld.sshfl [vmem:[%s4213] sm:$0xff pattern:$0xb3a29180]
  %4215 = vrot.lane.b32.xlu0 %v4214, 16
  %v4216 = vpop.permute.xlu0 %4215
  %vm4217 = vcmask 130048
  %s4218 = scalar_lea.vmem %s1, 455
  %4219 = vst.msk [vmem:[%s4218] ss:$8 sm:$0xf] %vm4217, %v4216
  %s4220 = scalar_lea.vmem %s1, 455
  %4221 = vst.msk [vmem:[%s4220] ss:$8 sm:$0xf0] %vm4217, %v4216
  %s4222 = scalar_lea.vmem %s0, 64
  %v4223 = vld.sshfl [vmem:[%s4222] sm:$0xff pattern:$0xb3a29180]
  %4224 = vrot.lane.b32.xlu0 %v4223, 16
  %v4225 = vpop.permute.xlu0 %4224
  %vm4226 = vcmask 130048
  %s4227 = scalar_lea.vmem %s1, 519
  %4228 = vst.msk [vmem:[%s4227] ss:$8 sm:$0xf] %vm4226, %v4225
  %s4229 = scalar_lea.vmem %s1, 519
  %4230 = vst.msk [vmem:[%s4229] ss:$8 sm:$0xf0] %vm4226, %v4225
  %s4231 = scalar_lea.vmem %s0, 68
  %v4232 = vld.sshfl [vmem:[%s4231] sm:$0xff pattern:$0xb3a29180]
  %4233 = vrot.lane.b32.xlu0 %v4232, 16
  %v4234 = vpop.permute.xlu0 %4233
  %vm4235 = vcmask 130048
  %s4236 = scalar_lea.vmem %s1, 583
  %4237 = vst.msk [vmem:[%s4236] ss:$8 sm:$0xf] %vm4235, %v4234
  %s4238 = scalar_lea.vmem %s1, 583
  %4239 = vst.msk [vmem:[%s4238] ss:$8 sm:$0xf0] %vm4235, %v4234
  %s4240 = scalar_lea.vmem %s0, 80
  %v4241 = vld.sshfl [vmem:[%s4240] sm:$0xff pattern:$0xb3a29180]
  %4242 = vrot.lane.b32.xlu0 %v4241, 16
  %v4243 = vpop.permute.xlu0 %4242
  %vm4244 = vcmask 130048
  %s4245 = scalar_lea.vmem %s1, 647
  %4246 = vst.msk [vmem:[%s4245] ss:$8 sm:$0xf] %vm4244, %v4243
  %s4247 = scalar_lea.vmem %s1, 647
  %4248 = vst.msk [vmem:[%s4247] ss:$8 sm:$0xf0] %vm4244, %v4243
  %s4249 = scalar_lea.vmem %s0, 84
  %v4250 = vld.sshfl [vmem:[%s4249] sm:$0xff pattern:$0xb3a29180]
  %4251 = vrot.lane.b32.xlu0 %v4250, 16
  %v4252 = vpop.permute.xlu0 %4251
  %vm4253 = vcmask 130048
  %s4254 = scalar_lea.vmem %s1, 711
  %4255 = vst.msk [vmem:[%s4254] ss:$8 sm:$0xf] %vm4253, %v4252
  %s4256 = scalar_lea.vmem %s1, 711
  %4257 = vst.msk [vmem:[%s4256] ss:$8 sm:$0xf0] %vm4253, %v4252
  %s4258 = scalar_lea.vmem %s0, 96
  %v4259 = vld.sshfl [vmem:[%s4258] sm:$0xff pattern:$0xb3a29180]
  %4260 = vrot.lane.b32.xlu0 %v4259, 16
  %v4261 = vpop.permute.xlu0 %4260
  %vm4262 = vcmask 130048
  %s4263 = scalar_lea.vmem %s1, 775
  %4264 = vst.msk [vmem:[%s4263] ss:$8 sm:$0xf] %vm4262, %v4261
  %s4265 = scalar_lea.vmem %s1, 775
  %4266 = vst.msk [vmem:[%s4265] ss:$8 sm:$0xf0] %vm4262, %v4261
  %s4267 = scalar_lea.vmem %s0, 100
  %v4268 = vld.sshfl [vmem:[%s4267] sm:$0xff pattern:$0xb3a29180]
  %4269 = vrot.lane.b32.xlu0 %v4268, 16
  %v4270 = vpop.permute.xlu0 %4269
  %vm4271 = vcmask 130048
  %s4272 = scalar_lea.vmem %s1, 839
  %4273 = vst.msk [vmem:[%s4272] ss:$8 sm:$0xf] %vm4271, %v4270
  %s4274 = scalar_lea.vmem %s1, 839
  %4275 = vst.msk [vmem:[%s4274] ss:$8 sm:$0xf0] %vm4271, %v4270
  %s4276 = scalar_lea.vmem %s0, 112
  %v4277 = vld.sshfl [vmem:[%s4276] sm:$0xff pattern:$0xb3a29180]
  %4278 = vrot.lane.b32.xlu0 %v4277, 16
  %v4279 = vpop.permute.xlu0 %4278
  %vm4280 = vcmask 130048
  %s4281 = scalar_lea.vmem %s1, 903
  %4282 = vst.msk [vmem:[%s4281] ss:$8 sm:$0xf] %vm4280, %v4279
  %s4283 = scalar_lea.vmem %s1, 903
  %4284 = vst.msk [vmem:[%s4283] ss:$8 sm:$0xf0] %vm4280, %v4279
  %s4285 = scalar_lea.vmem %s0, 116
  %v4286 = vld.sshfl [vmem:[%s4285] sm:$0xff pattern:$0xb3a29180]
  %4287 = vrot.lane.b32.xlu0 %v4286, 16
  %v4288 = vpop.permute.xlu0 %4287
  %vm4289 = vcmask 130048
  %s4290 = scalar_lea.vmem %s1, 967
  %4291 = vst.msk [vmem:[%s4290] ss:$8 sm:$0xf] %vm4289, %v4288
  %s4292 = scalar_lea.vmem %s1, 967
  %4293 = vst.msk [vmem:[%s4292] ss:$8 sm:$0xf0] %vm4289, %v4288
  %s4294 = scalar_lea.vmem %s0, 128
  %v4295 = vld.sshfl [vmem:[%s4294] sm:$0xff pattern:$0xb3a29180]
  %4296 = vrot.lane.b32.xlu0 %v4295, 16
  %v4297 = vpop.permute.xlu0 %4296
  %vm4298 = vcmask 130048
  %s4299 = scalar_lea.vmem %s1, 1031
  %4300 = vst.msk [vmem:[%s4299] ss:$8 sm:$0xf] %vm4298, %v4297
  %s4301 = scalar_lea.vmem %s1, 1031
  %4302 = vst.msk [vmem:[%s4301] ss:$8 sm:$0xf0] %vm4298, %v4297
  %s4303 = scalar_lea.vmem %s0, 132
  %v4304 = vld.sshfl [vmem:[%s4303] sm:$0xff pattern:$0xb3a29180]
  %4305 = vrot.lane.b32.xlu0 %v4304, 16
  %v4306 = vpop.permute.xlu0 %4305
  %vm4307 = vcmask 130048
  %s4308 = scalar_lea.vmem %s1, 1095
  %4309 = vst.msk [vmem:[%s4308] ss:$8 sm:$0xf] %vm4307, %v4306
  %s4310 = scalar_lea.vmem %s1, 1095
  %4311 = vst.msk [vmem:[%s4310] ss:$8 sm:$0xf0] %vm4307, %v4306
  %s4312 = scalar_lea.vmem %s0, 144
  %v4313 = vld.sshfl [vmem:[%s4312] sm:$0xff pattern:$0xb3a29180]
  %4314 = vrot.lane.b32.xlu0 %v4313, 16
  %v4315 = vpop.permute.xlu0 %4314
  %vm4316 = vcmask 130048
  %s4317 = scalar_lea.vmem %s1, 1159
  %4318 = vst.msk [vmem:[%s4317] ss:$8 sm:$0xf] %vm4316, %v4315
  %s4319 = scalar_lea.vmem %s1, 1159
  %4320 = vst.msk [vmem:[%s4319] ss:$8 sm:$0xf0] %vm4316, %v4315
  %s4321 = scalar_lea.vmem %s0, 148
  %v4322 = vld.sshfl [vmem:[%s4321] sm:$0xff pattern:$0xb3a29180]
  %4323 = vrot.lane.b32.xlu0 %v4322, 16
  %v4324 = vpop.permute.xlu0 %4323
  %vm4325 = vcmask 130048
  %s4326 = scalar_lea.vmem %s1, 1223
  %4327 = vst.msk [vmem:[%s4326] ss:$8 sm:$0xf] %vm4325, %v4324
  %s4328 = scalar_lea.vmem %s1, 1223
  %4329 = vst.msk [vmem:[%s4328] ss:$8 sm:$0xf0] %vm4325, %v4324
  %s4330 = scalar_lea.vmem %s0, 160
  %v4331 = vld.sshfl [vmem:[%s4330] sm:$0xff pattern:$0xb3a29180]
  %4332 = vrot.lane.b32.xlu0 %v4331, 16
  %v4333 = vpop.permute.xlu0 %4332
  %vm4334 = vcmask 130048
  %s4335 = scalar_lea.vmem %s1, 1287
  %4336 = vst.msk [vmem:[%s4335] ss:$8 sm:$0xf] %vm4334, %v4333
  %s4337 = scalar_lea.vmem %s1, 1287
  %4338 = vst.msk [vmem:[%s4337] ss:$8 sm:$0xf0] %vm4334, %v4333
  %s4339 = scalar_lea.vmem %s0, 164
  %v4340 = vld.sshfl [vmem:[%s4339] sm:$0xff pattern:$0xb3a29180]
  %4341 = vrot.lane.b32.xlu0 %v4340, 16
  %v4342 = vpop.permute.xlu0 %4341
  %vm4343 = vcmask 130048
  %s4344 = scalar_lea.vmem %s1, 1351
  %4345 = vst.msk [vmem:[%s4344] ss:$8 sm:$0xf] %vm4343, %v4342
  %s4346 = scalar_lea.vmem %s1, 1351
  %4347 = vst.msk [vmem:[%s4346] ss:$8 sm:$0xf0] %vm4343, %v4342
  %s4348 = scalar_lea.vmem %s0, 176
  %v4349 = vld.sshfl [vmem:[%s4348] sm:$0xff pattern:$0xb3a29180]
  %4350 = vrot.lane.b32.xlu0 %v4349, 16
  %v4351 = vpop.permute.xlu0 %4350
  %vm4352 = vcmask 130048
  %s4353 = scalar_lea.vmem %s1, 1415
  %4354 = vst.msk [vmem:[%s4353] ss:$8 sm:$0xf] %vm4352, %v4351
  %s4355 = scalar_lea.vmem %s1, 1415
  %4356 = vst.msk [vmem:[%s4355] ss:$8 sm:$0xf0] %vm4352, %v4351
  %s4357 = scalar_lea.vmem %s0, 180
  %v4358 = vld.sshfl [vmem:[%s4357] sm:$0xff pattern:$0xb3a29180]
  %4359 = vrot.lane.b32.xlu0 %v4358, 16
  %v4360 = vpop.permute.xlu0 %4359
  %vm4361 = vcmask 130048
  %s4362 = scalar_lea.vmem %s1, 1479
  %4363 = vst.msk [vmem:[%s4362] ss:$8 sm:$0xf] %vm4361, %v4360
  %s4364 = scalar_lea.vmem %s1, 1479
  %4365 = vst.msk [vmem:[%s4364] ss:$8 sm:$0xf0] %vm4361, %v4360
  %s4366 = scalar_lea.vmem %s0, 192
  %v4367 = vld.sshfl [vmem:[%s4366] sm:$0xff pattern:$0xb3a29180]
  %4368 = vrot.lane.b32.xlu0 %v4367, 16
  %v4369 = vpop.permute.xlu0 %4368
  %vm4370 = vcmask 130048
  %s4371 = scalar_lea.vmem %s1, 1543
  %4372 = vst.msk [vmem:[%s4371] ss:$8 sm:$0xf] %vm4370, %v4369
  %s4373 = scalar_lea.vmem %s1, 1543
  %4374 = vst.msk [vmem:[%s4373] ss:$8 sm:$0xf0] %vm4370, %v4369
  %s4375 = scalar_lea.vmem %s0, 196
  %v4376 = vld.sshfl [vmem:[%s4375] sm:$0xff pattern:$0xb3a29180]
  %4377 = vrot.lane.b32.xlu0 %v4376, 16
  %v4378 = vpop.permute.xlu0 %4377
  %vm4379 = vcmask 130048
  %s4380 = scalar_lea.vmem %s1, 1607
  %4381 = vst.msk [vmem:[%s4380] ss:$8 sm:$0xf] %vm4379, %v4378
  %s4382 = scalar_lea.vmem %s1, 1607
  %4383 = vst.msk [vmem:[%s4382] ss:$8 sm:$0xf0] %vm4379, %v4378
  %s4384 = scalar_lea.vmem %s0, 208
  %v4385 = vld.sshfl [vmem:[%s4384] sm:$0xff pattern:$0xb3a29180]
  %4386 = vrot.lane.b32.xlu0 %v4385, 16
  %v4387 = vpop.permute.xlu0 %4386
  %vm4388 = vcmask 130048
  %s4389 = scalar_lea.vmem %s1, 1671
  %4390 = vst.msk [vmem:[%s4389] ss:$8 sm:$0xf] %vm4388, %v4387
  %s4391 = scalar_lea.vmem %s1, 1671
  %4392 = vst.msk [vmem:[%s4391] ss:$8 sm:$0xf0] %vm4388, %v4387
  %s4393 = scalar_lea.vmem %s0, 212
  %v4394 = vld.sshfl [vmem:[%s4393] sm:$0xff pattern:$0xb3a29180]
  %4395 = vrot.lane.b32.xlu0 %v4394, 16
  %v4396 = vpop.permute.xlu0 %4395
  %vm4397 = vcmask 130048
  %s4398 = scalar_lea.vmem %s1, 1735
  %4399 = vst.msk [vmem:[%s4398] ss:$8 sm:$0xf] %vm4397, %v4396
  %s4400 = scalar_lea.vmem %s1, 1735
  %4401 = vst.msk [vmem:[%s4400] ss:$8 sm:$0xf0] %vm4397, %v4396
  %s4402 = scalar_lea.vmem %s0, 224
  %v4403 = vld.sshfl [vmem:[%s4402] sm:$0xff pattern:$0xb3a29180]
  %4404 = vrot.lane.b32.xlu0 %v4403, 16
  %v4405 = vpop.permute.xlu0 %4404
  %vm4406 = vcmask 130048
  %s4407 = scalar_lea.vmem %s1, 1799
  %4408 = vst.msk [vmem:[%s4407] ss:$8 sm:$0xf] %vm4406, %v4405
  %s4409 = scalar_lea.vmem %s1, 1799
  %4410 = vst.msk [vmem:[%s4409] ss:$8 sm:$0xf0] %vm4406, %v4405
  %s4411 = scalar_lea.vmem %s0, 228
  %v4412 = vld.sshfl [vmem:[%s4411] sm:$0xff pattern:$0xb3a29180]
  %4413 = vrot.lane.b32.xlu0 %v4412, 16
  %v4414 = vpop.permute.xlu0 %4413
  %vm4415 = vcmask 130048
  %s4416 = scalar_lea.vmem %s1, 1863
  %4417 = vst.msk [vmem:[%s4416] ss:$8 sm:$0xf] %vm4415, %v4414
  %s4418 = scalar_lea.vmem %s1, 1863
  %4419 = vst.msk [vmem:[%s4418] ss:$8 sm:$0xf0] %vm4415, %v4414
  %s4420 = scalar_lea.vmem %s0, 240
  %v4421 = vld.sshfl [vmem:[%s4420] sm:$0xff pattern:$0xb3a29180]
  %4422 = vrot.lane.b32.xlu0 %v4421, 16
  %v4423 = vpop.permute.xlu0 %4422
  %vm4424 = vcmask 130048
  %s4425 = scalar_lea.vmem %s1, 1927
  %4426 = vst.msk [vmem:[%s4425] ss:$8 sm:$0xf] %vm4424, %v4423
  %s4427 = scalar_lea.vmem %s1, 1927
  %4428 = vst.msk [vmem:[%s4427] ss:$8 sm:$0xf0] %vm4424, %v4423
  %s4429 = scalar_lea.vmem %s0, 244
  %v4430 = vld.sshfl [vmem:[%s4429] sm:$0xff pattern:$0xb3a29180]
  %4431 = vrot.lane.b32.xlu0 %v4430, 16
  %v4432 = vpop.permute.xlu0 %4431
  %vm4433 = vcmask 130048
  %s4434 = scalar_lea.vmem %s1, 1991
  %4435 = vst.msk [vmem:[%s4434] ss:$8 sm:$0xf] %vm4433, %v4432
  %s4436 = scalar_lea.vmem %s1, 1991
  %4437 = vst.msk [vmem:[%s4436] ss:$8 sm:$0xf0] %vm4433, %v4432
  %s4438 = scalar_lea.vmem %s0, 256
  %v4439 = vld.sshfl [vmem:[%s4438] sm:$0xff pattern:$0xb3a29180]
  %4440 = vrot.lane.b32.xlu0 %v4439, 16
  %v4441 = vpop.permute.xlu0 %4440
  %vm4442 = vcmask 130048
  %s4443 = scalar_lea.vmem %s1, 2055
  %4444 = vst.msk [vmem:[%s4443] ss:$8 sm:$0xf] %vm4442, %v4441
  %s4445 = scalar_lea.vmem %s1, 2055
  %4446 = vst.msk [vmem:[%s4445] ss:$8 sm:$0xf0] %vm4442, %v4441
  %s4447 = scalar_lea.vmem %s0, 260
  %v4448 = vld.sshfl [vmem:[%s4447] sm:$0xff pattern:$0xb3a29180]
  %4449 = vrot.lane.b32.xlu0 %v4448, 16
  %v4450 = vpop.permute.xlu0 %4449
  %vm4451 = vcmask 130048
  %s4452 = scalar_lea.vmem %s1, 2119
  %4453 = vst.msk [vmem:[%s4452] ss:$8 sm:$0xf] %vm4451, %v4450
  %s4454 = scalar_lea.vmem %s1, 2119
  %4455 = vst.msk [vmem:[%s4454] ss:$8 sm:$0xf0] %vm4451, %v4450
  %s4456 = scalar_lea.vmem %s0, 272
  %v4457 = vld.sshfl [vmem:[%s4456] sm:$0xff pattern:$0xb3a29180]
  %4458 = vrot.lane.b32.xlu0 %v4457, 16
  %v4459 = vpop.permute.xlu0 %4458
  %vm4460 = vcmask 130048
  %s4461 = scalar_lea.vmem %s1, 2183
  %4462 = vst.msk [vmem:[%s4461] ss:$8 sm:$0xf] %vm4460, %v4459
  %s4463 = scalar_lea.vmem %s1, 2183
  %4464 = vst.msk [vmem:[%s4463] ss:$8 sm:$0xf0] %vm4460, %v4459
  %s4465 = scalar_lea.vmem %s0, 276
  %v4466 = vld.sshfl [vmem:[%s4465] sm:$0xff pattern:$0xb3a29180]
  %4467 = vrot.lane.b32.xlu0 %v4466, 16
  %v4468 = vpop.permute.xlu0 %4467
  %vm4469 = vcmask 130048
  %s4470 = scalar_lea.vmem %s1, 2247
  %4471 = vst.msk [vmem:[%s4470] ss:$8 sm:$0xf] %vm4469, %v4468
  %s4472 = scalar_lea.vmem %s1, 2247
  %4473 = vst.msk [vmem:[%s4472] ss:$8 sm:$0xf0] %vm4469, %v4468
  %s4474 = scalar_lea.vmem %s0, 288
  %v4475 = vld.sshfl [vmem:[%s4474] sm:$0xff pattern:$0xb3a29180]
  %4476 = vrot.lane.b32.xlu0 %v4475, 16
  %v4477 = vpop.permute.xlu0 %4476
  %vm4478 = vcmask 130048
  %s4479 = scalar_lea.vmem %s1, 2311
  %4480 = vst.msk [vmem:[%s4479] ss:$8 sm:$0xf] %vm4478, %v4477
  %s4481 = scalar_lea.vmem %s1, 2311
  %4482 = vst.msk [vmem:[%s4481] ss:$8 sm:$0xf0] %vm4478, %v4477
  %s4483 = scalar_lea.vmem %s0, 292
  %v4484 = vld.sshfl [vmem:[%s4483] sm:$0xff pattern:$0xb3a29180]
  %4485 = vrot.lane.b32.xlu0 %v4484, 16
  %v4486 = vpop.permute.xlu0 %4485
  %vm4487 = vcmask 130048
  %s4488 = scalar_lea.vmem %s1, 2375
  %4489 = vst.msk [vmem:[%s4488] ss:$8 sm:$0xf] %vm4487, %v4486
  %s4490 = scalar_lea.vmem %s1, 2375
  %4491 = vst.msk [vmem:[%s4490] ss:$8 sm:$0xf0] %vm4487, %v4486
  %s4492 = scalar_lea.vmem %s0, 304
  %v4493 = vld.sshfl [vmem:[%s4492] sm:$0xff pattern:$0xb3a29180]
  %4494 = vrot.lane.b32.xlu0 %v4493, 16
  %v4495 = vpop.permute.xlu0 %4494
  %vm4496 = vcmask 130048
  %s4497 = scalar_lea.vmem %s1, 2439
  %4498 = vst.msk [vmem:[%s4497] ss:$8 sm:$0xf] %vm4496, %v4495
  %s4499 = scalar_lea.vmem %s1, 2439
  %4500 = vst.msk [vmem:[%s4499] ss:$8 sm:$0xf0] %vm4496, %v4495
  %s4501 = scalar_lea.vmem %s0, 308
  %v4502 = vld.sshfl [vmem:[%s4501] sm:$0xff pattern:$0xb3a29180]
  %4503 = vrot.lane.b32.xlu0 %v4502, 16
  %v4504 = vpop.permute.xlu0 %4503
  %vm4505 = vcmask 130048
  %s4506 = scalar_lea.vmem %s1, 2503
  %4507 = vst.msk [vmem:[%s4506] ss:$8 sm:$0xf] %vm4505, %v4504
  %s4508 = scalar_lea.vmem %s1, 2503
  %4509 = vst.msk [vmem:[%s4508] ss:$8 sm:$0xf0] %vm4505, %v4504
  %s4510 = scalar_lea.vmem %s0, 320
  %v4511 = vld.sshfl [vmem:[%s4510] sm:$0xff pattern:$0xb3a29180]
  %4512 = vrot.lane.b32.xlu0 %v4511, 16
  %v4513 = vpop.permute.xlu0 %4512
  %vm4514 = vcmask 130048
  %s4515 = scalar_lea.vmem %s1, 2567
  %4516 = vst.msk [vmem:[%s4515] ss:$8 sm:$0xf] %vm4514, %v4513
  %s4517 = scalar_lea.vmem %s1, 2567
  %4518 = vst.msk [vmem:[%s4517] ss:$8 sm:$0xf0] %vm4514, %v4513
  %s4519 = scalar_lea.vmem %s0, 324
  %v4520 = vld.sshfl [vmem:[%s4519] sm:$0xff pattern:$0xb3a29180]
  %4521 = vrot.lane.b32.xlu0 %v4520, 16
  %v4522 = vpop.permute.xlu0 %4521
  %vm4523 = vcmask 130048
  %s4524 = scalar_lea.vmem %s1, 2631
  %4525 = vst.msk [vmem:[%s4524] ss:$8 sm:$0xf] %vm4523, %v4522
  %s4526 = scalar_lea.vmem %s1, 2631
  %4527 = vst.msk [vmem:[%s4526] ss:$8 sm:$0xf0] %vm4523, %v4522
  %s4528 = scalar_lea.vmem %s0, 336
  %v4529 = vld.sshfl [vmem:[%s4528] sm:$0xff pattern:$0xb3a29180]
  %4530 = vrot.lane.b32.xlu0 %v4529, 16
  %v4531 = vpop.permute.xlu0 %4530
  %vm4532 = vcmask 130048
  %s4533 = scalar_lea.vmem %s1, 2695
  %4534 = vst.msk [vmem:[%s4533] ss:$8 sm:$0xf] %vm4532, %v4531
  %s4535 = scalar_lea.vmem %s1, 2695
  %4536 = vst.msk [vmem:[%s4535] ss:$8 sm:$0xf0] %vm4532, %v4531
  %s4537 = scalar_lea.vmem %s0, 340
  %v4538 = vld.sshfl [vmem:[%s4537] sm:$0xff pattern:$0xb3a29180]
  %4539 = vrot.lane.b32.xlu0 %v4538, 16
  %v4540 = vpop.permute.xlu0 %4539
  %vm4541 = vcmask 130048
  %s4542 = scalar_lea.vmem %s1, 2759
  %4543 = vst.msk [vmem:[%s4542] ss:$8 sm:$0xf] %vm4541, %v4540
  %s4544 = scalar_lea.vmem %s1, 2759
  %4545 = vst.msk [vmem:[%s4544] ss:$8 sm:$0xf0] %vm4541, %v4540
  %s4546 = scalar_lea.vmem %s0, 352
  %v4547 = vld.sshfl [vmem:[%s4546] sm:$0xff pattern:$0xb3a29180]
  %4548 = vrot.lane.b32.xlu0 %v4547, 16
  %v4549 = vpop.permute.xlu0 %4548
  %vm4550 = vcmask 130048
  %s4551 = scalar_lea.vmem %s1, 2823
  %4552 = vst.msk [vmem:[%s4551] ss:$8 sm:$0xf] %vm4550, %v4549
  %s4553 = scalar_lea.vmem %s1, 2823
  %4554 = vst.msk [vmem:[%s4553] ss:$8 sm:$0xf0] %vm4550, %v4549
  %s4555 = scalar_lea.vmem %s0, 356
  %v4556 = vld.sshfl [vmem:[%s4555] sm:$0xff pattern:$0xb3a29180]
  %4557 = vrot.lane.b32.xlu0 %v4556, 16
  %v4558 = vpop.permute.xlu0 %4557
  %vm4559 = vcmask 130048
  %s4560 = scalar_lea.vmem %s1, 2887
  %4561 = vst.msk [vmem:[%s4560] ss:$8 sm:$0xf] %vm4559, %v4558
  %s4562 = scalar_lea.vmem %s1, 2887
  %4563 = vst.msk [vmem:[%s4562] ss:$8 sm:$0xf0] %vm4559, %v4558
  %s4564 = scalar_lea.vmem %s0, 368
  %v4565 = vld.sshfl [vmem:[%s4564] sm:$0xff pattern:$0xb3a29180]
  %4566 = vrot.lane.b32.xlu0 %v4565, 16
  %v4567 = vpop.permute.xlu0 %4566
  %vm4568 = vcmask 130048
  %s4569 = scalar_lea.vmem %s1, 2951
  %4570 = vst.msk [vmem:[%s4569] ss:$8 sm:$0xf] %vm4568, %v4567
  %s4571 = scalar_lea.vmem %s1, 2951
  %4572 = vst.msk [vmem:[%s4571] ss:$8 sm:$0xf0] %vm4568, %v4567
  %s4573 = scalar_lea.vmem %s0, 372
  %v4574 = vld.sshfl [vmem:[%s4573] sm:$0xff pattern:$0xb3a29180]
  %4575 = vrot.lane.b32.xlu0 %v4574, 16
  %v4576 = vpop.permute.xlu0 %4575
  %vm4577 = vcmask 130048
  %s4578 = scalar_lea.vmem %s1, 3015
  %4579 = vst.msk [vmem:[%s4578] ss:$8 sm:$0xf] %vm4577, %v4576
  %s4580 = scalar_lea.vmem %s1, 3015
  %4581 = vst.msk [vmem:[%s4580] ss:$8 sm:$0xf0] %vm4577, %v4576
  %s4582 = scalar_lea.vmem %s0, 384
  %v4583 = vld.sshfl [vmem:[%s4582] sm:$0xff pattern:$0xb3a29180]
  %4584 = vrot.lane.b32.xlu0 %v4583, 16
  %v4585 = vpop.permute.xlu0 %4584
  %vm4586 = vcmask 130048
  %s4587 = scalar_lea.vmem %s1, 3079
  %4588 = vst.msk [vmem:[%s4587] ss:$8 sm:$0xf] %vm4586, %v4585
  %s4589 = scalar_lea.vmem %s1, 3079
  %4590 = vst.msk [vmem:[%s4589] ss:$8 sm:$0xf0] %vm4586, %v4585
  %s4591 = scalar_lea.vmem %s0, 388
  %v4592 = vld.sshfl [vmem:[%s4591] sm:$0xff pattern:$0xb3a29180]
  %4593 = vrot.lane.b32.xlu0 %v4592, 16
  %v4594 = vpop.permute.xlu0 %4593
  %vm4595 = vcmask 130048
  %s4596 = scalar_lea.vmem %s1, 3143
  %4597 = vst.msk [vmem:[%s4596] ss:$8 sm:$0xf] %vm4595, %v4594
  %s4598 = scalar_lea.vmem %s1, 3143
  %4599 = vst.msk [vmem:[%s4598] ss:$8 sm:$0xf0] %vm4595, %v4594
  %s4600 = scalar_lea.vmem %s0, 400
  %v4601 = vld.sshfl [vmem:[%s4600] sm:$0xff pattern:$0xb3a29180]
  %4602 = vrot.lane.b32.xlu0 %v4601, 16
  %v4603 = vpop.permute.xlu0 %4602
  %vm4604 = vcmask 130048
  %s4605 = scalar_lea.vmem %s1, 3207
  %4606 = vst.msk [vmem:[%s4605] ss:$8 sm:$0xf] %vm4604, %v4603
  %s4607 = scalar_lea.vmem %s1, 3207
  %4608 = vst.msk [vmem:[%s4607] ss:$8 sm:$0xf0] %vm4604, %v4603
  %s4609 = scalar_lea.vmem %s0, 404
  %v4610 = vld.sshfl [vmem:[%s4609] sm:$0xff pattern:$0xb3a29180]
  %4611 = vrot.lane.b32.xlu0 %v4610, 16
  %v4612 = vpop.permute.xlu0 %4611
  %vm4613 = vcmask 130048
  %s4614 = scalar_lea.vmem %s1, 3271
  %4615 = vst.msk [vmem:[%s4614] ss:$8 sm:$0xf] %vm4613, %v4612
  %s4616 = scalar_lea.vmem %s1, 3271
  %4617 = vst.msk [vmem:[%s4616] ss:$8 sm:$0xf0] %vm4613, %v4612
  %s4618 = scalar_lea.vmem %s0, 416
  %v4619 = vld.sshfl [vmem:[%s4618] sm:$0xff pattern:$0xb3a29180]
  %4620 = vrot.lane.b32.xlu0 %v4619, 16
  %v4621 = vpop.permute.xlu0 %4620
  %vm4622 = vcmask 130048
  %s4623 = scalar_lea.vmem %s1, 3335
  %4624 = vst.msk [vmem:[%s4623] ss:$8 sm:$0xf] %vm4622, %v4621
  %s4625 = scalar_lea.vmem %s1, 3335
  %4626 = vst.msk [vmem:[%s4625] ss:$8 sm:$0xf0] %vm4622, %v4621
  %s4627 = scalar_lea.vmem %s0, 420
  %v4628 = vld.sshfl [vmem:[%s4627] sm:$0xff pattern:$0xb3a29180]
  %4629 = vrot.lane.b32.xlu0 %v4628, 16
  %v4630 = vpop.permute.xlu0 %4629
  %vm4631 = vcmask 130048
  %s4632 = scalar_lea.vmem %s1, 3399
  %4633 = vst.msk [vmem:[%s4632] ss:$8 sm:$0xf] %vm4631, %v4630
  %s4634 = scalar_lea.vmem %s1, 3399
  %4635 = vst.msk [vmem:[%s4634] ss:$8 sm:$0xf0] %vm4631, %v4630
  %s4636 = scalar_lea.vmem %s0, 432
  %v4637 = vld.sshfl [vmem:[%s4636] sm:$0xff pattern:$0xb3a29180]
  %4638 = vrot.lane.b32.xlu0 %v4637, 16
  %v4639 = vpop.permute.xlu0 %4638
  %vm4640 = vcmask 130048
  %s4641 = scalar_lea.vmem %s1, 3463
  %4642 = vst.msk [vmem:[%s4641] ss:$8 sm:$0xf] %vm4640, %v4639
  %s4643 = scalar_lea.vmem %s1, 3463
  %4644 = vst.msk [vmem:[%s4643] ss:$8 sm:$0xf0] %vm4640, %v4639
  %s4645 = scalar_lea.vmem %s0, 436
  %v4646 = vld.sshfl [vmem:[%s4645] sm:$0xff pattern:$0xb3a29180]
  %4647 = vrot.lane.b32.xlu0 %v4646, 16
  %v4648 = vpop.permute.xlu0 %4647
  %vm4649 = vcmask 130048
  %s4650 = scalar_lea.vmem %s1, 3527
  %4651 = vst.msk [vmem:[%s4650] ss:$8 sm:$0xf] %vm4649, %v4648
  %s4652 = scalar_lea.vmem %s1, 3527
  %4653 = vst.msk [vmem:[%s4652] ss:$8 sm:$0xf0] %vm4649, %v4648
  %s4654 = scalar_lea.vmem %s0, 448
  %v4655 = vld.sshfl [vmem:[%s4654] sm:$0xff pattern:$0xb3a29180]
  %4656 = vrot.lane.b32.xlu0 %v4655, 16
  %v4657 = vpop.permute.xlu0 %4656
  %vm4658 = vcmask 130048
  %s4659 = scalar_lea.vmem %s1, 3591
  %4660 = vst.msk [vmem:[%s4659] ss:$8 sm:$0xf] %vm4658, %v4657
  %s4661 = scalar_lea.vmem %s1, 3591
  %4662 = vst.msk [vmem:[%s4661] ss:$8 sm:$0xf0] %vm4658, %v4657
  %s4663 = scalar_lea.vmem %s0, 452
  %v4664 = vld.sshfl [vmem:[%s4663] sm:$0xff pattern:$0xb3a29180]
  %4665 = vrot.lane.b32.xlu0 %v4664, 16
  %v4666 = vpop.permute.xlu0 %4665
  %vm4667 = vcmask 130048
  %s4668 = scalar_lea.vmem %s1, 3655
  %4669 = vst.msk [vmem:[%s4668] ss:$8 sm:$0xf] %vm4667, %v4666
  %s4670 = scalar_lea.vmem %s1, 3655
  %4671 = vst.msk [vmem:[%s4670] ss:$8 sm:$0xf0] %vm4667, %v4666
  %s4672 = scalar_lea.vmem %s0, 464
  %v4673 = vld.sshfl [vmem:[%s4672] sm:$0xff pattern:$0xb3a29180]
  %4674 = vrot.lane.b32.xlu0 %v4673, 16
  %v4675 = vpop.permute.xlu0 %4674
  %vm4676 = vcmask 130048
  %s4677 = scalar_lea.vmem %s1, 3719
  %4678 = vst.msk [vmem:[%s4677] ss:$8 sm:$0xf] %vm4676, %v4675
  %s4679 = scalar_lea.vmem %s1, 3719
  %4680 = vst.msk [vmem:[%s4679] ss:$8 sm:$0xf0] %vm4676, %v4675
  %s4681 = scalar_lea.vmem %s0, 468
  %v4682 = vld.sshfl [vmem:[%s4681] sm:$0xff pattern:$0xb3a29180]
  %4683 = vrot.lane.b32.xlu0 %v4682, 16
  %v4684 = vpop.permute.xlu0 %4683
  %vm4685 = vcmask 130048
  %s4686 = scalar_lea.vmem %s1, 3783
  %4687 = vst.msk [vmem:[%s4686] ss:$8 sm:$0xf] %vm4685, %v4684
  %s4688 = scalar_lea.vmem %s1, 3783
  %4689 = vst.msk [vmem:[%s4688] ss:$8 sm:$0xf0] %vm4685, %v4684
  %s4690 = scalar_lea.vmem %s0, 480
  %v4691 = vld.sshfl [vmem:[%s4690] sm:$0xff pattern:$0xb3a29180]
  %4692 = vrot.lane.b32.xlu0 %v4691, 16
  %v4693 = vpop.permute.xlu0 %4692
  %vm4694 = vcmask 130048
  %s4695 = scalar_lea.vmem %s1, 3847
  %4696 = vst.msk [vmem:[%s4695] ss:$8 sm:$0xf] %vm4694, %v4693
  %s4697 = scalar_lea.vmem %s1, 3847
  %4698 = vst.msk [vmem:[%s4697] ss:$8 sm:$0xf0] %vm4694, %v4693
  %s4699 = scalar_lea.vmem %s0, 484
  %v4700 = vld.sshfl [vmem:[%s4699] sm:$0xff pattern:$0xb3a29180]
  %4701 = vrot.lane.b32.xlu0 %v4700, 16
  %v4702 = vpop.permute.xlu0 %4701
  %vm4703 = vcmask 130048
  %s4704 = scalar_lea.vmem %s1, 3911
  %4705 = vst.msk [vmem:[%s4704] ss:$8 sm:$0xf] %vm4703, %v4702
  %s4706 = scalar_lea.vmem %s1, 3911
  %4707 = vst.msk [vmem:[%s4706] ss:$8 sm:$0xf0] %vm4703, %v4702
  %s4708 = scalar_lea.vmem %s0, 496
  %v4709 = vld.sshfl [vmem:[%s4708] sm:$0xff pattern:$0xb3a29180]
  %4710 = vrot.lane.b32.xlu0 %v4709, 16
  %v4711 = vpop.permute.xlu0 %4710
  %vm4712 = vcmask 130048
  %s4713 = scalar_lea.vmem %s1, 3975
  %4714 = vst.msk [vmem:[%s4713] ss:$8 sm:$0xf] %vm4712, %v4711
  %s4715 = scalar_lea.vmem %s1, 3975
  %4716 = vst.msk [vmem:[%s4715] ss:$8 sm:$0xf0] %vm4712, %v4711
  %s4717 = scalar_lea.vmem %s0, 500
  %v4718 = vld.sshfl [vmem:[%s4717] sm:$0xff pattern:$0xb3a29180]
  %4719 = vrot.lane.b32.xlu0 %v4718, 16
  %v4720 = vpop.permute.xlu0 %4719
  %vm4721 = vcmask 130048
  %s4722 = scalar_lea.vmem %s1, 4039
  %4723 = vst.msk [vmem:[%s4722] ss:$8 sm:$0xf] %vm4721, %v4720
  %s4724 = scalar_lea.vmem %s1, 4039
  %4725 = vst.msk [vmem:[%s4724] ss:$8 sm:$0xf0] %vm4721, %v4720

</llo_original>
